<compile_context>
chip_gen: v6e
topology: v6e:2x2x1
jax: 0.10.0
libtpu: 0.0.40
codegen_flags: <defaults>
</compile_context>

<pallas_src>
import jax
import jax.numpy as jnp
from jax import lax
from jax.experimental import pallas as pl
from jax.experimental.pallas import tpu as pltpu


HEAD_NAMES = ("l2", "l3", "l4", "l5", "lf")
NUM_HEADS = len(HEAD_NAMES)
NUM_CORES = 2  # leading "parallel" grid axis (v7x megacore; serial on v5e/v6e)


def _round_up(x, m):
    return (x + m - 1) // m * m


# ---------------------------------------------------------------------------
# Fused kernel.  One grid step = one (B, tk) x (N, tk) -> (B, N) partial
# matmul of one head on one core.  first/last flags (scalar-prefetched into
# SMEM) reset the f32 accumulator at a head's first K tile and write the
# head's pre-activation sum to the (core, head) output block on its last one.
# ---------------------------------------------------------------------------
def _fused_heads_kernel(blk_ref, head_ref, first_ref, last_ref,  # SMEM schedule
                        x_ref, w_ref,                            # VMEM inputs
                        o_ref,                                   # (1,1,B,N) out
                        acc_ref):                                # (B,N) scratch
    c = pl.program_id(0)
    s = pl.program_id(1)
    idx = c * pl.num_programs(1) + s

    @pl.when(first_ref[idx] == 1)
    def _():
        acc_ref[...] = jnp.zeros_like(acc_ref)

    # x: (B, tk) bf16, w: (N, tk) bf16, both lane-dense; contract lane dims.
    acc_ref[...] += lax.dot_general(
        x_ref[...], w_ref[...],
        dimension_numbers=(((1,), (1,)), ((), ())),
        preferred_element_type=jnp.float32)

    @pl.when(last_ref[idx] == 1)
    def _():
        o_ref[0, 0] = acc_ref[...]


# ---------------------------------------------------------------------------
# Parameter init (deterministic, PyTorch nn.Linear-style uniform bounds).
# ---------------------------------------------------------------------------
def init_linear(key, out_features, in_features, dtype=jnp.float32):
    kw, kb = jax.random.split(key)
    bound = 1.0 / (in_features ** 0.5)
    w = jax.random.uniform(kw, (out_features, in_features), dtype, -bound, bound)
    b = jax.random.uniform(kb, (out_features,), dtype, -bound, bound)
    return w, b


def init_resnet_uscl_params(key, out_dim, flat_dims):
    """flat_dims: dict with flattened sizes of f2, f3, f4, f5, fp."""
    keys = jax.random.split(key, 7)
    return {
        "l2": init_linear(keys[0], out_dim, flat_dims["f2"]),
        "l3": init_linear(keys[1], out_dim, flat_dims["f3"]),
        "l4": init_linear(keys[2], out_dim, flat_dims["f4"]),
        "l5": init_linear(keys[3], out_dim, flat_dims["f5"]),
        "lf": init_linear(keys[4], out_dim, flat_dims["fp"]),
        "linear": init_linear(keys[5], out_dim, 5 * out_dim),
        # fc exists in __init__ but is unused in forward(); kept for parity.
        "fc": init_linear(keys[6], 3, out_dim),
    }


# ---------------------------------------------------------------------------
# One-time repack of the five head Linears into the fused-kernel layout plus
# the flat ragged K-tile schedule split across the two cores.
# ---------------------------------------------------------------------------
def pack_resnet_uscl_params(params, flat_dims, out_dim, *, max_tk=32768):
    k_list = [flat_dims[k] for k in ("f2", "f3", "f4", "f5", "fp")]
    # Shared K tile: multiple of 128 lanes, as large as is useful.
    tk = min(max_tk, _round_up(max(k_list), 128))
    tk = max(128, (tk // 128) * 128)
    k_pads = [_round_up(k, tk) for k in k_list]

    # Lane-dense weight pack: (out_dim, sum(k_pads)) bf16, heads back to back.
    w_segs = []
    for name, k, kp in zip(HEAD_NAMES, k_list, k_pads):
        w, _ = params[name]                          # (N, K) f32
        if kp > k:
            w = jnp.pad(w, ((0, 0), (0, kp - k)))    # zero cols: no-op in dot
        w_segs.append(w)
    w_all = jnp.concatenate(w_segs, axis=1).astype(jnp.bfloat16)   # (N, sum kp)

    b_all = jnp.stack([params[name][1] for name in HEAD_NAMES], axis=0)  # (5,N)
    w_lin, b_lin = params["linear"]                  # (N, 5N), (N,)
    wlin = jnp.stack(
        [jnp.transpose(w_lin[:, i * out_dim:(i + 1) * out_dim])
         for i in range(NUM_HEADS)], axis=0)         # (5, N, N) f32
    blin = b_lin                                     # (N,) f32

    # Flat ragged K-tile schedule, heads back to back, split ~evenly across
    # the two cores (a head's K range may straddle the split -- its partial
    # pre-activation sums are combined in the JAX epilogue).
    tiles = []
    off = 0
    for i, kp in enumerate(k_pads):
        nb = kp // tk
        tiles.extend((i, off + j) for j in range(nb))
        off += nb
    total = len(tiles)
    steps = (total + NUM_CORES - 1) // NUM_CORES
    per_core = [tiles[c * steps:(c + 1) * steps] for c in range(NUM_CORES)]

    blk, head, first, last = [], [], [], []
    has = [[False] * NUM_HEADS for _ in range(NUM_CORES)]
    for c in range(NUM_CORES):
        lst = per_core[c]
        for pos, (h, b) in enumerate(lst):
            has[c][h] = True
            blk.append(b)
            head.append(h)
            first.append(1 if pos == 0 or lst[pos - 1][0] != h else 0)
            last.append(1 if pos == len(lst) - 1 or lst[pos + 1][0] != h else 0)
        # Pad the lighter core to `steps` with no-op repeats of its last real
        # tile (first=0 / last=0: accumulated into a dead accumulator, never
        # written out).  At most one pad step with this schedule.
        h_pad, b_pad = lst[-1] if lst else per_core[0][-1]
        for _ in range(steps - len(lst)):
            blk.append(b_pad)
            head.append(h_pad)
            first.append(0)
            last.append(0)

    return {
        "out_dim": out_dim, "tk": tk, "steps": steps,
        "k_list": k_list, "k_pads": k_pads, "has": has,
        "w_all": w_all, "b_all": b_all, "wlin": wlin, "blin": blin,
        "blk": jnp.array(blk, dtype=jnp.int32),
        "head": jnp.array(head, dtype=jnp.int32),
        "first": jnp.array(first, dtype=jnp.int32),
        "last": jnp.array(last, dtype=jnp.int32),
    }


# ---------------------------------------------------------------------------
# pallas_call wrapper + forward pass (matches ResNetUSCL.forward given the
# FPN features p2..p5 and h).
# ---------------------------------------------------------------------------
def _fused_heads_call(packed, x_all, batch):
    n = packed["out_dim"]
    tk = packed["tk"]
    steps = packed["steps"]

    x_spec = pl.BlockSpec(
        (batch, tk), lambda c, s, blk, hd, fi, la: (0, blk[c * steps + s]))
    w_spec = pl.BlockSpec(
        (n, tk), lambda c, s, blk, hd, fi, la: (0, blk[c * steps + s]))
    o_spec = pl.BlockSpec(
        (1, 1, batch, n),
        lambda c, s, blk, hd, fi, la: (c, hd[c * steps + s], 0, 0))

    grid_spec = pltpu.PrefetchScalarGridSpec(
        num_scalar_prefetch=4,
        grid=(NUM_CORES, steps),
        in_specs=[x_spec, w_spec],
        out_specs=o_spec,
        scratch_shapes=[pltpu.VMEM((batch, n), jnp.float32)],
    )

    k_total = sum(packed["k_pads"])
    flops = 2 * batch * sum(packed["k_list"]) * n
    x_rows = max(batch, 16)            # sublane-padded bf16 activation rows
    bytes_accessed = (x_rows * k_total * 2          # activations (padded rows)
                      + n * k_total * 2             # lane-dense bf16 weights
                      + NUM_CORES * NUM_HEADS * batch * n * 4)

    return pl.pallas_call(
        _fused_heads_kernel,
        out_shape=jax.ShapeDtypeStruct((NUM_CORES, NUM_HEADS, batch, n),
                                       jnp.float32),
        grid_spec=grid_spec,
        compiler_params=pltpu.CompilerParams(
            dimension_semantics=("parallel", "arbitrary"),
            vmem_limit_bytes=48 * 1024 * 1024),
        cost_estimate=pl.CostEstimate(
            flops=int(flops), transcendentals=0,
            bytes_accessed=int(bytes_accessed)),
    )(packed["blk"], packed["head"], packed["first"], packed["last"],
      x_all, packed["w_all"])


def resnet_uscl_forward(packed, p2, p3, p4, p5, h):
    batch = p2.shape[0]
    # TODO(synk): per review #7, weight DMA amortizes over batch -- callers
    # should batch several forwards (B >= 16) when possible.
    segs = []
    for f, k, kp in zip((p2, p3, p4, p5, h), packed["k_list"], packed["k_pads"]):
        flat = f.reshape(batch, -1).astype(jnp.bfloat16)   # torch.flatten(x, 1)
        if kp > k:
            flat = jnp.pad(flat, ((0, 0), (0, kp - k)))
        segs.append(flat)
    x_all = jnp.concatenate(segs, axis=1)                  # (B, sum(k_pads))

    parts = _fused_heads_call(packed, x_all, batch)        # (2, 5, B, N) f32

    # Tiny f32 epilogue in plain JAX: combine per-core partial pre-activation
    # sums, add bias + ReLU, then the fusing 5*out_dim -> out_dim Linear.
    has = packed["has"]
    out = None
    for hidx in range(NUM_HEADS):
        pre = None
        for c in range(NUM_CORES):
            if has[c][hidx]:
                t = parts[c, hidx]
                pre = t if pre is None else pre + t
        y = jnp.maximum(pre + packed["b_all"][hidx][None, :], 0.0)   # (B, N)
        term = y @ packed["wlin"][hidx]                              # (B, N)
        out = term if out is None else out + term
    return out + packed["blin"][None, :]


def resnet_uscl_forward_ref(params, p2, p3, p4, p5, h):
    """Plain-JAX reference: heads use the same bf16 weight/activation rounding
    as the kernel; the fusing Linear is f32 (as in the kernel path)."""
    batch = p2.shape[0]

    def bf(t):
        return t.astype(jnp.bfloat16).astype(jnp.float32)

    ys = []
    for f, name in zip((p2, p3, p4, p5, h), HEAD_NAMES):
        w, b = params[name]
        y = bf(f.reshape(batch, -1)) @ bf(w).T + b
        ys.append(jnp.maximum(y, 0.0))
    x = jnp.concatenate(ys, axis=1)
    w_lin, b_lin = params["linear"]
    return x @ w_lin.T + b_lin


if __name__ == "__main__":
    # Small shapes consistent with the module's structure: the original FPN
    # levels are (256,56,56)/(256,28,28)/(256,14,14)/(256,7,7) and h=(512,1,1);
    # here spatial sizes are scaled down (16/8/4/2/1) while keeping channel
    # counts and the halving pyramid structure.
    B = 2
    C = 256
    out_dim = 32

    key = jax.random.PRNGKey(0)
    k_p2, k_p3, k_p4, k_p5, k_h, k_params = jax.random.split(key, 6)

    p2 = jax.random.normal(k_p2, (B, C, 16, 16), jnp.float32)
    p3 = jax.random.normal(k_p3, (B, C, 8, 8), jnp.float32)
    p4 = jax.random.normal(k_p4, (B, C, 4, 4), jnp.float32)
    p5 = jax.random.normal(k_p5, (B, C, 2, 2), jnp.float32)
    h = jax.random.normal(k_h, (B, 512, 1, 1), jnp.float32)

    flat_dims = {
        "f2": C * 16 * 16,
        "f3": C * 8 * 8,
        "f4": C * 4 * 4,
        "f5": C * 2 * 2,
        "fp": 512,
    }
    params = init_resnet_uscl_params(k_params, out_dim, flat_dims)
    packed = pack_resnet_uscl_params(params, flat_dims, out_dim)

    out = resnet_uscl_forward(packed, p2, p3, p4, p5, h)
    out = jax.block_until_ready(out)

    ref = resnet_uscl_forward_ref(params, p2, p3, p4, p5, h)
    assert out.shape == (B, out_dim)
    err = float(jnp.max(jnp.abs(out - ref)))
    assert jnp.allclose(out, ref, atol=5e-3, rtol=5e-3), (
        f"mismatch vs reference, max abs err = {err}")

    print("KERNEL_OK")
</pallas_src>

<mosaic_0001>
module attributes {stable_mosaic.version = 11 : i64} {
  func.func @_fused_heads_kernel(%arg0: i32, %arg1: i32, %arg2: memref<6xi32, #tpu.memory_space<smem>>, %arg3: memref<6xi32, #tpu.memory_space<smem>>, %arg4: memref<6xi32, #tpu.memory_space<smem>>, %arg5: memref<6xi32, #tpu.memory_space<smem>>, %arg6: memref<2x32768xbf16, #tpu.memory_space<vmem>>, %arg7: memref<32x32768xbf16, #tpu.memory_space<vmem>>, %arg8: memref<1x1x2x32xf32, #tpu.memory_space<vmem>>, %arg9: memref<2x32xf32, #tpu.memory_space<vmem>>) attributes {dimension_semantics = [#tpu.dimension_semantics<parallel>, #tpu.dimension_semantics<arbitrary>], iteration_bounds = array<i64: 2, 3>, scalar_prefetch = 4 : i64, scratch_operands = 1 : i64, tpu.core_type = #tpu.core_type<tc>, window_params = [{transform_indices = @transform_0, window_bounds = array<i64: 2, 32768>}, {transform_indices = @transform_1, window_bounds = array<i64: 32, 32768>}, {transform_indices = @transform_2, window_bounds = array<i64: 1, 1, 2, 32>}]} {
    %c3_i32 = arith.constant 3 : i32
    %0 = arith.muli %arg0, %c3_i32 : i32
    %1 = arith.addi %0, %arg1 : i32
    %2 = arith.index_cast %1 : i32 to index
    %3 = memref.load %arg4[%2] : memref<6xi32, #tpu.memory_space<smem>>
    %c1_i32 = arith.constant 1 : i32
    %4 = arith.cmpi eq, %3, %c1_i32 : i32
    %5 = arith.extui %4 : i1 to i32
    %c0_i32 = arith.constant 0 : i32
    %6 = arith.cmpi ne, %5, %c0_i32 : i32
    scf.if %6 {
      %cst_9 = arith.constant 0.000000e+00 : f32
      %18 = vector.broadcast %cst_9 : f32 to vector<2x32xf32>
      %c0_10 = arith.constant 0 : index
      %c0_11 = arith.constant 0 : index
      %19 = vector.load %arg9[%c0_10, %c0_11] : memref<2x32xf32, #tpu.memory_space<vmem>>, vector<2x32xf32>
      tpu.vector_store %arg9[%c0_10, %c0_11], %18 {strides = array<i32>} : memref<2x32xf32, #tpu.memory_space<vmem>>, vector<2x32xf32>,
    } else {
    }
    %c0 = arith.constant 0 : index
    %c0_0 = arith.constant 0 : index
    %7 = vector.load %arg9[%c0, %c0_0] : memref<2x32xf32, #tpu.memory_space<vmem>>, vector<2x32xf32>
    %c0_1 = arith.constant 0 : index
    %c0_2 = arith.constant 0 : index
    %8 = vector.load %arg6[%c0_1, %c0_2] : memref<2x32768xbf16, #tpu.memory_space<vmem>>, vector<2x32768xbf16>
    %c0_3 = arith.constant 0 : index
    %c0_4 = arith.constant 0 : index
    %9 = vector.load %arg7[%c0_3, %c0_4] : memref<32x32768xbf16, #tpu.memory_space<vmem>>, vector<32x32768xbf16>
    %cst = arith.constant dense<0.000000e+00> : vector<2x32xf32>
    %10 = tpu.matmul %8, %9, %cst {dimension_numbers = #tpu.dot_dimension_numbers<[1], [1], [0], [0], [0, 0, 1, 0], [], []>} : vector<2x32768xbf16>, vector<32x32768xbf16>, vector<2x32xf32> -> vector<2x32xf32>
    %11 = arith.addf %7, %10 : vector<2x32xf32>
    %c0_5 = arith.constant 0 : index
    %c0_6 = arith.constant 0 : index
    %12 = vector.load %arg9[%c0_5, %c0_6] : memref<2x32xf32, #tpu.memory_space<vmem>>, vector<2x32xf32>
    tpu.vector_store %arg9[%c0_5, %c0_6], %11 {strides = array<i32>} : memref<2x32xf32, #tpu.memory_space<vmem>>, vector<2x32xf32>,
    %13 = arith.index_cast %1 : i32 to index
    %14 = memref.load %arg5[%13] : memref<6xi32, #tpu.memory_space<smem>>
    %c1_i32_7 = arith.constant 1 : i32
    %15 = arith.cmpi eq, %14, %c1_i32_7 : i32
    %16 = arith.extui %15 : i1 to i32
    %c0_i32_8 = arith.constant 0 : i32
    %17 = arith.cmpi ne, %16, %c0_i32_8 : i32
    scf.if %17 {
      %c0_9 = arith.constant 0 : index
      %c0_10 = arith.constant 0 : index
      %18 = vector.load %arg9[%c0_9, %c0_10] : memref<2x32xf32, #tpu.memory_space<vmem>>, vector<2x32xf32>
      %c0_11 = arith.constant 0 : index
      %c0_12 = arith.constant 0 : index
      %c0_13 = arith.constant 0 : index
      %c0_14 = arith.constant 0 : index
      %19 = vector.load %arg8[%c0_11, %c0_12, %c0_13, %c0_14] : memref<1x1x2x32xf32, #tpu.memory_space<vmem>>, vector<1x1x2x32xf32>
      %20 = vector.shape_cast %19 : vector<1x1x2x32xf32> to vector<2x32xf32>
      %21 = vector.shape_cast %18 : vector<2x32xf32> to vector<1x1x2x32xf32>
      tpu.vector_store %arg8[%c0_11, %c0_12, %c0_13, %c0_14], %21 {strides = array<i32>} : memref<1x1x2x32xf32, #tpu.memory_space<vmem>>, vector<1x1x2x32xf32>,
    } else {
    }
    return
  }
  func.func @transform_0(%arg0: i32, %arg1: i32, %arg2: memref<6xi32, #tpu.memory_space<smem>>, %arg3: memref<6xi32, #tpu.memory_space<smem>>, %arg4: memref<6xi32, #tpu.memory_space<smem>>, %arg5: memref<6xi32, #tpu.memory_space<smem>>) -> (i32, i32) {
    %c3_i32 = arith.constant 3 : i32
    %0 = arith.muli %arg0, %c3_i32 : i32
    %1 = arith.addi %0, %arg1 : i32
    %2 = arith.index_cast %1 : i32 to index
    %3 = memref.load %arg2[%2] : memref<6xi32, #tpu.memory_space<smem>>
    %c0_i32 = arith.constant 0 : i32
    %c0_i32_0 = arith.constant 0 : i32
    return %c0_i32, %3 : i32, i32
  }
  func.func @transform_1(%arg0: i32, %arg1: i32, %arg2: memref<6xi32, #tpu.memory_space<smem>>, %arg3: memref<6xi32, #tpu.memory_space<smem>>, %arg4: memref<6xi32, #tpu.memory_space<smem>>, %arg5: memref<6xi32, #tpu.memory_space<smem>>) -> (i32, i32) {
    %c3_i32 = arith.constant 3 : i32
    %0 = arith.muli %arg0, %c3_i32 : i32
    %1 = arith.addi %0, %arg1 : i32
    %2 = arith.index_cast %1 : i32 to index
    %3 = memref.load %arg2[%2] : memref<6xi32, #tpu.memory_space<smem>>
    %c0_i32 = arith.constant 0 : i32
    %c0_i32_0 = arith.constant 0 : i32
    return %c0_i32, %3 : i32, i32
  }
  func.func @transform_2(%arg0: i32, %arg1: i32, %arg2: memref<6xi32, #tpu.memory_space<smem>>, %arg3: memref<6xi32, #tpu.memory_space<smem>>, %arg4: memref<6xi32, #tpu.memory_space<smem>>, %arg5: memref<6xi32, #tpu.memory_space<smem>>) -> (i32, i32, i32, i32) {
    %c3_i32 = arith.constant 3 : i32
    %0 = arith.muli %arg0, %c3_i32 : i32
    %1 = arith.addi %0, %arg1 : i32
    %2 = arith.index_cast %1 : i32 to index
    %3 = memref.load %arg3[%2] : memref<6xi32, #tpu.memory_space<smem>>
    %c0_i32 = arith.constant 0 : i32
    %c0_i32_0 = arith.constant 0 : i32
    %c0_i32_1 = arith.constant 0 : i32
    return %arg0, %3, %c0_i32, %c0_i32_0 : i32, i32, i32, i32
  }
}

</mosaic_0001>

<llo_original>
// kernel: tpu_custom_call.1
$region0: #{tpu_custom_call.1}
  #allocation0 [shape = 'u32[]', space=smem, size = 0x4, offset = 0x4, fixed_abs, tag = 'smem constant byte address 0x4 - core index']
  #allocation1 [shape = 'u32[144,128]{1,0:T(1,128)}', space=vmem, size = 0x12000, scoped, tag = 'internal scratch']
  #allocation2 [shape = 'f32[2,32]{1,0:T(2,128)}', space=vmem, size = 0x400, scoped, tag = 'scratch operand']
  #allocation3 [shape = 's32[1]{0}', space=sflag, size = 0x4, scoped, tag = 'scoped memory for tpu_custom_call.1']
  #allocation4 [shape = 'u8[512]{0}', space=smem, size = 0x200, scoped, tag = 'prefetched SMEM operand 0']
  #allocation5 [shape = 'u8[512]{0}', space=smem, size = 0x200, scoped, tag = 'prefetched SMEM operand 1']
  #allocation6 [shape = 'u8[512]{0}', space=smem, size = 0x200, scoped, tag = 'prefetched SMEM operand 2']
  #allocation7 [shape = 'u8[512]{0}', space=smem, size = 0x200, scoped, tag = 'prefetched SMEM operand 3']
  %s0 = inlined_call_operand.hbm [shape: s32[6], index: 0, kind: input, shape index: {}]
  %s1 = inlined_call_operand.hbm [shape: s32[6], index: 1, kind: input, shape index: {}]
  %s2 = inlined_call_operand.hbm [shape: s32[6], index: 2, kind: input, shape index: {}]
  %s3 = inlined_call_operand.hbm [shape: s32[6], index: 3, kind: input, shape index: {}]
  %s4 = inlined_call_operand.hbm [shape: bf16[2,196608], index: 4, kind: input, shape index: {}]
  %s5 = inlined_call_operand.hbm [shape: bf16[32,196608], index: 5, kind: input, shape index: {}]
  %s6 = inlined_call_operand.hbm [shape: f32[2,5,2,32], index: 6, kind: output, shape index: {}]
  %s7 = sld [smem:[#allocation0]]
  $region57: #{tpu_custom_call.1} parent=0
    _
  %s9 = ssub.s32 1, %s7
  %s10 = scalar_select 0, %s9, %s7
  %12 = dma.hbm_to_smem %s0, 16, [#allocation4], [#allocation3]
  %14 = dma.hbm_to_smem %s1, 16, [#allocation5], [#allocation3]
  %16 = dma.hbm_to_smem %s2, 16, [#allocation6], [#allocation3]
  %18 = dma.hbm_to_smem %s3, 16, [#allocation7], [#allocation3]
  %19 = dma.done [#allocation3], 64
  %20 = sfence
  $region1: #{tpu_custom_call.1} parent=0
    #allocation8 [shape = 'u8[262144]{0}', space=vmem, size = 0x40000, scoped, tag = 'input window, operand 4']
    #allocation9 [shape = 's32[2]{0}', space=sflag, size = 0x8, scoped, tag = 'scoped memory for tpu_custom_call.1']
    #allocation10 [shape = 's32[2]{0}', space=sflag, size = 0x8, scoped, tag = 'scoped memory for tpu_custom_call.1']
    #allocation11 [shape = 'u8[4194304]{0}', space=vmem, size = 0x400000, scoped, tag = 'input window, operand 5']
    #allocation12 [shape = 's32[2]{0}', space=sflag, size = 0x8, scoped, tag = 'scoped memory for tpu_custom_call.1']
    #allocation13 [shape = 'u8[2048]{0}', space=vmem, size = 0x800, scoped, tag = 'output window, operand 0']
    %21 = vsyncpa [#allocation9], 0
    %s22 = scalar_lea.sflag [#allocation9], 1
    %23 = vsyncpa %s22, 0
    %24 = vsyncpa [#allocation12], 0
    %s25 = scalar_lea.sflag [#allocation12], 1
    %26 = vsyncpa %s25, 0
    %27 = vsyncpa [#allocation10], 0
    %s28 = scalar_lea.sflag [#allocation10], 1
    %29 = vsyncpa %s28, 0
    loop: start=0, step=1, limit=8
    $region2: #{tpu_custom_call.1} parent=1 // loop_pre_header
      _
    $region3: #{tpu_custom_call.1} parent=1 // loop_header
      %s31 = sphi 0, %s35
      %p32 = scmp.ge.s32.totalorder %s31, 8
      %s38 = sphi 0, %s50
      %s39 = sphi 0, %s46
      %s40 = sphi 0, %s38
      %s41 = sphi 0, %s39
      %s42 = sphi 0, %s40
      %s43 = sphi 0, %s41
      %s59 = sphi 0, %s61
      %s62 = sphi 0, %s59
      %s63 = sphi 0, %s62
      %s79 = sphi 0, %s63
      %s91 = sphi 0, %s93
      %s94 = sphi 0, %s91
      %s95 = sphi 0, %s94
      %s111 = sphi 0, %s95
      %s125 = sphi 0, %s127
      %s128 = sphi 0, %s125
      %s129 = sphi 0, %s128
      %s145 = sphi 0, %s129
    $region4: #{tpu_custom_call.1} parent=1 // loop_header_branch
      %34 = sbr.rel (%p32) target = $region8
    $region5: #{tpu_custom_call.1} parent=1 // loop_body
      %s36 = ssub.s32 %s31, 1
      %s37 = ssub.s32 %s31, 2
      %s44 = sadd.s32 1, %s39
      %p45 = scmp.ge.s32.totalorder %s44, 3
      %s46 = scalar_select %p45, 0, %s44
      %s47 = sadd.s32 1, %s38
      %s48 = scalar_select %p45, %s47, %s38
      %p49 = scmp.ge.s32.totalorder %s48, 2
      %s50 = scalar_select %p49, 0, %s48
      %s51 = smul.u32 %s38, 3
      %s52 = sadd.s32 %s51, %s39
      %s53 = sld [smem:[#allocation4 + %s52]]
      %s54 = smul.u32 %s50, 3
      %s55 = sadd.s32 %s54, %s46
      %s56 = sld [smem:[#allocation4 + %s55]]
      %s57 = ssub.s32 %s53, %s56
      %p58 = scmp.eq.s32.totalorder %s57, 0
      %s60 = sadd.s32 %s59, 1
      %s61 = scalar_select %p58, %s59, %s60
      %p64 = pneg %p58
      %p65 = scmp.eq.s32.totalorder %s31, 5
      %p66 = por %p64, %p65
      %p67 = scmp.ne.s32.totalorder %s59, %s62
      %p68 = scmp.eq.s32.totalorder %s31, 0
      %p69 = por %p67, %p68
      %p70 = scmp.ne.s32.totalorder %s59, %s62
      %p71 = scmp.eq.s32.totalorder %s36, 5
      %p72 = por %p70, %p71
      %p73 = scmp.ne.s32.totalorder %s62, %s63
      %p74 = scmp.eq.s32.totalorder %s36, 0
      %p75 = por %p73, %p74
      %p76 = scmp.ne.s32.totalorder %s62, %s63
      %p77 = scmp.eq.s32.totalorder %s37, 5
      %p78 = por %p76, %p77
      %p80 = scmp.ne.s32.totalorder %s63, %s79
      %p81 = scmp.eq.s32.totalorder %s37, 0
      %p82 = por %p80, %p81
      %s83 = smul.u32 %s38, 3
      %s84 = sadd.s32 %s83, %s39
      %s85 = sld [smem:[#allocation4 + %s84]]
      %s86 = smul.u32 %s50, 3
      %s87 = sadd.s32 %s86, %s46
      %s88 = sld [smem:[#allocation4 + %s87]]
      %s89 = ssub.s32 %s85, %s88
      %p90 = scmp.eq.s32.totalorder %s89, 0
      %s92 = sadd.s32 %s91, 1
      %s93 = scalar_select %p90, %s91, %s92
      %p96 = pneg %p90
      %p97 = scmp.eq.s32.totalorder %s31, 5
      %p98 = por %p96, %p97
      %p99 = scmp.ne.s32.totalorder %s91, %s94
      %p100 = scmp.eq.s32.totalorder %s31, 0
      %p101 = por %p99, %p100
      %p102 = scmp.ne.s32.totalorder %s91, %s94
      %p103 = scmp.eq.s32.totalorder %s36, 5
      %p104 = por %p102, %p103
      %p105 = scmp.ne.s32.totalorder %s94, %s95
      %p106 = scmp.eq.s32.totalorder %s36, 0
      %p107 = por %p105, %p106
      %p108 = scmp.ne.s32.totalorder %s94, %s95
      %p109 = scmp.eq.s32.totalorder %s37, 5
      %p110 = por %p108, %p109
      %p112 = scmp.ne.s32.totalorder %s95, %s111
      %p113 = scmp.eq.s32.totalorder %s37, 0
      %p114 = por %p112, %p113
      %s115 = smul.u32 %s38, 3
      %s116 = sadd.s32 %s115, %s39
      %s117 = sld [smem:[#allocation5 + %s116]]
      %s118 = smul.u32 %s50, 3
      %s119 = sadd.s32 %s118, %s46
      %s120 = sld [smem:[#allocation5 + %s119]]
      %s121 = ssub.s32 %s38, %s50
      %s122 = ssub.s32 %s117, %s120
      %s123 = sor.u32 %s121, %s122
      %p124 = scmp.eq.s32.totalorder %s123, 0
      %s126 = sadd.s32 %s125, 1
      %s127 = scalar_select %p124, %s125, %s126
      %p130 = pneg %p124
      %p131 = scmp.eq.s32.totalorder %s31, 5
      %p132 = por %p130, %p131
      %p133 = scmp.ne.s32.totalorder %s125, %s128
      %p134 = scmp.eq.s32.totalorder %s31, 0
      %p135 = por %p133, %p134
      %p136 = scmp.ne.s32.totalorder %s125, %s128
      %p137 = scmp.eq.s32.totalorder %s36, 5
      %p138 = por %p136, %p137
      %p139 = scmp.ne.s32.totalorder %s128, %s129
      %p140 = scmp.eq.s32.totalorder %s36, 0
      %p141 = por %p139, %p140
      %p142 = scmp.ne.s32.totalorder %s128, %s129
      %p143 = scmp.eq.s32.totalorder %s37, 5
      %p144 = por %p142, %p143
      %p146 = scmp.ne.s32.totalorder %s129, %s145
      %p147 = scmp.eq.s32.totalorder %s37, 0
      %p148 = por %p146, %p147
      %p149 = scmp.le.s32.totalorder 1, %s31
      %p150 = scmp.lt.s32.totalorder %s31, 7
      %p151 = pnand %p149, %p150
      %p152 = pneg %p151
      // Predicated region
      $region9: #{tpu_custom_call.1} parent=5 // pred_check
        _
      $region10: #{tpu_custom_call.1} parent=5 // pred_check_branch
        %154 = sbr.rel (%p151) target = $region12
      $region11: #{tpu_custom_call.1} parent=5 // pred_region
        %s155 = ssub.s32 %s31, 1
      $region12: #{tpu_custom_call.1} parent=5 // pred_fallthru
        _
      %p156 = scmp.lt.s32.totalorder %s31, 6
      // Predicated region
      $region13: #{tpu_custom_call.1} parent=5 // pred_check
        %p157 = pneg %p156
      $region14: #{tpu_custom_call.1} parent=5 // pred_check_branch
        %159 = sbr.rel (%p157) target = $region16
      $region15: #{tpu_custom_call.1} parent=5 // pred_region
        // Predicated region
        $region17: #{tpu_custom_call.1} parent=15 // pred_check
          %p160 = pneg %p69
        $region18: #{tpu_custom_call.1} parent=15 // pred_check_branch
          %162 = sbr.rel (%p160) target = $region20
        $region19: #{tpu_custom_call.1} parent=15 // pred_region
          %s163 = sand.u32 %s59, 1
          %s164 = scalar_lea.sflag [#allocation9], %s163
          %s165 = sand.u32 %s59, 1
          %s166 = smul.addr %s165, 256
          %s167 = scalar_lea.vmem [#allocation8], %s166
          %s168 = smul.u32 %s38, 3
          %s169 = sadd.s32 %s168, %s39
          %s170 = sld [smem:[#allocation4 + %s169]]
          %s171 = smul.u32 256, %s170
          %s173 = ssub.s32 4096, 4096
          %174 = vsyncadd %s164, %s173
          %s175 = smul.addr %s171, 16
          %s176 = scalar_lea.hbm %s4, %s175
          %s178 = sshll.u32 %s167, 4
          %s179 = int_to_ptr.vmem [resolvable:$true] %s178
          %181 = dma.hbm_to_vmem [thread:$0]  %s176, 4096, %s179, %s164
        $region20: #{tpu_custom_call.1} parent=15 // pred_fallthru
          _
        // Predicated region
        $region21: #{tpu_custom_call.1} parent=15 // pred_check
          %p182 = pneg %p101
        $region22: #{tpu_custom_call.1} parent=15 // pred_check_branch
          %184 = sbr.rel (%p182) target = $region24
        $region23: #{tpu_custom_call.1} parent=15 // pred_region
          %s185 = sand.u32 %s91, 1
          %s186 = scalar_lea.sflag [#allocation12], %s185
          %s187 = sand.u32 %s91, 1
          %s188 = smul.addr %s187, 4096
          %s189 = scalar_lea.vmem [#allocation11], %s188
          %s190 = smul.u32 %s38, 3
          %s191 = sadd.s32 %s190, %s39
          %s192 = sld [smem:[#allocation4 + %s191]]
          %s193 = smul.u32 256, %s192
          %s195 = ssub.s32 65536, 65536
          %196 = vsyncadd %s186, %s195
          %s197 = smul.addr %s193, 64
          %s198 = scalar_lea.hbm %s5, %s197
          %s199 = sshll.u32 %s189, 4
          %s200 = int_to_ptr.vmem [resolvable:$true] %s199
          %205 = dma.hbm_to_vmem [thread:$0]  %s198, 65536, %s200, %s186, 98304, 16384, 1024
        $region24: #{tpu_custom_call.1} parent=15 // pred_fallthru
          _
      $region16: #{tpu_custom_call.1} parent=5 // pred_fallthru
        _
      %p206 = scmp.le.s32.totalorder 1, %s31
      %p207 = scmp.lt.s32.totalorder %s31, 7
      %p208 = pnand %p206, %p207
      %p209 = pneg %p208
      // Predicated region
      $region25: #{tpu_custom_call.1} parent=5 // pred_check
        _
      $region26: #{tpu_custom_call.1} parent=5 // pred_check_branch
        %211 = sbr.rel (%p208) target = $region28
      $region27: #{tpu_custom_call.1} parent=5 // pred_region
        %s212 = ssub.s32 %s31, 1
        %s213 = sand.u32 %s62, 1
        %s214 = scalar_lea.sflag [#allocation9], %s213
        %s215 = sand.u32 %s62, 1
        %s216 = smul.addr %s215, 256
        %s217 = scalar_lea.vmem [#allocation8], %s216
        // Predicated region
        $region29: #{tpu_custom_call.1} parent=27 // pred_check
          %p218 = pneg %p75
        $region30: #{tpu_custom_call.1} parent=27 // pred_check_branch
          %220 = sbr.rel (%p218) target = $region32
        $region31: #{tpu_custom_call.1} parent=27 // pred_region
          %221 = dma.done %s214, 4096
        $region32: #{tpu_custom_call.1} parent=27 // pred_fallthru
          _
        %s222 = sand.u32 %s94, 1
        %s223 = scalar_lea.sflag [#allocation12], %s222
        %s224 = sand.u32 %s94, 1
        %s225 = smul.addr %s224, 4096
        %s226 = scalar_lea.vmem [#allocation11], %s225
        // Predicated region
        $region33: #{tpu_custom_call.1} parent=27 // pred_check
          %p227 = pneg %p107
        $region34: #{tpu_custom_call.1} parent=27 // pred_check_branch
          %229 = sbr.rel (%p227) target = $region36
        $region35: #{tpu_custom_call.1} parent=27 // pred_region
          %230 = dma.done %s223, 65536
        $region36: #{tpu_custom_call.1} parent=27 // pred_fallthru
          _
        %s231 = sand.u32 %s62, 1
        %s232 = scalar_lea.sflag [#allocation9], %s231
        %s233 = sand.u32 %s62, 1
        %s234 = smul.addr %s233, 256
        %s235 = scalar_lea.vmem [#allocation8], %s234
        %p236 = pneg %p75
        %p237 = pneg %p72
        %s238 = sand.u32 %s94, 1
        %s239 = scalar_lea.sflag [#allocation12], %s238
        %s240 = sand.u32 %s94, 1
        %s241 = smul.addr %s240, 4096
        %s242 = scalar_lea.vmem [#allocation11], %s241
        %p243 = pneg %p107
        %p244 = pneg %p104
        %p245 = pneg %p141
        %p246 = pneg %p138
        %s247 = sand.u32 %s128, 1
        %s248 = scalar_lea.sflag [#allocation10], %s247
        %s249 = sand.u32 %s128, 1
        %s250 = smul.addr %s249, 2
        %s251 = scalar_lea.vmem [#allocation13], %s250
        %s252 = smul.u32 %s40, 3
        %s253 = sadd.s32 %s252, %s41
        %s254 = sld [smem:[#allocation4 + %s253]]
        %s255 = smul.u32 256, %s254
        %s256 = smul.u32 %s40, 3
        %s257 = sadd.s32 %s256, %s41
        %s258 = sld [smem:[#allocation4 + %s257]]
        %s259 = smul.u32 256, %s258
        %s260 = smul.u32 %s40, 3
        %s261 = sadd.s32 %s260, %s41
        %s262 = sld [smem:[#allocation5 + %s261]]
        %s264 = smul.u32 %s40, 3
        %s265 = sadd.s32 %s264, %s41
        %s266 = sld [smem:[#allocation6 + %s265]]
        %p267 = scmp.eq.s32.totalorder %s266, 1
        // Predicated region
        $region37: #{tpu_custom_call.1} parent=27 // pred_check
          %p268 = pneg %p267
        $region38: #{tpu_custom_call.1} parent=27 // pred_check_branch
          %270 = sbr.rel (%p268) target = $region40
        $region39: #{tpu_custom_call.1} parent=27 // pred_region
          %vm271 = vcmask 254976
          %272 = vst.msk [vmem:[#allocation2] sm:$0x3] %vm271, 0.0
        $region40: #{tpu_custom_call.1} parent=27 // pred_fallthru
          _
        %v273 = vld [vmem:[#allocation2] sm:$0x3]
        %v274 = vld [vmem:[%s217] sm:$0xff]
        %v275 = vld [vmem:[%s217 + $0x8] sm:$0xff]
        %v276 = vld [vmem:[%s217 + $0x10] sm:$0xff]
        %v277 = vld [vmem:[%s217 + $0x18] sm:$0xff]
        %v278 = vld [vmem:[%s217 + $0x20] sm:$0xff]
        %v279 = vld [vmem:[%s217 + $0x28] sm:$0xff]
        %v280 = vld [vmem:[%s217 + $0x30] sm:$0xff]
        %v281 = vld [vmem:[%s217 + $0x38] sm:$0xff]
        %v282 = vld [vmem:[%s217 + $0x40] sm:$0xff]
        %v283 = vld [vmem:[%s217 + $0x48] sm:$0xff]
        %v284 = vld [vmem:[%s217 + $0x50] sm:$0xff]
        %v285 = vld [vmem:[%s217 + $0x58] sm:$0xff]
        %v286 = vld [vmem:[%s217 + $0x60] sm:$0xff]
        %v287 = vld [vmem:[%s217 + $0x68] sm:$0xff]
        %v288 = vld [vmem:[%s217 + $0x70] sm:$0xff]
        %v289 = vld [vmem:[%s217 + $0x78] sm:$0xff]
        %v290 = vld [vmem:[%s217 + $0x80] sm:$0xff]
        %v291 = vld [vmem:[%s217 + $0x88] sm:$0xff]
        %v292 = vld [vmem:[%s217 + $0x90] sm:$0xff]
        %v293 = vld [vmem:[%s217 + $0x98] sm:$0xff]
        %v294 = vld [vmem:[%s217 + $0xa0] sm:$0xff]
        %v295 = vld [vmem:[%s217 + $0xa8] sm:$0xff]
        %v296 = vld [vmem:[%s217 + $0xb0] sm:$0xff]
        %v297 = vld [vmem:[%s217 + $0xb8] sm:$0xff]
        %v298 = vld [vmem:[%s217 + $0xc0] sm:$0xff]
        %v299 = vld [vmem:[%s217 + $0xc8] sm:$0xff]
        %v300 = vld [vmem:[%s217 + $0xd0] sm:$0xff]
        %v301 = vld [vmem:[%s217 + $0xd8] sm:$0xff]
        %v302 = vld [vmem:[%s217 + $0xe0] sm:$0xff]
        %v303 = vld [vmem:[%s217 + $0xe8] sm:$0xff]
        %v304 = vld [vmem:[%s217 + $0xf0] sm:$0xff]
        %v305 = vld [vmem:[%s217 + $0xf8] sm:$0xff]
        %v306 = vld [vmem:[%s226] sm:$0xff]
        %v307 = vld [vmem:[%s226 + $0x8] sm:$0xff]
        %v308 = vld [vmem:[%s226 + $0x10] sm:$0xff]
        %v309 = vld [vmem:[%s226 + $0x18] sm:$0xff]
        %v310 = vld [vmem:[%s226 + $0x20] sm:$0xff]
        %v311 = vld [vmem:[%s226 + $0x28] sm:$0xff]
        %v312 = vld [vmem:[%s226 + $0x30] sm:$0xff]
        %v313 = vld [vmem:[%s226 + $0x38] sm:$0xff]
        %v314 = vld [vmem:[%s226 + $0x40] sm:$0xff]
        %v315 = vld [vmem:[%s226 + $0x48] sm:$0xff]
        %v316 = vld [vmem:[%s226 + $0x50] sm:$0xff]
        %v317 = vld [vmem:[%s226 + $0x58] sm:$0xff]
        %v318 = vld [vmem:[%s226 + $0x60] sm:$0xff]
        %v319 = vld [vmem:[%s226 + $0x68] sm:$0xff]
        %v320 = vld [vmem:[%s226 + $0x70] sm:$0xff]
        %v321 = vld [vmem:[%s226 + $0x78] sm:$0xff]
        %v322 = vld [vmem:[%s226 + $0x80] sm:$0xff]
        %v323 = vld [vmem:[%s226 + $0x88] sm:$0xff]
        %v324 = vld [vmem:[%s226 + $0x90] sm:$0xff]
        %v325 = vld [vmem:[%s226 + $0x98] sm:$0xff]
        %v326 = vld [vmem:[%s226 + $0xa0] sm:$0xff]
        %v327 = vld [vmem:[%s226 + $0xa8] sm:$0xff]
        %v328 = vld [vmem:[%s226 + $0xb0] sm:$0xff]
        %v329 = vld [vmem:[%s226 + $0xb8] sm:$0xff]
        %v330 = vld [vmem:[%s226 + $0xc0] sm:$0xff]
        %v331 = vld [vmem:[%s226 + $0xc8] sm:$0xff]
        %v332 = vld [vmem:[%s226 + $0xd0] sm:$0xff]
        %v333 = vld [vmem:[%s226 + $0xd8] sm:$0xff]
        %v334 = vld [vmem:[%s226 + $0xe0] sm:$0xff]
        %v335 = vld [vmem:[%s226 + $0xe8] sm:$0xff]
        %v336 = vld [vmem:[%s226 + $0xf0] sm:$0xff]
        %v337 = vld [vmem:[%s226 + $0xf8] sm:$0xff]
        %v338 = vld [vmem:[%s226 + $0x100] sm:$0xff]
        %v339 = vld [vmem:[%s226 + $0x108] sm:$0xff]
        %v340 = vld [vmem:[%s226 + $0x110] sm:$0xff]
        %v341 = vld [vmem:[%s226 + $0x118] sm:$0xff]
        %v342 = vld [vmem:[%s226 + $0x120] sm:$0xff]
        %v343 = vld [vmem:[%s226 + $0x128] sm:$0xff]
        %v344 = vld [vmem:[%s226 + $0x130] sm:$0xff]
        %v345 = vld [vmem:[%s226 + $0x138] sm:$0xff]
        %v346 = vld [vmem:[%s226 + $0x140] sm:$0xff]
        %v347 = vld [vmem:[%s226 + $0x148] sm:$0xff]
        %v348 = vld [vmem:[%s226 + $0x150] sm:$0xff]
        %v349 = vld [vmem:[%s226 + $0x158] sm:$0xff]
        %v350 = vld [vmem:[%s226 + $0x160] sm:$0xff]
        %v351 = vld [vmem:[%s226 + $0x168] sm:$0xff]
        %v352 = vld [vmem:[%s226 + $0x170] sm:$0xff]
        %v353 = vld [vmem:[%s226 + $0x178] sm:$0xff]
        %v354 = vld [vmem:[%s226 + $0x180] sm:$0xff]
        %v355 = vld [vmem:[%s226 + $0x188] sm:$0xff]
        %v356 = vld [vmem:[%s226 + $0x190] sm:$0xff]
        %v357 = vld [vmem:[%s226 + $0x198] sm:$0xff]
        %v358 = vld [vmem:[%s226 + $0x1a0] sm:$0xff]
        %v359 = vld [vmem:[%s226 + $0x1a8] sm:$0xff]
        %v360 = vld [vmem:[%s226 + $0x1b0] sm:$0xff]
        %v361 = vld [vmem:[%s226 + $0x1b8] sm:$0xff]
        %v362 = vld [vmem:[%s226 + $0x1c0] sm:$0xff]
        %v363 = vld [vmem:[%s226 + $0x1c8] sm:$0xff]
        %v364 = vld [vmem:[%s226 + $0x1d0] sm:$0xff]
        %v365 = vld [vmem:[%s226 + $0x1d8] sm:$0xff]
        %v366 = vld [vmem:[%s226 + $0x1e0] sm:$0xff]
        %v367 = vld [vmem:[%s226 + $0x1e8] sm:$0xff]
        %v368 = vld [vmem:[%s226 + $0x1f0] sm:$0xff]
        %v369 = vld [vmem:[%s226 + $0x1f8] sm:$0xff]
        %v370 = vld [vmem:[%s226 + $0x200] sm:$0xff]
        %v371 = vld [vmem:[%s226 + $0x208] sm:$0xff]
        %v372 = vld [vmem:[%s226 + $0x210] sm:$0xff]
        %v373 = vld [vmem:[%s226 + $0x218] sm:$0xff]
        %v374 = vld [vmem:[%s226 + $0x220] sm:$0xff]
        %v375 = vld [vmem:[%s226 + $0x228] sm:$0xff]
        %v376 = vld [vmem:[%s226 + $0x230] sm:$0xff]
        %v377 = vld [vmem:[%s226 + $0x238] sm:$0xff]
        %v378 = vld [vmem:[%s226 + $0x240] sm:$0xff]
        %v379 = vld [vmem:[%s226 + $0x248] sm:$0xff]
        %v380 = vld [vmem:[%s226 + $0x250] sm:$0xff]
        %v381 = vld [vmem:[%s226 + $0x258] sm:$0xff]
        %v382 = vld [vmem:[%s226 + $0x260] sm:$0xff]
        %v383 = vld [vmem:[%s226 + $0x268] sm:$0xff]
        %v384 = vld [vmem:[%s226 + $0x270] sm:$0xff]
        %v385 = vld [vmem:[%s226 + $0x278] sm:$0xff]
        %v386 = vld [vmem:[%s226 + $0x280] sm:$0xff]
        %v387 = vld [vmem:[%s226 + $0x288] sm:$0xff]
        %v388 = vld [vmem:[%s226 + $0x290] sm:$0xff]
        %v389 = vld [vmem:[%s226 + $0x298] sm:$0xff]
        %v390 = vld [vmem:[%s226 + $0x2a0] sm:$0xff]
        %v391 = vld [vmem:[%s226 + $0x2a8] sm:$0xff]
        %v392 = vld [vmem:[%s226 + $0x2b0] sm:$0xff]
        %v393 = vld [vmem:[%s226 + $0x2b8] sm:$0xff]
        %v394 = vld [vmem:[%s226 + $0x2c0] sm:$0xff]
        %v395 = vld [vmem:[%s226 + $0x2c8] sm:$0xff]
        %v396 = vld [vmem:[%s226 + $0x2d0] sm:$0xff]
        %v397 = vld [vmem:[%s226 + $0x2d8] sm:$0xff]
        %v398 = vld [vmem:[%s226 + $0x2e0] sm:$0xff]
        %v399 = vld [vmem:[%s226 + $0x2e8] sm:$0xff]
        %v400 = vld [vmem:[%s226 + $0x2f0] sm:$0xff]
        %v401 = vld [vmem:[%s226 + $0x2f8] sm:$0xff]
        %v402 = vld [vmem:[%s226 + $0x300] sm:$0xff]
        %v403 = vld [vmem:[%s226 + $0x308] sm:$0xff]
        %v404 = vld [vmem:[%s226 + $0x310] sm:$0xff]
        %v405 = vld [vmem:[%s226 + $0x318] sm:$0xff]
        %v406 = vld [vmem:[%s226 + $0x320] sm:$0xff]
        %v407 = vld [vmem:[%s226 + $0x328] sm:$0xff]
        %v408 = vld [vmem:[%s226 + $0x330] sm:$0xff]
        %v409 = vld [vmem:[%s226 + $0x338] sm:$0xff]
        %v410 = vld [vmem:[%s226 + $0x340] sm:$0xff]
        %v411 = vld [vmem:[%s226 + $0x348] sm:$0xff]
        %v412 = vld [vmem:[%s226 + $0x350] sm:$0xff]
        %v413 = vld [vmem:[%s226 + $0x358] sm:$0xff]
        %v414 = vld [vmem:[%s226 + $0x360] sm:$0xff]
        %v415 = vld [vmem:[%s226 + $0x368] sm:$0xff]
        %v416 = vld [vmem:[%s226 + $0x370] sm:$0xff]
        %v417 = vld [vmem:[%s226 + $0x378] sm:$0xff]
        %v418 = vld [vmem:[%s226 + $0x380] sm:$0xff]
        %v419 = vld [vmem:[%s226 + $0x388] sm:$0xff]
        %v420 = vld [vmem:[%s226 + $0x390] sm:$0xff]
        %v421 = vld [vmem:[%s226 + $0x398] sm:$0xff]
        %v422 = vld [vmem:[%s226 + $0x3a0] sm:$0xff]
        %v423 = vld [vmem:[%s226 + $0x3a8] sm:$0xff]
        %v424 = vld [vmem:[%s226 + $0x3b0] sm:$0xff]
        %v425 = vld [vmem:[%s226 + $0x3b8] sm:$0xff]
        %v426 = vld [vmem:[%s226 + $0x3c0] sm:$0xff]
        %v427 = vld [vmem:[%s226 + $0x3c8] sm:$0xff]
        %v428 = vld [vmem:[%s226 + $0x3d0] sm:$0xff]
        %v429 = vld [vmem:[%s226 + $0x3d8] sm:$0xff]
        %v430 = vld [vmem:[%s226 + $0x3e0] sm:$0xff]
        %v431 = vld [vmem:[%s226 + $0x3e8] sm:$0xff]
        %v432 = vld [vmem:[%s226 + $0x3f0] sm:$0xff]
        %v433 = vld [vmem:[%s226 + $0x3f8] sm:$0xff]
        %v434 = vld [vmem:[%s226 + $0x400] sm:$0xff]
        %v435 = vld [vmem:[%s226 + $0x408] sm:$0xff]
        %v436 = vld [vmem:[%s226 + $0x410] sm:$0xff]
        %v437 = vld [vmem:[%s226 + $0x418] sm:$0xff]
        %v438 = vld [vmem:[%s226 + $0x420] sm:$0xff]
        %v439 = vld [vmem:[%s226 + $0x428] sm:$0xff]
        %v440 = vld [vmem:[%s226 + $0x430] sm:$0xff]
        %v441 = vld [vmem:[%s226 + $0x438] sm:$0xff]
        %v442 = vld [vmem:[%s226 + $0x440] sm:$0xff]
        %v443 = vld [vmem:[%s226 + $0x448] sm:$0xff]
        %v444 = vld [vmem:[%s226 + $0x450] sm:$0xff]
        %v445 = vld [vmem:[%s226 + $0x458] sm:$0xff]
        %v446 = vld [vmem:[%s226 + $0x460] sm:$0xff]
        %v447 = vld [vmem:[%s226 + $0x468] sm:$0xff]
        %v448 = vld [vmem:[%s226 + $0x470] sm:$0xff]
        %v449 = vld [vmem:[%s226 + $0x478] sm:$0xff]
        %v450 = vld [vmem:[%s226 + $0x480] sm:$0xff]
        %v451 = vld [vmem:[%s226 + $0x488] sm:$0xff]
        %v452 = vld [vmem:[%s226 + $0x490] sm:$0xff]
        %v453 = vld [vmem:[%s226 + $0x498] sm:$0xff]
        %v454 = vld [vmem:[%s226 + $0x4a0] sm:$0xff]
        %v455 = vld [vmem:[%s226 + $0x4a8] sm:$0xff]
        %v456 = vld [vmem:[%s226 + $0x4b0] sm:$0xff]
        %v457 = vld [vmem:[%s226 + $0x4b8] sm:$0xff]
        %v458 = vld [vmem:[%s226 + $0x4c0] sm:$0xff]
        %v459 = vld [vmem:[%s226 + $0x4c8] sm:$0xff]
        %v460 = vld [vmem:[%s226 + $0x4d0] sm:$0xff]
        %v461 = vld [vmem:[%s226 + $0x4d8] sm:$0xff]
        %v462 = vld [vmem:[%s226 + $0x4e0] sm:$0xff]
        %v463 = vld [vmem:[%s226 + $0x4e8] sm:$0xff]
        %v464 = vld [vmem:[%s226 + $0x4f0] sm:$0xff]
        %v465 = vld [vmem:[%s226 + $0x4f8] sm:$0xff]
        %v466 = vld [vmem:[%s226 + $0x500] sm:$0xff]
        %v467 = vld [vmem:[%s226 + $0x508] sm:$0xff]
        %v468 = vld [vmem:[%s226 + $0x510] sm:$0xff]
        %v469 = vld [vmem:[%s226 + $0x518] sm:$0xff]
        %v470 = vld [vmem:[%s226 + $0x520] sm:$0xff]
        %v471 = vld [vmem:[%s226 + $0x528] sm:$0xff]
        %v472 = vld [vmem:[%s226 + $0x530] sm:$0xff]
        %v473 = vld [vmem:[%s226 + $0x538] sm:$0xff]
        %v474 = vld [vmem:[%s226 + $0x540] sm:$0xff]
        %v475 = vld [vmem:[%s226 + $0x548] sm:$0xff]
        %v476 = vld [vmem:[%s226 + $0x550] sm:$0xff]
        %v477 = vld [vmem:[%s226 + $0x558] sm:$0xff]
        %v478 = vld [vmem:[%s226 + $0x560] sm:$0xff]
        %v479 = vld [vmem:[%s226 + $0x568] sm:$0xff]
        %v480 = vld [vmem:[%s226 + $0x570] sm:$0xff]
        %v481 = vld [vmem:[%s226 + $0x578] sm:$0xff]
        %v482 = vld [vmem:[%s226 + $0x580] sm:$0xff]
        %v483 = vld [vmem:[%s226 + $0x588] sm:$0xff]
        %v484 = vld [vmem:[%s226 + $0x590] sm:$0xff]
        %v485 = vld [vmem:[%s226 + $0x598] sm:$0xff]
        %v486 = vld [vmem:[%s226 + $0x5a0] sm:$0xff]
        %v487 = vld [vmem:[%s226 + $0x5a8] sm:$0xff]
        %v488 = vld [vmem:[%s226 + $0x5b0] sm:$0xff]
        %v489 = vld [vmem:[%s226 + $0x5b8] sm:$0xff]
        %v490 = vld [vmem:[%s226 + $0x5c0] sm:$0xff]
        %v491 = vld [vmem:[%s226 + $0x5c8] sm:$0xff]
        %v492 = vld [vmem:[%s226 + $0x5d0] sm:$0xff]
        %v493 = vld [vmem:[%s226 + $0x5d8] sm:$0xff]
        %v494 = vld [vmem:[%s226 + $0x5e0] sm:$0xff]
        %v495 = vld [vmem:[%s226 + $0x5e8] sm:$0xff]
        %v496 = vld [vmem:[%s226 + $0x5f0] sm:$0xff]
        %v497 = vld [vmem:[%s226 + $0x5f8] sm:$0xff]
        %v498 = vld [vmem:[%s226 + $0x600] sm:$0xff]
        %v499 = vld [vmem:[%s226 + $0x608] sm:$0xff]
        %v500 = vld [vmem:[%s226 + $0x610] sm:$0xff]
        %v501 = vld [vmem:[%s226 + $0x618] sm:$0xff]
        %v502 = vld [vmem:[%s226 + $0x620] sm:$0xff]
        %v503 = vld [vmem:[%s226 + $0x628] sm:$0xff]
        %v504 = vld [vmem:[%s226 + $0x630] sm:$0xff]
        %v505 = vld [vmem:[%s226 + $0x638] sm:$0xff]
        %v506 = vld [vmem:[%s226 + $0x640] sm:$0xff]
        %v507 = vld [vmem:[%s226 + $0x648] sm:$0xff]
        %v508 = vld [vmem:[%s226 + $0x650] sm:$0xff]
        %v509 = vld [vmem:[%s226 + $0x658] sm:$0xff]
        %v510 = vld [vmem:[%s226 + $0x660] sm:$0xff]
        %v511 = vld [vmem:[%s226 + $0x668] sm:$0xff]
        %v512 = vld [vmem:[%s226 + $0x670] sm:$0xff]
        %v513 = vld [vmem:[%s226 + $0x678] sm:$0xff]
        %v514 = vld [vmem:[%s226 + $0x680] sm:$0xff]
        %v515 = vld [vmem:[%s226 + $0x688] sm:$0xff]
        %v516 = vld [vmem:[%s226 + $0x690] sm:$0xff]
        %v517 = vld [vmem:[%s226 + $0x698] sm:$0xff]
        %v518 = vld [vmem:[%s226 + $0x6a0] sm:$0xff]
        %v519 = vld [vmem:[%s226 + $0x6a8] sm:$0xff]
        %v520 = vld [vmem:[%s226 + $0x6b0] sm:$0xff]
        %v521 = vld [vmem:[%s226 + $0x6b8] sm:$0xff]
        %v522 = vld [vmem:[%s226 + $0x6c0] sm:$0xff]
        %v523 = vld [vmem:[%s226 + $0x6c8] sm:$0xff]
        %v524 = vld [vmem:[%s226 + $0x6d0] sm:$0xff]
        %v525 = vld [vmem:[%s226 + $0x6d8] sm:$0xff]
        %v526 = vld [vmem:[%s226 + $0x6e0] sm:$0xff]
        %v527 = vld [vmem:[%s226 + $0x6e8] sm:$0xff]
        %v528 = vld [vmem:[%s226 + $0x6f0] sm:$0xff]
        %v529 = vld [vmem:[%s226 + $0x6f8] sm:$0xff]
        %v530 = vld [vmem:[%s226 + $0x700] sm:$0xff]
        %v531 = vld [vmem:[%s226 + $0x708] sm:$0xff]
        %v532 = vld [vmem:[%s226 + $0x710] sm:$0xff]
        %v533 = vld [vmem:[%s226 + $0x718] sm:$0xff]
        %v534 = vld [vmem:[%s226 + $0x720] sm:$0xff]
        %v535 = vld [vmem:[%s226 + $0x728] sm:$0xff]
        %v536 = vld [vmem:[%s226 + $0x730] sm:$0xff]
        %v537 = vld [vmem:[%s226 + $0x738] sm:$0xff]
        %v538 = vld [vmem:[%s226 + $0x740] sm:$0xff]
        %v539 = vld [vmem:[%s226 + $0x748] sm:$0xff]
        %v540 = vld [vmem:[%s226 + $0x750] sm:$0xff]
        %v541 = vld [vmem:[%s226 + $0x758] sm:$0xff]
        %v542 = vld [vmem:[%s226 + $0x760] sm:$0xff]
        %v543 = vld [vmem:[%s226 + $0x768] sm:$0xff]
        %v544 = vld [vmem:[%s226 + $0x770] sm:$0xff]
        %v545 = vld [vmem:[%s226 + $0x778] sm:$0xff]
        %v546 = vld [vmem:[%s226 + $0x780] sm:$0xff]
        %v547 = vld [vmem:[%s226 + $0x788] sm:$0xff]
        %v548 = vld [vmem:[%s226 + $0x790] sm:$0xff]
        %v549 = vld [vmem:[%s226 + $0x798] sm:$0xff]
        %v550 = vld [vmem:[%s226 + $0x7a0] sm:$0xff]
        %v551 = vld [vmem:[%s226 + $0x7a8] sm:$0xff]
        %v552 = vld [vmem:[%s226 + $0x7b0] sm:$0xff]
        %v553 = vld [vmem:[%s226 + $0x7b8] sm:$0xff]
        %v554 = vld [vmem:[%s226 + $0x7c0] sm:$0xff]
        %v555 = vld [vmem:[%s226 + $0x7c8] sm:$0xff]
        %v556 = vld [vmem:[%s226 + $0x7d0] sm:$0xff]
        %v557 = vld [vmem:[%s226 + $0x7d8] sm:$0xff]
        %v558 = vld [vmem:[%s226 + $0x7e0] sm:$0xff]
        %v559 = vld [vmem:[%s226 + $0x7e8] sm:$0xff]
        %v560 = vld [vmem:[%s226 + $0x7f0] sm:$0xff]
        %v561 = vld [vmem:[%s226 + $0x7f8] sm:$0xff]
        %v562 = vld [vmem:[%s226 + $0x800] sm:$0xff]
        %v563 = vld [vmem:[%s226 + $0x808] sm:$0xff]
        %v564 = vld [vmem:[%s226 + $0x810] sm:$0xff]
        %v565 = vld [vmem:[%s226 + $0x818] sm:$0xff]
        %v566 = vld [vmem:[%s226 + $0x820] sm:$0xff]
        %v567 = vld [vmem:[%s226 + $0x828] sm:$0xff]
        %v568 = vld [vmem:[%s226 + $0x830] sm:$0xff]
        %v569 = vld [vmem:[%s226 + $0x838] sm:$0xff]
        %v570 = vld [vmem:[%s226 + $0x840] sm:$0xff]
        %v571 = vld [vmem:[%s226 + $0x848] sm:$0xff]
        %v572 = vld [vmem:[%s226 + $0x850] sm:$0xff]
        %v573 = vld [vmem:[%s226 + $0x858] sm:$0xff]
        %v574 = vld [vmem:[%s226 + $0x860] sm:$0xff]
        %v575 = vld [vmem:[%s226 + $0x868] sm:$0xff]
        %v576 = vld [vmem:[%s226 + $0x870] sm:$0xff]
        %v577 = vld [vmem:[%s226 + $0x878] sm:$0xff]
        %v578 = vld [vmem:[%s226 + $0x880] sm:$0xff]
        %v579 = vld [vmem:[%s226 + $0x888] sm:$0xff]
        %v580 = vld [vmem:[%s226 + $0x890] sm:$0xff]
        %v581 = vld [vmem:[%s226 + $0x898] sm:$0xff]
        %v582 = vld [vmem:[%s226 + $0x8a0] sm:$0xff]
        %v583 = vld [vmem:[%s226 + $0x8a8] sm:$0xff]
        %v584 = vld [vmem:[%s226 + $0x8b0] sm:$0xff]
        %v585 = vld [vmem:[%s226 + $0x8b8] sm:$0xff]
        %v586 = vld [vmem:[%s226 + $0x8c0] sm:$0xff]
        %v587 = vld [vmem:[%s226 + $0x8c8] sm:$0xff]
        %v588 = vld [vmem:[%s226 + $0x8d0] sm:$0xff]
        %v589 = vld [vmem:[%s226 + $0x8d8] sm:$0xff]
        %v590 = vld [vmem:[%s226 + $0x8e0] sm:$0xff]
        %v591 = vld [vmem:[%s226 + $0x8e8] sm:$0xff]
        %v592 = vld [vmem:[%s226 + $0x8f0] sm:$0xff]
        %v593 = vld [vmem:[%s226 + $0x8f8] sm:$0xff]
        %v594 = vld [vmem:[%s226 + $0x900] sm:$0xff]
        %v595 = vld [vmem:[%s226 + $0x908] sm:$0xff]
        %v596 = vld [vmem:[%s226 + $0x910] sm:$0xff]
        %v597 = vld [vmem:[%s226 + $0x918] sm:$0xff]
        %v598 = vld [vmem:[%s226 + $0x920] sm:$0xff]
        %v599 = vld [vmem:[%s226 + $0x928] sm:$0xff]
        %v600 = vld [vmem:[%s226 + $0x930] sm:$0xff]
        %v601 = vld [vmem:[%s226 + $0x938] sm:$0xff]
        %v602 = vld [vmem:[%s226 + $0x940] sm:$0xff]
        %v603 = vld [vmem:[%s226 + $0x948] sm:$0xff]
        %v604 = vld [vmem:[%s226 + $0x950] sm:$0xff]
        %v605 = vld [vmem:[%s226 + $0x958] sm:$0xff]
        %v606 = vld [vmem:[%s226 + $0x960] sm:$0xff]
        %v607 = vld [vmem:[%s226 + $0x968] sm:$0xff]
        %v608 = vld [vmem:[%s226 + $0x970] sm:$0xff]
        %v609 = vld [vmem:[%s226 + $0x978] sm:$0xff]
        %v610 = vld [vmem:[%s226 + $0x980] sm:$0xff]
        %v611 = vld [vmem:[%s226 + $0x988] sm:$0xff]
        %v612 = vld [vmem:[%s226 + $0x990] sm:$0xff]
        %v613 = vld [vmem:[%s226 + $0x998] sm:$0xff]
        %v614 = vld [vmem:[%s226 + $0x9a0] sm:$0xff]
        %v615 = vld [vmem:[%s226 + $0x9a8] sm:$0xff]
        %v616 = vld [vmem:[%s226 + $0x9b0] sm:$0xff]
        %v617 = vld [vmem:[%s226 + $0x9b8] sm:$0xff]
        %v618 = vld [vmem:[%s226 + $0x9c0] sm:$0xff]
        %v619 = vld [vmem:[%s226 + $0x9c8] sm:$0xff]
        %v620 = vld [vmem:[%s226 + $0x9d0] sm:$0xff]
        %v621 = vld [vmem:[%s226 + $0x9d8] sm:$0xff]
        %v622 = vld [vmem:[%s226 + $0x9e0] sm:$0xff]
        %v623 = vld [vmem:[%s226 + $0x9e8] sm:$0xff]
        %v624 = vld [vmem:[%s226 + $0x9f0] sm:$0xff]
        %v625 = vld [vmem:[%s226 + $0x9f8] sm:$0xff]
        %v626 = vld [vmem:[%s226 + $0xa00] sm:$0xff]
        %v627 = vld [vmem:[%s226 + $0xa08] sm:$0xff]
        %v628 = vld [vmem:[%s226 + $0xa10] sm:$0xff]
        %v629 = vld [vmem:[%s226 + $0xa18] sm:$0xff]
        %v630 = vld [vmem:[%s226 + $0xa20] sm:$0xff]
        %v631 = vld [vmem:[%s226 + $0xa28] sm:$0xff]
        %v632 = vld [vmem:[%s226 + $0xa30] sm:$0xff]
        %v633 = vld [vmem:[%s226 + $0xa38] sm:$0xff]
        %v634 = vld [vmem:[%s226 + $0xa40] sm:$0xff]
        %v635 = vld [vmem:[%s226 + $0xa48] sm:$0xff]
        %v636 = vld [vmem:[%s226 + $0xa50] sm:$0xff]
        %v637 = vld [vmem:[%s226 + $0xa58] sm:$0xff]
        %v638 = vld [vmem:[%s226 + $0xa60] sm:$0xff]
        %v639 = vld [vmem:[%s226 + $0xa68] sm:$0xff]
        %v640 = vld [vmem:[%s226 + $0xa70] sm:$0xff]
        %v641 = vld [vmem:[%s226 + $0xa78] sm:$0xff]
        %v642 = vld [vmem:[%s226 + $0xa80] sm:$0xff]
        %v643 = vld [vmem:[%s226 + $0xa88] sm:$0xff]
        %v644 = vld [vmem:[%s226 + $0xa90] sm:$0xff]
        %v645 = vld [vmem:[%s226 + $0xa98] sm:$0xff]
        %v646 = vld [vmem:[%s226 + $0xaa0] sm:$0xff]
        %v647 = vld [vmem:[%s226 + $0xaa8] sm:$0xff]
        %v648 = vld [vmem:[%s226 + $0xab0] sm:$0xff]
        %v649 = vld [vmem:[%s226 + $0xab8] sm:$0xff]
        %v650 = vld [vmem:[%s226 + $0xac0] sm:$0xff]
        %v651 = vld [vmem:[%s226 + $0xac8] sm:$0xff]
        %v652 = vld [vmem:[%s226 + $0xad0] sm:$0xff]
        %v653 = vld [vmem:[%s226 + $0xad8] sm:$0xff]
        %v654 = vld [vmem:[%s226 + $0xae0] sm:$0xff]
        %v655 = vld [vmem:[%s226 + $0xae8] sm:$0xff]
        %v656 = vld [vmem:[%s226 + $0xaf0] sm:$0xff]
        %v657 = vld [vmem:[%s226 + $0xaf8] sm:$0xff]
        %v658 = vld [vmem:[%s226 + $0xb00] sm:$0xff]
        %v659 = vld [vmem:[%s226 + $0xb08] sm:$0xff]
        %v660 = vld [vmem:[%s226 + $0xb10] sm:$0xff]
        %v661 = vld [vmem:[%s226 + $0xb18] sm:$0xff]
        %v662 = vld [vmem:[%s226 + $0xb20] sm:$0xff]
        %v663 = vld [vmem:[%s226 + $0xb28] sm:$0xff]
        %v664 = vld [vmem:[%s226 + $0xb30] sm:$0xff]
        %v665 = vld [vmem:[%s226 + $0xb38] sm:$0xff]
        %v666 = vld [vmem:[%s226 + $0xb40] sm:$0xff]
        %v667 = vld [vmem:[%s226 + $0xb48] sm:$0xff]
        %v668 = vld [vmem:[%s226 + $0xb50] sm:$0xff]
        %v669 = vld [vmem:[%s226 + $0xb58] sm:$0xff]
        %v670 = vld [vmem:[%s226 + $0xb60] sm:$0xff]
        %v671 = vld [vmem:[%s226 + $0xb68] sm:$0xff]
        %v672 = vld [vmem:[%s226 + $0xb70] sm:$0xff]
        %v673 = vld [vmem:[%s226 + $0xb78] sm:$0xff]
        %v674 = vld [vmem:[%s226 + $0xb80] sm:$0xff]
        %v675 = vld [vmem:[%s226 + $0xb88] sm:$0xff]
        %v676 = vld [vmem:[%s226 + $0xb90] sm:$0xff]
        %v677 = vld [vmem:[%s226 + $0xb98] sm:$0xff]
        %v678 = vld [vmem:[%s226 + $0xba0] sm:$0xff]
        %v679 = vld [vmem:[%s226 + $0xba8] sm:$0xff]
        %v680 = vld [vmem:[%s226 + $0xbb0] sm:$0xff]
        %v681 = vld [vmem:[%s226 + $0xbb8] sm:$0xff]
        %v682 = vld [vmem:[%s226 + $0xbc0] sm:$0xff]
        %v683 = vld [vmem:[%s226 + $0xbc8] sm:$0xff]
        %v684 = vld [vmem:[%s226 + $0xbd0] sm:$0xff]
        %v685 = vld [vmem:[%s226 + $0xbd8] sm:$0xff]
        %v686 = vld [vmem:[%s226 + $0xbe0] sm:$0xff]
        %v687 = vld [vmem:[%s226 + $0xbe8] sm:$0xff]
        %v688 = vld [vmem:[%s226 + $0xbf0] sm:$0xff]
        %v689 = vld [vmem:[%s226 + $0xbf8] sm:$0xff]
        %v690 = vld [vmem:[%s226 + $0xc00] sm:$0xff]
        %v691 = vld [vmem:[%s226 + $0xc08] sm:$0xff]
        %v692 = vld [vmem:[%s226 + $0xc10] sm:$0xff]
        %v693 = vld [vmem:[%s226 + $0xc18] sm:$0xff]
        %v694 = vld [vmem:[%s226 + $0xc20] sm:$0xff]
        %v695 = vld [vmem:[%s226 + $0xc28] sm:$0xff]
        %v696 = vld [vmem:[%s226 + $0xc30] sm:$0xff]
        %v697 = vld [vmem:[%s226 + $0xc38] sm:$0xff]
        %v698 = vld [vmem:[%s226 + $0xc40] sm:$0xff]
        %v699 = vld [vmem:[%s226 + $0xc48] sm:$0xff]
        %v700 = vld [vmem:[%s226 + $0xc50] sm:$0xff]
        %v701 = vld [vmem:[%s226 + $0xc58] sm:$0xff]
        %v702 = vld [vmem:[%s226 + $0xc60] sm:$0xff]
        %v703 = vld [vmem:[%s226 + $0xc68] sm:$0xff]
        %v704 = vld [vmem:[%s226 + $0xc70] sm:$0xff]
        %v705 = vld [vmem:[%s226 + $0xc78] sm:$0xff]
        %v706 = vld [vmem:[%s226 + $0xc80] sm:$0xff]
        %v707 = vld [vmem:[%s226 + $0xc88] sm:$0xff]
        %v708 = vld [vmem:[%s226 + $0xc90] sm:$0xff]
        %v709 = vld [vmem:[%s226 + $0xc98] sm:$0xff]
        %v710 = vld [vmem:[%s226 + $0xca0] sm:$0xff]
        %v711 = vld [vmem:[%s226 + $0xca8] sm:$0xff]
        %v712 = vld [vmem:[%s226 + $0xcb0] sm:$0xff]
        %v713 = vld [vmem:[%s226 + $0xcb8] sm:$0xff]
        %v714 = vld [vmem:[%s226 + $0xcc0] sm:$0xff]
        %v715 = vld [vmem:[%s226 + $0xcc8] sm:$0xff]
        %v716 = vld [vmem:[%s226 + $0xcd0] sm:$0xff]
        %v717 = vld [vmem:[%s226 + $0xcd8] sm:$0xff]
        %v718 = vld [vmem:[%s226 + $0xce0] sm:$0xff]
        %v719 = vld [vmem:[%s226 + $0xce8] sm:$0xff]
        %v720 = vld [vmem:[%s226 + $0xcf0] sm:$0xff]
        %v721 = vld [vmem:[%s226 + $0xcf8] sm:$0xff]
        %v722 = vld [vmem:[%s226 + $0xd00] sm:$0xff]
        %v723 = vld [vmem:[%s226 + $0xd08] sm:$0xff]
        %v724 = vld [vmem:[%s226 + $0xd10] sm:$0xff]
        %v725 = vld [vmem:[%s226 + $0xd18] sm:$0xff]
        %v726 = vld [vmem:[%s226 + $0xd20] sm:$0xff]
        %v727 = vld [vmem:[%s226 + $0xd28] sm:$0xff]
        %v728 = vld [vmem:[%s226 + $0xd30] sm:$0xff]
        %v729 = vld [vmem:[%s226 + $0xd38] sm:$0xff]
        %v730 = vld [vmem:[%s226 + $0xd40] sm:$0xff]
        %v731 = vld [vmem:[%s226 + $0xd48] sm:$0xff]
        %v732 = vld [vmem:[%s226 + $0xd50] sm:$0xff]
        %v733 = vld [vmem:[%s226 + $0xd58] sm:$0xff]
        %v734 = vld [vmem:[%s226 + $0xd60] sm:$0xff]
        %v735 = vld [vmem:[%s226 + $0xd68] sm:$0xff]
        %v736 = vld [vmem:[%s226 + $0xd70] sm:$0xff]
        %v737 = vld [vmem:[%s226 + $0xd78] sm:$0xff]
        %v738 = vld [vmem:[%s226 + $0xd80] sm:$0xff]
        %v739 = vld [vmem:[%s226 + $0xd88] sm:$0xff]
        %v740 = vld [vmem:[%s226 + $0xd90] sm:$0xff]
        %v741 = vld [vmem:[%s226 + $0xd98] sm:$0xff]
        %v742 = vld [vmem:[%s226 + $0xda0] sm:$0xff]
        %v743 = vld [vmem:[%s226 + $0xda8] sm:$0xff]
        %v744 = vld [vmem:[%s226 + $0xdb0] sm:$0xff]
        %v745 = vld [vmem:[%s226 + $0xdb8] sm:$0xff]
        %v746 = vld [vmem:[%s226 + $0xdc0] sm:$0xff]
        %v747 = vld [vmem:[%s226 + $0xdc8] sm:$0xff]
        %v748 = vld [vmem:[%s226 + $0xdd0] sm:$0xff]
        %v749 = vld [vmem:[%s226 + $0xdd8] sm:$0xff]
        %v750 = vld [vmem:[%s226 + $0xde0] sm:$0xff]
        %v751 = vld [vmem:[%s226 + $0xde8] sm:$0xff]
        %v752 = vld [vmem:[%s226 + $0xdf0] sm:$0xff]
        %v753 = vld [vmem:[%s226 + $0xdf8] sm:$0xff]
        %v754 = vld [vmem:[%s226 + $0xe00] sm:$0xff]
        %v755 = vld [vmem:[%s226 + $0xe08] sm:$0xff]
        %v756 = vld [vmem:[%s226 + $0xe10] sm:$0xff]
        %v757 = vld [vmem:[%s226 + $0xe18] sm:$0xff]
        %v758 = vld [vmem:[%s226 + $0xe20] sm:$0xff]
        %v759 = vld [vmem:[%s226 + $0xe28] sm:$0xff]
        %v760 = vld [vmem:[%s226 + $0xe30] sm:$0xff]
        %v761 = vld [vmem:[%s226 + $0xe38] sm:$0xff]
        %v762 = vld [vmem:[%s226 + $0xe40] sm:$0xff]
        %v763 = vld [vmem:[%s226 + $0xe48] sm:$0xff]
        %v764 = vld [vmem:[%s226 + $0xe50] sm:$0xff]
        %v765 = vld [vmem:[%s226 + $0xe58] sm:$0xff]
        %v766 = vld [vmem:[%s226 + $0xe60] sm:$0xff]
        %v767 = vld [vmem:[%s226 + $0xe68] sm:$0xff]
        %v768 = vld [vmem:[%s226 + $0xe70] sm:$0xff]
        %v769 = vld [vmem:[%s226 + $0xe78] sm:$0xff]
        %v770 = vld [vmem:[%s226 + $0xe80] sm:$0xff]
        %v771 = vld [vmem:[%s226 + $0xe88] sm:$0xff]
        %v772 = vld [vmem:[%s226 + $0xe90] sm:$0xff]
        %v773 = vld [vmem:[%s226 + $0xe98] sm:$0xff]
        %v774 = vld [vmem:[%s226 + $0xea0] sm:$0xff]
        %v775 = vld [vmem:[%s226 + $0xea8] sm:$0xff]
        %v776 = vld [vmem:[%s226 + $0xeb0] sm:$0xff]
        %v777 = vld [vmem:[%s226 + $0xeb8] sm:$0xff]
        %v778 = vld [vmem:[%s226 + $0xec0] sm:$0xff]
        %v779 = vld [vmem:[%s226 + $0xec8] sm:$0xff]
        %v780 = vld [vmem:[%s226 + $0xed0] sm:$0xff]
        %v781 = vld [vmem:[%s226 + $0xed8] sm:$0xff]
        %v782 = vld [vmem:[%s226 + $0xee0] sm:$0xff]
        %v783 = vld [vmem:[%s226 + $0xee8] sm:$0xff]
        %v784 = vld [vmem:[%s226 + $0xef0] sm:$0xff]
        %v785 = vld [vmem:[%s226 + $0xef8] sm:$0xff]
        %v786 = vld [vmem:[%s226 + $0xf00] sm:$0xff]
        %v787 = vld [vmem:[%s226 + $0xf08] sm:$0xff]
        %v788 = vld [vmem:[%s226 + $0xf10] sm:$0xff]
        %v789 = vld [vmem:[%s226 + $0xf18] sm:$0xff]
        %v790 = vld [vmem:[%s226 + $0xf20] sm:$0xff]
        %v791 = vld [vmem:[%s226 + $0xf28] sm:$0xff]
        %v792 = vld [vmem:[%s226 + $0xf30] sm:$0xff]
        %v793 = vld [vmem:[%s226 + $0xf38] sm:$0xff]
        %v794 = vld [vmem:[%s226 + $0xf40] sm:$0xff]
        %v795 = vld [vmem:[%s226 + $0xf48] sm:$0xff]
        %v796 = vld [vmem:[%s226 + $0xf50] sm:$0xff]
        %v797 = vld [vmem:[%s226 + $0xf58] sm:$0xff]
        %v798 = vld [vmem:[%s226 + $0xf60] sm:$0xff]
        %v799 = vld [vmem:[%s226 + $0xf68] sm:$0xff]
        %v800 = vld [vmem:[%s226 + $0xf70] sm:$0xff]
        %v801 = vld [vmem:[%s226 + $0xf78] sm:$0xff]
        %v802 = vld [vmem:[%s226 + $0xf80] sm:$0xff]
        %v803 = vld [vmem:[%s226 + $0xf88] sm:$0xff]
        %v804 = vld [vmem:[%s226 + $0xf90] sm:$0xff]
        %v805 = vld [vmem:[%s226 + $0xf98] sm:$0xff]
        %v806 = vld [vmem:[%s226 + $0xfa0] sm:$0xff]
        %v807 = vld [vmem:[%s226 + $0xfa8] sm:$0xff]
        %v808 = vld [vmem:[%s226 + $0xfb0] sm:$0xff]
        %v809 = vld [vmem:[%s226 + $0xfb8] sm:$0xff]
        %v810 = vld [vmem:[%s226 + $0xfc0] sm:$0xff]
        %v811 = vld [vmem:[%s226 + $0xfc8] sm:$0xff]
        %v812 = vld [vmem:[%s226 + $0xfd0] sm:$0xff]
        %v813 = vld [vmem:[%s226 + $0xfd8] sm:$0xff]
        %v814 = vld [vmem:[%s226 + $0xfe0] sm:$0xff]
        %v815 = vld [vmem:[%s226 + $0xfe8] sm:$0xff]
        %v816 = vld [vmem:[%s226 + $0xff0] sm:$0xff]
        %v817 = vld [vmem:[%s226 + $0xff8] sm:$0xff]
        %v850 = vcombine.high %v274, %v274
        %v852 = vunpack.c.l.s4 1966171168
        %v853 = vunpack.c.0.s8 %v852
        %v854 = vlaneseq
        %v855 = vshrl.u32 %v854, 7
        %v856 = vsub.s32 %v853, %v855
        %v857 = vrot.slane %v274, %v856
        %v859 = vunpack.c.l.s4 1966171168
        %v860 = vunpack.c.0.s8 %v859
        %v861 = vlaneseq
        %v862 = vshrl.u32 %v861, 7
        %v863 = vsub.s32 %v860, %v862
        %v864 = vrot.slane %v850, %v863
        %v865 = vcombine.high %v857, %v857
        %v866 = vcombine.high %v864, %v864
        %v868 = vunpack.c.l.s4 1966171168
        %v869 = vunpack.c.0.s8 %v868
        %v870 = vlaneseq
        %v871 = vshrl.u32 %v870, 7
        %v872 = vsub.s32 %v869, %v871
        %v873 = vrot.slane %v857, %v872
        %v875 = vunpack.c.l.s4 1966171168
        %v876 = vunpack.c.0.s8 %v875
        %v877 = vlaneseq
        %v878 = vshrl.u32 %v877, 7
        %v879 = vsub.s32 %v876, %v878
        %v880 = vrot.slane %v864, %v879
        %v882 = vunpack.c.l.s4 1966171168
        %v883 = vunpack.c.0.s8 %v882
        %v884 = vlaneseq
        %v885 = vshrl.u32 %v884, 7
        %v886 = vsub.s32 %v883, %v885
        %v887 = vrot.slane %v865, %v886
        %v889 = vunpack.c.l.s4 1966171168
        %v890 = vunpack.c.0.s8 %v889
        %v891 = vlaneseq
        %v892 = vshrl.u32 %v891, 7
        %v893 = vsub.s32 %v890, %v892
        %v894 = vrot.slane %v866, %v893
        %v895 = vcombine.high %v873, %v873
        %v896 = vcombine.high %v880, %v880
        %v897 = vcombine.high %v887, %v887
        %v898 = vcombine.high %v894, %v894
        %v899 = vcombine.high %v275, %v275
        %v901 = vunpack.c.l.s4 1966171168
        %v902 = vunpack.c.0.s8 %v901
        %v903 = vlaneseq
        %v904 = vshrl.u32 %v903, 7
        %v905 = vsub.s32 %v902, %v904
        %v906 = vrot.slane %v275, %v905
        %v908 = vunpack.c.l.s4 1966171168
        %v909 = vunpack.c.0.s8 %v908
        %v910 = vlaneseq
        %v911 = vshrl.u32 %v910, 7
        %v912 = vsub.s32 %v909, %v911
        %v913 = vrot.slane %v899, %v912
        %v914 = vcombine.high %v906, %v906
        %v915 = vcombine.high %v913, %v913
        %v917 = vunpack.c.l.s4 1966171168
        %v918 = vunpack.c.0.s8 %v917
        %v919 = vlaneseq
        %v920 = vshrl.u32 %v919, 7
        %v921 = vsub.s32 %v918, %v920
        %v922 = vrot.slane %v906, %v921
        %v924 = vunpack.c.l.s4 1966171168
        %v925 = vunpack.c.0.s8 %v924
        %v926 = vlaneseq
        %v927 = vshrl.u32 %v926, 7
        %v928 = vsub.s32 %v925, %v927
        %v929 = vrot.slane %v913, %v928
        %v931 = vunpack.c.l.s4 1966171168
        %v932 = vunpack.c.0.s8 %v931
        %v933 = vlaneseq
        %v934 = vshrl.u32 %v933, 7
        %v935 = vsub.s32 %v932, %v934
        %v936 = vrot.slane %v914, %v935
        %v938 = vunpack.c.l.s4 1966171168
        %v939 = vunpack.c.0.s8 %v938
        %v940 = vlaneseq
        %v941 = vshrl.u32 %v940, 7
        %v942 = vsub.s32 %v939, %v941
        %v943 = vrot.slane %v915, %v942
        %v944 = vcombine.high %v922, %v922
        %v945 = vcombine.high %v929, %v929
        %v946 = vcombine.high %v936, %v936
        %v947 = vcombine.high %v943, %v943
        %v948 = vcombine.high %v276, %v276
        %v950 = vunpack.c.l.s4 1966171168
        %v951 = vunpack.c.0.s8 %v950
        %v952 = vlaneseq
        %v953 = vshrl.u32 %v952, 7
        %v954 = vsub.s32 %v951, %v953
        %v955 = vrot.slane %v276, %v954
        %v957 = vunpack.c.l.s4 1966171168
        %v958 = vunpack.c.0.s8 %v957
        %v959 = vlaneseq
        %v960 = vshrl.u32 %v959, 7
        %v961 = vsub.s32 %v958, %v960
        %v962 = vrot.slane %v948, %v961
        %v963 = vcombine.high %v955, %v955
        %v964 = vcombine.high %v962, %v962
        %v966 = vunpack.c.l.s4 1966171168
        %v967 = vunpack.c.0.s8 %v966
        %v968 = vlaneseq
        %v969 = vshrl.u32 %v968, 7
        %v970 = vsub.s32 %v967, %v969
        %v971 = vrot.slane %v955, %v970
        %v973 = vunpack.c.l.s4 1966171168
        %v974 = vunpack.c.0.s8 %v973
        %v975 = vlaneseq
        %v976 = vshrl.u32 %v975, 7
        %v977 = vsub.s32 %v974, %v976
        %v978 = vrot.slane %v962, %v977
        %v980 = vunpack.c.l.s4 1966171168
        %v981 = vunpack.c.0.s8 %v980
        %v982 = vlaneseq
        %v983 = vshrl.u32 %v982, 7
        %v984 = vsub.s32 %v981, %v983
        %v985 = vrot.slane %v963, %v984
        %v987 = vunpack.c.l.s4 1966171168
        %v988 = vunpack.c.0.s8 %v987
        %v989 = vlaneseq
        %v990 = vshrl.u32 %v989, 7
        %v991 = vsub.s32 %v988, %v990
        %v992 = vrot.slane %v964, %v991
        %v993 = vcombine.high %v971, %v971
        %v994 = vcombine.high %v978, %v978
        %v995 = vcombine.high %v985, %v985
        %v996 = vcombine.high %v992, %v992
        %v997 = vcombine.high %v277, %v277
        %v999 = vunpack.c.l.s4 1966171168
        %v1000 = vunpack.c.0.s8 %v999
        %v1001 = vlaneseq
        %v1002 = vshrl.u32 %v1001, 7
        %v1003 = vsub.s32 %v1000, %v1002
        %v1004 = vrot.slane %v277, %v1003
        %v1006 = vunpack.c.l.s4 1966171168
        %v1007 = vunpack.c.0.s8 %v1006
        %v1008 = vlaneseq
        %v1009 = vshrl.u32 %v1008, 7
        %v1010 = vsub.s32 %v1007, %v1009
        %v1011 = vrot.slane %v997, %v1010
        %v1012 = vcombine.high %v1004, %v1004
        %v1013 = vcombine.high %v1011, %v1011
        %v1015 = vunpack.c.l.s4 1966171168
        %v1016 = vunpack.c.0.s8 %v1015
        %v1017 = vlaneseq
        %v1018 = vshrl.u32 %v1017, 7
        %v1019 = vsub.s32 %v1016, %v1018
        %v1020 = vrot.slane %v1004, %v1019
        %v1022 = vunpack.c.l.s4 1966171168
        %v1023 = vunpack.c.0.s8 %v1022
        %v1024 = vlaneseq
        %v1025 = vshrl.u32 %v1024, 7
        %v1026 = vsub.s32 %v1023, %v1025
        %v1027 = vrot.slane %v1011, %v1026
        %v1029 = vunpack.c.l.s4 1966171168
        %v1030 = vunpack.c.0.s8 %v1029
        %v1031 = vlaneseq
        %v1032 = vshrl.u32 %v1031, 7
        %v1033 = vsub.s32 %v1030, %v1032
        %v1034 = vrot.slane %v1012, %v1033
        %v1036 = vunpack.c.l.s4 1966171168
        %v1037 = vunpack.c.0.s8 %v1036
        %v1038 = vlaneseq
        %v1039 = vshrl.u32 %v1038, 7
        %v1040 = vsub.s32 %v1037, %v1039
        %v1041 = vrot.slane %v1013, %v1040
        %v1042 = vcombine.high %v1020, %v1020
        %v1043 = vcombine.high %v1027, %v1027
        %v1044 = vcombine.high %v1034, %v1034
        %v1045 = vcombine.high %v1041, %v1041
        %v1046 = vcombine.high %v278, %v278
        %v1048 = vunpack.c.l.s4 1966171168
        %v1049 = vunpack.c.0.s8 %v1048
        %v1050 = vlaneseq
        %v1051 = vshrl.u32 %v1050, 7
        %v1052 = vsub.s32 %v1049, %v1051
        %v1053 = vrot.slane %v278, %v1052
        %v1055 = vunpack.c.l.s4 1966171168
        %v1056 = vunpack.c.0.s8 %v1055
        %v1057 = vlaneseq
        %v1058 = vshrl.u32 %v1057, 7
        %v1059 = vsub.s32 %v1056, %v1058
        %v1060 = vrot.slane %v1046, %v1059
        %v1061 = vcombine.high %v1053, %v1053
        %v1062 = vcombine.high %v1060, %v1060
        %v1064 = vunpack.c.l.s4 1966171168
        %v1065 = vunpack.c.0.s8 %v1064
        %v1066 = vlaneseq
        %v1067 = vshrl.u32 %v1066, 7
        %v1068 = vsub.s32 %v1065, %v1067
        %v1069 = vrot.slane %v1053, %v1068
        %v1071 = vunpack.c.l.s4 1966171168
        %v1072 = vunpack.c.0.s8 %v1071
        %v1073 = vlaneseq
        %v1074 = vshrl.u32 %v1073, 7
        %v1075 = vsub.s32 %v1072, %v1074
        %v1076 = vrot.slane %v1060, %v1075
        %v1078 = vunpack.c.l.s4 1966171168
        %v1079 = vunpack.c.0.s8 %v1078
        %v1080 = vlaneseq
        %v1081 = vshrl.u32 %v1080, 7
        %v1082 = vsub.s32 %v1079, %v1081
        %v1083 = vrot.slane %v1061, %v1082
        %v1085 = vunpack.c.l.s4 1966171168
        %v1086 = vunpack.c.0.s8 %v1085
        %v1087 = vlaneseq
        %v1088 = vshrl.u32 %v1087, 7
        %v1089 = vsub.s32 %v1086, %v1088
        %v1090 = vrot.slane %v1062, %v1089
        %v1091 = vcombine.high %v1069, %v1069
        %v1092 = vcombine.high %v1076, %v1076
        %v1093 = vcombine.high %v1083, %v1083
        %v1094 = vcombine.high %v1090, %v1090
        %v1095 = vcombine.high %v279, %v279
        %v1097 = vunpack.c.l.s4 1966171168
        %v1098 = vunpack.c.0.s8 %v1097
        %v1099 = vlaneseq
        %v1100 = vshrl.u32 %v1099, 7
        %v1101 = vsub.s32 %v1098, %v1100
        %v1102 = vrot.slane %v279, %v1101
        %v1104 = vunpack.c.l.s4 1966171168
        %v1105 = vunpack.c.0.s8 %v1104
        %v1106 = vlaneseq
        %v1107 = vshrl.u32 %v1106, 7
        %v1108 = vsub.s32 %v1105, %v1107
        %v1109 = vrot.slane %v1095, %v1108
        %v1110 = vcombine.high %v1102, %v1102
        %v1111 = vcombine.high %v1109, %v1109
        %v1113 = vunpack.c.l.s4 1966171168
        %v1114 = vunpack.c.0.s8 %v1113
        %v1115 = vlaneseq
        %v1116 = vshrl.u32 %v1115, 7
        %v1117 = vsub.s32 %v1114, %v1116
        %v1118 = vrot.slane %v1102, %v1117
        %v1120 = vunpack.c.l.s4 1966171168
        %v1121 = vunpack.c.0.s8 %v1120
        %v1122 = vlaneseq
        %v1123 = vshrl.u32 %v1122, 7
        %v1124 = vsub.s32 %v1121, %v1123
        %v1125 = vrot.slane %v1109, %v1124
        %v1127 = vunpack.c.l.s4 1966171168
        %v1128 = vunpack.c.0.s8 %v1127
        %v1129 = vlaneseq
        %v1130 = vshrl.u32 %v1129, 7
        %v1131 = vsub.s32 %v1128, %v1130
        %v1132 = vrot.slane %v1110, %v1131
        %v1134 = vunpack.c.l.s4 1966171168
        %v1135 = vunpack.c.0.s8 %v1134
        %v1136 = vlaneseq
        %v1137 = vshrl.u32 %v1136, 7
        %v1138 = vsub.s32 %v1135, %v1137
        %v1139 = vrot.slane %v1111, %v1138
        %v1140 = vcombine.high %v1118, %v1118
        %v1141 = vcombine.high %v1125, %v1125
        %v1142 = vcombine.high %v1132, %v1132
        %v1143 = vcombine.high %v1139, %v1139
        %v1144 = vcombine.high %v280, %v280
        %v1146 = vunpack.c.l.s4 1966171168
        %v1147 = vunpack.c.0.s8 %v1146
        %v1148 = vlaneseq
        %v1149 = vshrl.u32 %v1148, 7
        %v1150 = vsub.s32 %v1147, %v1149
        %v1151 = vrot.slane %v280, %v1150
        %v1153 = vunpack.c.l.s4 1966171168
        %v1154 = vunpack.c.0.s8 %v1153
        %v1155 = vlaneseq
        %v1156 = vshrl.u32 %v1155, 7
        %v1157 = vsub.s32 %v1154, %v1156
        %v1158 = vrot.slane %v1144, %v1157
        %v1159 = vcombine.high %v1151, %v1151
        %v1160 = vcombine.high %v1158, %v1158
        %v1162 = vunpack.c.l.s4 1966171168
        %v1163 = vunpack.c.0.s8 %v1162
        %v1164 = vlaneseq
        %v1165 = vshrl.u32 %v1164, 7
        %v1166 = vsub.s32 %v1163, %v1165
        %v1167 = vrot.slane %v1151, %v1166
        %v1169 = vunpack.c.l.s4 1966171168
        %v1170 = vunpack.c.0.s8 %v1169
        %v1171 = vlaneseq
        %v1172 = vshrl.u32 %v1171, 7
        %v1173 = vsub.s32 %v1170, %v1172
        %v1174 = vrot.slane %v1158, %v1173
        %v1176 = vunpack.c.l.s4 1966171168
        %v1177 = vunpack.c.0.s8 %v1176
        %v1178 = vlaneseq
        %v1179 = vshrl.u32 %v1178, 7
        %v1180 = vsub.s32 %v1177, %v1179
        %v1181 = vrot.slane %v1159, %v1180
        %v1183 = vunpack.c.l.s4 1966171168
        %v1184 = vunpack.c.0.s8 %v1183
        %v1185 = vlaneseq
        %v1186 = vshrl.u32 %v1185, 7
        %v1187 = vsub.s32 %v1184, %v1186
        %v1188 = vrot.slane %v1160, %v1187
        %v1189 = vcombine.high %v1167, %v1167
        %v1190 = vcombine.high %v1174, %v1174
        %v1191 = vcombine.high %v1181, %v1181
        %v1192 = vcombine.high %v1188, %v1188
        %v1193 = vcombine.high %v281, %v281
        %v1195 = vunpack.c.l.s4 1966171168
        %v1196 = vunpack.c.0.s8 %v1195
        %v1197 = vlaneseq
        %v1198 = vshrl.u32 %v1197, 7
        %v1199 = vsub.s32 %v1196, %v1198
        %v1200 = vrot.slane %v281, %v1199
        %v1202 = vunpack.c.l.s4 1966171168
        %v1203 = vunpack.c.0.s8 %v1202
        %v1204 = vlaneseq
        %v1205 = vshrl.u32 %v1204, 7
        %v1206 = vsub.s32 %v1203, %v1205
        %v1207 = vrot.slane %v1193, %v1206
        %v1208 = vcombine.high %v1200, %v1200
        %v1209 = vcombine.high %v1207, %v1207
        %v1211 = vunpack.c.l.s4 1966171168
        %v1212 = vunpack.c.0.s8 %v1211
        %v1213 = vlaneseq
        %v1214 = vshrl.u32 %v1213, 7
        %v1215 = vsub.s32 %v1212, %v1214
        %v1216 = vrot.slane %v1200, %v1215
        %v1218 = vunpack.c.l.s4 1966171168
        %v1219 = vunpack.c.0.s8 %v1218
        %v1220 = vlaneseq
        %v1221 = vshrl.u32 %v1220, 7
        %v1222 = vsub.s32 %v1219, %v1221
        %v1223 = vrot.slane %v1207, %v1222
        %v1225 = vunpack.c.l.s4 1966171168
        %v1226 = vunpack.c.0.s8 %v1225
        %v1227 = vlaneseq
        %v1228 = vshrl.u32 %v1227, 7
        %v1229 = vsub.s32 %v1226, %v1228
        %v1230 = vrot.slane %v1208, %v1229
        %v1232 = vunpack.c.l.s4 1966171168
        %v1233 = vunpack.c.0.s8 %v1232
        %v1234 = vlaneseq
        %v1235 = vshrl.u32 %v1234, 7
        %v1236 = vsub.s32 %v1233, %v1235
        %v1237 = vrot.slane %v1209, %v1236
        %v1238 = vcombine.high %v1216, %v1216
        %v1239 = vcombine.high %v1223, %v1223
        %v1240 = vcombine.high %v1230, %v1230
        %v1241 = vcombine.high %v1237, %v1237
        %v1242 = vcombine.high %v282, %v282
        %v1244 = vunpack.c.l.s4 1966171168
        %v1245 = vunpack.c.0.s8 %v1244
        %v1246 = vlaneseq
        %v1247 = vshrl.u32 %v1246, 7
        %v1248 = vsub.s32 %v1245, %v1247
        %v1249 = vrot.slane %v282, %v1248
        %v1251 = vunpack.c.l.s4 1966171168
        %v1252 = vunpack.c.0.s8 %v1251
        %v1253 = vlaneseq
        %v1254 = vshrl.u32 %v1253, 7
        %v1255 = vsub.s32 %v1252, %v1254
        %v1256 = vrot.slane %v1242, %v1255
        %v1257 = vcombine.high %v1249, %v1249
        %v1258 = vcombine.high %v1256, %v1256
        %v1260 = vunpack.c.l.s4 1966171168
        %v1261 = vunpack.c.0.s8 %v1260
        %v1262 = vlaneseq
        %v1263 = vshrl.u32 %v1262, 7
        %v1264 = vsub.s32 %v1261, %v1263
        %v1265 = vrot.slane %v1249, %v1264
        %v1267 = vunpack.c.l.s4 1966171168
        %v1268 = vunpack.c.0.s8 %v1267
        %v1269 = vlaneseq
        %v1270 = vshrl.u32 %v1269, 7
        %v1271 = vsub.s32 %v1268, %v1270
        %v1272 = vrot.slane %v1256, %v1271
        %v1274 = vunpack.c.l.s4 1966171168
        %v1275 = vunpack.c.0.s8 %v1274
        %v1276 = vlaneseq
        %v1277 = vshrl.u32 %v1276, 7
        %v1278 = vsub.s32 %v1275, %v1277
        %v1279 = vrot.slane %v1257, %v1278
        %v1281 = vunpack.c.l.s4 1966171168
        %v1282 = vunpack.c.0.s8 %v1281
        %v1283 = vlaneseq
        %v1284 = vshrl.u32 %v1283, 7
        %v1285 = vsub.s32 %v1282, %v1284
        %v1286 = vrot.slane %v1258, %v1285
        %v1287 = vcombine.high %v1265, %v1265
        %v1288 = vcombine.high %v1272, %v1272
        %v1289 = vcombine.high %v1279, %v1279
        %v1290 = vcombine.high %v1286, %v1286
        %v1291 = vcombine.high %v283, %v283
        %v1293 = vunpack.c.l.s4 1966171168
        %v1294 = vunpack.c.0.s8 %v1293
        %v1295 = vlaneseq
        %v1296 = vshrl.u32 %v1295, 7
        %v1297 = vsub.s32 %v1294, %v1296
        %v1298 = vrot.slane %v283, %v1297
        %v1300 = vunpack.c.l.s4 1966171168
        %v1301 = vunpack.c.0.s8 %v1300
        %v1302 = vlaneseq
        %v1303 = vshrl.u32 %v1302, 7
        %v1304 = vsub.s32 %v1301, %v1303
        %v1305 = vrot.slane %v1291, %v1304
        %v1306 = vcombine.high %v1298, %v1298
        %v1307 = vcombine.high %v1305, %v1305
        %v1309 = vunpack.c.l.s4 1966171168
        %v1310 = vunpack.c.0.s8 %v1309
        %v1311 = vlaneseq
        %v1312 = vshrl.u32 %v1311, 7
        %v1313 = vsub.s32 %v1310, %v1312
        %v1314 = vrot.slane %v1298, %v1313
        %v1316 = vunpack.c.l.s4 1966171168
        %v1317 = vunpack.c.0.s8 %v1316
        %v1318 = vlaneseq
        %v1319 = vshrl.u32 %v1318, 7
        %v1320 = vsub.s32 %v1317, %v1319
        %v1321 = vrot.slane %v1305, %v1320
        %v1323 = vunpack.c.l.s4 1966171168
        %v1324 = vunpack.c.0.s8 %v1323
        %v1325 = vlaneseq
        %v1326 = vshrl.u32 %v1325, 7
        %v1327 = vsub.s32 %v1324, %v1326
        %v1328 = vrot.slane %v1306, %v1327
        %v1330 = vunpack.c.l.s4 1966171168
        %v1331 = vunpack.c.0.s8 %v1330
        %v1332 = vlaneseq
        %v1333 = vshrl.u32 %v1332, 7
        %v1334 = vsub.s32 %v1331, %v1333
        %v1335 = vrot.slane %v1307, %v1334
        %v1336 = vcombine.high %v1314, %v1314
        %v1337 = vcombine.high %v1321, %v1321
        %v1338 = vcombine.high %v1328, %v1328
        %v1339 = vcombine.high %v1335, %v1335
        %v1340 = vcombine.high %v284, %v284
        %v1342 = vunpack.c.l.s4 1966171168
        %v1343 = vunpack.c.0.s8 %v1342
        %v1344 = vlaneseq
        %v1345 = vshrl.u32 %v1344, 7
        %v1346 = vsub.s32 %v1343, %v1345
        %v1347 = vrot.slane %v284, %v1346
        %v1349 = vunpack.c.l.s4 1966171168
        %v1350 = vunpack.c.0.s8 %v1349
        %v1351 = vlaneseq
        %v1352 = vshrl.u32 %v1351, 7
        %v1353 = vsub.s32 %v1350, %v1352
        %v1354 = vrot.slane %v1340, %v1353
        %v1355 = vcombine.high %v1347, %v1347
        %v1356 = vcombine.high %v1354, %v1354
        %v1358 = vunpack.c.l.s4 1966171168
        %v1359 = vunpack.c.0.s8 %v1358
        %v1360 = vlaneseq
        %v1361 = vshrl.u32 %v1360, 7
        %v1362 = vsub.s32 %v1359, %v1361
        %v1363 = vrot.slane %v1347, %v1362
        %v1365 = vunpack.c.l.s4 1966171168
        %v1366 = vunpack.c.0.s8 %v1365
        %v1367 = vlaneseq
        %v1368 = vshrl.u32 %v1367, 7
        %v1369 = vsub.s32 %v1366, %v1368
        %v1370 = vrot.slane %v1354, %v1369
        %v1372 = vunpack.c.l.s4 1966171168
        %v1373 = vunpack.c.0.s8 %v1372
        %v1374 = vlaneseq
        %v1375 = vshrl.u32 %v1374, 7
        %v1376 = vsub.s32 %v1373, %v1375
        %v1377 = vrot.slane %v1355, %v1376
        %v1379 = vunpack.c.l.s4 1966171168
        %v1380 = vunpack.c.0.s8 %v1379
        %v1381 = vlaneseq
        %v1382 = vshrl.u32 %v1381, 7
        %v1383 = vsub.s32 %v1380, %v1382
        %v1384 = vrot.slane %v1356, %v1383
        %v1385 = vcombine.high %v1363, %v1363
        %v1386 = vcombine.high %v1370, %v1370
        %v1387 = vcombine.high %v1377, %v1377
        %v1388 = vcombine.high %v1384, %v1384
        %v1389 = vcombine.high %v285, %v285
        %v1391 = vunpack.c.l.s4 1966171168
        %v1392 = vunpack.c.0.s8 %v1391
        %v1393 = vlaneseq
        %v1394 = vshrl.u32 %v1393, 7
        %v1395 = vsub.s32 %v1392, %v1394
        %v1396 = vrot.slane %v285, %v1395
        %v1398 = vunpack.c.l.s4 1966171168
        %v1399 = vunpack.c.0.s8 %v1398
        %v1400 = vlaneseq
        %v1401 = vshrl.u32 %v1400, 7
        %v1402 = vsub.s32 %v1399, %v1401
        %v1403 = vrot.slane %v1389, %v1402
        %v1404 = vcombine.high %v1396, %v1396
        %v1405 = vcombine.high %v1403, %v1403
        %v1407 = vunpack.c.l.s4 1966171168
        %v1408 = vunpack.c.0.s8 %v1407
        %v1409 = vlaneseq
        %v1410 = vshrl.u32 %v1409, 7
        %v1411 = vsub.s32 %v1408, %v1410
        %v1412 = vrot.slane %v1396, %v1411
        %v1414 = vunpack.c.l.s4 1966171168
        %v1415 = vunpack.c.0.s8 %v1414
        %v1416 = vlaneseq
        %v1417 = vshrl.u32 %v1416, 7
        %v1418 = vsub.s32 %v1415, %v1417
        %v1419 = vrot.slane %v1403, %v1418
        %v1421 = vunpack.c.l.s4 1966171168
        %v1422 = vunpack.c.0.s8 %v1421
        %v1423 = vlaneseq
        %v1424 = vshrl.u32 %v1423, 7
        %v1425 = vsub.s32 %v1422, %v1424
        %v1426 = vrot.slane %v1404, %v1425
        %v1428 = vunpack.c.l.s4 1966171168
        %v1429 = vunpack.c.0.s8 %v1428
        %v1430 = vlaneseq
        %v1431 = vshrl.u32 %v1430, 7
        %v1432 = vsub.s32 %v1429, %v1431
        %v1433 = vrot.slane %v1405, %v1432
        %v1434 = vcombine.high %v1412, %v1412
        %v1435 = vcombine.high %v1419, %v1419
        %v1436 = vcombine.high %v1426, %v1426
        %v1437 = vcombine.high %v1433, %v1433
        %v1438 = vcombine.high %v286, %v286
        %v1440 = vunpack.c.l.s4 1966171168
        %v1441 = vunpack.c.0.s8 %v1440
        %v1442 = vlaneseq
        %v1443 = vshrl.u32 %v1442, 7
        %v1444 = vsub.s32 %v1441, %v1443
        %v1445 = vrot.slane %v286, %v1444
        %v1447 = vunpack.c.l.s4 1966171168
        %v1448 = vunpack.c.0.s8 %v1447
        %v1449 = vlaneseq
        %v1450 = vshrl.u32 %v1449, 7
        %v1451 = vsub.s32 %v1448, %v1450
        %v1452 = vrot.slane %v1438, %v1451
        %v1453 = vcombine.high %v1445, %v1445
        %v1454 = vcombine.high %v1452, %v1452
        %v1456 = vunpack.c.l.s4 1966171168
        %v1457 = vunpack.c.0.s8 %v1456
        %v1458 = vlaneseq
        %v1459 = vshrl.u32 %v1458, 7
        %v1460 = vsub.s32 %v1457, %v1459
        %v1461 = vrot.slane %v1445, %v1460
        %v1463 = vunpack.c.l.s4 1966171168
        %v1464 = vunpack.c.0.s8 %v1463
        %v1465 = vlaneseq
        %v1466 = vshrl.u32 %v1465, 7
        %v1467 = vsub.s32 %v1464, %v1466
        %v1468 = vrot.slane %v1452, %v1467
        %v1470 = vunpack.c.l.s4 1966171168
        %v1471 = vunpack.c.0.s8 %v1470
        %v1472 = vlaneseq
        %v1473 = vshrl.u32 %v1472, 7
        %v1474 = vsub.s32 %v1471, %v1473
        %v1475 = vrot.slane %v1453, %v1474
        %v1477 = vunpack.c.l.s4 1966171168
        %v1478 = vunpack.c.0.s8 %v1477
        %v1479 = vlaneseq
        %v1480 = vshrl.u32 %v1479, 7
        %v1481 = vsub.s32 %v1478, %v1480
        %v1482 = vrot.slane %v1454, %v1481
        %v1483 = vcombine.high %v1461, %v1461
        %v1484 = vcombine.high %v1468, %v1468
        %v1485 = vcombine.high %v1475, %v1475
        %v1486 = vcombine.high %v1482, %v1482
        %v1487 = vcombine.high %v287, %v287
        %v1489 = vunpack.c.l.s4 1966171168
        %v1490 = vunpack.c.0.s8 %v1489
        %v1491 = vlaneseq
        %v1492 = vshrl.u32 %v1491, 7
        %v1493 = vsub.s32 %v1490, %v1492
        %v1494 = vrot.slane %v287, %v1493
        %v1496 = vunpack.c.l.s4 1966171168
        %v1497 = vunpack.c.0.s8 %v1496
        %v1498 = vlaneseq
        %v1499 = vshrl.u32 %v1498, 7
        %v1500 = vsub.s32 %v1497, %v1499
        %v1501 = vrot.slane %v1487, %v1500
        %v1502 = vcombine.high %v1494, %v1494
        %v1503 = vcombine.high %v1501, %v1501
        %v1505 = vunpack.c.l.s4 1966171168
        %v1506 = vunpack.c.0.s8 %v1505
        %v1507 = vlaneseq
        %v1508 = vshrl.u32 %v1507, 7
        %v1509 = vsub.s32 %v1506, %v1508
        %v1510 = vrot.slane %v1494, %v1509
        %v1512 = vunpack.c.l.s4 1966171168
        %v1513 = vunpack.c.0.s8 %v1512
        %v1514 = vlaneseq
        %v1515 = vshrl.u32 %v1514, 7
        %v1516 = vsub.s32 %v1513, %v1515
        %v1517 = vrot.slane %v1501, %v1516
        %v1519 = vunpack.c.l.s4 1966171168
        %v1520 = vunpack.c.0.s8 %v1519
        %v1521 = vlaneseq
        %v1522 = vshrl.u32 %v1521, 7
        %v1523 = vsub.s32 %v1520, %v1522
        %v1524 = vrot.slane %v1502, %v1523
        %v1526 = vunpack.c.l.s4 1966171168
        %v1527 = vunpack.c.0.s8 %v1526
        %v1528 = vlaneseq
        %v1529 = vshrl.u32 %v1528, 7
        %v1530 = vsub.s32 %v1527, %v1529
        %v1531 = vrot.slane %v1503, %v1530
        %v1532 = vcombine.high %v1510, %v1510
        %v1533 = vcombine.high %v1517, %v1517
        %v1534 = vcombine.high %v1524, %v1524
        %v1535 = vcombine.high %v1531, %v1531
        %v1536 = vcombine.high %v288, %v288
        %v1538 = vunpack.c.l.s4 1966171168
        %v1539 = vunpack.c.0.s8 %v1538
        %v1540 = vlaneseq
        %v1541 = vshrl.u32 %v1540, 7
        %v1542 = vsub.s32 %v1539, %v1541
        %v1543 = vrot.slane %v288, %v1542
        %v1545 = vunpack.c.l.s4 1966171168
        %v1546 = vunpack.c.0.s8 %v1545
        %v1547 = vlaneseq
        %v1548 = vshrl.u32 %v1547, 7
        %v1549 = vsub.s32 %v1546, %v1548
        %v1550 = vrot.slane %v1536, %v1549
        %v1551 = vcombine.high %v1543, %v1543
        %v1552 = vcombine.high %v1550, %v1550
        %v1554 = vunpack.c.l.s4 1966171168
        %v1555 = vunpack.c.0.s8 %v1554
        %v1556 = vlaneseq
        %v1557 = vshrl.u32 %v1556, 7
        %v1558 = vsub.s32 %v1555, %v1557
        %v1559 = vrot.slane %v1543, %v1558
        %v1561 = vunpack.c.l.s4 1966171168
        %v1562 = vunpack.c.0.s8 %v1561
        %v1563 = vlaneseq
        %v1564 = vshrl.u32 %v1563, 7
        %v1565 = vsub.s32 %v1562, %v1564
        %v1566 = vrot.slane %v1550, %v1565
        %v1568 = vunpack.c.l.s4 1966171168
        %v1569 = vunpack.c.0.s8 %v1568
        %v1570 = vlaneseq
        %v1571 = vshrl.u32 %v1570, 7
        %v1572 = vsub.s32 %v1569, %v1571
        %v1573 = vrot.slane %v1551, %v1572
        %v1575 = vunpack.c.l.s4 1966171168
        %v1576 = vunpack.c.0.s8 %v1575
        %v1577 = vlaneseq
        %v1578 = vshrl.u32 %v1577, 7
        %v1579 = vsub.s32 %v1576, %v1578
        %v1580 = vrot.slane %v1552, %v1579
        %v1581 = vcombine.high %v1559, %v1559
        %v1582 = vcombine.high %v1566, %v1566
        %v1583 = vcombine.high %v1573, %v1573
        %v1584 = vcombine.high %v1580, %v1580
        %v1585 = vcombine.high %v289, %v289
        %v1587 = vunpack.c.l.s4 1966171168
        %v1588 = vunpack.c.0.s8 %v1587
        %v1589 = vlaneseq
        %v1590 = vshrl.u32 %v1589, 7
        %v1591 = vsub.s32 %v1588, %v1590
        %v1592 = vrot.slane %v289, %v1591
        %v1594 = vunpack.c.l.s4 1966171168
        %v1595 = vunpack.c.0.s8 %v1594
        %v1596 = vlaneseq
        %v1597 = vshrl.u32 %v1596, 7
        %v1598 = vsub.s32 %v1595, %v1597
        %v1599 = vrot.slane %v1585, %v1598
        %v1600 = vcombine.high %v1592, %v1592
        %v1601 = vcombine.high %v1599, %v1599
        %v1603 = vunpack.c.l.s4 1966171168
        %v1604 = vunpack.c.0.s8 %v1603
        %v1605 = vlaneseq
        %v1606 = vshrl.u32 %v1605, 7
        %v1607 = vsub.s32 %v1604, %v1606
        %v1608 = vrot.slane %v1592, %v1607
        %v1610 = vunpack.c.l.s4 1966171168
        %v1611 = vunpack.c.0.s8 %v1610
        %v1612 = vlaneseq
        %v1613 = vshrl.u32 %v1612, 7
        %v1614 = vsub.s32 %v1611, %v1613
        %v1615 = vrot.slane %v1599, %v1614
        %v1617 = vunpack.c.l.s4 1966171168
        %v1618 = vunpack.c.0.s8 %v1617
        %v1619 = vlaneseq
        %v1620 = vshrl.u32 %v1619, 7
        %v1621 = vsub.s32 %v1618, %v1620
        %v1622 = vrot.slane %v1600, %v1621
        %v1624 = vunpack.c.l.s4 1966171168
        %v1625 = vunpack.c.0.s8 %v1624
        %v1626 = vlaneseq
        %v1627 = vshrl.u32 %v1626, 7
        %v1628 = vsub.s32 %v1625, %v1627
        %v1629 = vrot.slane %v1601, %v1628
        %v1630 = vcombine.high %v1608, %v1608
        %v1631 = vcombine.high %v1615, %v1615
        %v1632 = vcombine.high %v1622, %v1622
        %v1633 = vcombine.high %v1629, %v1629
        %v1634 = vcombine.high %v290, %v290
        %v1636 = vunpack.c.l.s4 1966171168
        %v1637 = vunpack.c.0.s8 %v1636
        %v1638 = vlaneseq
        %v1639 = vshrl.u32 %v1638, 7
        %v1640 = vsub.s32 %v1637, %v1639
        %v1641 = vrot.slane %v290, %v1640
        %v1643 = vunpack.c.l.s4 1966171168
        %v1644 = vunpack.c.0.s8 %v1643
        %v1645 = vlaneseq
        %v1646 = vshrl.u32 %v1645, 7
        %v1647 = vsub.s32 %v1644, %v1646
        %v1648 = vrot.slane %v1634, %v1647
        %v1649 = vcombine.high %v1641, %v1641
        %v1650 = vcombine.high %v1648, %v1648
        %v1652 = vunpack.c.l.s4 1966171168
        %v1653 = vunpack.c.0.s8 %v1652
        %v1654 = vlaneseq
        %v1655 = vshrl.u32 %v1654, 7
        %v1656 = vsub.s32 %v1653, %v1655
        %v1657 = vrot.slane %v1641, %v1656
        %v1659 = vunpack.c.l.s4 1966171168
        %v1660 = vunpack.c.0.s8 %v1659
        %v1661 = vlaneseq
        %v1662 = vshrl.u32 %v1661, 7
        %v1663 = vsub.s32 %v1660, %v1662
        %v1664 = vrot.slane %v1648, %v1663
        %v1666 = vunpack.c.l.s4 1966171168
        %v1667 = vunpack.c.0.s8 %v1666
        %v1668 = vlaneseq
        %v1669 = vshrl.u32 %v1668, 7
        %v1670 = vsub.s32 %v1667, %v1669
        %v1671 = vrot.slane %v1649, %v1670
        %v1673 = vunpack.c.l.s4 1966171168
        %v1674 = vunpack.c.0.s8 %v1673
        %v1675 = vlaneseq
        %v1676 = vshrl.u32 %v1675, 7
        %v1677 = vsub.s32 %v1674, %v1676
        %v1678 = vrot.slane %v1650, %v1677
        %v1679 = vcombine.high %v1657, %v1657
        %v1680 = vcombine.high %v1664, %v1664
        %v1681 = vcombine.high %v1671, %v1671
        %v1682 = vcombine.high %v1678, %v1678
        %v1683 = vcombine.high %v291, %v291
        %v1685 = vunpack.c.l.s4 1966171168
        %v1686 = vunpack.c.0.s8 %v1685
        %v1687 = vlaneseq
        %v1688 = vshrl.u32 %v1687, 7
        %v1689 = vsub.s32 %v1686, %v1688
        %v1690 = vrot.slane %v291, %v1689
        %v1692 = vunpack.c.l.s4 1966171168
        %v1693 = vunpack.c.0.s8 %v1692
        %v1694 = vlaneseq
        %v1695 = vshrl.u32 %v1694, 7
        %v1696 = vsub.s32 %v1693, %v1695
        %v1697 = vrot.slane %v1683, %v1696
        %v1698 = vcombine.high %v1690, %v1690
        %v1699 = vcombine.high %v1697, %v1697
        %v1701 = vunpack.c.l.s4 1966171168
        %v1702 = vunpack.c.0.s8 %v1701
        %v1703 = vlaneseq
        %v1704 = vshrl.u32 %v1703, 7
        %v1705 = vsub.s32 %v1702, %v1704
        %v1706 = vrot.slane %v1690, %v1705
        %v1708 = vunpack.c.l.s4 1966171168
        %v1709 = vunpack.c.0.s8 %v1708
        %v1710 = vlaneseq
        %v1711 = vshrl.u32 %v1710, 7
        %v1712 = vsub.s32 %v1709, %v1711
        %v1713 = vrot.slane %v1697, %v1712
        %v1715 = vunpack.c.l.s4 1966171168
        %v1716 = vunpack.c.0.s8 %v1715
        %v1717 = vlaneseq
        %v1718 = vshrl.u32 %v1717, 7
        %v1719 = vsub.s32 %v1716, %v1718
        %v1720 = vrot.slane %v1698, %v1719
        %v1722 = vunpack.c.l.s4 1966171168
        %v1723 = vunpack.c.0.s8 %v1722
        %v1724 = vlaneseq
        %v1725 = vshrl.u32 %v1724, 7
        %v1726 = vsub.s32 %v1723, %v1725
        %v1727 = vrot.slane %v1699, %v1726
        %v1728 = vcombine.high %v1706, %v1706
        %v1729 = vcombine.high %v1713, %v1713
        %v1730 = vcombine.high %v1720, %v1720
        %v1731 = vcombine.high %v1727, %v1727
        %v1732 = vcombine.high %v292, %v292
        %v1734 = vunpack.c.l.s4 1966171168
        %v1735 = vunpack.c.0.s8 %v1734
        %v1736 = vlaneseq
        %v1737 = vshrl.u32 %v1736, 7
        %v1738 = vsub.s32 %v1735, %v1737
        %v1739 = vrot.slane %v292, %v1738
        %v1741 = vunpack.c.l.s4 1966171168
        %v1742 = vunpack.c.0.s8 %v1741
        %v1743 = vlaneseq
        %v1744 = vshrl.u32 %v1743, 7
        %v1745 = vsub.s32 %v1742, %v1744
        %v1746 = vrot.slane %v1732, %v1745
        %v1747 = vcombine.high %v1739, %v1739
        %v1748 = vcombine.high %v1746, %v1746
        %v1750 = vunpack.c.l.s4 1966171168
        %v1751 = vunpack.c.0.s8 %v1750
        %v1752 = vlaneseq
        %v1753 = vshrl.u32 %v1752, 7
        %v1754 = vsub.s32 %v1751, %v1753
        %v1755 = vrot.slane %v1739, %v1754
        %v1757 = vunpack.c.l.s4 1966171168
        %v1758 = vunpack.c.0.s8 %v1757
        %v1759 = vlaneseq
        %v1760 = vshrl.u32 %v1759, 7
        %v1761 = vsub.s32 %v1758, %v1760
        %v1762 = vrot.slane %v1746, %v1761
        %v1764 = vunpack.c.l.s4 1966171168
        %v1765 = vunpack.c.0.s8 %v1764
        %v1766 = vlaneseq
        %v1767 = vshrl.u32 %v1766, 7
        %v1768 = vsub.s32 %v1765, %v1767
        %v1769 = vrot.slane %v1747, %v1768
        %v1771 = vunpack.c.l.s4 1966171168
        %v1772 = vunpack.c.0.s8 %v1771
        %v1773 = vlaneseq
        %v1774 = vshrl.u32 %v1773, 7
        %v1775 = vsub.s32 %v1772, %v1774
        %v1776 = vrot.slane %v1748, %v1775
        %v1777 = vcombine.high %v1755, %v1755
        %v1778 = vcombine.high %v1762, %v1762
        %v1779 = vcombine.high %v1769, %v1769
        %v1780 = vcombine.high %v1776, %v1776
        %v1781 = vcombine.high %v293, %v293
        %v1783 = vunpack.c.l.s4 1966171168
        %v1784 = vunpack.c.0.s8 %v1783
        %v1785 = vlaneseq
        %v1786 = vshrl.u32 %v1785, 7
        %v1787 = vsub.s32 %v1784, %v1786
        %v1788 = vrot.slane %v293, %v1787
        %v1790 = vunpack.c.l.s4 1966171168
        %v1791 = vunpack.c.0.s8 %v1790
        %v1792 = vlaneseq
        %v1793 = vshrl.u32 %v1792, 7
        %v1794 = vsub.s32 %v1791, %v1793
        %v1795 = vrot.slane %v1781, %v1794
        %v1796 = vcombine.high %v1788, %v1788
        %v1797 = vcombine.high %v1795, %v1795
        %v1799 = vunpack.c.l.s4 1966171168
        %v1800 = vunpack.c.0.s8 %v1799
        %v1801 = vlaneseq
        %v1802 = vshrl.u32 %v1801, 7
        %v1803 = vsub.s32 %v1800, %v1802
        %v1804 = vrot.slane %v1788, %v1803
        %v1806 = vunpack.c.l.s4 1966171168
        %v1807 = vunpack.c.0.s8 %v1806
        %v1808 = vlaneseq
        %v1809 = vshrl.u32 %v1808, 7
        %v1810 = vsub.s32 %v1807, %v1809
        %v1811 = vrot.slane %v1795, %v1810
        %v1813 = vunpack.c.l.s4 1966171168
        %v1814 = vunpack.c.0.s8 %v1813
        %v1815 = vlaneseq
        %v1816 = vshrl.u32 %v1815, 7
        %v1817 = vsub.s32 %v1814, %v1816
        %v1818 = vrot.slane %v1796, %v1817
        %v1820 = vunpack.c.l.s4 1966171168
        %v1821 = vunpack.c.0.s8 %v1820
        %v1822 = vlaneseq
        %v1823 = vshrl.u32 %v1822, 7
        %v1824 = vsub.s32 %v1821, %v1823
        %v1825 = vrot.slane %v1797, %v1824
        %v1826 = vcombine.high %v1804, %v1804
        %v1827 = vcombine.high %v1811, %v1811
        %v1828 = vcombine.high %v1818, %v1818
        %v1829 = vcombine.high %v1825, %v1825
        %v1830 = vcombine.high %v294, %v294
        %v1832 = vunpack.c.l.s4 1966171168
        %v1833 = vunpack.c.0.s8 %v1832
        %v1834 = vlaneseq
        %v1835 = vshrl.u32 %v1834, 7
        %v1836 = vsub.s32 %v1833, %v1835
        %v1837 = vrot.slane %v294, %v1836
        %v1839 = vunpack.c.l.s4 1966171168
        %v1840 = vunpack.c.0.s8 %v1839
        %v1841 = vlaneseq
        %v1842 = vshrl.u32 %v1841, 7
        %v1843 = vsub.s32 %v1840, %v1842
        %v1844 = vrot.slane %v1830, %v1843
        %v1845 = vcombine.high %v1837, %v1837
        %v1846 = vcombine.high %v1844, %v1844
        %v1848 = vunpack.c.l.s4 1966171168
        %v1849 = vunpack.c.0.s8 %v1848
        %v1850 = vlaneseq
        %v1851 = vshrl.u32 %v1850, 7
        %v1852 = vsub.s32 %v1849, %v1851
        %v1853 = vrot.slane %v1837, %v1852
        %v1855 = vunpack.c.l.s4 1966171168
        %v1856 = vunpack.c.0.s8 %v1855
        %v1857 = vlaneseq
        %v1858 = vshrl.u32 %v1857, 7
        %v1859 = vsub.s32 %v1856, %v1858
        %v1860 = vrot.slane %v1844, %v1859
        %v1862 = vunpack.c.l.s4 1966171168
        %v1863 = vunpack.c.0.s8 %v1862
        %v1864 = vlaneseq
        %v1865 = vshrl.u32 %v1864, 7
        %v1866 = vsub.s32 %v1863, %v1865
        %v1867 = vrot.slane %v1845, %v1866
        %v1869 = vunpack.c.l.s4 1966171168
        %v1870 = vunpack.c.0.s8 %v1869
        %v1871 = vlaneseq
        %v1872 = vshrl.u32 %v1871, 7
        %v1873 = vsub.s32 %v1870, %v1872
        %v1874 = vrot.slane %v1846, %v1873
        %v1875 = vcombine.high %v1853, %v1853
        %v1876 = vcombine.high %v1860, %v1860
        %v1877 = vcombine.high %v1867, %v1867
        %v1878 = vcombine.high %v1874, %v1874
        %v1879 = vcombine.high %v295, %v295
        %v1881 = vunpack.c.l.s4 1966171168
        %v1882 = vunpack.c.0.s8 %v1881
        %v1883 = vlaneseq
        %v1884 = vshrl.u32 %v1883, 7
        %v1885 = vsub.s32 %v1882, %v1884
        %v1886 = vrot.slane %v295, %v1885
        %v1888 = vunpack.c.l.s4 1966171168
        %v1889 = vunpack.c.0.s8 %v1888
        %v1890 = vlaneseq
        %v1891 = vshrl.u32 %v1890, 7
        %v1892 = vsub.s32 %v1889, %v1891
        %v1893 = vrot.slane %v1879, %v1892
        %v1894 = vcombine.high %v1886, %v1886
        %v1895 = vcombine.high %v1893, %v1893
        %v1897 = vunpack.c.l.s4 1966171168
        %v1898 = vunpack.c.0.s8 %v1897
        %v1899 = vlaneseq
        %v1900 = vshrl.u32 %v1899, 7
        %v1901 = vsub.s32 %v1898, %v1900
        %v1902 = vrot.slane %v1886, %v1901
        %v1904 = vunpack.c.l.s4 1966171168
        %v1905 = vunpack.c.0.s8 %v1904
        %v1906 = vlaneseq
        %v1907 = vshrl.u32 %v1906, 7
        %v1908 = vsub.s32 %v1905, %v1907
        %v1909 = vrot.slane %v1893, %v1908
        %v1911 = vunpack.c.l.s4 1966171168
        %v1912 = vunpack.c.0.s8 %v1911
        %v1913 = vlaneseq
        %v1914 = vshrl.u32 %v1913, 7
        %v1915 = vsub.s32 %v1912, %v1914
        %v1916 = vrot.slane %v1894, %v1915
        %v1918 = vunpack.c.l.s4 1966171168
        %v1919 = vunpack.c.0.s8 %v1918
        %v1920 = vlaneseq
        %v1921 = vshrl.u32 %v1920, 7
        %v1922 = vsub.s32 %v1919, %v1921
        %v1923 = vrot.slane %v1895, %v1922
        %v1924 = vcombine.high %v1902, %v1902
        %v1925 = vcombine.high %v1909, %v1909
        %v1926 = vcombine.high %v1916, %v1916
        %v1927 = vcombine.high %v1923, %v1923
        %v1928 = vcombine.high %v296, %v296
        %v1930 = vunpack.c.l.s4 1966171168
        %v1931 = vunpack.c.0.s8 %v1930
        %v1932 = vlaneseq
        %v1933 = vshrl.u32 %v1932, 7
        %v1934 = vsub.s32 %v1931, %v1933
        %v1935 = vrot.slane %v296, %v1934
        %v1937 = vunpack.c.l.s4 1966171168
        %v1938 = vunpack.c.0.s8 %v1937
        %v1939 = vlaneseq
        %v1940 = vshrl.u32 %v1939, 7
        %v1941 = vsub.s32 %v1938, %v1940
        %v1942 = vrot.slane %v1928, %v1941
        %v1943 = vcombine.high %v1935, %v1935
        %v1944 = vcombine.high %v1942, %v1942
        %v1946 = vunpack.c.l.s4 1966171168
        %v1947 = vunpack.c.0.s8 %v1946
        %v1948 = vlaneseq
        %v1949 = vshrl.u32 %v1948, 7
        %v1950 = vsub.s32 %v1947, %v1949
        %v1951 = vrot.slane %v1935, %v1950
        %v1953 = vunpack.c.l.s4 1966171168
        %v1954 = vunpack.c.0.s8 %v1953
        %v1955 = vlaneseq
        %v1956 = vshrl.u32 %v1955, 7
        %v1957 = vsub.s32 %v1954, %v1956
        %v1958 = vrot.slane %v1942, %v1957
        %v1960 = vunpack.c.l.s4 1966171168
        %v1961 = vunpack.c.0.s8 %v1960
        %v1962 = vlaneseq
        %v1963 = vshrl.u32 %v1962, 7
        %v1964 = vsub.s32 %v1961, %v1963
        %v1965 = vrot.slane %v1943, %v1964
        %v1967 = vunpack.c.l.s4 1966171168
        %v1968 = vunpack.c.0.s8 %v1967
        %v1969 = vlaneseq
        %v1970 = vshrl.u32 %v1969, 7
        %v1971 = vsub.s32 %v1968, %v1970
        %v1972 = vrot.slane %v1944, %v1971
        %v1973 = vcombine.high %v1951, %v1951
        %v1974 = vcombine.high %v1958, %v1958
        %v1975 = vcombine.high %v1965, %v1965
        %v1976 = vcombine.high %v1972, %v1972
        %v1977 = vcombine.high %v297, %v297
        %v1979 = vunpack.c.l.s4 1966171168
        %v1980 = vunpack.c.0.s8 %v1979
        %v1981 = vlaneseq
        %v1982 = vshrl.u32 %v1981, 7
        %v1983 = vsub.s32 %v1980, %v1982
        %v1984 = vrot.slane %v297, %v1983
        %v1986 = vunpack.c.l.s4 1966171168
        %v1987 = vunpack.c.0.s8 %v1986
        %v1988 = vlaneseq
        %v1989 = vshrl.u32 %v1988, 7
        %v1990 = vsub.s32 %v1987, %v1989
        %v1991 = vrot.slane %v1977, %v1990
        %v1992 = vcombine.high %v1984, %v1984
        %v1993 = vcombine.high %v1991, %v1991
        %v1995 = vunpack.c.l.s4 1966171168
        %v1996 = vunpack.c.0.s8 %v1995
        %v1997 = vlaneseq
        %v1998 = vshrl.u32 %v1997, 7
        %v1999 = vsub.s32 %v1996, %v1998
        %v2000 = vrot.slane %v1984, %v1999
        %v2002 = vunpack.c.l.s4 1966171168
        %v2003 = vunpack.c.0.s8 %v2002
        %v2004 = vlaneseq
        %v2005 = vshrl.u32 %v2004, 7
        %v2006 = vsub.s32 %v2003, %v2005
        %v2007 = vrot.slane %v1991, %v2006
        %v2009 = vunpack.c.l.s4 1966171168
        %v2010 = vunpack.c.0.s8 %v2009
        %v2011 = vlaneseq
        %v2012 = vshrl.u32 %v2011, 7
        %v2013 = vsub.s32 %v2010, %v2012
        %v2014 = vrot.slane %v1992, %v2013
        %v2016 = vunpack.c.l.s4 1966171168
        %v2017 = vunpack.c.0.s8 %v2016
        %v2018 = vlaneseq
        %v2019 = vshrl.u32 %v2018, 7
        %v2020 = vsub.s32 %v2017, %v2019
        %v2021 = vrot.slane %v1993, %v2020
        %v2022 = vcombine.high %v2000, %v2000
        %v2023 = vcombine.high %v2007, %v2007
        %v2024 = vcombine.high %v2014, %v2014
        %v2025 = vcombine.high %v2021, %v2021
        %v2026 = vcombine.high %v298, %v298
        %v2028 = vunpack.c.l.s4 1966171168
        %v2029 = vunpack.c.0.s8 %v2028
        %v2030 = vlaneseq
        %v2031 = vshrl.u32 %v2030, 7
        %v2032 = vsub.s32 %v2029, %v2031
        %v2033 = vrot.slane %v298, %v2032
        %v2035 = vunpack.c.l.s4 1966171168
        %v2036 = vunpack.c.0.s8 %v2035
        %v2037 = vlaneseq
        %v2038 = vshrl.u32 %v2037, 7
        %v2039 = vsub.s32 %v2036, %v2038
        %v2040 = vrot.slane %v2026, %v2039
        %v2041 = vcombine.high %v2033, %v2033
        %v2042 = vcombine.high %v2040, %v2040
        %v2044 = vunpack.c.l.s4 1966171168
        %v2045 = vunpack.c.0.s8 %v2044
        %v2046 = vlaneseq
        %v2047 = vshrl.u32 %v2046, 7
        %v2048 = vsub.s32 %v2045, %v2047
        %v2049 = vrot.slane %v2033, %v2048
        %v2051 = vunpack.c.l.s4 1966171168
        %v2052 = vunpack.c.0.s8 %v2051
        %v2053 = vlaneseq
        %v2054 = vshrl.u32 %v2053, 7
        %v2055 = vsub.s32 %v2052, %v2054
        %v2056 = vrot.slane %v2040, %v2055
        %v2058 = vunpack.c.l.s4 1966171168
        %v2059 = vunpack.c.0.s8 %v2058
        %v2060 = vlaneseq
        %v2061 = vshrl.u32 %v2060, 7
        %v2062 = vsub.s32 %v2059, %v2061
        %v2063 = vrot.slane %v2041, %v2062
        %v2065 = vunpack.c.l.s4 1966171168
        %v2066 = vunpack.c.0.s8 %v2065
        %v2067 = vlaneseq
        %v2068 = vshrl.u32 %v2067, 7
        %v2069 = vsub.s32 %v2066, %v2068
        %v2070 = vrot.slane %v2042, %v2069
        %v2071 = vcombine.high %v2049, %v2049
        %v2072 = vcombine.high %v2056, %v2056
        %v2073 = vcombine.high %v2063, %v2063
        %v2074 = vcombine.high %v2070, %v2070
        %v2075 = vcombine.high %v299, %v299
        %v2077 = vunpack.c.l.s4 1966171168
        %v2078 = vunpack.c.0.s8 %v2077
        %v2079 = vlaneseq
        %v2080 = vshrl.u32 %v2079, 7
        %v2081 = vsub.s32 %v2078, %v2080
        %v2082 = vrot.slane %v299, %v2081
        %v2084 = vunpack.c.l.s4 1966171168
        %v2085 = vunpack.c.0.s8 %v2084
        %v2086 = vlaneseq
        %v2087 = vshrl.u32 %v2086, 7
        %v2088 = vsub.s32 %v2085, %v2087
        %v2089 = vrot.slane %v2075, %v2088
        %v2090 = vcombine.high %v2082, %v2082
        %v2091 = vcombine.high %v2089, %v2089
        %v2093 = vunpack.c.l.s4 1966171168
        %v2094 = vunpack.c.0.s8 %v2093
        %v2095 = vlaneseq
        %v2096 = vshrl.u32 %v2095, 7
        %v2097 = vsub.s32 %v2094, %v2096
        %v2098 = vrot.slane %v2082, %v2097
        %v2100 = vunpack.c.l.s4 1966171168
        %v2101 = vunpack.c.0.s8 %v2100
        %v2102 = vlaneseq
        %v2103 = vshrl.u32 %v2102, 7
        %v2104 = vsub.s32 %v2101, %v2103
        %v2105 = vrot.slane %v2089, %v2104
        %v2107 = vunpack.c.l.s4 1966171168
        %v2108 = vunpack.c.0.s8 %v2107
        %v2109 = vlaneseq
        %v2110 = vshrl.u32 %v2109, 7
        %v2111 = vsub.s32 %v2108, %v2110
        %v2112 = vrot.slane %v2090, %v2111
        %v2114 = vunpack.c.l.s4 1966171168
        %v2115 = vunpack.c.0.s8 %v2114
        %v2116 = vlaneseq
        %v2117 = vshrl.u32 %v2116, 7
        %v2118 = vsub.s32 %v2115, %v2117
        %v2119 = vrot.slane %v2091, %v2118
        %v2120 = vcombine.high %v2098, %v2098
        %v2121 = vcombine.high %v2105, %v2105
        %v2122 = vcombine.high %v2112, %v2112
        %v2123 = vcombine.high %v2119, %v2119
        %v2124 = vcombine.high %v300, %v300
        %v2126 = vunpack.c.l.s4 1966171168
        %v2127 = vunpack.c.0.s8 %v2126
        %v2128 = vlaneseq
        %v2129 = vshrl.u32 %v2128, 7
        %v2130 = vsub.s32 %v2127, %v2129
        %v2131 = vrot.slane %v300, %v2130
        %v2133 = vunpack.c.l.s4 1966171168
        %v2134 = vunpack.c.0.s8 %v2133
        %v2135 = vlaneseq
        %v2136 = vshrl.u32 %v2135, 7
        %v2137 = vsub.s32 %v2134, %v2136
        %v2138 = vrot.slane %v2124, %v2137
        %v2139 = vcombine.high %v2131, %v2131
        %v2140 = vcombine.high %v2138, %v2138
        %v2142 = vunpack.c.l.s4 1966171168
        %v2143 = vunpack.c.0.s8 %v2142
        %v2144 = vlaneseq
        %v2145 = vshrl.u32 %v2144, 7
        %v2146 = vsub.s32 %v2143, %v2145
        %v2147 = vrot.slane %v2131, %v2146
        %v2149 = vunpack.c.l.s4 1966171168
        %v2150 = vunpack.c.0.s8 %v2149
        %v2151 = vlaneseq
        %v2152 = vshrl.u32 %v2151, 7
        %v2153 = vsub.s32 %v2150, %v2152
        %v2154 = vrot.slane %v2138, %v2153
        %v2156 = vunpack.c.l.s4 1966171168
        %v2157 = vunpack.c.0.s8 %v2156
        %v2158 = vlaneseq
        %v2159 = vshrl.u32 %v2158, 7
        %v2160 = vsub.s32 %v2157, %v2159
        %v2161 = vrot.slane %v2139, %v2160
        %v2163 = vunpack.c.l.s4 1966171168
        %v2164 = vunpack.c.0.s8 %v2163
        %v2165 = vlaneseq
        %v2166 = vshrl.u32 %v2165, 7
        %v2167 = vsub.s32 %v2164, %v2166
        %v2168 = vrot.slane %v2140, %v2167
        %v2169 = vcombine.high %v2147, %v2147
        %v2170 = vcombine.high %v2154, %v2154
        %v2171 = vcombine.high %v2161, %v2161
        %v2172 = vcombine.high %v2168, %v2168
        %v2173 = vcombine.high %v301, %v301
        %v2175 = vunpack.c.l.s4 1966171168
        %v2176 = vunpack.c.0.s8 %v2175
        %v2177 = vlaneseq
        %v2178 = vshrl.u32 %v2177, 7
        %v2179 = vsub.s32 %v2176, %v2178
        %v2180 = vrot.slane %v301, %v2179
        %v2182 = vunpack.c.l.s4 1966171168
        %v2183 = vunpack.c.0.s8 %v2182
        %v2184 = vlaneseq
        %v2185 = vshrl.u32 %v2184, 7
        %v2186 = vsub.s32 %v2183, %v2185
        %v2187 = vrot.slane %v2173, %v2186
        %v2188 = vcombine.high %v2180, %v2180
        %v2189 = vcombine.high %v2187, %v2187
        %v2191 = vunpack.c.l.s4 1966171168
        %v2192 = vunpack.c.0.s8 %v2191
        %v2193 = vlaneseq
        %v2194 = vshrl.u32 %v2193, 7
        %v2195 = vsub.s32 %v2192, %v2194
        %v2196 = vrot.slane %v2180, %v2195
        %v2198 = vunpack.c.l.s4 1966171168
        %v2199 = vunpack.c.0.s8 %v2198
        %v2200 = vlaneseq
        %v2201 = vshrl.u32 %v2200, 7
        %v2202 = vsub.s32 %v2199, %v2201
        %v2203 = vrot.slane %v2187, %v2202
        %v2205 = vunpack.c.l.s4 1966171168
        %v2206 = vunpack.c.0.s8 %v2205
        %v2207 = vlaneseq
        %v2208 = vshrl.u32 %v2207, 7
        %v2209 = vsub.s32 %v2206, %v2208
        %v2210 = vrot.slane %v2188, %v2209
        %v2212 = vunpack.c.l.s4 1966171168
        %v2213 = vunpack.c.0.s8 %v2212
        %v2214 = vlaneseq
        %v2215 = vshrl.u32 %v2214, 7
        %v2216 = vsub.s32 %v2213, %v2215
        %v2217 = vrot.slane %v2189, %v2216
        %v2218 = vcombine.high %v2196, %v2196
        %v2219 = vcombine.high %v2203, %v2203
        %v2220 = vcombine.high %v2210, %v2210
        %v2221 = vcombine.high %v2217, %v2217
        %v2222 = vcombine.high %v302, %v302
        %v2224 = vunpack.c.l.s4 1966171168
        %v2225 = vunpack.c.0.s8 %v2224
        %v2226 = vlaneseq
        %v2227 = vshrl.u32 %v2226, 7
        %v2228 = vsub.s32 %v2225, %v2227
        %v2229 = vrot.slane %v302, %v2228
        %v2231 = vunpack.c.l.s4 1966171168
        %v2232 = vunpack.c.0.s8 %v2231
        %v2233 = vlaneseq
        %v2234 = vshrl.u32 %v2233, 7
        %v2235 = vsub.s32 %v2232, %v2234
        %v2236 = vrot.slane %v2222, %v2235
        %v2237 = vcombine.high %v2229, %v2229
        %v2238 = vcombine.high %v2236, %v2236
        %v2240 = vunpack.c.l.s4 1966171168
        %v2241 = vunpack.c.0.s8 %v2240
        %v2242 = vlaneseq
        %v2243 = vshrl.u32 %v2242, 7
        %v2244 = vsub.s32 %v2241, %v2243
        %v2245 = vrot.slane %v2229, %v2244
        %v2247 = vunpack.c.l.s4 1966171168
        %v2248 = vunpack.c.0.s8 %v2247
        %v2249 = vlaneseq
        %v2250 = vshrl.u32 %v2249, 7
        %v2251 = vsub.s32 %v2248, %v2250
        %v2252 = vrot.slane %v2236, %v2251
        %v2254 = vunpack.c.l.s4 1966171168
        %v2255 = vunpack.c.0.s8 %v2254
        %v2256 = vlaneseq
        %v2257 = vshrl.u32 %v2256, 7
        %v2258 = vsub.s32 %v2255, %v2257
        %v2259 = vrot.slane %v2237, %v2258
        %v2261 = vunpack.c.l.s4 1966171168
        %v2262 = vunpack.c.0.s8 %v2261
        %v2263 = vlaneseq
        %v2264 = vshrl.u32 %v2263, 7
        %v2265 = vsub.s32 %v2262, %v2264
        %v2266 = vrot.slane %v2238, %v2265
        %v2267 = vcombine.high %v2245, %v2245
        %v2268 = vcombine.high %v2252, %v2252
        %v2269 = vcombine.high %v2259, %v2259
        %v2270 = vcombine.high %v2266, %v2266
        %v2271 = vcombine.high %v303, %v303
        %v2273 = vunpack.c.l.s4 1966171168
        %v2274 = vunpack.c.0.s8 %v2273
        %v2275 = vlaneseq
        %v2276 = vshrl.u32 %v2275, 7
        %v2277 = vsub.s32 %v2274, %v2276
        %v2278 = vrot.slane %v303, %v2277
        %v2280 = vunpack.c.l.s4 1966171168
        %v2281 = vunpack.c.0.s8 %v2280
        %v2282 = vlaneseq
        %v2283 = vshrl.u32 %v2282, 7
        %v2284 = vsub.s32 %v2281, %v2283
        %v2285 = vrot.slane %v2271, %v2284
        %v2286 = vcombine.high %v2278, %v2278
        %v2287 = vcombine.high %v2285, %v2285
        %v2289 = vunpack.c.l.s4 1966171168
        %v2290 = vunpack.c.0.s8 %v2289
        %v2291 = vlaneseq
        %v2292 = vshrl.u32 %v2291, 7
        %v2293 = vsub.s32 %v2290, %v2292
        %v2294 = vrot.slane %v2278, %v2293
        %v2296 = vunpack.c.l.s4 1966171168
        %v2297 = vunpack.c.0.s8 %v2296
        %v2298 = vlaneseq
        %v2299 = vshrl.u32 %v2298, 7
        %v2300 = vsub.s32 %v2297, %v2299
        %v2301 = vrot.slane %v2285, %v2300
        %v2303 = vunpack.c.l.s4 1966171168
        %v2304 = vunpack.c.0.s8 %v2303
        %v2305 = vlaneseq
        %v2306 = vshrl.u32 %v2305, 7
        %v2307 = vsub.s32 %v2304, %v2306
        %v2308 = vrot.slane %v2286, %v2307
        %v2310 = vunpack.c.l.s4 1966171168
        %v2311 = vunpack.c.0.s8 %v2310
        %v2312 = vlaneseq
        %v2313 = vshrl.u32 %v2312, 7
        %v2314 = vsub.s32 %v2311, %v2313
        %v2315 = vrot.slane %v2287, %v2314
        %v2316 = vcombine.high %v2294, %v2294
        %v2317 = vcombine.high %v2301, %v2301
        %v2318 = vcombine.high %v2308, %v2308
        %v2319 = vcombine.high %v2315, %v2315
        %v2320 = vcombine.high %v304, %v304
        %v2322 = vunpack.c.l.s4 1966171168
        %v2323 = vunpack.c.0.s8 %v2322
        %v2324 = vlaneseq
        %v2325 = vshrl.u32 %v2324, 7
        %v2326 = vsub.s32 %v2323, %v2325
        %v2327 = vrot.slane %v304, %v2326
        %v2329 = vunpack.c.l.s4 1966171168
        %v2330 = vunpack.c.0.s8 %v2329
        %v2331 = vlaneseq
        %v2332 = vshrl.u32 %v2331, 7
        %v2333 = vsub.s32 %v2330, %v2332
        %v2334 = vrot.slane %v2320, %v2333
        %v2335 = vcombine.high %v2327, %v2327
        %v2336 = vcombine.high %v2334, %v2334
        %v2338 = vunpack.c.l.s4 1966171168
        %v2339 = vunpack.c.0.s8 %v2338
        %v2340 = vlaneseq
        %v2341 = vshrl.u32 %v2340, 7
        %v2342 = vsub.s32 %v2339, %v2341
        %v2343 = vrot.slane %v2327, %v2342
        %v2345 = vunpack.c.l.s4 1966171168
        %v2346 = vunpack.c.0.s8 %v2345
        %v2347 = vlaneseq
        %v2348 = vshrl.u32 %v2347, 7
        %v2349 = vsub.s32 %v2346, %v2348
        %v2350 = vrot.slane %v2334, %v2349
        %v2352 = vunpack.c.l.s4 1966171168
        %v2353 = vunpack.c.0.s8 %v2352
        %v2354 = vlaneseq
        %v2355 = vshrl.u32 %v2354, 7
        %v2356 = vsub.s32 %v2353, %v2355
        %v2357 = vrot.slane %v2335, %v2356
        %v2359 = vunpack.c.l.s4 1966171168
        %v2360 = vunpack.c.0.s8 %v2359
        %v2361 = vlaneseq
        %v2362 = vshrl.u32 %v2361, 7
        %v2363 = vsub.s32 %v2360, %v2362
        %v2364 = vrot.slane %v2336, %v2363
        %v2365 = vcombine.high %v2343, %v2343
        %v2366 = vcombine.high %v2350, %v2350
        %v2367 = vcombine.high %v2357, %v2357
        %v2368 = vcombine.high %v2364, %v2364
        %v2369 = vcombine.high %v305, %v305
        %v2371 = vunpack.c.l.s4 1966171168
        %v2372 = vunpack.c.0.s8 %v2371
        %v2373 = vlaneseq
        %v2374 = vshrl.u32 %v2373, 7
        %v2375 = vsub.s32 %v2372, %v2374
        %v2376 = vrot.slane %v305, %v2375
        %v2378 = vunpack.c.l.s4 1966171168
        %v2379 = vunpack.c.0.s8 %v2378
        %v2380 = vlaneseq
        %v2381 = vshrl.u32 %v2380, 7
        %v2382 = vsub.s32 %v2379, %v2381
        %v2383 = vrot.slane %v2369, %v2382
        %v2384 = vcombine.high %v2376, %v2376
        %v2385 = vcombine.high %v2383, %v2383
        %v2387 = vunpack.c.l.s4 1966171168
        %v2388 = vunpack.c.0.s8 %v2387
        %v2389 = vlaneseq
        %v2390 = vshrl.u32 %v2389, 7
        %v2391 = vsub.s32 %v2388, %v2390
        %v2392 = vrot.slane %v2376, %v2391
        %v2394 = vunpack.c.l.s4 1966171168
        %v2395 = vunpack.c.0.s8 %v2394
        %v2396 = vlaneseq
        %v2397 = vshrl.u32 %v2396, 7
        %v2398 = vsub.s32 %v2395, %v2397
        %v2399 = vrot.slane %v2383, %v2398
        %v2401 = vunpack.c.l.s4 1966171168
        %v2402 = vunpack.c.0.s8 %v2401
        %v2403 = vlaneseq
        %v2404 = vshrl.u32 %v2403, 7
        %v2405 = vsub.s32 %v2402, %v2404
        %v2406 = vrot.slane %v2384, %v2405
        %v2408 = vunpack.c.l.s4 1966171168
        %v2409 = vunpack.c.0.s8 %v2408
        %v2410 = vlaneseq
        %v2411 = vshrl.u32 %v2410, 7
        %v2412 = vsub.s32 %v2409, %v2411
        %v2413 = vrot.slane %v2385, %v2412
        %v2414 = vcombine.high %v2392, %v2392
        %v2415 = vcombine.high %v2399, %v2399
        %v2416 = vcombine.high %v2406, %v2406
        %v2417 = vcombine.high %v2413, %v2413
        %v3186 = vunpack.c.l.b16 %v306
        %v3187 = vunpack.c.h.b16 %v306
        %v3188 = vunpack.c.l.b16 %v307
        %v3189 = vunpack.c.h.b16 %v307
        %v3190 = vunpack.c.l.b16 %v308
        %v3191 = vunpack.c.h.b16 %v308
        %v3192 = vunpack.c.l.b16 %v309
        %v3193 = vunpack.c.h.b16 %v309
        %v3194 = vunpack.c.l.b16 %v310
        %v3195 = vunpack.c.h.b16 %v310
        %v3196 = vunpack.c.l.b16 %v311
        %v3197 = vunpack.c.h.b16 %v311
        %v3198 = vunpack.c.l.b16 %v312
        %v3199 = vunpack.c.h.b16 %v312
        %v3200 = vunpack.c.l.b16 %v313
        %v3201 = vunpack.c.h.b16 %v313
        %v3202 = vunpack.c.l.b16 %v314
        %v3203 = vunpack.c.h.b16 %v314
        %v3204 = vunpack.c.l.b16 %v315
        %v3205 = vunpack.c.h.b16 %v315
        %v3206 = vunpack.c.l.b16 %v316
        %v3207 = vunpack.c.h.b16 %v316
        %v3208 = vunpack.c.l.b16 %v317
        %v3209 = vunpack.c.h.b16 %v317
        %v3210 = vunpack.c.l.b16 %v318
        %v3211 = vunpack.c.h.b16 %v318
        %v3212 = vunpack.c.l.b16 %v319
        %v3213 = vunpack.c.h.b16 %v319
        %v3214 = vunpack.c.l.b16 %v320
        %v3215 = vunpack.c.h.b16 %v320
        %v3216 = vunpack.c.l.b16 %v321
        %v3217 = vunpack.c.h.b16 %v321
        %v3218 = vunpack.c.l.b16 %v322
        %v3219 = vunpack.c.h.b16 %v322
        %v3220 = vunpack.c.l.b16 %v323
        %v3221 = vunpack.c.h.b16 %v323
        %v3222 = vunpack.c.l.b16 %v324
        %v3223 = vunpack.c.h.b16 %v324
        %v3224 = vunpack.c.l.b16 %v325
        %v3225 = vunpack.c.h.b16 %v325
        %v3226 = vunpack.c.l.b16 %v326
        %v3227 = vunpack.c.h.b16 %v326
        %v3228 = vunpack.c.l.b16 %v327
        %v3229 = vunpack.c.h.b16 %v327
        %v3230 = vunpack.c.l.b16 %v328
        %v3231 = vunpack.c.h.b16 %v328
        %v3232 = vunpack.c.l.b16 %v329
        %v3233 = vunpack.c.h.b16 %v329
        %v3234 = vunpack.c.l.b16 %v330
        %v3235 = vunpack.c.h.b16 %v330
        %v3236 = vunpack.c.l.b16 %v331
        %v3237 = vunpack.c.h.b16 %v331
        %v3238 = vunpack.c.l.b16 %v332
        %v3239 = vunpack.c.h.b16 %v332
        %v3240 = vunpack.c.l.b16 %v333
        %v3241 = vunpack.c.h.b16 %v333
        %v3242 = vunpack.c.l.b16 %v334
        %v3243 = vunpack.c.h.b16 %v334
        %v3244 = vunpack.c.l.b16 %v335
        %v3245 = vunpack.c.h.b16 %v335
        %v3246 = vunpack.c.l.b16 %v336
        %v3247 = vunpack.c.h.b16 %v336
        %v3248 = vunpack.c.l.b16 %v337
        %v3249 = vunpack.c.h.b16 %v337
        %v3250 = vunpack.c.l.b16 %v338
        %v3251 = vunpack.c.h.b16 %v338
        %v3252 = vunpack.c.l.b16 %v339
        %v3253 = vunpack.c.h.b16 %v339
        %v3254 = vunpack.c.l.b16 %v340
        %v3255 = vunpack.c.h.b16 %v340
        %v3256 = vunpack.c.l.b16 %v341
        %v3257 = vunpack.c.h.b16 %v341
        %v3258 = vunpack.c.l.b16 %v342
        %v3259 = vunpack.c.h.b16 %v342
        %v3260 = vunpack.c.l.b16 %v343
        %v3261 = vunpack.c.h.b16 %v343
        %v3262 = vunpack.c.l.b16 %v344
        %v3263 = vunpack.c.h.b16 %v344
        %v3264 = vunpack.c.l.b16 %v345
        %v3265 = vunpack.c.h.b16 %v345
        %v3266 = vunpack.c.l.b16 %v346
        %v3267 = vunpack.c.h.b16 %v346
        %v3268 = vunpack.c.l.b16 %v347
        %v3269 = vunpack.c.h.b16 %v347
        %v3270 = vunpack.c.l.b16 %v348
        %v3271 = vunpack.c.h.b16 %v348
        %v3272 = vunpack.c.l.b16 %v349
        %v3273 = vunpack.c.h.b16 %v349
        %v3274 = vunpack.c.l.b16 %v350
        %v3275 = vunpack.c.h.b16 %v350
        %v3276 = vunpack.c.l.b16 %v351
        %v3277 = vunpack.c.h.b16 %v351
        %v3278 = vunpack.c.l.b16 %v352
        %v3279 = vunpack.c.h.b16 %v352
        %v3280 = vunpack.c.l.b16 %v353
        %v3281 = vunpack.c.h.b16 %v353
        %v3282 = vunpack.c.l.b16 %v354
        %v3283 = vunpack.c.h.b16 %v354
        %v3284 = vunpack.c.l.b16 %v355
        %v3285 = vunpack.c.h.b16 %v355
        %v3286 = vunpack.c.l.b16 %v356
        %v3287 = vunpack.c.h.b16 %v356
        %v3288 = vunpack.c.l.b16 %v357
        %v3289 = vunpack.c.h.b16 %v357
        %v3290 = vunpack.c.l.b16 %v358
        %v3291 = vunpack.c.h.b16 %v358
        %v3292 = vunpack.c.l.b16 %v359
        %v3293 = vunpack.c.h.b16 %v359
        %v3294 = vunpack.c.l.b16 %v360
        %v3295 = vunpack.c.h.b16 %v360
        %v3296 = vunpack.c.l.b16 %v361
        %v3297 = vunpack.c.h.b16 %v361
        %v3298 = vunpack.c.l.b16 %v362
        %v3299 = vunpack.c.h.b16 %v362
        %v3300 = vunpack.c.l.b16 %v363
        %v3301 = vunpack.c.h.b16 %v363
        %v3302 = vunpack.c.l.b16 %v364
        %v3303 = vunpack.c.h.b16 %v364
        %v3304 = vunpack.c.l.b16 %v365
        %v3305 = vunpack.c.h.b16 %v365
        %v3306 = vunpack.c.l.b16 %v366
        %v3307 = vunpack.c.h.b16 %v366
        %v3308 = vunpack.c.l.b16 %v367
        %v3309 = vunpack.c.h.b16 %v367
        %v3310 = vunpack.c.l.b16 %v368
        %v3311 = vunpack.c.h.b16 %v368
        %v3312 = vunpack.c.l.b16 %v369
        %v3313 = vunpack.c.h.b16 %v369
        %v3314 = vunpack.c.l.b16 %v370
        %v3315 = vunpack.c.h.b16 %v370
        %v3316 = vunpack.c.l.b16 %v371
        %v3317 = vunpack.c.h.b16 %v371
        %v3318 = vunpack.c.l.b16 %v372
        %v3319 = vunpack.c.h.b16 %v372
        %v3320 = vunpack.c.l.b16 %v373
        %v3321 = vunpack.c.h.b16 %v373
        %v3322 = vunpack.c.l.b16 %v374
        %v3323 = vunpack.c.h.b16 %v374
        %v3324 = vunpack.c.l.b16 %v375
        %v3325 = vunpack.c.h.b16 %v375
        %v3326 = vunpack.c.l.b16 %v376
        %v3327 = vunpack.c.h.b16 %v376
        %v3328 = vunpack.c.l.b16 %v377
        %v3329 = vunpack.c.h.b16 %v377
        %v3330 = vunpack.c.l.b16 %v378
        %v3331 = vunpack.c.h.b16 %v378
        %v3332 = vunpack.c.l.b16 %v379
        %v3333 = vunpack.c.h.b16 %v379
        %v3334 = vunpack.c.l.b16 %v380
        %v3335 = vunpack.c.h.b16 %v380
        %v3336 = vunpack.c.l.b16 %v381
        %v3337 = vunpack.c.h.b16 %v381
        %v3338 = vunpack.c.l.b16 %v382
        %v3339 = vunpack.c.h.b16 %v382
        %v3340 = vunpack.c.l.b16 %v383
        %v3341 = vunpack.c.h.b16 %v383
        %v3342 = vunpack.c.l.b16 %v384
        %v3343 = vunpack.c.h.b16 %v384
        %v3344 = vunpack.c.l.b16 %v385
        %v3345 = vunpack.c.h.b16 %v385
        %v3346 = vunpack.c.l.b16 %v386
        %v3347 = vunpack.c.h.b16 %v386
        %v3348 = vunpack.c.l.b16 %v387
        %v3349 = vunpack.c.h.b16 %v387
        %v3350 = vunpack.c.l.b16 %v388
        %v3351 = vunpack.c.h.b16 %v388
        %v3352 = vunpack.c.l.b16 %v389
        %v3353 = vunpack.c.h.b16 %v389
        %v3354 = vunpack.c.l.b16 %v390
        %v3355 = vunpack.c.h.b16 %v390
        %v3356 = vunpack.c.l.b16 %v391
        %v3357 = vunpack.c.h.b16 %v391
        %v3358 = vunpack.c.l.b16 %v392
        %v3359 = vunpack.c.h.b16 %v392
        %v3360 = vunpack.c.l.b16 %v393
        %v3361 = vunpack.c.h.b16 %v393
        %v3362 = vunpack.c.l.b16 %v394
        %v3363 = vunpack.c.h.b16 %v394
        %v3364 = vunpack.c.l.b16 %v395
        %v3365 = vunpack.c.h.b16 %v395
        %v3366 = vunpack.c.l.b16 %v396
        %v3367 = vunpack.c.h.b16 %v396
        %v3368 = vunpack.c.l.b16 %v397
        %v3369 = vunpack.c.h.b16 %v397
        %v3370 = vunpack.c.l.b16 %v398
        %v3371 = vunpack.c.h.b16 %v398
        %v3372 = vunpack.c.l.b16 %v399
        %v3373 = vunpack.c.h.b16 %v399
        %v3374 = vunpack.c.l.b16 %v400
        %v3375 = vunpack.c.h.b16 %v400
        %v3376 = vunpack.c.l.b16 %v401
        %v3377 = vunpack.c.h.b16 %v401
        %v3378 = vunpack.c.l.b16 %v402
        %v3379 = vunpack.c.h.b16 %v402
        %v3380 = vunpack.c.l.b16 %v403
        %v3381 = vunpack.c.h.b16 %v403
        %v3382 = vunpack.c.l.b16 %v404
        %v3383 = vunpack.c.h.b16 %v404
        %v3384 = vunpack.c.l.b16 %v405
        %v3385 = vunpack.c.h.b16 %v405
        %v3386 = vunpack.c.l.b16 %v406
        %v3387 = vunpack.c.h.b16 %v406
        %v3388 = vunpack.c.l.b16 %v407
        %v3389 = vunpack.c.h.b16 %v407
        %v3390 = vunpack.c.l.b16 %v408
        %v3391 = vunpack.c.h.b16 %v408
        %v3392 = vunpack.c.l.b16 %v409
        %v3393 = vunpack.c.h.b16 %v409
        %v3394 = vunpack.c.l.b16 %v410
        %v3395 = vunpack.c.h.b16 %v410
        %v3396 = vunpack.c.l.b16 %v411
        %v3397 = vunpack.c.h.b16 %v411
        %v3398 = vunpack.c.l.b16 %v412
        %v3399 = vunpack.c.h.b16 %v412
        %v3400 = vunpack.c.l.b16 %v413
        %v3401 = vunpack.c.h.b16 %v413
        %v3402 = vunpack.c.l.b16 %v414
        %v3403 = vunpack.c.h.b16 %v414
        %v3404 = vunpack.c.l.b16 %v415
        %v3405 = vunpack.c.h.b16 %v415
        %v3406 = vunpack.c.l.b16 %v416
        %v3407 = vunpack.c.h.b16 %v416
        %v3408 = vunpack.c.l.b16 %v417
        %v3409 = vunpack.c.h.b16 %v417
        %v3410 = vunpack.c.l.b16 %v418
        %v3411 = vunpack.c.h.b16 %v418
        %v3412 = vunpack.c.l.b16 %v419
        %v3413 = vunpack.c.h.b16 %v419
        %v3414 = vunpack.c.l.b16 %v420
        %v3415 = vunpack.c.h.b16 %v420
        %v3416 = vunpack.c.l.b16 %v421
        %v3417 = vunpack.c.h.b16 %v421
        %v3418 = vunpack.c.l.b16 %v422
        %v3419 = vunpack.c.h.b16 %v422
        %v3420 = vunpack.c.l.b16 %v423
        %v3421 = vunpack.c.h.b16 %v423
        %v3422 = vunpack.c.l.b16 %v424
        %v3423 = vunpack.c.h.b16 %v424
        %v3424 = vunpack.c.l.b16 %v425
        %v3425 = vunpack.c.h.b16 %v425
        %v3426 = vunpack.c.l.b16 %v426
        %v3427 = vunpack.c.h.b16 %v426
        %v3428 = vunpack.c.l.b16 %v427
        %v3429 = vunpack.c.h.b16 %v427
        %v3430 = vunpack.c.l.b16 %v428
        %v3431 = vunpack.c.h.b16 %v428
        %v3432 = vunpack.c.l.b16 %v429
        %v3433 = vunpack.c.h.b16 %v429
        %v3434 = vunpack.c.l.b16 %v430
        %v3435 = vunpack.c.h.b16 %v430
        %v3436 = vunpack.c.l.b16 %v431
        %v3437 = vunpack.c.h.b16 %v431
        %v3438 = vunpack.c.l.b16 %v432
        %v3439 = vunpack.c.h.b16 %v432
        %v3440 = vunpack.c.l.b16 %v433
        %v3441 = vunpack.c.h.b16 %v433
        %v3442 = vunpack.c.l.b16 %v434
        %v3443 = vunpack.c.h.b16 %v434
        %v3444 = vunpack.c.l.b16 %v435
        %v3445 = vunpack.c.h.b16 %v435
        %v3446 = vunpack.c.l.b16 %v436
        %v3447 = vunpack.c.h.b16 %v436
        %v3448 = vunpack.c.l.b16 %v437
        %v3449 = vunpack.c.h.b16 %v437
        %v3450 = vunpack.c.l.b16 %v438
        %v3451 = vunpack.c.h.b16 %v438
        %v3452 = vunpack.c.l.b16 %v439
        %v3453 = vunpack.c.h.b16 %v439
        %v3454 = vunpack.c.l.b16 %v440
        %v3455 = vunpack.c.h.b16 %v440
        %v3456 = vunpack.c.l.b16 %v441
        %v3457 = vunpack.c.h.b16 %v441
        %v3458 = vunpack.c.l.b16 %v442
        %v3459 = vunpack.c.h.b16 %v442
        %v3460 = vunpack.c.l.b16 %v443
        %v3461 = vunpack.c.h.b16 %v443
        %v3462 = vunpack.c.l.b16 %v444
        %v3463 = vunpack.c.h.b16 %v444
        %v3464 = vunpack.c.l.b16 %v445
        %v3465 = vunpack.c.h.b16 %v445
        %v3466 = vunpack.c.l.b16 %v446
        %v3467 = vunpack.c.h.b16 %v446
        %v3468 = vunpack.c.l.b16 %v447
        %v3469 = vunpack.c.h.b16 %v447
        %v3470 = vunpack.c.l.b16 %v448
        %v3471 = vunpack.c.h.b16 %v448
        %v3472 = vunpack.c.l.b16 %v449
        %v3473 = vunpack.c.h.b16 %v449
        %v3474 = vunpack.c.l.b16 %v450
        %v3475 = vunpack.c.h.b16 %v450
        %v3476 = vunpack.c.l.b16 %v451
        %v3477 = vunpack.c.h.b16 %v451
        %v3478 = vunpack.c.l.b16 %v452
        %v3479 = vunpack.c.h.b16 %v452
        %v3480 = vunpack.c.l.b16 %v453
        %v3481 = vunpack.c.h.b16 %v453
        %v3482 = vunpack.c.l.b16 %v454
        %v3483 = vunpack.c.h.b16 %v454
        %v3484 = vunpack.c.l.b16 %v455
        %v3485 = vunpack.c.h.b16 %v455
        %v3486 = vunpack.c.l.b16 %v456
        %v3487 = vunpack.c.h.b16 %v456
        %v3488 = vunpack.c.l.b16 %v457
        %v3489 = vunpack.c.h.b16 %v457
        %v3490 = vunpack.c.l.b16 %v458
        %v3491 = vunpack.c.h.b16 %v458
        %v3492 = vunpack.c.l.b16 %v459
        %v3493 = vunpack.c.h.b16 %v459
        %v3494 = vunpack.c.l.b16 %v460
        %v3495 = vunpack.c.h.b16 %v460
        %v3496 = vunpack.c.l.b16 %v461
        %v3497 = vunpack.c.h.b16 %v461
        %v3498 = vunpack.c.l.b16 %v462
        %v3499 = vunpack.c.h.b16 %v462
        %v3500 = vunpack.c.l.b16 %v463
        %v3501 = vunpack.c.h.b16 %v463
        %v3502 = vunpack.c.l.b16 %v464
        %v3503 = vunpack.c.h.b16 %v464
        %v3504 = vunpack.c.l.b16 %v465
        %v3505 = vunpack.c.h.b16 %v465
        %v3506 = vunpack.c.l.b16 %v466
        %v3507 = vunpack.c.h.b16 %v466
        %v3508 = vunpack.c.l.b16 %v467
        %v3509 = vunpack.c.h.b16 %v467
        %v3510 = vunpack.c.l.b16 %v468
        %v3511 = vunpack.c.h.b16 %v468
        %v3512 = vunpack.c.l.b16 %v469
        %v3513 = vunpack.c.h.b16 %v469
        %v3514 = vunpack.c.l.b16 %v470
        %v3515 = vunpack.c.h.b16 %v470
        %v3516 = vunpack.c.l.b16 %v471
        %v3517 = vunpack.c.h.b16 %v471
        %v3518 = vunpack.c.l.b16 %v472
        %v3519 = vunpack.c.h.b16 %v472
        %v3520 = vunpack.c.l.b16 %v473
        %v3521 = vunpack.c.h.b16 %v473
        %v3522 = vunpack.c.l.b16 %v474
        %v3523 = vunpack.c.h.b16 %v474
        %v3524 = vunpack.c.l.b16 %v475
        %v3525 = vunpack.c.h.b16 %v475
        %v3526 = vunpack.c.l.b16 %v476
        %v3527 = vunpack.c.h.b16 %v476
        %v3528 = vunpack.c.l.b16 %v477
        %v3529 = vunpack.c.h.b16 %v477
        %v3530 = vunpack.c.l.b16 %v478
        %v3531 = vunpack.c.h.b16 %v478
        %v3532 = vunpack.c.l.b16 %v479
        %v3533 = vunpack.c.h.b16 %v479
        %v3534 = vunpack.c.l.b16 %v480
        %v3535 = vunpack.c.h.b16 %v480
        %v3536 = vunpack.c.l.b16 %v481
        %v3537 = vunpack.c.h.b16 %v481
        %v3538 = vunpack.c.l.b16 %v482
        %v3539 = vunpack.c.h.b16 %v482
        %v3540 = vunpack.c.l.b16 %v483
        %v3541 = vunpack.c.h.b16 %v483
        %v3542 = vunpack.c.l.b16 %v484
        %v3543 = vunpack.c.h.b16 %v484
        %v3544 = vunpack.c.l.b16 %v485
        %v3545 = vunpack.c.h.b16 %v485
        %v3546 = vunpack.c.l.b16 %v486
        %v3547 = vunpack.c.h.b16 %v486
        %v3548 = vunpack.c.l.b16 %v487
        %v3549 = vunpack.c.h.b16 %v487
        %v3550 = vunpack.c.l.b16 %v488
        %v3551 = vunpack.c.h.b16 %v488
        %v3552 = vunpack.c.l.b16 %v489
        %v3553 = vunpack.c.h.b16 %v489
        %v3554 = vunpack.c.l.b16 %v490
        %v3555 = vunpack.c.h.b16 %v490
        %v3556 = vunpack.c.l.b16 %v491
        %v3557 = vunpack.c.h.b16 %v491
        %v3558 = vunpack.c.l.b16 %v492
        %v3559 = vunpack.c.h.b16 %v492
        %v3560 = vunpack.c.l.b16 %v493
        %v3561 = vunpack.c.h.b16 %v493
        %v3562 = vunpack.c.l.b16 %v494
        %v3563 = vunpack.c.h.b16 %v494
        %v3564 = vunpack.c.l.b16 %v495
        %v3565 = vunpack.c.h.b16 %v495
        %v3566 = vunpack.c.l.b16 %v496
        %v3567 = vunpack.c.h.b16 %v496
        %v3568 = vunpack.c.l.b16 %v497
        %v3569 = vunpack.c.h.b16 %v497
        %v3570 = vunpack.c.l.b16 %v498
        %v3571 = vunpack.c.h.b16 %v498
        %v3572 = vunpack.c.l.b16 %v499
        %v3573 = vunpack.c.h.b16 %v499
        %v3574 = vunpack.c.l.b16 %v500
        %v3575 = vunpack.c.h.b16 %v500
        %v3576 = vunpack.c.l.b16 %v501
        %v3577 = vunpack.c.h.b16 %v501
        %v3578 = vunpack.c.l.b16 %v502
        %v3579 = vunpack.c.h.b16 %v502
        %v3580 = vunpack.c.l.b16 %v503
        %v3581 = vunpack.c.h.b16 %v503
        %v3582 = vunpack.c.l.b16 %v504
        %v3583 = vunpack.c.h.b16 %v504
        %v3584 = vunpack.c.l.b16 %v505
        %v3585 = vunpack.c.h.b16 %v505
        %v3586 = vunpack.c.l.b16 %v506
        %v3587 = vunpack.c.h.b16 %v506
        %v3588 = vunpack.c.l.b16 %v507
        %v3589 = vunpack.c.h.b16 %v507
        %v3590 = vunpack.c.l.b16 %v508
        %v3591 = vunpack.c.h.b16 %v508
        %v3592 = vunpack.c.l.b16 %v509
        %v3593 = vunpack.c.h.b16 %v509
        %v3594 = vunpack.c.l.b16 %v510
        %v3595 = vunpack.c.h.b16 %v510
        %v3596 = vunpack.c.l.b16 %v511
        %v3597 = vunpack.c.h.b16 %v511
        %v3598 = vunpack.c.l.b16 %v512
        %v3599 = vunpack.c.h.b16 %v512
        %v3600 = vunpack.c.l.b16 %v513
        %v3601 = vunpack.c.h.b16 %v513
        %v3602 = vunpack.c.l.b16 %v514
        %v3603 = vunpack.c.h.b16 %v514
        %v3604 = vunpack.c.l.b16 %v515
        %v3605 = vunpack.c.h.b16 %v515
        %v3606 = vunpack.c.l.b16 %v516
        %v3607 = vunpack.c.h.b16 %v516
        %v3608 = vunpack.c.l.b16 %v517
        %v3609 = vunpack.c.h.b16 %v517
        %v3610 = vunpack.c.l.b16 %v518
        %v3611 = vunpack.c.h.b16 %v518
        %v3612 = vunpack.c.l.b16 %v519
        %v3613 = vunpack.c.h.b16 %v519
        %v3614 = vunpack.c.l.b16 %v520
        %v3615 = vunpack.c.h.b16 %v520
        %v3616 = vunpack.c.l.b16 %v521
        %v3617 = vunpack.c.h.b16 %v521
        %v3618 = vunpack.c.l.b16 %v522
        %v3619 = vunpack.c.h.b16 %v522
        %v3620 = vunpack.c.l.b16 %v523
        %v3621 = vunpack.c.h.b16 %v523
        %v3622 = vunpack.c.l.b16 %v524
        %v3623 = vunpack.c.h.b16 %v524
        %v3624 = vunpack.c.l.b16 %v525
        %v3625 = vunpack.c.h.b16 %v525
        %v3626 = vunpack.c.l.b16 %v526
        %v3627 = vunpack.c.h.b16 %v526
        %v3628 = vunpack.c.l.b16 %v527
        %v3629 = vunpack.c.h.b16 %v527
        %v3630 = vunpack.c.l.b16 %v528
        %v3631 = vunpack.c.h.b16 %v528
        %v3632 = vunpack.c.l.b16 %v529
        %v3633 = vunpack.c.h.b16 %v529
        %v3634 = vunpack.c.l.b16 %v530
        %v3635 = vunpack.c.h.b16 %v530
        %v3636 = vunpack.c.l.b16 %v531
        %v3637 = vunpack.c.h.b16 %v531
        %v3638 = vunpack.c.l.b16 %v532
        %v3639 = vunpack.c.h.b16 %v532
        %v3640 = vunpack.c.l.b16 %v533
        %v3641 = vunpack.c.h.b16 %v533
        %v3642 = vunpack.c.l.b16 %v534
        %v3643 = vunpack.c.h.b16 %v534
        %v3644 = vunpack.c.l.b16 %v535
        %v3645 = vunpack.c.h.b16 %v535
        %v3646 = vunpack.c.l.b16 %v536
        %v3647 = vunpack.c.h.b16 %v536
        %v3648 = vunpack.c.l.b16 %v537
        %v3649 = vunpack.c.h.b16 %v537
        %v3650 = vunpack.c.l.b16 %v538
        %v3651 = vunpack.c.h.b16 %v538
        %v3652 = vunpack.c.l.b16 %v539
        %v3653 = vunpack.c.h.b16 %v539
        %v3654 = vunpack.c.l.b16 %v540
        %v3655 = vunpack.c.h.b16 %v540
        %v3656 = vunpack.c.l.b16 %v541
        %v3657 = vunpack.c.h.b16 %v541
        %v3658 = vunpack.c.l.b16 %v542
        %v3659 = vunpack.c.h.b16 %v542
        %v3660 = vunpack.c.l.b16 %v543
        %v3661 = vunpack.c.h.b16 %v543
        %v3662 = vunpack.c.l.b16 %v544
        %v3663 = vunpack.c.h.b16 %v544
        %v3664 = vunpack.c.l.b16 %v545
        %v3665 = vunpack.c.h.b16 %v545
        %v3666 = vunpack.c.l.b16 %v546
        %v3667 = vunpack.c.h.b16 %v546
        %v3668 = vunpack.c.l.b16 %v547
        %v3669 = vunpack.c.h.b16 %v547
        %v3670 = vunpack.c.l.b16 %v548
        %v3671 = vunpack.c.h.b16 %v548
        %v3672 = vunpack.c.l.b16 %v549
        %v3673 = vunpack.c.h.b16 %v549
        %v3674 = vunpack.c.l.b16 %v550
        %v3675 = vunpack.c.h.b16 %v550
        %v3676 = vunpack.c.l.b16 %v551
        %v3677 = vunpack.c.h.b16 %v551
        %v3678 = vunpack.c.l.b16 %v552
        %v3679 = vunpack.c.h.b16 %v552
        %v3680 = vunpack.c.l.b16 %v553
        %v3681 = vunpack.c.h.b16 %v553
        %v3682 = vunpack.c.l.b16 %v554
        %v3683 = vunpack.c.h.b16 %v554
        %v3684 = vunpack.c.l.b16 %v555
        %v3685 = vunpack.c.h.b16 %v555
        %v3686 = vunpack.c.l.b16 %v556
        %v3687 = vunpack.c.h.b16 %v556
        %v3688 = vunpack.c.l.b16 %v557
        %v3689 = vunpack.c.h.b16 %v557
        %v3690 = vunpack.c.l.b16 %v558
        %v3691 = vunpack.c.h.b16 %v558
        %v3692 = vunpack.c.l.b16 %v559
        %v3693 = vunpack.c.h.b16 %v559
        %v3694 = vunpack.c.l.b16 %v560
        %v3695 = vunpack.c.h.b16 %v560
        %v3696 = vunpack.c.l.b16 %v561
        %v3697 = vunpack.c.h.b16 %v561
        %v3698 = vunpack.c.l.b16 %v562
        %v3699 = vunpack.c.h.b16 %v562
        %v3700 = vunpack.c.l.b16 %v563
        %v3701 = vunpack.c.h.b16 %v563
        %v3702 = vunpack.c.l.b16 %v564
        %v3703 = vunpack.c.h.b16 %v564
        %v3704 = vunpack.c.l.b16 %v565
        %v3705 = vunpack.c.h.b16 %v565
        %v3706 = vunpack.c.l.b16 %v566
        %v3707 = vunpack.c.h.b16 %v566
        %v3708 = vunpack.c.l.b16 %v567
        %v3709 = vunpack.c.h.b16 %v567
        %v3710 = vunpack.c.l.b16 %v568
        %v3711 = vunpack.c.h.b16 %v568
        %v3712 = vunpack.c.l.b16 %v569
        %v3713 = vunpack.c.h.b16 %v569
        %v3714 = vunpack.c.l.b16 %v570
        %v3715 = vunpack.c.h.b16 %v570
        %v3716 = vunpack.c.l.b16 %v571
        %v3717 = vunpack.c.h.b16 %v571
        %v3718 = vunpack.c.l.b16 %v572
        %v3719 = vunpack.c.h.b16 %v572
        %v3720 = vunpack.c.l.b16 %v573
        %v3721 = vunpack.c.h.b16 %v573
        %v3722 = vunpack.c.l.b16 %v574
        %v3723 = vunpack.c.h.b16 %v574
        %v3724 = vunpack.c.l.b16 %v575
        %v3725 = vunpack.c.h.b16 %v575
        %v3726 = vunpack.c.l.b16 %v576
        %v3727 = vunpack.c.h.b16 %v576
        %v3728 = vunpack.c.l.b16 %v577
        %v3729 = vunpack.c.h.b16 %v577
        %v3730 = vunpack.c.l.b16 %v578
        %v3731 = vunpack.c.h.b16 %v578
        %v3732 = vunpack.c.l.b16 %v579
        %v3733 = vunpack.c.h.b16 %v579
        %v3734 = vunpack.c.l.b16 %v580
        %v3735 = vunpack.c.h.b16 %v580
        %v3736 = vunpack.c.l.b16 %v581
        %v3737 = vunpack.c.h.b16 %v581
        %v3738 = vunpack.c.l.b16 %v582
        %v3739 = vunpack.c.h.b16 %v582
        %v3740 = vunpack.c.l.b16 %v583
        %v3741 = vunpack.c.h.b16 %v583
        %v3742 = vunpack.c.l.b16 %v584
        %v3743 = vunpack.c.h.b16 %v584
        %v3744 = vunpack.c.l.b16 %v585
        %v3745 = vunpack.c.h.b16 %v585
        %v3746 = vunpack.c.l.b16 %v586
        %v3747 = vunpack.c.h.b16 %v586
        %v3748 = vunpack.c.l.b16 %v587
        %v3749 = vunpack.c.h.b16 %v587
        %v3750 = vunpack.c.l.b16 %v588
        %v3751 = vunpack.c.h.b16 %v588
        %v3752 = vunpack.c.l.b16 %v589
        %v3753 = vunpack.c.h.b16 %v589
        %v3754 = vunpack.c.l.b16 %v590
        %v3755 = vunpack.c.h.b16 %v590
        %v3756 = vunpack.c.l.b16 %v591
        %v3757 = vunpack.c.h.b16 %v591
        %v3758 = vunpack.c.l.b16 %v592
        %v3759 = vunpack.c.h.b16 %v592
        %v3760 = vunpack.c.l.b16 %v593
        %v3761 = vunpack.c.h.b16 %v593
        %v3762 = vunpack.c.l.b16 %v594
        %v3763 = vunpack.c.h.b16 %v594
        %v3764 = vunpack.c.l.b16 %v595
        %v3765 = vunpack.c.h.b16 %v595
        %v3766 = vunpack.c.l.b16 %v596
        %v3767 = vunpack.c.h.b16 %v596
        %v3768 = vunpack.c.l.b16 %v597
        %v3769 = vunpack.c.h.b16 %v597
        %v3770 = vunpack.c.l.b16 %v598
        %v3771 = vunpack.c.h.b16 %v598
        %v3772 = vunpack.c.l.b16 %v599
        %v3773 = vunpack.c.h.b16 %v599
        %v3774 = vunpack.c.l.b16 %v600
        %v3775 = vunpack.c.h.b16 %v600
        %v3776 = vunpack.c.l.b16 %v601
        %v3777 = vunpack.c.h.b16 %v601
        %v3778 = vunpack.c.l.b16 %v602
        %v3779 = vunpack.c.h.b16 %v602
        %v3780 = vunpack.c.l.b16 %v603
        %v3781 = vunpack.c.h.b16 %v603
        %v3782 = vunpack.c.l.b16 %v604
        %v3783 = vunpack.c.h.b16 %v604
        %v3784 = vunpack.c.l.b16 %v605
        %v3785 = vunpack.c.h.b16 %v605
        %v3786 = vunpack.c.l.b16 %v606
        %v3787 = vunpack.c.h.b16 %v606
        %v3788 = vunpack.c.l.b16 %v607
        %v3789 = vunpack.c.h.b16 %v607
        %v3790 = vunpack.c.l.b16 %v608
        %v3791 = vunpack.c.h.b16 %v608
        %v3792 = vunpack.c.l.b16 %v609
        %v3793 = vunpack.c.h.b16 %v609
        %v3794 = vunpack.c.l.b16 %v610
        %v3795 = vunpack.c.h.b16 %v610
        %v3796 = vunpack.c.l.b16 %v611
        %v3797 = vunpack.c.h.b16 %v611
        %v3798 = vunpack.c.l.b16 %v612
        %v3799 = vunpack.c.h.b16 %v612
        %v3800 = vunpack.c.l.b16 %v613
        %v3801 = vunpack.c.h.b16 %v613
        %v3802 = vunpack.c.l.b16 %v614
        %v3803 = vunpack.c.h.b16 %v614
        %v3804 = vunpack.c.l.b16 %v615
        %v3805 = vunpack.c.h.b16 %v615
        %v3806 = vunpack.c.l.b16 %v616
        %v3807 = vunpack.c.h.b16 %v616
        %v3808 = vunpack.c.l.b16 %v617
        %v3809 = vunpack.c.h.b16 %v617
        %v3810 = vunpack.c.l.b16 %v618
        %v3811 = vunpack.c.h.b16 %v618
        %v3812 = vunpack.c.l.b16 %v619
        %v3813 = vunpack.c.h.b16 %v619
        %v3814 = vunpack.c.l.b16 %v620
        %v3815 = vunpack.c.h.b16 %v620
        %v3816 = vunpack.c.l.b16 %v621
        %v3817 = vunpack.c.h.b16 %v621
        %v3818 = vunpack.c.l.b16 %v622
        %v3819 = vunpack.c.h.b16 %v622
        %v3820 = vunpack.c.l.b16 %v623
        %v3821 = vunpack.c.h.b16 %v623
        %v3822 = vunpack.c.l.b16 %v624
        %v3823 = vunpack.c.h.b16 %v624
        %v3824 = vunpack.c.l.b16 %v625
        %v3825 = vunpack.c.h.b16 %v625
        %v3826 = vunpack.c.l.b16 %v626
        %v3827 = vunpack.c.h.b16 %v626
        %v3828 = vunpack.c.l.b16 %v627
        %v3829 = vunpack.c.h.b16 %v627
        %v3830 = vunpack.c.l.b16 %v628
        %v3831 = vunpack.c.h.b16 %v628
        %v3832 = vunpack.c.l.b16 %v629
        %v3833 = vunpack.c.h.b16 %v629
        %v3834 = vunpack.c.l.b16 %v630
        %v3835 = vunpack.c.h.b16 %v630
        %v3836 = vunpack.c.l.b16 %v631
        %v3837 = vunpack.c.h.b16 %v631
        %v3838 = vunpack.c.l.b16 %v632
        %v3839 = vunpack.c.h.b16 %v632
        %v3840 = vunpack.c.l.b16 %v633
        %v3841 = vunpack.c.h.b16 %v633
        %v3842 = vunpack.c.l.b16 %v634
        %v3843 = vunpack.c.h.b16 %v634
        %v3844 = vunpack.c.l.b16 %v635
        %v3845 = vunpack.c.h.b16 %v635
        %v3846 = vunpack.c.l.b16 %v636
        %v3847 = vunpack.c.h.b16 %v636
        %v3848 = vunpack.c.l.b16 %v637
        %v3849 = vunpack.c.h.b16 %v637
        %v3850 = vunpack.c.l.b16 %v638
        %v3851 = vunpack.c.h.b16 %v638
        %v3852 = vunpack.c.l.b16 %v639
        %v3853 = vunpack.c.h.b16 %v639
        %v3854 = vunpack.c.l.b16 %v640
        %v3855 = vunpack.c.h.b16 %v640
        %v3856 = vunpack.c.l.b16 %v641
        %v3857 = vunpack.c.h.b16 %v641
        %v3858 = vunpack.c.l.b16 %v642
        %v3859 = vunpack.c.h.b16 %v642
        %v3860 = vunpack.c.l.b16 %v643
        %v3861 = vunpack.c.h.b16 %v643
        %v3862 = vunpack.c.l.b16 %v644
        %v3863 = vunpack.c.h.b16 %v644
        %v3864 = vunpack.c.l.b16 %v645
        %v3865 = vunpack.c.h.b16 %v645
        %v3866 = vunpack.c.l.b16 %v646
        %v3867 = vunpack.c.h.b16 %v646
        %v3868 = vunpack.c.l.b16 %v647
        %v3869 = vunpack.c.h.b16 %v647
        %v3870 = vunpack.c.l.b16 %v648
        %v3871 = vunpack.c.h.b16 %v648
        %v3872 = vunpack.c.l.b16 %v649
        %v3873 = vunpack.c.h.b16 %v649
        %v3874 = vunpack.c.l.b16 %v650
        %v3875 = vunpack.c.h.b16 %v650
        %v3876 = vunpack.c.l.b16 %v651
        %v3877 = vunpack.c.h.b16 %v651
        %v3878 = vunpack.c.l.b16 %v652
        %v3879 = vunpack.c.h.b16 %v652
        %v3880 = vunpack.c.l.b16 %v653
        %v3881 = vunpack.c.h.b16 %v653
        %v3882 = vunpack.c.l.b16 %v654
        %v3883 = vunpack.c.h.b16 %v654
        %v3884 = vunpack.c.l.b16 %v655
        %v3885 = vunpack.c.h.b16 %v655
        %v3886 = vunpack.c.l.b16 %v656
        %v3887 = vunpack.c.h.b16 %v656
        %v3888 = vunpack.c.l.b16 %v657
        %v3889 = vunpack.c.h.b16 %v657
        %v3890 = vunpack.c.l.b16 %v658
        %v3891 = vunpack.c.h.b16 %v658
        %v3892 = vunpack.c.l.b16 %v659
        %v3893 = vunpack.c.h.b16 %v659
        %v3894 = vunpack.c.l.b16 %v660
        %v3895 = vunpack.c.h.b16 %v660
        %v3896 = vunpack.c.l.b16 %v661
        %v3897 = vunpack.c.h.b16 %v661
        %v3898 = vunpack.c.l.b16 %v662
        %v3899 = vunpack.c.h.b16 %v662
        %v3900 = vunpack.c.l.b16 %v663
        %v3901 = vunpack.c.h.b16 %v663
        %v3902 = vunpack.c.l.b16 %v664
        %v3903 = vunpack.c.h.b16 %v664
        %v3904 = vunpack.c.l.b16 %v665
        %v3905 = vunpack.c.h.b16 %v665
        %v3906 = vunpack.c.l.b16 %v666
        %v3907 = vunpack.c.h.b16 %v666
        %v3908 = vunpack.c.l.b16 %v667
        %v3909 = vunpack.c.h.b16 %v667
        %v3910 = vunpack.c.l.b16 %v668
        %v3911 = vunpack.c.h.b16 %v668
        %v3912 = vunpack.c.l.b16 %v669
        %v3913 = vunpack.c.h.b16 %v669
        %v3914 = vunpack.c.l.b16 %v670
        %v3915 = vunpack.c.h.b16 %v670
        %v3916 = vunpack.c.l.b16 %v671
        %v3917 = vunpack.c.h.b16 %v671
        %v3918 = vunpack.c.l.b16 %v672
        %v3919 = vunpack.c.h.b16 %v672
        %v3920 = vunpack.c.l.b16 %v673
        %v3921 = vunpack.c.h.b16 %v673
        %v3922 = vunpack.c.l.b16 %v674
        %v3923 = vunpack.c.h.b16 %v674
        %v3924 = vunpack.c.l.b16 %v675
        %v3925 = vunpack.c.h.b16 %v675
        %v3926 = vunpack.c.l.b16 %v676
        %v3927 = vunpack.c.h.b16 %v676
        %v3928 = vunpack.c.l.b16 %v677
        %v3929 = vunpack.c.h.b16 %v677
        %v3930 = vunpack.c.l.b16 %v678
        %v3931 = vunpack.c.h.b16 %v678
        %v3932 = vunpack.c.l.b16 %v679
        %v3933 = vunpack.c.h.b16 %v679
        %v3934 = vunpack.c.l.b16 %v680
        %v3935 = vunpack.c.h.b16 %v680
        %v3936 = vunpack.c.l.b16 %v681
        %v3937 = vunpack.c.h.b16 %v681
        %v3938 = vunpack.c.l.b16 %v682
        %v3939 = vunpack.c.h.b16 %v682
        %v3940 = vunpack.c.l.b16 %v683
        %v3941 = vunpack.c.h.b16 %v683
        %v3942 = vunpack.c.l.b16 %v684
        %v3943 = vunpack.c.h.b16 %v684
        %v3944 = vunpack.c.l.b16 %v685
        %v3945 = vunpack.c.h.b16 %v685
        %v3946 = vunpack.c.l.b16 %v686
        %v3947 = vunpack.c.h.b16 %v686
        %v3948 = vunpack.c.l.b16 %v687
        %v3949 = vunpack.c.h.b16 %v687
        %v3950 = vunpack.c.l.b16 %v688
        %v3951 = vunpack.c.h.b16 %v688
        %v3952 = vunpack.c.l.b16 %v689
        %v3953 = vunpack.c.h.b16 %v689
        %v3954 = vunpack.c.l.b16 %v690
        %v3955 = vunpack.c.h.b16 %v690
        %v3956 = vunpack.c.l.b16 %v691
        %v3957 = vunpack.c.h.b16 %v691
        %v3958 = vunpack.c.l.b16 %v692
        %v3959 = vunpack.c.h.b16 %v692
        %v3960 = vunpack.c.l.b16 %v693
        %v3961 = vunpack.c.h.b16 %v693
        %v3962 = vunpack.c.l.b16 %v694
        %v3963 = vunpack.c.h.b16 %v694
        %v3964 = vunpack.c.l.b16 %v695
        %v3965 = vunpack.c.h.b16 %v695
        %v3966 = vunpack.c.l.b16 %v696
        %v3967 = vunpack.c.h.b16 %v696
        %v3968 = vunpack.c.l.b16 %v697
        %v3969 = vunpack.c.h.b16 %v697
        %v3970 = vunpack.c.l.b16 %v698
        %v3971 = vunpack.c.h.b16 %v698
        %v3972 = vunpack.c.l.b16 %v699
        %v3973 = vunpack.c.h.b16 %v699
        %v3974 = vunpack.c.l.b16 %v700
        %v3975 = vunpack.c.h.b16 %v700
        %v3976 = vunpack.c.l.b16 %v701
        %v3977 = vunpack.c.h.b16 %v701
        %v3978 = vunpack.c.l.b16 %v702
        %v3979 = vunpack.c.h.b16 %v702
        %v3980 = vunpack.c.l.b16 %v703
        %v3981 = vunpack.c.h.b16 %v703
        %v3982 = vunpack.c.l.b16 %v704
        %v3983 = vunpack.c.h.b16 %v704
        %v3984 = vunpack.c.l.b16 %v705
        %v3985 = vunpack.c.h.b16 %v705
        %v3986 = vunpack.c.l.b16 %v706
        %v3987 = vunpack.c.h.b16 %v706
        %v3988 = vunpack.c.l.b16 %v707
        %v3989 = vunpack.c.h.b16 %v707
        %v3990 = vunpack.c.l.b16 %v708
        %v3991 = vunpack.c.h.b16 %v708
        %v3992 = vunpack.c.l.b16 %v709
        %v3993 = vunpack.c.h.b16 %v709
        %v3994 = vunpack.c.l.b16 %v710
        %v3995 = vunpack.c.h.b16 %v710
        %v3996 = vunpack.c.l.b16 %v711
        %v3997 = vunpack.c.h.b16 %v711
        %v3998 = vunpack.c.l.b16 %v712
        %v3999 = vunpack.c.h.b16 %v712
        %v4000 = vunpack.c.l.b16 %v713
        %v4001 = vunpack.c.h.b16 %v713
        %v4002 = vunpack.c.l.b16 %v714
        %v4003 = vunpack.c.h.b16 %v714
        %v4004 = vunpack.c.l.b16 %v715
        %v4005 = vunpack.c.h.b16 %v715
        %v4006 = vunpack.c.l.b16 %v716
        %v4007 = vunpack.c.h.b16 %v716
        %v4008 = vunpack.c.l.b16 %v717
        %v4009 = vunpack.c.h.b16 %v717
        %v4010 = vunpack.c.l.b16 %v718
        %v4011 = vunpack.c.h.b16 %v718
        %v4012 = vunpack.c.l.b16 %v719
        %v4013 = vunpack.c.h.b16 %v719
        %v4014 = vunpack.c.l.b16 %v720
        %v4015 = vunpack.c.h.b16 %v720
        %v4016 = vunpack.c.l.b16 %v721
        %v4017 = vunpack.c.h.b16 %v721
        %v4018 = vunpack.c.l.b16 %v722
        %v4019 = vunpack.c.h.b16 %v722
        %v4020 = vunpack.c.l.b16 %v723
        %v4021 = vunpack.c.h.b16 %v723
        %v4022 = vunpack.c.l.b16 %v724
        %v4023 = vunpack.c.h.b16 %v724
        %v4024 = vunpack.c.l.b16 %v725
        %v4025 = vunpack.c.h.b16 %v725
        %v4026 = vunpack.c.l.b16 %v726
        %v4027 = vunpack.c.h.b16 %v726
        %v4028 = vunpack.c.l.b16 %v727
        %v4029 = vunpack.c.h.b16 %v727
        %v4030 = vunpack.c.l.b16 %v728
        %v4031 = vunpack.c.h.b16 %v728
        %v4032 = vunpack.c.l.b16 %v729
        %v4033 = vunpack.c.h.b16 %v729
        %v4034 = vunpack.c.l.b16 %v730
        %v4035 = vunpack.c.h.b16 %v730
        %v4036 = vunpack.c.l.b16 %v731
        %v4037 = vunpack.c.h.b16 %v731
        %v4038 = vunpack.c.l.b16 %v732
        %v4039 = vunpack.c.h.b16 %v732
        %v4040 = vunpack.c.l.b16 %v733
        %v4041 = vunpack.c.h.b16 %v733
        %v4042 = vunpack.c.l.b16 %v734
        %v4043 = vunpack.c.h.b16 %v734
        %v4044 = vunpack.c.l.b16 %v735
        %v4045 = vunpack.c.h.b16 %v735
        %v4046 = vunpack.c.l.b16 %v736
        %v4047 = vunpack.c.h.b16 %v736
        %v4048 = vunpack.c.l.b16 %v737
        %v4049 = vunpack.c.h.b16 %v737
        %v4050 = vunpack.c.l.b16 %v738
        %v4051 = vunpack.c.h.b16 %v738
        %v4052 = vunpack.c.l.b16 %v739
        %v4053 = vunpack.c.h.b16 %v739
        %v4054 = vunpack.c.l.b16 %v740
        %v4055 = vunpack.c.h.b16 %v740
        %v4056 = vunpack.c.l.b16 %v741
        %v4057 = vunpack.c.h.b16 %v741
        %v4058 = vunpack.c.l.b16 %v742
        %v4059 = vunpack.c.h.b16 %v742
        %v4060 = vunpack.c.l.b16 %v743
        %v4061 = vunpack.c.h.b16 %v743
        %v4062 = vunpack.c.l.b16 %v744
        %v4063 = vunpack.c.h.b16 %v744
        %v4064 = vunpack.c.l.b16 %v745
        %v4065 = vunpack.c.h.b16 %v745
        %v4066 = vunpack.c.l.b16 %v746
        %v4067 = vunpack.c.h.b16 %v746
        %v4068 = vunpack.c.l.b16 %v747
        %v4069 = vunpack.c.h.b16 %v747
        %v4070 = vunpack.c.l.b16 %v748
        %v4071 = vunpack.c.h.b16 %v748
        %v4072 = vunpack.c.l.b16 %v749
        %v4073 = vunpack.c.h.b16 %v749
        %v4074 = vunpack.c.l.b16 %v750
        %v4075 = vunpack.c.h.b16 %v750
        %v4076 = vunpack.c.l.b16 %v751
        %v4077 = vunpack.c.h.b16 %v751
        %v4078 = vunpack.c.l.b16 %v752
        %v4079 = vunpack.c.h.b16 %v752
        %v4080 = vunpack.c.l.b16 %v753
        %v4081 = vunpack.c.h.b16 %v753
        %v4082 = vunpack.c.l.b16 %v754
        %v4083 = vunpack.c.h.b16 %v754
        %v4084 = vunpack.c.l.b16 %v755
        %v4085 = vunpack.c.h.b16 %v755
        %v4086 = vunpack.c.l.b16 %v756
        %v4087 = vunpack.c.h.b16 %v756
        %v4088 = vunpack.c.l.b16 %v757
        %v4089 = vunpack.c.h.b16 %v757
        %v4090 = vunpack.c.l.b16 %v758
        %v4091 = vunpack.c.h.b16 %v758
        %v4092 = vunpack.c.l.b16 %v759
        %v4093 = vunpack.c.h.b16 %v759
        %v4094 = vunpack.c.l.b16 %v760
        %v4095 = vunpack.c.h.b16 %v760
        %v4096 = vunpack.c.l.b16 %v761
        %v4097 = vunpack.c.h.b16 %v761
        %v4098 = vunpack.c.l.b16 %v762
        %v4099 = vunpack.c.h.b16 %v762
        %v4100 = vunpack.c.l.b16 %v763
        %v4101 = vunpack.c.h.b16 %v763
        %v4102 = vunpack.c.l.b16 %v764
        %v4103 = vunpack.c.h.b16 %v764
        %v4104 = vunpack.c.l.b16 %v765
        %v4105 = vunpack.c.h.b16 %v765
        %v4106 = vunpack.c.l.b16 %v766
        %v4107 = vunpack.c.h.b16 %v766
        %v4108 = vunpack.c.l.b16 %v767
        %v4109 = vunpack.c.h.b16 %v767
        %v4110 = vunpack.c.l.b16 %v768
        %v4111 = vunpack.c.h.b16 %v768
        %v4112 = vunpack.c.l.b16 %v769
        %v4113 = vunpack.c.h.b16 %v769
        %v4114 = vunpack.c.l.b16 %v770
        %v4115 = vunpack.c.h.b16 %v770
        %v4116 = vunpack.c.l.b16 %v771
        %v4117 = vunpack.c.h.b16 %v771
        %v4118 = vunpack.c.l.b16 %v772
        %v4119 = vunpack.c.h.b16 %v772
        %v4120 = vunpack.c.l.b16 %v773
        %v4121 = vunpack.c.h.b16 %v773
        %v4122 = vunpack.c.l.b16 %v774
        %v4123 = vunpack.c.h.b16 %v774
        %v4124 = vunpack.c.l.b16 %v775
        %v4125 = vunpack.c.h.b16 %v775
        %v4126 = vunpack.c.l.b16 %v776
        %v4127 = vunpack.c.h.b16 %v776
        %v4128 = vunpack.c.l.b16 %v777
        %v4129 = vunpack.c.h.b16 %v777
        %v4130 = vunpack.c.l.b16 %v778
        %v4131 = vunpack.c.h.b16 %v778
        %v4132 = vunpack.c.l.b16 %v779
        %v4133 = vunpack.c.h.b16 %v779
        %v4134 = vunpack.c.l.b16 %v780
        %v4135 = vunpack.c.h.b16 %v780
        %v4136 = vunpack.c.l.b16 %v781
        %v4137 = vunpack.c.h.b16 %v781
        %v4138 = vunpack.c.l.b16 %v782
        %v4139 = vunpack.c.h.b16 %v782
        %v4140 = vunpack.c.l.b16 %v783
        %v4141 = vunpack.c.h.b16 %v783
        %v4142 = vunpack.c.l.b16 %v784
        %v4143 = vunpack.c.h.b16 %v784
        %v4144 = vunpack.c.l.b16 %v785
        %v4145 = vunpack.c.h.b16 %v785
        %v4146 = vunpack.c.l.b16 %v786
        %v4147 = vunpack.c.h.b16 %v786
        %v4148 = vunpack.c.l.b16 %v787
        %v4149 = vunpack.c.h.b16 %v787
        %v4150 = vunpack.c.l.b16 %v788
        %v4151 = vunpack.c.h.b16 %v788
        %v4152 = vunpack.c.l.b16 %v789
        %v4153 = vunpack.c.h.b16 %v789
        %v4154 = vunpack.c.l.b16 %v790
        %v4155 = vunpack.c.h.b16 %v790
        %v4156 = vunpack.c.l.b16 %v791
        %v4157 = vunpack.c.h.b16 %v791
        %v4158 = vunpack.c.l.b16 %v792
        %v4159 = vunpack.c.h.b16 %v792
        %v4160 = vunpack.c.l.b16 %v793
        %v4161 = vunpack.c.h.b16 %v793
        %v4162 = vunpack.c.l.b16 %v794
        %v4163 = vunpack.c.h.b16 %v794
        %v4164 = vunpack.c.l.b16 %v795
        %v4165 = vunpack.c.h.b16 %v795
        %v4166 = vunpack.c.l.b16 %v796
        %v4167 = vunpack.c.h.b16 %v796
        %v4168 = vunpack.c.l.b16 %v797
        %v4169 = vunpack.c.h.b16 %v797
        %v4170 = vunpack.c.l.b16 %v798
        %v4171 = vunpack.c.h.b16 %v798
        %v4172 = vunpack.c.l.b16 %v799
        %v4173 = vunpack.c.h.b16 %v799
        %v4174 = vunpack.c.l.b16 %v800
        %v4175 = vunpack.c.h.b16 %v800
        %v4176 = vunpack.c.l.b16 %v801
        %v4177 = vunpack.c.h.b16 %v801
        %v4178 = vunpack.c.l.b16 %v802
        %v4179 = vunpack.c.h.b16 %v802
        %v4180 = vunpack.c.l.b16 %v803
        %v4181 = vunpack.c.h.b16 %v803
        %v4182 = vunpack.c.l.b16 %v804
        %v4183 = vunpack.c.h.b16 %v804
        %v4184 = vunpack.c.l.b16 %v805
        %v4185 = vunpack.c.h.b16 %v805
        %v4186 = vunpack.c.l.b16 %v806
        %v4187 = vunpack.c.h.b16 %v806
        %v4188 = vunpack.c.l.b16 %v807
        %v4189 = vunpack.c.h.b16 %v807
        %v4190 = vunpack.c.l.b16 %v808
        %v4191 = vunpack.c.h.b16 %v808
        %v4192 = vunpack.c.l.b16 %v809
        %v4193 = vunpack.c.h.b16 %v809
        %v4194 = vunpack.c.l.b16 %v810
        %v4195 = vunpack.c.h.b16 %v810
        %v4196 = vunpack.c.l.b16 %v811
        %v4197 = vunpack.c.h.b16 %v811
        %v4198 = vunpack.c.l.b16 %v812
        %v4199 = vunpack.c.h.b16 %v812
        %v4200 = vunpack.c.l.b16 %v813
        %v4201 = vunpack.c.h.b16 %v813
        %v4202 = vunpack.c.l.b16 %v814
        %v4203 = vunpack.c.h.b16 %v814
        %v4204 = vunpack.c.l.b16 %v815
        %v4205 = vunpack.c.h.b16 %v815
        %v4206 = vunpack.c.l.b16 %v816
        %v4207 = vunpack.c.h.b16 %v816
        %v4208 = vunpack.c.l.b16 %v817
        %v4209 = vunpack.c.h.b16 %v817
        %v4210 = vpack.c.b16 %v3442, %v3186
        %v4211 = vpack.c.b16 %v3443, %v3187
        %v4212 = vpack.c.b16 %v3444, %v3188
        %v4213 = vpack.c.b16 %v3445, %v3189
        %v4214 = vpack.c.b16 %v3446, %v3190
        %v4215 = vpack.c.b16 %v3447, %v3191
        %v4216 = vpack.c.b16 %v3448, %v3192
        %v4217 = vpack.c.b16 %v3449, %v3193
        %v4218 = vpack.c.b16 %v3450, %v3194
        %v4219 = vpack.c.b16 %v3451, %v3195
        %v4220 = vpack.c.b16 %v3452, %v3196
        %v4221 = vpack.c.b16 %v3453, %v3197
        %v4222 = vpack.c.b16 %v3454, %v3198
        %v4223 = vpack.c.b16 %v3455, %v3199
        %v4224 = vpack.c.b16 %v3456, %v3200
        %v4225 = vpack.c.b16 %v3457, %v3201
        %v4226 = vpack.c.b16 %v3458, %v3202
        %v4227 = vpack.c.b16 %v3459, %v3203
        %v4228 = vpack.c.b16 %v3460, %v3204
        %v4229 = vpack.c.b16 %v3461, %v3205
        %v4230 = vpack.c.b16 %v3462, %v3206
        %v4231 = vpack.c.b16 %v3463, %v3207
        %v4232 = vpack.c.b16 %v3464, %v3208
        %v4233 = vpack.c.b16 %v3465, %v3209
        %v4234 = vpack.c.b16 %v3466, %v3210
        %v4235 = vpack.c.b16 %v3467, %v3211
        %v4236 = vpack.c.b16 %v3468, %v3212
        %v4237 = vpack.c.b16 %v3469, %v3213
        %v4238 = vpack.c.b16 %v3470, %v3214
        %v4239 = vpack.c.b16 %v3471, %v3215
        %v4240 = vpack.c.b16 %v3472, %v3216
        %v4241 = vpack.c.b16 %v3473, %v3217
        %v4242 = vpack.c.b16 %v3474, %v3218
        %v4243 = vpack.c.b16 %v3475, %v3219
        %v4244 = vpack.c.b16 %v3476, %v3220
        %v4245 = vpack.c.b16 %v3477, %v3221
        %v4246 = vpack.c.b16 %v3478, %v3222
        %v4247 = vpack.c.b16 %v3479, %v3223
        %v4248 = vpack.c.b16 %v3480, %v3224
        %v4249 = vpack.c.b16 %v3481, %v3225
        %v4250 = vpack.c.b16 %v3482, %v3226
        %v4251 = vpack.c.b16 %v3483, %v3227
        %v4252 = vpack.c.b16 %v3484, %v3228
        %v4253 = vpack.c.b16 %v3485, %v3229
        %v4254 = vpack.c.b16 %v3486, %v3230
        %v4255 = vpack.c.b16 %v3487, %v3231
        %v4256 = vpack.c.b16 %v3488, %v3232
        %v4257 = vpack.c.b16 %v3489, %v3233
        %v4258 = vpack.c.b16 %v3490, %v3234
        %v4259 = vpack.c.b16 %v3491, %v3235
        %v4260 = vpack.c.b16 %v3492, %v3236
        %v4261 = vpack.c.b16 %v3493, %v3237
        %v4262 = vpack.c.b16 %v3494, %v3238
        %v4263 = vpack.c.b16 %v3495, %v3239
        %v4264 = vpack.c.b16 %v3496, %v3240
        %v4265 = vpack.c.b16 %v3497, %v3241
        %v4266 = vpack.c.b16 %v3498, %v3242
        %v4267 = vpack.c.b16 %v3499, %v3243
        %v4268 = vpack.c.b16 %v3500, %v3244
        %v4269 = vpack.c.b16 %v3501, %v3245
        %v4270 = vpack.c.b16 %v3502, %v3246
        %v4271 = vpack.c.b16 %v3503, %v3247
        %v4272 = vpack.c.b16 %v3504, %v3248
        %v4273 = vpack.c.b16 %v3505, %v3249
        %v4274 = vpack.c.b16 %v3506, %v3250
        %v4275 = vpack.c.b16 %v3507, %v3251
        %v4276 = vpack.c.b16 %v3508, %v3252
        %v4277 = vpack.c.b16 %v3509, %v3253
        %v4278 = vpack.c.b16 %v3510, %v3254
        %v4279 = vpack.c.b16 %v3511, %v3255
        %v4280 = vpack.c.b16 %v3512, %v3256
        %v4281 = vpack.c.b16 %v3513, %v3257
        %v4282 = vpack.c.b16 %v3514, %v3258
        %v4283 = vpack.c.b16 %v3515, %v3259
        %v4284 = vpack.c.b16 %v3516, %v3260
        %v4285 = vpack.c.b16 %v3517, %v3261
        %v4286 = vpack.c.b16 %v3518, %v3262
        %v4287 = vpack.c.b16 %v3519, %v3263
        %v4288 = vpack.c.b16 %v3520, %v3264
        %v4289 = vpack.c.b16 %v3521, %v3265
        %v4290 = vpack.c.b16 %v3522, %v3266
        %v4291 = vpack.c.b16 %v3523, %v3267
        %v4292 = vpack.c.b16 %v3524, %v3268
        %v4293 = vpack.c.b16 %v3525, %v3269
        %v4294 = vpack.c.b16 %v3526, %v3270
        %v4295 = vpack.c.b16 %v3527, %v3271
        %v4296 = vpack.c.b16 %v3528, %v3272
        %v4297 = vpack.c.b16 %v3529, %v3273
        %v4298 = vpack.c.b16 %v3530, %v3274
        %v4299 = vpack.c.b16 %v3531, %v3275
        %v4300 = vpack.c.b16 %v3532, %v3276
        %v4301 = vpack.c.b16 %v3533, %v3277
        %v4302 = vpack.c.b16 %v3534, %v3278
        %v4303 = vpack.c.b16 %v3535, %v3279
        %v4304 = vpack.c.b16 %v3536, %v3280
        %v4305 = vpack.c.b16 %v3537, %v3281
        %v4306 = vpack.c.b16 %v3538, %v3282
        %v4307 = vpack.c.b16 %v3539, %v3283
        %v4308 = vpack.c.b16 %v3540, %v3284
        %v4309 = vpack.c.b16 %v3541, %v3285
        %v4310 = vpack.c.b16 %v3542, %v3286
        %v4311 = vpack.c.b16 %v3543, %v3287
        %v4312 = vpack.c.b16 %v3544, %v3288
        %v4313 = vpack.c.b16 %v3545, %v3289
        %v4314 = vpack.c.b16 %v3546, %v3290
        %v4315 = vpack.c.b16 %v3547, %v3291
        %v4316 = vpack.c.b16 %v3548, %v3292
        %v4317 = vpack.c.b16 %v3549, %v3293
        %v4318 = vpack.c.b16 %v3550, %v3294
        %v4319 = vpack.c.b16 %v3551, %v3295
        %v4320 = vpack.c.b16 %v3552, %v3296
        %v4321 = vpack.c.b16 %v3553, %v3297
        %v4322 = vpack.c.b16 %v3554, %v3298
        %v4323 = vpack.c.b16 %v3555, %v3299
        %v4324 = vpack.c.b16 %v3556, %v3300
        %v4325 = vpack.c.b16 %v3557, %v3301
        %v4326 = vpack.c.b16 %v3558, %v3302
        %v4327 = vpack.c.b16 %v3559, %v3303
        %v4328 = vpack.c.b16 %v3560, %v3304
        %v4329 = vpack.c.b16 %v3561, %v3305
        %v4330 = vpack.c.b16 %v3562, %v3306
        %v4331 = vpack.c.b16 %v3563, %v3307
        %v4332 = vpack.c.b16 %v3564, %v3308
        %v4333 = vpack.c.b16 %v3565, %v3309
        %v4334 = vpack.c.b16 %v3566, %v3310
        %v4335 = vpack.c.b16 %v3567, %v3311
        %v4336 = vpack.c.b16 %v3568, %v3312
        %v4337 = vpack.c.b16 %v3569, %v3313
        %v4338 = vpack.c.b16 %v3570, %v3314
        %v4339 = vpack.c.b16 %v3571, %v3315
        %v4340 = vpack.c.b16 %v3572, %v3316
        %v4341 = vpack.c.b16 %v3573, %v3317
        %v4342 = vpack.c.b16 %v3574, %v3318
        %v4343 = vpack.c.b16 %v3575, %v3319
        %v4344 = vpack.c.b16 %v3576, %v3320
        %v4345 = vpack.c.b16 %v3577, %v3321
        %v4346 = vpack.c.b16 %v3578, %v3322
        %v4347 = vpack.c.b16 %v3579, %v3323
        %v4348 = vpack.c.b16 %v3580, %v3324
        %v4349 = vpack.c.b16 %v3581, %v3325
        %v4350 = vpack.c.b16 %v3582, %v3326
        %v4351 = vpack.c.b16 %v3583, %v3327
        %v4352 = vpack.c.b16 %v3584, %v3328
        %v4353 = vpack.c.b16 %v3585, %v3329
        %v4354 = vpack.c.b16 %v3586, %v3330
        %v4355 = vpack.c.b16 %v3587, %v3331
        %v4356 = vpack.c.b16 %v3588, %v3332
        %v4357 = vpack.c.b16 %v3589, %v3333
        %v4358 = vpack.c.b16 %v3590, %v3334
        %v4359 = vpack.c.b16 %v3591, %v3335
        %v4360 = vpack.c.b16 %v3592, %v3336
        %v4361 = vpack.c.b16 %v3593, %v3337
        %v4362 = vpack.c.b16 %v3594, %v3338
        %v4363 = vpack.c.b16 %v3595, %v3339
        %v4364 = vpack.c.b16 %v3596, %v3340
        %v4365 = vpack.c.b16 %v3597, %v3341
        %v4366 = vpack.c.b16 %v3598, %v3342
        %v4367 = vpack.c.b16 %v3599, %v3343
        %v4368 = vpack.c.b16 %v3600, %v3344
        %v4369 = vpack.c.b16 %v3601, %v3345
        %v4370 = vpack.c.b16 %v3602, %v3346
        %v4371 = vpack.c.b16 %v3603, %v3347
        %v4372 = vpack.c.b16 %v3604, %v3348
        %v4373 = vpack.c.b16 %v3605, %v3349
        %v4374 = vpack.c.b16 %v3606, %v3350
        %v4375 = vpack.c.b16 %v3607, %v3351
        %v4376 = vpack.c.b16 %v3608, %v3352
        %v4377 = vpack.c.b16 %v3609, %v3353
        %v4378 = vpack.c.b16 %v3610, %v3354
        %v4379 = vpack.c.b16 %v3611, %v3355
        %v4380 = vpack.c.b16 %v3612, %v3356
        %v4381 = vpack.c.b16 %v3613, %v3357
        %v4382 = vpack.c.b16 %v3614, %v3358
        %v4383 = vpack.c.b16 %v3615, %v3359
        %v4384 = vpack.c.b16 %v3616, %v3360
        %v4385 = vpack.c.b16 %v3617, %v3361
        %v4386 = vpack.c.b16 %v3618, %v3362
        %v4387 = vpack.c.b16 %v3619, %v3363
        %v4388 = vpack.c.b16 %v3620, %v3364
        %v4389 = vpack.c.b16 %v3621, %v3365
        %v4390 = vpack.c.b16 %v3622, %v3366
        %v4391 = vpack.c.b16 %v3623, %v3367
        %v4392 = vpack.c.b16 %v3624, %v3368
        %v4393 = vpack.c.b16 %v3625, %v3369
        %v4394 = vpack.c.b16 %v3626, %v3370
        %v4395 = vpack.c.b16 %v3627, %v3371
        %v4396 = vpack.c.b16 %v3628, %v3372
        %v4397 = vpack.c.b16 %v3629, %v3373
        %v4398 = vpack.c.b16 %v3630, %v3374
        %v4399 = vpack.c.b16 %v3631, %v3375
        %v4400 = vpack.c.b16 %v3632, %v3376
        %v4401 = vpack.c.b16 %v3633, %v3377
        %v4402 = vpack.c.b16 %v3634, %v3378
        %v4403 = vpack.c.b16 %v3635, %v3379
        %v4404 = vpack.c.b16 %v3636, %v3380
        %v4405 = vpack.c.b16 %v3637, %v3381
        %v4406 = vpack.c.b16 %v3638, %v3382
        %v4407 = vpack.c.b16 %v3639, %v3383
        %v4408 = vpack.c.b16 %v3640, %v3384
        %v4409 = vpack.c.b16 %v3641, %v3385
        %v4410 = vpack.c.b16 %v3642, %v3386
        %v4411 = vpack.c.b16 %v3643, %v3387
        %v4412 = vpack.c.b16 %v3644, %v3388
        %v4413 = vpack.c.b16 %v3645, %v3389
        %v4414 = vpack.c.b16 %v3646, %v3390
        %v4415 = vpack.c.b16 %v3647, %v3391
        %v4416 = vpack.c.b16 %v3648, %v3392
        %v4417 = vpack.c.b16 %v3649, %v3393
        %v4418 = vpack.c.b16 %v3650, %v3394
        %v4419 = vpack.c.b16 %v3651, %v3395
        %v4420 = vpack.c.b16 %v3652, %v3396
        %v4421 = vpack.c.b16 %v3653, %v3397
        %v4422 = vpack.c.b16 %v3654, %v3398
        %v4423 = vpack.c.b16 %v3655, %v3399
        %v4424 = vpack.c.b16 %v3656, %v3400
        %v4425 = vpack.c.b16 %v3657, %v3401
        %v4426 = vpack.c.b16 %v3658, %v3402
        %v4427 = vpack.c.b16 %v3659, %v3403
        %v4428 = vpack.c.b16 %v3660, %v3404
        %v4429 = vpack.c.b16 %v3661, %v3405
        %v4430 = vpack.c.b16 %v3662, %v3406
        %v4431 = vpack.c.b16 %v3663, %v3407
        %v4432 = vpack.c.b16 %v3664, %v3408
        %v4433 = vpack.c.b16 %v3665, %v3409
        %v4434 = vpack.c.b16 %v3666, %v3410
        %v4435 = vpack.c.b16 %v3667, %v3411
        %v4436 = vpack.c.b16 %v3668, %v3412
        %v4437 = vpack.c.b16 %v3669, %v3413
        %v4438 = vpack.c.b16 %v3670, %v3414
        %v4439 = vpack.c.b16 %v3671, %v3415
        %v4440 = vpack.c.b16 %v3672, %v3416
        %v4441 = vpack.c.b16 %v3673, %v3417
        %v4442 = vpack.c.b16 %v3674, %v3418
        %v4443 = vpack.c.b16 %v3675, %v3419
        %v4444 = vpack.c.b16 %v3676, %v3420
        %v4445 = vpack.c.b16 %v3677, %v3421
        %v4446 = vpack.c.b16 %v3678, %v3422
        %v4447 = vpack.c.b16 %v3679, %v3423
        %v4448 = vpack.c.b16 %v3680, %v3424
        %v4449 = vpack.c.b16 %v3681, %v3425
        %v4450 = vpack.c.b16 %v3682, %v3426
        %v4451 = vpack.c.b16 %v3683, %v3427
        %v4452 = vpack.c.b16 %v3684, %v3428
        %v4453 = vpack.c.b16 %v3685, %v3429
        %v4454 = vpack.c.b16 %v3686, %v3430
        %v4455 = vpack.c.b16 %v3687, %v3431
        %v4456 = vpack.c.b16 %v3688, %v3432
        %v4457 = vpack.c.b16 %v3689, %v3433
        %v4458 = vpack.c.b16 %v3690, %v3434
        %v4459 = vpack.c.b16 %v3691, %v3435
        %v4460 = vpack.c.b16 %v3692, %v3436
        %v4461 = vpack.c.b16 %v3693, %v3437
        %v4462 = vpack.c.b16 %v3694, %v3438
        %v4463 = vpack.c.b16 %v3695, %v3439
        %v4464 = vpack.c.b16 %v3696, %v3440
        %v4465 = vpack.c.b16 %v3697, %v3441
        %v4466 = vpack.c.b16 %v3954, %v3698
        %v4467 = vpack.c.b16 %v3955, %v3699
        %v4468 = vpack.c.b16 %v3956, %v3700
        %v4469 = vpack.c.b16 %v3957, %v3701
        %v4470 = vpack.c.b16 %v3958, %v3702
        %v4471 = vpack.c.b16 %v3959, %v3703
        %v4472 = vpack.c.b16 %v3960, %v3704
        %v4473 = vpack.c.b16 %v3961, %v3705
        %v4474 = vpack.c.b16 %v3962, %v3706
        %v4475 = vpack.c.b16 %v3963, %v3707
        %v4476 = vpack.c.b16 %v3964, %v3708
        %v4477 = vpack.c.b16 %v3965, %v3709
        %v4478 = vpack.c.b16 %v3966, %v3710
        %v4479 = vpack.c.b16 %v3967, %v3711
        %v4480 = vpack.c.b16 %v3968, %v3712
        %v4481 = vpack.c.b16 %v3969, %v3713
        %v4482 = vpack.c.b16 %v3970, %v3714
        %v4483 = vpack.c.b16 %v3971, %v3715
        %v4484 = vpack.c.b16 %v3972, %v3716
        %v4485 = vpack.c.b16 %v3973, %v3717
        %v4486 = vpack.c.b16 %v3974, %v3718
        %v4487 = vpack.c.b16 %v3975, %v3719
        %v4488 = vpack.c.b16 %v3976, %v3720
        %v4489 = vpack.c.b16 %v3977, %v3721
        %v4490 = vpack.c.b16 %v3978, %v3722
        %v4491 = vpack.c.b16 %v3979, %v3723
        %v4492 = vpack.c.b16 %v3980, %v3724
        %v4493 = vpack.c.b16 %v3981, %v3725
        %v4494 = vpack.c.b16 %v3982, %v3726
        %v4495 = vpack.c.b16 %v3983, %v3727
        %v4496 = vpack.c.b16 %v3984, %v3728
        %v4497 = vpack.c.b16 %v3985, %v3729
        %v4498 = vpack.c.b16 %v3986, %v3730
        %v4499 = vpack.c.b16 %v3987, %v3731
        %v4500 = vpack.c.b16 %v3988, %v3732
        %v4501 = vpack.c.b16 %v3989, %v3733
        %v4502 = vpack.c.b16 %v3990, %v3734
        %v4503 = vpack.c.b16 %v3991, %v3735
        %v4504 = vpack.c.b16 %v3992, %v3736
        %v4505 = vpack.c.b16 %v3993, %v3737
        %v4506 = vpack.c.b16 %v3994, %v3738
        %v4507 = vpack.c.b16 %v3995, %v3739
        %v4508 = vpack.c.b16 %v3996, %v3740
        %v4509 = vpack.c.b16 %v3997, %v3741
        %v4510 = vpack.c.b16 %v3998, %v3742
        %v4511 = vpack.c.b16 %v3999, %v3743
        %v4512 = vpack.c.b16 %v4000, %v3744
        %v4513 = vpack.c.b16 %v4001, %v3745
        %v4514 = vpack.c.b16 %v4002, %v3746
        %v4515 = vpack.c.b16 %v4003, %v3747
        %v4516 = vpack.c.b16 %v4004, %v3748
        %v4517 = vpack.c.b16 %v4005, %v3749
        %v4518 = vpack.c.b16 %v4006, %v3750
        %v4519 = vpack.c.b16 %v4007, %v3751
        %v4520 = vpack.c.b16 %v4008, %v3752
        %v4521 = vpack.c.b16 %v4009, %v3753
        %v4522 = vpack.c.b16 %v4010, %v3754
        %v4523 = vpack.c.b16 %v4011, %v3755
        %v4524 = vpack.c.b16 %v4012, %v3756
        %v4525 = vpack.c.b16 %v4013, %v3757
        %v4526 = vpack.c.b16 %v4014, %v3758
        %v4527 = vpack.c.b16 %v4015, %v3759
        %v4528 = vpack.c.b16 %v4016, %v3760
        %v4529 = vpack.c.b16 %v4017, %v3761
        %v4530 = vpack.c.b16 %v4018, %v3762
        %v4531 = vpack.c.b16 %v4019, %v3763
        %v4532 = vpack.c.b16 %v4020, %v3764
        %v4533 = vpack.c.b16 %v4021, %v3765
        %v4534 = vpack.c.b16 %v4022, %v3766
        %v4535 = vpack.c.b16 %v4023, %v3767
        %v4536 = vpack.c.b16 %v4024, %v3768
        %v4537 = vpack.c.b16 %v4025, %v3769
        %v4538 = vpack.c.b16 %v4026, %v3770
        %v4539 = vpack.c.b16 %v4027, %v3771
        %v4540 = vpack.c.b16 %v4028, %v3772
        %v4541 = vpack.c.b16 %v4029, %v3773
        %v4542 = vpack.c.b16 %v4030, %v3774
        %v4543 = vpack.c.b16 %v4031, %v3775
        %v4544 = vpack.c.b16 %v4032, %v3776
        %v4545 = vpack.c.b16 %v4033, %v3777
        %v4546 = vpack.c.b16 %v4034, %v3778
        %v4547 = vpack.c.b16 %v4035, %v3779
        %v4548 = vpack.c.b16 %v4036, %v3780
        %v4549 = vpack.c.b16 %v4037, %v3781
        %v4550 = vpack.c.b16 %v4038, %v3782
        %v4551 = vpack.c.b16 %v4039, %v3783
        %v4552 = vpack.c.b16 %v4040, %v3784
        %v4553 = vpack.c.b16 %v4041, %v3785
        %v4554 = vpack.c.b16 %v4042, %v3786
        %v4555 = vpack.c.b16 %v4043, %v3787
        %v4556 = vpack.c.b16 %v4044, %v3788
        %v4557 = vpack.c.b16 %v4045, %v3789
        %v4558 = vpack.c.b16 %v4046, %v3790
        %v4559 = vpack.c.b16 %v4047, %v3791
        %v4560 = vpack.c.b16 %v4048, %v3792
        %v4561 = vpack.c.b16 %v4049, %v3793
        %v4562 = vpack.c.b16 %v4050, %v3794
        %v4563 = vpack.c.b16 %v4051, %v3795
        %v4564 = vpack.c.b16 %v4052, %v3796
        %v4565 = vpack.c.b16 %v4053, %v3797
        %v4566 = vpack.c.b16 %v4054, %v3798
        %v4567 = vpack.c.b16 %v4055, %v3799
        %v4568 = vpack.c.b16 %v4056, %v3800
        %v4569 = vpack.c.b16 %v4057, %v3801
        %v4570 = vpack.c.b16 %v4058, %v3802
        %v4571 = vpack.c.b16 %v4059, %v3803
        %v4572 = vpack.c.b16 %v4060, %v3804
        %v4573 = vpack.c.b16 %v4061, %v3805
        %v4574 = vpack.c.b16 %v4062, %v3806
        %v4575 = vpack.c.b16 %v4063, %v3807
        %v4576 = vpack.c.b16 %v4064, %v3808
        %v4577 = vpack.c.b16 %v4065, %v3809
        %v4578 = vpack.c.b16 %v4066, %v3810
        %v4579 = vpack.c.b16 %v4067, %v3811
        %v4580 = vpack.c.b16 %v4068, %v3812
        %v4581 = vpack.c.b16 %v4069, %v3813
        %v4582 = vpack.c.b16 %v4070, %v3814
        %v4583 = vpack.c.b16 %v4071, %v3815
        %v4584 = vpack.c.b16 %v4072, %v3816
        %v4585 = vpack.c.b16 %v4073, %v3817
        %v4586 = vpack.c.b16 %v4074, %v3818
        %v4587 = vpack.c.b16 %v4075, %v3819
        %v4588 = vpack.c.b16 %v4076, %v3820
        %v4589 = vpack.c.b16 %v4077, %v3821
        %v4590 = vpack.c.b16 %v4078, %v3822
        %v4591 = vpack.c.b16 %v4079, %v3823
        %v4592 = vpack.c.b16 %v4080, %v3824
        %v4593 = vpack.c.b16 %v4081, %v3825
        %v4594 = vpack.c.b16 %v4082, %v3826
        %v4595 = vpack.c.b16 %v4083, %v3827
        %v4596 = vpack.c.b16 %v4084, %v3828
        %v4597 = vpack.c.b16 %v4085, %v3829
        %v4598 = vpack.c.b16 %v4086, %v3830
        %v4599 = vpack.c.b16 %v4087, %v3831
        %v4600 = vpack.c.b16 %v4088, %v3832
        %v4601 = vpack.c.b16 %v4089, %v3833
        %v4602 = vpack.c.b16 %v4090, %v3834
        %v4603 = vpack.c.b16 %v4091, %v3835
        %v4604 = vpack.c.b16 %v4092, %v3836
        %v4605 = vpack.c.b16 %v4093, %v3837
        %v4606 = vpack.c.b16 %v4094, %v3838
        %v4607 = vpack.c.b16 %v4095, %v3839
        %v4608 = vpack.c.b16 %v4096, %v3840
        %v4609 = vpack.c.b16 %v4097, %v3841
        %v4610 = vpack.c.b16 %v4098, %v3842
        %v4611 = vpack.c.b16 %v4099, %v3843
        %v4612 = vpack.c.b16 %v4100, %v3844
        %v4613 = vpack.c.b16 %v4101, %v3845
        %v4614 = vpack.c.b16 %v4102, %v3846
        %v4615 = vpack.c.b16 %v4103, %v3847
        %v4616 = vpack.c.b16 %v4104, %v3848
        %v4617 = vpack.c.b16 %v4105, %v3849
        %v4618 = vpack.c.b16 %v4106, %v3850
        %v4619 = vpack.c.b16 %v4107, %v3851
        %v4620 = vpack.c.b16 %v4108, %v3852
        %v4621 = vpack.c.b16 %v4109, %v3853
        %v4622 = vpack.c.b16 %v4110, %v3854
        %v4623 = vpack.c.b16 %v4111, %v3855
        %v4624 = vpack.c.b16 %v4112, %v3856
        %v4625 = vpack.c.b16 %v4113, %v3857
        %v4626 = vpack.c.b16 %v4114, %v3858
        %v4627 = vpack.c.b16 %v4115, %v3859
        %v4628 = vpack.c.b16 %v4116, %v3860
        %v4629 = vpack.c.b16 %v4117, %v3861
        %v4630 = vpack.c.b16 %v4118, %v3862
        %v4631 = vpack.c.b16 %v4119, %v3863
        %v4632 = vpack.c.b16 %v4120, %v3864
        %v4633 = vpack.c.b16 %v4121, %v3865
        %v4634 = vpack.c.b16 %v4122, %v3866
        %v4635 = vpack.c.b16 %v4123, %v3867
        %v4636 = vpack.c.b16 %v4124, %v3868
        %v4637 = vpack.c.b16 %v4125, %v3869
        %v4638 = vpack.c.b16 %v4126, %v3870
        %v4639 = vpack.c.b16 %v4127, %v3871
        %v4640 = vpack.c.b16 %v4128, %v3872
        %v4641 = vpack.c.b16 %v4129, %v3873
        %v4642 = vpack.c.b16 %v4130, %v3874
        %v4643 = vpack.c.b16 %v4131, %v3875
        %v4644 = vpack.c.b16 %v4132, %v3876
        %v4645 = vpack.c.b16 %v4133, %v3877
        %v4646 = vpack.c.b16 %v4134, %v3878
        %v4647 = vpack.c.b16 %v4135, %v3879
        %v4648 = vpack.c.b16 %v4136, %v3880
        %v4649 = vpack.c.b16 %v4137, %v3881
        %v4650 = vpack.c.b16 %v4138, %v3882
        %v4651 = vpack.c.b16 %v4139, %v3883
        %v4652 = vpack.c.b16 %v4140, %v3884
        %v4653 = vpack.c.b16 %v4141, %v3885
        %v4654 = vpack.c.b16 %v4142, %v3886
        %v4655 = vpack.c.b16 %v4143, %v3887
        %v4656 = vpack.c.b16 %v4144, %v3888
        %v4657 = vpack.c.b16 %v4145, %v3889
        %v4658 = vpack.c.b16 %v4146, %v3890
        %v4659 = vpack.c.b16 %v4147, %v3891
        %v4660 = vpack.c.b16 %v4148, %v3892
        %v4661 = vpack.c.b16 %v4149, %v3893
        %v4662 = vpack.c.b16 %v4150, %v3894
        %v4663 = vpack.c.b16 %v4151, %v3895
        %v4664 = vpack.c.b16 %v4152, %v3896
        %v4665 = vpack.c.b16 %v4153, %v3897
        %v4666 = vpack.c.b16 %v4154, %v3898
        %v4667 = vpack.c.b16 %v4155, %v3899
        %v4668 = vpack.c.b16 %v4156, %v3900
        %v4669 = vpack.c.b16 %v4157, %v3901
        %v4670 = vpack.c.b16 %v4158, %v3902
        %v4671 = vpack.c.b16 %v4159, %v3903
        %v4672 = vpack.c.b16 %v4160, %v3904
        %v4673 = vpack.c.b16 %v4161, %v3905
        %v4674 = vpack.c.b16 %v4162, %v3906
        %v4675 = vpack.c.b16 %v4163, %v3907
        %v4676 = vpack.c.b16 %v4164, %v3908
        %v4677 = vpack.c.b16 %v4165, %v3909
        %v4678 = vpack.c.b16 %v4166, %v3910
        %v4679 = vpack.c.b16 %v4167, %v3911
        %v4680 = vpack.c.b16 %v4168, %v3912
        %v4681 = vpack.c.b16 %v4169, %v3913
        %v4682 = vpack.c.b16 %v4170, %v3914
        %v4683 = vpack.c.b16 %v4171, %v3915
        %v4684 = vpack.c.b16 %v4172, %v3916
        %v4685 = vpack.c.b16 %v4173, %v3917
        %v4686 = vpack.c.b16 %v4174, %v3918
        %v4687 = vpack.c.b16 %v4175, %v3919
        %v4688 = vpack.c.b16 %v4176, %v3920
        %v4689 = vpack.c.b16 %v4177, %v3921
        %v4690 = vpack.c.b16 %v4178, %v3922
        %v4691 = vpack.c.b16 %v4179, %v3923
        %v4692 = vpack.c.b16 %v4180, %v3924
        %v4693 = vpack.c.b16 %v4181, %v3925
        %v4694 = vpack.c.b16 %v4182, %v3926
        %v4695 = vpack.c.b16 %v4183, %v3927
        %v4696 = vpack.c.b16 %v4184, %v3928
        %v4697 = vpack.c.b16 %v4185, %v3929
        %v4698 = vpack.c.b16 %v4186, %v3930
        %v4699 = vpack.c.b16 %v4187, %v3931
        %v4700 = vpack.c.b16 %v4188, %v3932
        %v4701 = vpack.c.b16 %v4189, %v3933
        %v4702 = vpack.c.b16 %v4190, %v3934
        %v4703 = vpack.c.b16 %v4191, %v3935
        %v4704 = vpack.c.b16 %v4192, %v3936
        %v4705 = vpack.c.b16 %v4193, %v3937
        %v4706 = vpack.c.b16 %v4194, %v3938
        %v4707 = vpack.c.b16 %v4195, %v3939
        %v4708 = vpack.c.b16 %v4196, %v3940
        %v4709 = vpack.c.b16 %v4197, %v3941
        %v4710 = vpack.c.b16 %v4198, %v3942
        %v4711 = vpack.c.b16 %v4199, %v3943
        %v4712 = vpack.c.b16 %v4200, %v3944
        %v4713 = vpack.c.b16 %v4201, %v3945
        %v4714 = vpack.c.b16 %v4202, %v3946
        %v4715 = vpack.c.b16 %v4203, %v3947
        %v4716 = vpack.c.b16 %v4204, %v3948
        %v4717 = vpack.c.b16 %v4205, %v3949
        %v4718 = vpack.c.b16 %v4206, %v3950
        %v4719 = vpack.c.b16 %v4207, %v3951
        %v4720 = vpack.c.b16 %v4208, %v3952
        %v4721 = vpack.c.b16 %v4209, %v3953
        %5234 = vmatprep.subr.bf16.mxu0 0
        %5235 = vmatpush1.bf16.xpose.msra.mxu0 0
        %5236 = vmatprep.subr.bf16.mxu0 0
        %5237 = vmatpush1.bf16.xpose.msra.mxu0 0
        %5238 = vmatprep.subr.bf16.mxu0 0
        %5239 = vmatpush1.bf16.xpose.msra.mxu0 0
        %5240 = vmatprep.subr.bf16.mxu0 0
        %5241 = vmatpush1.bf16.xpose.msra.mxu0 0
        %5242 = vmatprep.subr.bf16.mxu0 0
        %5243 = vmatpush1.bf16.xpose.msra.mxu0 0
        %5244 = vmatprep.subr.bf16.mxu0 0
        %5245 = vmatpush1.bf16.xpose.msra.mxu0 0
        %5246 = vmatprep.subr.bf16.mxu0 %v4467
        %5247 = vmatpush1.bf16.xpose.msra.mxu0 %v4466
        %5248 = vmatprep.subr.bf16.mxu0 %v4211
        %5249 = vmatpush1.bf16.xpose.msra.mxu0 %v4210
        %5250 = vmatprep.subr.bf16.mxu0 0
        %5251 = vmatpush2.bf16.xpose.msra.mxu0 0
        %5252 = vmatprep.subr.bf16.mxu0 0
        %5253 = vmatpush2.bf16.xpose.msra.mxu0 0
        %5254 = vmatprep.subr.bf16.mxu0 0
        %5255 = vmatpush2.bf16.xpose.msra.mxu0 0
        %5256 = vmatprep.subr.bf16.mxu0 0
        %5257 = vmatpush2.bf16.xpose.msra.mxu0 0
        %5258 = vmatprep.subr.bf16.mxu0 0
        %5259 = vmatpush2.bf16.xpose.msra.mxu0 0
        %5260 = vmatprep.subr.bf16.mxu0 0
        %5261 = vmatpush2.bf16.xpose.msra.mxu0 0
        %5262 = vmatprep.subr.bf16.mxu0 0
        %5263 = vmatpush2.bf16.xpose.msra.mxu0 0
        %5264 = vmatprep.subr.bf16.mxu0 0
        %5265 = vmatpush2.bf16.xpose.msra.mxu0 0
        %5266 = vmatprep.mubr.bf16.mxu0 %v887
        %5267 = vmatmul.mubr.bf16.gmra.mxu0 %v873
        %v5268 = vpop.f32.mrf.mxu0
        %v5269 = vadd.f32 0.0, %v5268
        %v5270 = vpop.f32.mrf.mxu0
        %v5271 = vpop.f32.mrf.mxu0
        %v5272 = vpop.f32.mrf.mxu0
        %5273 = vdwg.mxu0
        %5274 = vmatprep.subr.bf16.mxu0 0
        %5275 = vmatpush1.bf16.xpose.msra.mxu0 0
        %5276 = vmatprep.subr.bf16.mxu0 0
        %5277 = vmatpush1.bf16.xpose.msra.mxu0 0
        %5278 = vmatprep.subr.bf16.mxu0 0
        %5279 = vmatpush1.bf16.xpose.msra.mxu0 0
        %5280 = vmatprep.subr.bf16.mxu0 0
        %5281 = vmatpush1.bf16.xpose.msra.mxu0 0
        %5282 = vmatprep.subr.bf16.mxu0 0
        %5283 = vmatpush1.bf16.xpose.msra.mxu0 0
        %5284 = vmatprep.subr.bf16.mxu0 0
        %5285 = vmatpush1.bf16.xpose.msra.mxu0 0
        %5286 = vmatprep.subr.bf16.mxu0 %v4469
        %5287 = vmatpush1.bf16.xpose.msra.mxu0 %v4468
        %5288 = vmatprep.subr.bf16.mxu0 %v4213
        %5289 = vmatpush1.bf16.xpose.msra.mxu0 %v4212
        %5290 = vmatprep.subr.bf16.mxu0 0
        %5291 = vmatpush2.bf16.xpose.msra.mxu0 0
        %5292 = vmatprep.subr.bf16.mxu0 0
        %5293 = vmatpush2.bf16.xpose.msra.mxu0 0
        %5294 = vmatprep.subr.bf16.mxu0 0
        %5295 = vmatpush2.bf16.xpose.msra.mxu0 0
        %5296 = vmatprep.subr.bf16.mxu0 0
        %5297 = vmatpush2.bf16.xpose.msra.mxu0 0
        %5298 = vmatprep.subr.bf16.mxu0 0
        %5299 = vmatpush2.bf16.xpose.msra.mxu0 0
        %5300 = vmatprep.subr.bf16.mxu0 0
        %5301 = vmatpush2.bf16.xpose.msra.mxu0 0
        %5302 = vmatprep.subr.bf16.mxu0 0
        %5303 = vmatpush2.bf16.xpose.msra.mxu0 0
        %5304 = vmatprep.subr.bf16.mxu0 0
        %5305 = vmatpush2.bf16.xpose.msra.mxu0 0
        %5306 = vmatprep.mubr.bf16.mxu0 %v897
        %5307 = vmatmul.mubr.bf16.gmra.mxu0 %v895
        %v5308 = vpop.f32.mrf.mxu0
        %v5309 = vadd.f32 %v5269, %v5308
        %v5310 = vpop.f32.mrf.mxu0
        %v5311 = vpop.f32.mrf.mxu0
        %v5312 = vpop.f32.mrf.mxu0
        %5313 = vdwg.mxu0
        %5314 = vmatprep.subr.bf16.mxu0 0
        %5315 = vmatpush1.bf16.xpose.msra.mxu0 0
        %5316 = vmatprep.subr.bf16.mxu0 0
        %5317 = vmatpush1.bf16.xpose.msra.mxu0 0
        %5318 = vmatprep.subr.bf16.mxu0 0
        %5319 = vmatpush1.bf16.xpose.msra.mxu0 0
        %5320 = vmatprep.subr.bf16.mxu0 0
        %5321 = vmatpush1.bf16.xpose.msra.mxu0 0
        %5322 = vmatprep.subr.bf16.mxu0 0
        %5323 = vmatpush1.bf16.xpose.msra.mxu0 0
        %5324 = vmatprep.subr.bf16.mxu0 0
        %5325 = vmatpush1.bf16.xpose.msra.mxu0 0
        %5326 = vmatprep.subr.bf16.mxu0 %v4471
        %5327 = vmatpush1.bf16.xpose.msra.mxu0 %v4470
        %5328 = vmatprep.subr.bf16.mxu0 %v4215
        %5329 = vmatpush1.bf16.xpose.msra.mxu0 %v4214
        %5330 = vmatprep.subr.bf16.mxu0 0
        %5331 = vmatpush2.bf16.xpose.msra.mxu0 0
        %5332 = vmatprep.subr.bf16.mxu0 0
        %5333 = vmatpush2.bf16.xpose.msra.mxu0 0
        %5334 = vmatprep.subr.bf16.mxu0 0
        %5335 = vmatpush2.bf16.xpose.msra.mxu0 0
        %5336 = vmatprep.subr.bf16.mxu0 0
        %5337 = vmatpush2.bf16.xpose.msra.mxu0 0
        %5338 = vmatprep.subr.bf16.mxu0 0
        %5339 = vmatpush2.bf16.xpose.msra.mxu0 0
        %5340 = vmatprep.subr.bf16.mxu0 0
        %5341 = vmatpush2.bf16.xpose.msra.mxu0 0
        %5342 = vmatprep.subr.bf16.mxu0 0
        %5343 = vmatpush2.bf16.xpose.msra.mxu0 0
        %5344 = vmatprep.subr.bf16.mxu0 0
        %5345 = vmatpush2.bf16.xpose.msra.mxu0 0
        %5346 = vmatprep.mubr.bf16.mxu0 %v894
        %5347 = vmatmul.mubr.bf16.gmra.mxu0 %v880
        %v5348 = vpop.f32.mrf.mxu0
        %v5349 = vadd.f32 %v5309, %v5348
        %v5350 = vpop.f32.mrf.mxu0
        %v5351 = vpop.f32.mrf.mxu0
        %v5352 = vpop.f32.mrf.mxu0
        %5353 = vdwg.mxu0
        %5354 = vmatprep.subr.bf16.mxu0 0
        %5355 = vmatpush1.bf16.xpose.msra.mxu0 0
        %5356 = vmatprep.subr.bf16.mxu0 0
        %5357 = vmatpush1.bf16.xpose.msra.mxu0 0
        %5358 = vmatprep.subr.bf16.mxu0 0
        %5359 = vmatpush1.bf16.xpose.msra.mxu0 0
        %5360 = vmatprep.subr.bf16.mxu0 0
        %5361 = vmatpush1.bf16.xpose.msra.mxu0 0
        %5362 = vmatprep.subr.bf16.mxu0 0
        %5363 = vmatpush1.bf16.xpose.msra.mxu0 0
        %5364 = vmatprep.subr.bf16.mxu0 0
        %5365 = vmatpush1.bf16.xpose.msra.mxu0 0
        %5366 = vmatprep.subr.bf16.mxu0 %v4473
        %5367 = vmatpush1.bf16.xpose.msra.mxu0 %v4472
        %5368 = vmatprep.subr.bf16.mxu0 %v4217
        %5369 = vmatpush1.bf16.xpose.msra.mxu0 %v4216
        %5370 = vmatprep.subr.bf16.mxu0 0
        %5371 = vmatpush2.bf16.xpose.msra.mxu0 0
        %5372 = vmatprep.subr.bf16.mxu0 0
        %5373 = vmatpush2.bf16.xpose.msra.mxu0 0
        %5374 = vmatprep.subr.bf16.mxu0 0
        %5375 = vmatpush2.bf16.xpose.msra.mxu0 0
        %5376 = vmatprep.subr.bf16.mxu0 0
        %5377 = vmatpush2.bf16.xpose.msra.mxu0 0
        %5378 = vmatprep.subr.bf16.mxu0 0
        %5379 = vmatpush2.bf16.xpose.msra.mxu0 0
        %5380 = vmatprep.subr.bf16.mxu0 0
        %5381 = vmatpush2.bf16.xpose.msra.mxu0 0
        %5382 = vmatprep.subr.bf16.mxu0 0
        %5383 = vmatpush2.bf16.xpose.msra.mxu0 0
        %5384 = vmatprep.subr.bf16.mxu0 0
        %5385 = vmatpush2.bf16.xpose.msra.mxu0 0
        %5386 = vmatprep.mubr.bf16.mxu0 %v898
        %5387 = vmatmul.mubr.bf16.gmra.mxu0 %v896
        %v5388 = vpop.f32.mrf.mxu0
        %v5389 = vadd.f32 %v5349, %v5388
        %v5390 = vpop.f32.mrf.mxu0
        %v5391 = vpop.f32.mrf.mxu0
        %v5392 = vpop.f32.mrf.mxu0
        %5393 = vdwg.mxu0
        %5394 = vmatprep.subr.bf16.mxu0 0
        %5395 = vmatpush1.bf16.xpose.msra.mxu0 0
        %5396 = vmatprep.subr.bf16.mxu0 0
        %5397 = vmatpush1.bf16.xpose.msra.mxu0 0
        %5398 = vmatprep.subr.bf16.mxu0 0
        %5399 = vmatpush1.bf16.xpose.msra.mxu0 0
        %5400 = vmatprep.subr.bf16.mxu0 0
        %5401 = vmatpush1.bf16.xpose.msra.mxu0 0
        %5402 = vmatprep.subr.bf16.mxu0 0
        %5403 = vmatpush1.bf16.xpose.msra.mxu0 0
        %5404 = vmatprep.subr.bf16.mxu0 0
        %5405 = vmatpush1.bf16.xpose.msra.mxu0 0
        %5406 = vmatprep.subr.bf16.mxu0 %v4475
        %5407 = vmatpush1.bf16.xpose.msra.mxu0 %v4474
        %5408 = vmatprep.subr.bf16.mxu0 %v4219
        %5409 = vmatpush1.bf16.xpose.msra.mxu0 %v4218
        %5410 = vmatprep.subr.bf16.mxu0 0
        %5411 = vmatpush2.bf16.xpose.msra.mxu0 0
        %5412 = vmatprep.subr.bf16.mxu0 0
        %5413 = vmatpush2.bf16.xpose.msra.mxu0 0
        %5414 = vmatprep.subr.bf16.mxu0 0
        %5415 = vmatpush2.bf16.xpose.msra.mxu0 0
        %5416 = vmatprep.subr.bf16.mxu0 0
        %5417 = vmatpush2.bf16.xpose.msra.mxu0 0
        %5418 = vmatprep.subr.bf16.mxu0 0
        %5419 = vmatpush2.bf16.xpose.msra.mxu0 0
        %5420 = vmatprep.subr.bf16.mxu0 0
        %5421 = vmatpush2.bf16.xpose.msra.mxu0 0
        %5422 = vmatprep.subr.bf16.mxu0 0
        %5423 = vmatpush2.bf16.xpose.msra.mxu0 0
        %5424 = vmatprep.subr.bf16.mxu0 0
        %5425 = vmatpush2.bf16.xpose.msra.mxu0 0
        %5426 = vmatprep.mubr.bf16.mxu0 %v936
        %5427 = vmatmul.mubr.bf16.gmra.mxu0 %v922
        %v5428 = vpop.f32.mrf.mxu0
        %v5429 = vadd.f32 %v5389, %v5428
        %v5430 = vpop.f32.mrf.mxu0
        %v5431 = vpop.f32.mrf.mxu0
        %v5432 = vpop.f32.mrf.mxu0
        %5433 = vdwg.mxu0
        %5434 = vmatprep.subr.bf16.mxu0 0
        %5435 = vmatpush1.bf16.xpose.msra.mxu0 0
        %5436 = vmatprep.subr.bf16.mxu0 0
        %5437 = vmatpush1.bf16.xpose.msra.mxu0 0
        %5438 = vmatprep.subr.bf16.mxu0 0
        %5439 = vmatpush1.bf16.xpose.msra.mxu0 0
        %5440 = vmatprep.subr.bf16.mxu0 0
        %5441 = vmatpush1.bf16.xpose.msra.mxu0 0
        %5442 = vmatprep.subr.bf16.mxu0 0
        %5443 = vmatpush1.bf16.xpose.msra.mxu0 0
        %5444 = vmatprep.subr.bf16.mxu0 0
        %5445 = vmatpush1.bf16.xpose.msra.mxu0 0
        %5446 = vmatprep.subr.bf16.mxu0 %v4477
        %5447 = vmatpush1.bf16.xpose.msra.mxu0 %v4476
        %5448 = vmatprep.subr.bf16.mxu0 %v4221
        %5449 = vmatpush1.bf16.xpose.msra.mxu0 %v4220
        %5450 = vmatprep.subr.bf16.mxu0 0
        %5451 = vmatpush2.bf16.xpose.msra.mxu0 0
        %5452 = vmatprep.subr.bf16.mxu0 0
        %5453 = vmatpush2.bf16.xpose.msra.mxu0 0
        %5454 = vmatprep.subr.bf16.mxu0 0
        %5455 = vmatpush2.bf16.xpose.msra.mxu0 0
        %5456 = vmatprep.subr.bf16.mxu0 0
        %5457 = vmatpush2.bf16.xpose.msra.mxu0 0
        %5458 = vmatprep.subr.bf16.mxu0 0
        %5459 = vmatpush2.bf16.xpose.msra.mxu0 0
        %5460 = vmatprep.subr.bf16.mxu0 0
        %5461 = vmatpush2.bf16.xpose.msra.mxu0 0
        %5462 = vmatprep.subr.bf16.mxu0 0
        %5463 = vmatpush2.bf16.xpose.msra.mxu0 0
        %5464 = vmatprep.subr.bf16.mxu0 0
        %5465 = vmatpush2.bf16.xpose.msra.mxu0 0
        %5466 = vmatprep.mubr.bf16.mxu0 %v946
        %5467 = vmatmul.mubr.bf16.gmra.mxu0 %v944
        %v5468 = vpop.f32.mrf.mxu0
        %v5469 = vadd.f32 %v5429, %v5468
        %v5470 = vpop.f32.mrf.mxu0
        %v5471 = vpop.f32.mrf.mxu0
        %v5472 = vpop.f32.mrf.mxu0
        %5473 = vdwg.mxu0
        %5474 = vmatprep.subr.bf16.mxu0 0
        %5475 = vmatpush1.bf16.xpose.msra.mxu0 0
        %5476 = vmatprep.subr.bf16.mxu0 0
        %5477 = vmatpush1.bf16.xpose.msra.mxu0 0
        %5478 = vmatprep.subr.bf16.mxu0 0
        %5479 = vmatpush1.bf16.xpose.msra.mxu0 0
        %5480 = vmatprep.subr.bf16.mxu0 0
        %5481 = vmatpush1.bf16.xpose.msra.mxu0 0
        %5482 = vmatprep.subr.bf16.mxu0 0
        %5483 = vmatpush1.bf16.xpose.msra.mxu0 0
        %5484 = vmatprep.subr.bf16.mxu0 0
        %5485 = vmatpush1.bf16.xpose.msra.mxu0 0
        %5486 = vmatprep.subr.bf16.mxu0 %v4479
        %5487 = vmatpush1.bf16.xpose.msra.mxu0 %v4478
        %5488 = vmatprep.subr.bf16.mxu0 %v4223
        %5489 = vmatpush1.bf16.xpose.msra.mxu0 %v4222
        %5490 = vmatprep.subr.bf16.mxu0 0
        %5491 = vmatpush2.bf16.xpose.msra.mxu0 0
        %5492 = vmatprep.subr.bf16.mxu0 0
        %5493 = vmatpush2.bf16.xpose.msra.mxu0 0
        %5494 = vmatprep.subr.bf16.mxu0 0
        %5495 = vmatpush2.bf16.xpose.msra.mxu0 0
        %5496 = vmatprep.subr.bf16.mxu0 0
        %5497 = vmatpush2.bf16.xpose.msra.mxu0 0
        %5498 = vmatprep.subr.bf16.mxu0 0
        %5499 = vmatpush2.bf16.xpose.msra.mxu0 0
        %5500 = vmatprep.subr.bf16.mxu0 0
        %5501 = vmatpush2.bf16.xpose.msra.mxu0 0
        %5502 = vmatprep.subr.bf16.mxu0 0
        %5503 = vmatpush2.bf16.xpose.msra.mxu0 0
        %5504 = vmatprep.subr.bf16.mxu0 0
        %5505 = vmatpush2.bf16.xpose.msra.mxu0 0
        %5506 = vmatprep.mubr.bf16.mxu0 %v943
        %5507 = vmatmul.mubr.bf16.gmra.mxu0 %v929
        %v5508 = vpop.f32.mrf.mxu0
        %v5509 = vadd.f32 %v5469, %v5508
        %v5510 = vpop.f32.mrf.mxu0
        %v5511 = vpop.f32.mrf.mxu0
        %v5512 = vpop.f32.mrf.mxu0
        %5513 = vdwg.mxu0
        %5514 = vmatprep.subr.bf16.mxu0 0
        %5515 = vmatpush1.bf16.xpose.msra.mxu0 0
        %5516 = vmatprep.subr.bf16.mxu0 0
        %5517 = vmatpush1.bf16.xpose.msra.mxu0 0
        %5518 = vmatprep.subr.bf16.mxu0 0
        %5519 = vmatpush1.bf16.xpose.msra.mxu0 0
        %5520 = vmatprep.subr.bf16.mxu0 0
        %5521 = vmatpush1.bf16.xpose.msra.mxu0 0
        %5522 = vmatprep.subr.bf16.mxu0 0
        %5523 = vmatpush1.bf16.xpose.msra.mxu0 0
        %5524 = vmatprep.subr.bf16.mxu0 0
        %5525 = vmatpush1.bf16.xpose.msra.mxu0 0
        %5526 = vmatprep.subr.bf16.mxu0 %v4481
        %5527 = vmatpush1.bf16.xpose.msra.mxu0 %v4480
        %5528 = vmatprep.subr.bf16.mxu0 %v4225
        %5529 = vmatpush1.bf16.xpose.msra.mxu0 %v4224
        %5530 = vmatprep.subr.bf16.mxu0 0
        %5531 = vmatpush2.bf16.xpose.msra.mxu0 0
        %5532 = vmatprep.subr.bf16.mxu0 0
        %5533 = vmatpush2.bf16.xpose.msra.mxu0 0
        %5534 = vmatprep.subr.bf16.mxu0 0
        %5535 = vmatpush2.bf16.xpose.msra.mxu0 0
        %5536 = vmatprep.subr.bf16.mxu0 0
        %5537 = vmatpush2.bf16.xpose.msra.mxu0 0
        %5538 = vmatprep.subr.bf16.mxu0 0
        %5539 = vmatpush2.bf16.xpose.msra.mxu0 0
        %5540 = vmatprep.subr.bf16.mxu0 0
        %5541 = vmatpush2.bf16.xpose.msra.mxu0 0
        %5542 = vmatprep.subr.bf16.mxu0 0
        %5543 = vmatpush2.bf16.xpose.msra.mxu0 0
        %5544 = vmatprep.subr.bf16.mxu0 0
        %5545 = vmatpush2.bf16.xpose.msra.mxu0 0
        %5546 = vmatprep.mubr.bf16.mxu0 %v947
        %5547 = vmatmul.mubr.bf16.gmra.mxu0 %v945
        %v5548 = vpop.f32.mrf.mxu0
        %v5549 = vadd.f32 %v5509, %v5548
        %v5550 = vpop.f32.mrf.mxu0
        %v5551 = vpop.f32.mrf.mxu0
        %v5552 = vpop.f32.mrf.mxu0
        %5553 = vdwg.mxu0
        %5554 = vmatprep.subr.bf16.mxu0 0
        %5555 = vmatpush1.bf16.xpose.msra.mxu0 0
        %5556 = vmatprep.subr.bf16.mxu0 0
        %5557 = vmatpush1.bf16.xpose.msra.mxu0 0
        %5558 = vmatprep.subr.bf16.mxu0 0
        %5559 = vmatpush1.bf16.xpose.msra.mxu0 0
        %5560 = vmatprep.subr.bf16.mxu0 0
        %5561 = vmatpush1.bf16.xpose.msra.mxu0 0
        %5562 = vmatprep.subr.bf16.mxu0 0
        %5563 = vmatpush1.bf16.xpose.msra.mxu0 0
        %5564 = vmatprep.subr.bf16.mxu0 0
        %5565 = vmatpush1.bf16.xpose.msra.mxu0 0
        %5566 = vmatprep.subr.bf16.mxu0 %v4483
        %5567 = vmatpush1.bf16.xpose.msra.mxu0 %v4482
        %5568 = vmatprep.subr.bf16.mxu0 %v4227
        %5569 = vmatpush1.bf16.xpose.msra.mxu0 %v4226
        %5570 = vmatprep.subr.bf16.mxu0 0
        %5571 = vmatpush2.bf16.xpose.msra.mxu0 0
        %5572 = vmatprep.subr.bf16.mxu0 0
        %5573 = vmatpush2.bf16.xpose.msra.mxu0 0
        %5574 = vmatprep.subr.bf16.mxu0 0
        %5575 = vmatpush2.bf16.xpose.msra.mxu0 0
        %5576 = vmatprep.subr.bf16.mxu0 0
        %5577 = vmatpush2.bf16.xpose.msra.mxu0 0
        %5578 = vmatprep.subr.bf16.mxu0 0
        %5579 = vmatpush2.bf16.xpose.msra.mxu0 0
        %5580 = vmatprep.subr.bf16.mxu0 0
        %5581 = vmatpush2.bf16.xpose.msra.mxu0 0
        %5582 = vmatprep.subr.bf16.mxu0 0
        %5583 = vmatpush2.bf16.xpose.msra.mxu0 0
        %5584 = vmatprep.subr.bf16.mxu0 0
        %5585 = vmatpush2.bf16.xpose.msra.mxu0 0
        %5586 = vmatprep.mubr.bf16.mxu0 %v985
        %5587 = vmatmul.mubr.bf16.gmra.mxu0 %v971
        %v5588 = vpop.f32.mrf.mxu0
        %v5589 = vadd.f32 %v5549, %v5588
        %v5590 = vpop.f32.mrf.mxu0
        %v5591 = vpop.f32.mrf.mxu0
        %v5592 = vpop.f32.mrf.mxu0
        %5593 = vdwg.mxu0
        %5594 = vmatprep.subr.bf16.mxu0 0
        %5595 = vmatpush1.bf16.xpose.msra.mxu0 0
        %5596 = vmatprep.subr.bf16.mxu0 0
        %5597 = vmatpush1.bf16.xpose.msra.mxu0 0
        %5598 = vmatprep.subr.bf16.mxu0 0
        %5599 = vmatpush1.bf16.xpose.msra.mxu0 0
        %5600 = vmatprep.subr.bf16.mxu0 0
        %5601 = vmatpush1.bf16.xpose.msra.mxu0 0
        %5602 = vmatprep.subr.bf16.mxu0 0
        %5603 = vmatpush1.bf16.xpose.msra.mxu0 0
        %5604 = vmatprep.subr.bf16.mxu0 0
        %5605 = vmatpush1.bf16.xpose.msra.mxu0 0
        %5606 = vmatprep.subr.bf16.mxu0 %v4485
        %5607 = vmatpush1.bf16.xpose.msra.mxu0 %v4484
        %5608 = vmatprep.subr.bf16.mxu0 %v4229
        %5609 = vmatpush1.bf16.xpose.msra.mxu0 %v4228
        %5610 = vmatprep.subr.bf16.mxu0 0
        %5611 = vmatpush2.bf16.xpose.msra.mxu0 0
        %5612 = vmatprep.subr.bf16.mxu0 0
        %5613 = vmatpush2.bf16.xpose.msra.mxu0 0
        %5614 = vmatprep.subr.bf16.mxu0 0
        %5615 = vmatpush2.bf16.xpose.msra.mxu0 0
        %5616 = vmatprep.subr.bf16.mxu0 0
        %5617 = vmatpush2.bf16.xpose.msra.mxu0 0
        %5618 = vmatprep.subr.bf16.mxu0 0
        %5619 = vmatpush2.bf16.xpose.msra.mxu0 0
        %5620 = vmatprep.subr.bf16.mxu0 0
        %5621 = vmatpush2.bf16.xpose.msra.mxu0 0
        %5622 = vmatprep.subr.bf16.mxu0 0
        %5623 = vmatpush2.bf16.xpose.msra.mxu0 0
        %5624 = vmatprep.subr.bf16.mxu0 0
        %5625 = vmatpush2.bf16.xpose.msra.mxu0 0
        %5626 = vmatprep.mubr.bf16.mxu0 %v995
        %5627 = vmatmul.mubr.bf16.gmra.mxu0 %v993
        %v5628 = vpop.f32.mrf.mxu0
        %v5629 = vadd.f32 %v5589, %v5628
        %v5630 = vpop.f32.mrf.mxu0
        %v5631 = vpop.f32.mrf.mxu0
        %v5632 = vpop.f32.mrf.mxu0
        %5633 = vdwg.mxu0
        %5634 = vmatprep.subr.bf16.mxu0 0
        %5635 = vmatpush1.bf16.xpose.msra.mxu0 0
        %5636 = vmatprep.subr.bf16.mxu0 0
        %5637 = vmatpush1.bf16.xpose.msra.mxu0 0
        %5638 = vmatprep.subr.bf16.mxu0 0
        %5639 = vmatpush1.bf16.xpose.msra.mxu0 0
        %5640 = vmatprep.subr.bf16.mxu0 0
        %5641 = vmatpush1.bf16.xpose.msra.mxu0 0
        %5642 = vmatprep.subr.bf16.mxu0 0
        %5643 = vmatpush1.bf16.xpose.msra.mxu0 0
        %5644 = vmatprep.subr.bf16.mxu0 0
        %5645 = vmatpush1.bf16.xpose.msra.mxu0 0
        %5646 = vmatprep.subr.bf16.mxu0 %v4487
        %5647 = vmatpush1.bf16.xpose.msra.mxu0 %v4486
        %5648 = vmatprep.subr.bf16.mxu0 %v4231
        %5649 = vmatpush1.bf16.xpose.msra.mxu0 %v4230
        %5650 = vmatprep.subr.bf16.mxu0 0
        %5651 = vmatpush2.bf16.xpose.msra.mxu0 0
        %5652 = vmatprep.subr.bf16.mxu0 0
        %5653 = vmatpush2.bf16.xpose.msra.mxu0 0
        %5654 = vmatprep.subr.bf16.mxu0 0
        %5655 = vmatpush2.bf16.xpose.msra.mxu0 0
        %5656 = vmatprep.subr.bf16.mxu0 0
        %5657 = vmatpush2.bf16.xpose.msra.mxu0 0
        %5658 = vmatprep.subr.bf16.mxu0 0
        %5659 = vmatpush2.bf16.xpose.msra.mxu0 0
        %5660 = vmatprep.subr.bf16.mxu0 0
        %5661 = vmatpush2.bf16.xpose.msra.mxu0 0
        %5662 = vmatprep.subr.bf16.mxu0 0
        %5663 = vmatpush2.bf16.xpose.msra.mxu0 0
        %5664 = vmatprep.subr.bf16.mxu0 0
        %5665 = vmatpush2.bf16.xpose.msra.mxu0 0
        %5666 = vmatprep.mubr.bf16.mxu0 %v992
        %5667 = vmatmul.mubr.bf16.gmra.mxu0 %v978
        %v5668 = vpop.f32.mrf.mxu0
        %v5669 = vadd.f32 %v5629, %v5668
        %v5670 = vpop.f32.mrf.mxu0
        %v5671 = vpop.f32.mrf.mxu0
        %v5672 = vpop.f32.mrf.mxu0
        %5673 = vdwg.mxu0
        %5674 = vmatprep.subr.bf16.mxu0 0
        %5675 = vmatpush1.bf16.xpose.msra.mxu0 0
        %5676 = vmatprep.subr.bf16.mxu0 0
        %5677 = vmatpush1.bf16.xpose.msra.mxu0 0
        %5678 = vmatprep.subr.bf16.mxu0 0
        %5679 = vmatpush1.bf16.xpose.msra.mxu0 0
        %5680 = vmatprep.subr.bf16.mxu0 0
        %5681 = vmatpush1.bf16.xpose.msra.mxu0 0
        %5682 = vmatprep.subr.bf16.mxu0 0
        %5683 = vmatpush1.bf16.xpose.msra.mxu0 0
        %5684 = vmatprep.subr.bf16.mxu0 0
        %5685 = vmatpush1.bf16.xpose.msra.mxu0 0
        %5686 = vmatprep.subr.bf16.mxu0 %v4489
        %5687 = vmatpush1.bf16.xpose.msra.mxu0 %v4488
        %5688 = vmatprep.subr.bf16.mxu0 %v4233
        %5689 = vmatpush1.bf16.xpose.msra.mxu0 %v4232
        %5690 = vmatprep.subr.bf16.mxu0 0
        %5691 = vmatpush2.bf16.xpose.msra.mxu0 0
        %5692 = vmatprep.subr.bf16.mxu0 0
        %5693 = vmatpush2.bf16.xpose.msra.mxu0 0
        %5694 = vmatprep.subr.bf16.mxu0 0
        %5695 = vmatpush2.bf16.xpose.msra.mxu0 0
        %5696 = vmatprep.subr.bf16.mxu0 0
        %5697 = vmatpush2.bf16.xpose.msra.mxu0 0
        %5698 = vmatprep.subr.bf16.mxu0 0
        %5699 = vmatpush2.bf16.xpose.msra.mxu0 0
        %5700 = vmatprep.subr.bf16.mxu0 0
        %5701 = vmatpush2.bf16.xpose.msra.mxu0 0
        %5702 = vmatprep.subr.bf16.mxu0 0
        %5703 = vmatpush2.bf16.xpose.msra.mxu0 0
        %5704 = vmatprep.subr.bf16.mxu0 0
        %5705 = vmatpush2.bf16.xpose.msra.mxu0 0
        %5706 = vmatprep.mubr.bf16.mxu0 %v996
        %5707 = vmatmul.mubr.bf16.gmra.mxu0 %v994
        %v5708 = vpop.f32.mrf.mxu0
        %v5709 = vadd.f32 %v5669, %v5708
        %v5710 = vpop.f32.mrf.mxu0
        %v5711 = vpop.f32.mrf.mxu0
        %v5712 = vpop.f32.mrf.mxu0
        %5713 = vdwg.mxu0
        %5714 = vmatprep.subr.bf16.mxu0 0
        %5715 = vmatpush1.bf16.xpose.msra.mxu0 0
        %5716 = vmatprep.subr.bf16.mxu0 0
        %5717 = vmatpush1.bf16.xpose.msra.mxu0 0
        %5718 = vmatprep.subr.bf16.mxu0 0
        %5719 = vmatpush1.bf16.xpose.msra.mxu0 0
        %5720 = vmatprep.subr.bf16.mxu0 0
        %5721 = vmatpush1.bf16.xpose.msra.mxu0 0
        %5722 = vmatprep.subr.bf16.mxu0 0
        %5723 = vmatpush1.bf16.xpose.msra.mxu0 0
        %5724 = vmatprep.subr.bf16.mxu0 0
        %5725 = vmatpush1.bf16.xpose.msra.mxu0 0
        %5726 = vmatprep.subr.bf16.mxu0 %v4491
        %5727 = vmatpush1.bf16.xpose.msra.mxu0 %v4490
        %5728 = vmatprep.subr.bf16.mxu0 %v4235
        %5729 = vmatpush1.bf16.xpose.msra.mxu0 %v4234
        %5730 = vmatprep.subr.bf16.mxu0 0
        %5731 = vmatpush2.bf16.xpose.msra.mxu0 0
        %5732 = vmatprep.subr.bf16.mxu0 0
        %5733 = vmatpush2.bf16.xpose.msra.mxu0 0
        %5734 = vmatprep.subr.bf16.mxu0 0
        %5735 = vmatpush2.bf16.xpose.msra.mxu0 0
        %5736 = vmatprep.subr.bf16.mxu0 0
        %5737 = vmatpush2.bf16.xpose.msra.mxu0 0
        %5738 = vmatprep.subr.bf16.mxu0 0
        %5739 = vmatpush2.bf16.xpose.msra.mxu0 0
        %5740 = vmatprep.subr.bf16.mxu0 0
        %5741 = vmatpush2.bf16.xpose.msra.mxu0 0
        %5742 = vmatprep.subr.bf16.mxu0 0
        %5743 = vmatpush2.bf16.xpose.msra.mxu0 0
        %5744 = vmatprep.subr.bf16.mxu0 0
        %5745 = vmatpush2.bf16.xpose.msra.mxu0 0
        %5746 = vmatprep.mubr.bf16.mxu0 %v1034
        %5747 = vmatmul.mubr.bf16.gmra.mxu0 %v1020
        %v5748 = vpop.f32.mrf.mxu0
        %v5749 = vadd.f32 %v5709, %v5748
        %v5750 = vpop.f32.mrf.mxu0
        %v5751 = vpop.f32.mrf.mxu0
        %v5752 = vpop.f32.mrf.mxu0
        %5753 = vdwg.mxu0
        %5754 = vmatprep.subr.bf16.mxu0 0
        %5755 = vmatpush1.bf16.xpose.msra.mxu0 0
        %5756 = vmatprep.subr.bf16.mxu0 0
        %5757 = vmatpush1.bf16.xpose.msra.mxu0 0
        %5758 = vmatprep.subr.bf16.mxu0 0
        %5759 = vmatpush1.bf16.xpose.msra.mxu0 0
        %5760 = vmatprep.subr.bf16.mxu0 0
        %5761 = vmatpush1.bf16.xpose.msra.mxu0 0
        %5762 = vmatprep.subr.bf16.mxu0 0
        %5763 = vmatpush1.bf16.xpose.msra.mxu0 0
        %5764 = vmatprep.subr.bf16.mxu0 0
        %5765 = vmatpush1.bf16.xpose.msra.mxu0 0
        %5766 = vmatprep.subr.bf16.mxu0 %v4493
        %5767 = vmatpush1.bf16.xpose.msra.mxu0 %v4492
        %5768 = vmatprep.subr.bf16.mxu0 %v4237
        %5769 = vmatpush1.bf16.xpose.msra.mxu0 %v4236
        %5770 = vmatprep.subr.bf16.mxu0 0
        %5771 = vmatpush2.bf16.xpose.msra.mxu0 0
        %5772 = vmatprep.subr.bf16.mxu0 0
        %5773 = vmatpush2.bf16.xpose.msra.mxu0 0
        %5774 = vmatprep.subr.bf16.mxu0 0
        %5775 = vmatpush2.bf16.xpose.msra.mxu0 0
        %5776 = vmatprep.subr.bf16.mxu0 0
        %5777 = vmatpush2.bf16.xpose.msra.mxu0 0
        %5778 = vmatprep.subr.bf16.mxu0 0
        %5779 = vmatpush2.bf16.xpose.msra.mxu0 0
        %5780 = vmatprep.subr.bf16.mxu0 0
        %5781 = vmatpush2.bf16.xpose.msra.mxu0 0
        %5782 = vmatprep.subr.bf16.mxu0 0
        %5783 = vmatpush2.bf16.xpose.msra.mxu0 0
        %5784 = vmatprep.subr.bf16.mxu0 0
        %5785 = vmatpush2.bf16.xpose.msra.mxu0 0
        %5786 = vmatprep.mubr.bf16.mxu0 %v1044
        %5787 = vmatmul.mubr.bf16.gmra.mxu0 %v1042
        %v5788 = vpop.f32.mrf.mxu0
        %v5789 = vadd.f32 %v5749, %v5788
        %v5790 = vpop.f32.mrf.mxu0
        %v5791 = vpop.f32.mrf.mxu0
        %v5792 = vpop.f32.mrf.mxu0
        %5793 = vdwg.mxu0
        %5794 = vmatprep.subr.bf16.mxu0 0
        %5795 = vmatpush1.bf16.xpose.msra.mxu0 0
        %5796 = vmatprep.subr.bf16.mxu0 0
        %5797 = vmatpush1.bf16.xpose.msra.mxu0 0
        %5798 = vmatprep.subr.bf16.mxu0 0
        %5799 = vmatpush1.bf16.xpose.msra.mxu0 0
        %5800 = vmatprep.subr.bf16.mxu0 0
        %5801 = vmatpush1.bf16.xpose.msra.mxu0 0
        %5802 = vmatprep.subr.bf16.mxu0 0
        %5803 = vmatpush1.bf16.xpose.msra.mxu0 0
        %5804 = vmatprep.subr.bf16.mxu0 0
        %5805 = vmatpush1.bf16.xpose.msra.mxu0 0
        %5806 = vmatprep.subr.bf16.mxu0 %v4495
        %5807 = vmatpush1.bf16.xpose.msra.mxu0 %v4494
        %5808 = vmatprep.subr.bf16.mxu0 %v4239
        %5809 = vmatpush1.bf16.xpose.msra.mxu0 %v4238
        %5810 = vmatprep.subr.bf16.mxu0 0
        %5811 = vmatpush2.bf16.xpose.msra.mxu0 0
        %5812 = vmatprep.subr.bf16.mxu0 0
        %5813 = vmatpush2.bf16.xpose.msra.mxu0 0
        %5814 = vmatprep.subr.bf16.mxu0 0
        %5815 = vmatpush2.bf16.xpose.msra.mxu0 0
        %5816 = vmatprep.subr.bf16.mxu0 0
        %5817 = vmatpush2.bf16.xpose.msra.mxu0 0
        %5818 = vmatprep.subr.bf16.mxu0 0
        %5819 = vmatpush2.bf16.xpose.msra.mxu0 0
        %5820 = vmatprep.subr.bf16.mxu0 0
        %5821 = vmatpush2.bf16.xpose.msra.mxu0 0
        %5822 = vmatprep.subr.bf16.mxu0 0
        %5823 = vmatpush2.bf16.xpose.msra.mxu0 0
        %5824 = vmatprep.subr.bf16.mxu0 0
        %5825 = vmatpush2.bf16.xpose.msra.mxu0 0
        %5826 = vmatprep.mubr.bf16.mxu0 %v1041
        %5827 = vmatmul.mubr.bf16.gmra.mxu0 %v1027
        %v5828 = vpop.f32.mrf.mxu0
        %v5829 = vadd.f32 %v5789, %v5828
        %v5830 = vpop.f32.mrf.mxu0
        %v5831 = vpop.f32.mrf.mxu0
        %v5832 = vpop.f32.mrf.mxu0
        %5833 = vdwg.mxu0
        %5834 = vmatprep.subr.bf16.mxu0 0
        %5835 = vmatpush1.bf16.xpose.msra.mxu0 0
        %5836 = vmatprep.subr.bf16.mxu0 0
        %5837 = vmatpush1.bf16.xpose.msra.mxu0 0
        %5838 = vmatprep.subr.bf16.mxu0 0
        %5839 = vmatpush1.bf16.xpose.msra.mxu0 0
        %5840 = vmatprep.subr.bf16.mxu0 0
        %5841 = vmatpush1.bf16.xpose.msra.mxu0 0
        %5842 = vmatprep.subr.bf16.mxu0 0
        %5843 = vmatpush1.bf16.xpose.msra.mxu0 0
        %5844 = vmatprep.subr.bf16.mxu0 0
        %5845 = vmatpush1.bf16.xpose.msra.mxu0 0
        %5846 = vmatprep.subr.bf16.mxu0 %v4497
        %5847 = vmatpush1.bf16.xpose.msra.mxu0 %v4496
        %5848 = vmatprep.subr.bf16.mxu0 %v4241
        %5849 = vmatpush1.bf16.xpose.msra.mxu0 %v4240
        %5850 = vmatprep.subr.bf16.mxu0 0
        %5851 = vmatpush2.bf16.xpose.msra.mxu0 0
        %5852 = vmatprep.subr.bf16.mxu0 0
        %5853 = vmatpush2.bf16.xpose.msra.mxu0 0
        %5854 = vmatprep.subr.bf16.mxu0 0
        %5855 = vmatpush2.bf16.xpose.msra.mxu0 0
        %5856 = vmatprep.subr.bf16.mxu0 0
        %5857 = vmatpush2.bf16.xpose.msra.mxu0 0
        %5858 = vmatprep.subr.bf16.mxu0 0
        %5859 = vmatpush2.bf16.xpose.msra.mxu0 0
        %5860 = vmatprep.subr.bf16.mxu0 0
        %5861 = vmatpush2.bf16.xpose.msra.mxu0 0
        %5862 = vmatprep.subr.bf16.mxu0 0
        %5863 = vmatpush2.bf16.xpose.msra.mxu0 0
        %5864 = vmatprep.subr.bf16.mxu0 0
        %5865 = vmatpush2.bf16.xpose.msra.mxu0 0
        %5866 = vmatprep.mubr.bf16.mxu0 %v1045
        %5867 = vmatmul.mubr.bf16.gmra.mxu0 %v1043
        %v5868 = vpop.f32.mrf.mxu0
        %v5869 = vadd.f32 %v5829, %v5868
        %v5870 = vpop.f32.mrf.mxu0
        %v5871 = vpop.f32.mrf.mxu0
        %v5872 = vpop.f32.mrf.mxu0
        %5873 = vdwg.mxu0
        %5874 = vmatprep.subr.bf16.mxu0 0
        %5875 = vmatpush1.bf16.xpose.msra.mxu0 0
        %5876 = vmatprep.subr.bf16.mxu0 0
        %5877 = vmatpush1.bf16.xpose.msra.mxu0 0
        %5878 = vmatprep.subr.bf16.mxu0 0
        %5879 = vmatpush1.bf16.xpose.msra.mxu0 0
        %5880 = vmatprep.subr.bf16.mxu0 0
        %5881 = vmatpush1.bf16.xpose.msra.mxu0 0
        %5882 = vmatprep.subr.bf16.mxu0 0
        %5883 = vmatpush1.bf16.xpose.msra.mxu0 0
        %5884 = vmatprep.subr.bf16.mxu0 0
        %5885 = vmatpush1.bf16.xpose.msra.mxu0 0
        %5886 = vmatprep.subr.bf16.mxu0 %v4499
        %5887 = vmatpush1.bf16.xpose.msra.mxu0 %v4498
        %5888 = vmatprep.subr.bf16.mxu0 %v4243
        %5889 = vmatpush1.bf16.xpose.msra.mxu0 %v4242
        %5890 = vmatprep.subr.bf16.mxu0 0
        %5891 = vmatpush2.bf16.xpose.msra.mxu0 0
        %5892 = vmatprep.subr.bf16.mxu0 0
        %5893 = vmatpush2.bf16.xpose.msra.mxu0 0
        %5894 = vmatprep.subr.bf16.mxu0 0
        %5895 = vmatpush2.bf16.xpose.msra.mxu0 0
        %5896 = vmatprep.subr.bf16.mxu0 0
        %5897 = vmatpush2.bf16.xpose.msra.mxu0 0
        %5898 = vmatprep.subr.bf16.mxu0 0
        %5899 = vmatpush2.bf16.xpose.msra.mxu0 0
        %5900 = vmatprep.subr.bf16.mxu0 0
        %5901 = vmatpush2.bf16.xpose.msra.mxu0 0
        %5902 = vmatprep.subr.bf16.mxu0 0
        %5903 = vmatpush2.bf16.xpose.msra.mxu0 0
        %5904 = vmatprep.subr.bf16.mxu0 0
        %5905 = vmatpush2.bf16.xpose.msra.mxu0 0
        %5906 = vmatprep.mubr.bf16.mxu0 %v1083
        %5907 = vmatmul.mubr.bf16.gmra.mxu0 %v1069
        %v5908 = vpop.f32.mrf.mxu0
        %v5909 = vadd.f32 %v5869, %v5908
        %v5910 = vpop.f32.mrf.mxu0
        %v5911 = vpop.f32.mrf.mxu0
        %v5912 = vpop.f32.mrf.mxu0
        %5913 = vdwg.mxu0
        %5914 = vmatprep.subr.bf16.mxu0 0
        %5915 = vmatpush1.bf16.xpose.msra.mxu0 0
        %5916 = vmatprep.subr.bf16.mxu0 0
        %5917 = vmatpush1.bf16.xpose.msra.mxu0 0
        %5918 = vmatprep.subr.bf16.mxu0 0
        %5919 = vmatpush1.bf16.xpose.msra.mxu0 0
        %5920 = vmatprep.subr.bf16.mxu0 0
        %5921 = vmatpush1.bf16.xpose.msra.mxu0 0
        %5922 = vmatprep.subr.bf16.mxu0 0
        %5923 = vmatpush1.bf16.xpose.msra.mxu0 0
        %5924 = vmatprep.subr.bf16.mxu0 0
        %5925 = vmatpush1.bf16.xpose.msra.mxu0 0
        %5926 = vmatprep.subr.bf16.mxu0 %v4501
        %5927 = vmatpush1.bf16.xpose.msra.mxu0 %v4500
        %5928 = vmatprep.subr.bf16.mxu0 %v4245
        %5929 = vmatpush1.bf16.xpose.msra.mxu0 %v4244
        %5930 = vmatprep.subr.bf16.mxu0 0
        %5931 = vmatpush2.bf16.xpose.msra.mxu0 0
        %5932 = vmatprep.subr.bf16.mxu0 0
        %5933 = vmatpush2.bf16.xpose.msra.mxu0 0
        %5934 = vmatprep.subr.bf16.mxu0 0
        %5935 = vmatpush2.bf16.xpose.msra.mxu0 0
        %5936 = vmatprep.subr.bf16.mxu0 0
        %5937 = vmatpush2.bf16.xpose.msra.mxu0 0
        %5938 = vmatprep.subr.bf16.mxu0 0
        %5939 = vmatpush2.bf16.xpose.msra.mxu0 0
        %5940 = vmatprep.subr.bf16.mxu0 0
        %5941 = vmatpush2.bf16.xpose.msra.mxu0 0
        %5942 = vmatprep.subr.bf16.mxu0 0
        %5943 = vmatpush2.bf16.xpose.msra.mxu0 0
        %5944 = vmatprep.subr.bf16.mxu0 0
        %5945 = vmatpush2.bf16.xpose.msra.mxu0 0
        %5946 = vmatprep.mubr.bf16.mxu0 %v1093
        %5947 = vmatmul.mubr.bf16.gmra.mxu0 %v1091
        %v5948 = vpop.f32.mrf.mxu0
        %v5949 = vadd.f32 %v5909, %v5948
        %v5950 = vpop.f32.mrf.mxu0
        %v5951 = vpop.f32.mrf.mxu0
        %v5952 = vpop.f32.mrf.mxu0
        %5953 = vdwg.mxu0
        %5954 = vmatprep.subr.bf16.mxu0 0
        %5955 = vmatpush1.bf16.xpose.msra.mxu0 0
        %5956 = vmatprep.subr.bf16.mxu0 0
        %5957 = vmatpush1.bf16.xpose.msra.mxu0 0
        %5958 = vmatprep.subr.bf16.mxu0 0
        %5959 = vmatpush1.bf16.xpose.msra.mxu0 0
        %5960 = vmatprep.subr.bf16.mxu0 0
        %5961 = vmatpush1.bf16.xpose.msra.mxu0 0
        %5962 = vmatprep.subr.bf16.mxu0 0
        %5963 = vmatpush1.bf16.xpose.msra.mxu0 0
        %5964 = vmatprep.subr.bf16.mxu0 0
        %5965 = vmatpush1.bf16.xpose.msra.mxu0 0
        %5966 = vmatprep.subr.bf16.mxu0 %v4503
        %5967 = vmatpush1.bf16.xpose.msra.mxu0 %v4502
        %5968 = vmatprep.subr.bf16.mxu0 %v4247
        %5969 = vmatpush1.bf16.xpose.msra.mxu0 %v4246
        %5970 = vmatprep.subr.bf16.mxu0 0
        %5971 = vmatpush2.bf16.xpose.msra.mxu0 0
        %5972 = vmatprep.subr.bf16.mxu0 0
        %5973 = vmatpush2.bf16.xpose.msra.mxu0 0
        %5974 = vmatprep.subr.bf16.mxu0 0
        %5975 = vmatpush2.bf16.xpose.msra.mxu0 0
        %5976 = vmatprep.subr.bf16.mxu0 0
        %5977 = vmatpush2.bf16.xpose.msra.mxu0 0
        %5978 = vmatprep.subr.bf16.mxu0 0
        %5979 = vmatpush2.bf16.xpose.msra.mxu0 0
        %5980 = vmatprep.subr.bf16.mxu0 0
        %5981 = vmatpush2.bf16.xpose.msra.mxu0 0
        %5982 = vmatprep.subr.bf16.mxu0 0
        %5983 = vmatpush2.bf16.xpose.msra.mxu0 0
        %5984 = vmatprep.subr.bf16.mxu0 0
        %5985 = vmatpush2.bf16.xpose.msra.mxu0 0
        %5986 = vmatprep.mubr.bf16.mxu0 %v1090
        %5987 = vmatmul.mubr.bf16.gmra.mxu0 %v1076
        %v5988 = vpop.f32.mrf.mxu0
        %v5989 = vadd.f32 %v5949, %v5988
        %v5990 = vpop.f32.mrf.mxu0
        %v5991 = vpop.f32.mrf.mxu0
        %v5992 = vpop.f32.mrf.mxu0
        %5993 = vdwg.mxu0
        %5994 = vmatprep.subr.bf16.mxu0 0
        %5995 = vmatpush1.bf16.xpose.msra.mxu0 0
        %5996 = vmatprep.subr.bf16.mxu0 0
        %5997 = vmatpush1.bf16.xpose.msra.mxu0 0
        %5998 = vmatprep.subr.bf16.mxu0 0
        %5999 = vmatpush1.bf16.xpose.msra.mxu0 0
        %6000 = vmatprep.subr.bf16.mxu0 0
        %6001 = vmatpush1.bf16.xpose.msra.mxu0 0
        %6002 = vmatprep.subr.bf16.mxu0 0
        %6003 = vmatpush1.bf16.xpose.msra.mxu0 0
        %6004 = vmatprep.subr.bf16.mxu0 0
        %6005 = vmatpush1.bf16.xpose.msra.mxu0 0
        %6006 = vmatprep.subr.bf16.mxu0 %v4505
        %6007 = vmatpush1.bf16.xpose.msra.mxu0 %v4504
        %6008 = vmatprep.subr.bf16.mxu0 %v4249
        %6009 = vmatpush1.bf16.xpose.msra.mxu0 %v4248
        %6010 = vmatprep.subr.bf16.mxu0 0
        %6011 = vmatpush2.bf16.xpose.msra.mxu0 0
        %6012 = vmatprep.subr.bf16.mxu0 0
        %6013 = vmatpush2.bf16.xpose.msra.mxu0 0
        %6014 = vmatprep.subr.bf16.mxu0 0
        %6015 = vmatpush2.bf16.xpose.msra.mxu0 0
        %6016 = vmatprep.subr.bf16.mxu0 0
        %6017 = vmatpush2.bf16.xpose.msra.mxu0 0
        %6018 = vmatprep.subr.bf16.mxu0 0
        %6019 = vmatpush2.bf16.xpose.msra.mxu0 0
        %6020 = vmatprep.subr.bf16.mxu0 0
        %6021 = vmatpush2.bf16.xpose.msra.mxu0 0
        %6022 = vmatprep.subr.bf16.mxu0 0
        %6023 = vmatpush2.bf16.xpose.msra.mxu0 0
        %6024 = vmatprep.subr.bf16.mxu0 0
        %6025 = vmatpush2.bf16.xpose.msra.mxu0 0
        %6026 = vmatprep.mubr.bf16.mxu0 %v1094
        %6027 = vmatmul.mubr.bf16.gmra.mxu0 %v1092
        %v6028 = vpop.f32.mrf.mxu0
        %v6029 = vadd.f32 %v5989, %v6028
        %v6030 = vpop.f32.mrf.mxu0
        %v6031 = vpop.f32.mrf.mxu0
        %v6032 = vpop.f32.mrf.mxu0
        %6033 = vdwg.mxu0
        %6034 = vmatprep.subr.bf16.mxu0 0
        %6035 = vmatpush1.bf16.xpose.msra.mxu0 0
        %6036 = vmatprep.subr.bf16.mxu0 0
        %6037 = vmatpush1.bf16.xpose.msra.mxu0 0
        %6038 = vmatprep.subr.bf16.mxu0 0
        %6039 = vmatpush1.bf16.xpose.msra.mxu0 0
        %6040 = vmatprep.subr.bf16.mxu0 0
        %6041 = vmatpush1.bf16.xpose.msra.mxu0 0
        %6042 = vmatprep.subr.bf16.mxu0 0
        %6043 = vmatpush1.bf16.xpose.msra.mxu0 0
        %6044 = vmatprep.subr.bf16.mxu0 0
        %6045 = vmatpush1.bf16.xpose.msra.mxu0 0
        %6046 = vmatprep.subr.bf16.mxu0 %v4507
        %6047 = vmatpush1.bf16.xpose.msra.mxu0 %v4506
        %6048 = vmatprep.subr.bf16.mxu0 %v4251
        %6049 = vmatpush1.bf16.xpose.msra.mxu0 %v4250
        %6050 = vmatprep.subr.bf16.mxu0 0
        %6051 = vmatpush2.bf16.xpose.msra.mxu0 0
        %6052 = vmatprep.subr.bf16.mxu0 0
        %6053 = vmatpush2.bf16.xpose.msra.mxu0 0
        %6054 = vmatprep.subr.bf16.mxu0 0
        %6055 = vmatpush2.bf16.xpose.msra.mxu0 0
        %6056 = vmatprep.subr.bf16.mxu0 0
        %6057 = vmatpush2.bf16.xpose.msra.mxu0 0
        %6058 = vmatprep.subr.bf16.mxu0 0
        %6059 = vmatpush2.bf16.xpose.msra.mxu0 0
        %6060 = vmatprep.subr.bf16.mxu0 0
        %6061 = vmatpush2.bf16.xpose.msra.mxu0 0
        %6062 = vmatprep.subr.bf16.mxu0 0
        %6063 = vmatpush2.bf16.xpose.msra.mxu0 0
        %6064 = vmatprep.subr.bf16.mxu0 0
        %6065 = vmatpush2.bf16.xpose.msra.mxu0 0
        %6066 = vmatprep.mubr.bf16.mxu0 %v1132
        %6067 = vmatmul.mubr.bf16.gmra.mxu0 %v1118
        %v6068 = vpop.f32.mrf.mxu0
        %v6069 = vadd.f32 %v6029, %v6068
        %v6070 = vpop.f32.mrf.mxu0
        %v6071 = vpop.f32.mrf.mxu0
        %v6072 = vpop.f32.mrf.mxu0
        %6073 = vdwg.mxu0
        %6074 = vmatprep.subr.bf16.mxu0 0
        %6075 = vmatpush1.bf16.xpose.msra.mxu0 0
        %6076 = vmatprep.subr.bf16.mxu0 0
        %6077 = vmatpush1.bf16.xpose.msra.mxu0 0
        %6078 = vmatprep.subr.bf16.mxu0 0
        %6079 = vmatpush1.bf16.xpose.msra.mxu0 0
        %6080 = vmatprep.subr.bf16.mxu0 0
        %6081 = vmatpush1.bf16.xpose.msra.mxu0 0
        %6082 = vmatprep.subr.bf16.mxu0 0
        %6083 = vmatpush1.bf16.xpose.msra.mxu0 0
        %6084 = vmatprep.subr.bf16.mxu0 0
        %6085 = vmatpush1.bf16.xpose.msra.mxu0 0
        %6086 = vmatprep.subr.bf16.mxu0 %v4509
        %6087 = vmatpush1.bf16.xpose.msra.mxu0 %v4508
        %6088 = vmatprep.subr.bf16.mxu0 %v4253
        %6089 = vmatpush1.bf16.xpose.msra.mxu0 %v4252
        %6090 = vmatprep.subr.bf16.mxu0 0
        %6091 = vmatpush2.bf16.xpose.msra.mxu0 0
        %6092 = vmatprep.subr.bf16.mxu0 0
        %6093 = vmatpush2.bf16.xpose.msra.mxu0 0
        %6094 = vmatprep.subr.bf16.mxu0 0
        %6095 = vmatpush2.bf16.xpose.msra.mxu0 0
        %6096 = vmatprep.subr.bf16.mxu0 0
        %6097 = vmatpush2.bf16.xpose.msra.mxu0 0
        %6098 = vmatprep.subr.bf16.mxu0 0
        %6099 = vmatpush2.bf16.xpose.msra.mxu0 0
        %6100 = vmatprep.subr.bf16.mxu0 0
        %6101 = vmatpush2.bf16.xpose.msra.mxu0 0
        %6102 = vmatprep.subr.bf16.mxu0 0
        %6103 = vmatpush2.bf16.xpose.msra.mxu0 0
        %6104 = vmatprep.subr.bf16.mxu0 0
        %6105 = vmatpush2.bf16.xpose.msra.mxu0 0
        %6106 = vmatprep.mubr.bf16.mxu0 %v1142
        %6107 = vmatmul.mubr.bf16.gmra.mxu0 %v1140
        %v6108 = vpop.f32.mrf.mxu0
        %v6109 = vadd.f32 %v6069, %v6108
        %v6110 = vpop.f32.mrf.mxu0
        %v6111 = vpop.f32.mrf.mxu0
        %v6112 = vpop.f32.mrf.mxu0
        %6113 = vdwg.mxu0
        %6114 = vmatprep.subr.bf16.mxu0 0
        %6115 = vmatpush1.bf16.xpose.msra.mxu0 0
        %6116 = vmatprep.subr.bf16.mxu0 0
        %6117 = vmatpush1.bf16.xpose.msra.mxu0 0
        %6118 = vmatprep.subr.bf16.mxu0 0
        %6119 = vmatpush1.bf16.xpose.msra.mxu0 0
        %6120 = vmatprep.subr.bf16.mxu0 0
        %6121 = vmatpush1.bf16.xpose.msra.mxu0 0
        %6122 = vmatprep.subr.bf16.mxu0 0
        %6123 = vmatpush1.bf16.xpose.msra.mxu0 0
        %6124 = vmatprep.subr.bf16.mxu0 0
        %6125 = vmatpush1.bf16.xpose.msra.mxu0 0
        %6126 = vmatprep.subr.bf16.mxu0 %v4511
        %6127 = vmatpush1.bf16.xpose.msra.mxu0 %v4510
        %6128 = vmatprep.subr.bf16.mxu0 %v4255
        %6129 = vmatpush1.bf16.xpose.msra.mxu0 %v4254
        %6130 = vmatprep.subr.bf16.mxu0 0
        %6131 = vmatpush2.bf16.xpose.msra.mxu0 0
        %6132 = vmatprep.subr.bf16.mxu0 0
        %6133 = vmatpush2.bf16.xpose.msra.mxu0 0
        %6134 = vmatprep.subr.bf16.mxu0 0
        %6135 = vmatpush2.bf16.xpose.msra.mxu0 0
        %6136 = vmatprep.subr.bf16.mxu0 0
        %6137 = vmatpush2.bf16.xpose.msra.mxu0 0
        %6138 = vmatprep.subr.bf16.mxu0 0
        %6139 = vmatpush2.bf16.xpose.msra.mxu0 0
        %6140 = vmatprep.subr.bf16.mxu0 0
        %6141 = vmatpush2.bf16.xpose.msra.mxu0 0
        %6142 = vmatprep.subr.bf16.mxu0 0
        %6143 = vmatpush2.bf16.xpose.msra.mxu0 0
        %6144 = vmatprep.subr.bf16.mxu0 0
        %6145 = vmatpush2.bf16.xpose.msra.mxu0 0
        %6146 = vmatprep.mubr.bf16.mxu0 %v1139
        %6147 = vmatmul.mubr.bf16.gmra.mxu0 %v1125
        %v6148 = vpop.f32.mrf.mxu0
        %v6149 = vadd.f32 %v6109, %v6148
        %v6150 = vpop.f32.mrf.mxu0
        %v6151 = vpop.f32.mrf.mxu0
        %v6152 = vpop.f32.mrf.mxu0
        %6153 = vdwg.mxu0
        %6154 = vmatprep.subr.bf16.mxu0 0
        %6155 = vmatpush1.bf16.xpose.msra.mxu0 0
        %6156 = vmatprep.subr.bf16.mxu0 0
        %6157 = vmatpush1.bf16.xpose.msra.mxu0 0
        %6158 = vmatprep.subr.bf16.mxu0 0
        %6159 = vmatpush1.bf16.xpose.msra.mxu0 0
        %6160 = vmatprep.subr.bf16.mxu0 0
        %6161 = vmatpush1.bf16.xpose.msra.mxu0 0
        %6162 = vmatprep.subr.bf16.mxu0 0
        %6163 = vmatpush1.bf16.xpose.msra.mxu0 0
        %6164 = vmatprep.subr.bf16.mxu0 0
        %6165 = vmatpush1.bf16.xpose.msra.mxu0 0
        %6166 = vmatprep.subr.bf16.mxu0 %v4513
        %6167 = vmatpush1.bf16.xpose.msra.mxu0 %v4512
        %6168 = vmatprep.subr.bf16.mxu0 %v4257
        %6169 = vmatpush1.bf16.xpose.msra.mxu0 %v4256
        %6170 = vmatprep.subr.bf16.mxu0 0
        %6171 = vmatpush2.bf16.xpose.msra.mxu0 0
        %6172 = vmatprep.subr.bf16.mxu0 0
        %6173 = vmatpush2.bf16.xpose.msra.mxu0 0
        %6174 = vmatprep.subr.bf16.mxu0 0
        %6175 = vmatpush2.bf16.xpose.msra.mxu0 0
        %6176 = vmatprep.subr.bf16.mxu0 0
        %6177 = vmatpush2.bf16.xpose.msra.mxu0 0
        %6178 = vmatprep.subr.bf16.mxu0 0
        %6179 = vmatpush2.bf16.xpose.msra.mxu0 0
        %6180 = vmatprep.subr.bf16.mxu0 0
        %6181 = vmatpush2.bf16.xpose.msra.mxu0 0
        %6182 = vmatprep.subr.bf16.mxu0 0
        %6183 = vmatpush2.bf16.xpose.msra.mxu0 0
        %6184 = vmatprep.subr.bf16.mxu0 0
        %6185 = vmatpush2.bf16.xpose.msra.mxu0 0
        %6186 = vmatprep.mubr.bf16.mxu0 %v1143
        %6187 = vmatmul.mubr.bf16.gmra.mxu0 %v1141
        %v6188 = vpop.f32.mrf.mxu0
        %v6189 = vadd.f32 %v6149, %v6188
        %v6190 = vpop.f32.mrf.mxu0
        %v6191 = vpop.f32.mrf.mxu0
        %v6192 = vpop.f32.mrf.mxu0
        %6193 = vdwg.mxu0
        %6194 = vmatprep.subr.bf16.mxu0 0
        %6195 = vmatpush1.bf16.xpose.msra.mxu0 0
        %6196 = vmatprep.subr.bf16.mxu0 0
        %6197 = vmatpush1.bf16.xpose.msra.mxu0 0
        %6198 = vmatprep.subr.bf16.mxu0 0
        %6199 = vmatpush1.bf16.xpose.msra.mxu0 0
        %6200 = vmatprep.subr.bf16.mxu0 0
        %6201 = vmatpush1.bf16.xpose.msra.mxu0 0
        %6202 = vmatprep.subr.bf16.mxu0 0
        %6203 = vmatpush1.bf16.xpose.msra.mxu0 0
        %6204 = vmatprep.subr.bf16.mxu0 0
        %6205 = vmatpush1.bf16.xpose.msra.mxu0 0
        %6206 = vmatprep.subr.bf16.mxu0 %v4515
        %6207 = vmatpush1.bf16.xpose.msra.mxu0 %v4514
        %6208 = vmatprep.subr.bf16.mxu0 %v4259
        %6209 = vmatpush1.bf16.xpose.msra.mxu0 %v4258
        %6210 = vmatprep.subr.bf16.mxu0 0
        %6211 = vmatpush2.bf16.xpose.msra.mxu0 0
        %6212 = vmatprep.subr.bf16.mxu0 0
        %6213 = vmatpush2.bf16.xpose.msra.mxu0 0
        %6214 = vmatprep.subr.bf16.mxu0 0
        %6215 = vmatpush2.bf16.xpose.msra.mxu0 0
        %6216 = vmatprep.subr.bf16.mxu0 0
        %6217 = vmatpush2.bf16.xpose.msra.mxu0 0
        %6218 = vmatprep.subr.bf16.mxu0 0
        %6219 = vmatpush2.bf16.xpose.msra.mxu0 0
        %6220 = vmatprep.subr.bf16.mxu0 0
        %6221 = vmatpush2.bf16.xpose.msra.mxu0 0
        %6222 = vmatprep.subr.bf16.mxu0 0
        %6223 = vmatpush2.bf16.xpose.msra.mxu0 0
        %6224 = vmatprep.subr.bf16.mxu0 0
        %6225 = vmatpush2.bf16.xpose.msra.mxu0 0
        %6226 = vmatprep.mubr.bf16.mxu0 %v1181
        %6227 = vmatmul.mubr.bf16.gmra.mxu0 %v1167
        %v6228 = vpop.f32.mrf.mxu0
        %v6229 = vadd.f32 %v6189, %v6228
        %v6230 = vpop.f32.mrf.mxu0
        %v6231 = vpop.f32.mrf.mxu0
        %v6232 = vpop.f32.mrf.mxu0
        %6233 = vdwg.mxu0
        %6234 = vmatprep.subr.bf16.mxu0 0
        %6235 = vmatpush1.bf16.xpose.msra.mxu0 0
        %6236 = vmatprep.subr.bf16.mxu0 0
        %6237 = vmatpush1.bf16.xpose.msra.mxu0 0
        %6238 = vmatprep.subr.bf16.mxu0 0
        %6239 = vmatpush1.bf16.xpose.msra.mxu0 0
        %6240 = vmatprep.subr.bf16.mxu0 0
        %6241 = vmatpush1.bf16.xpose.msra.mxu0 0
        %6242 = vmatprep.subr.bf16.mxu0 0
        %6243 = vmatpush1.bf16.xpose.msra.mxu0 0
        %6244 = vmatprep.subr.bf16.mxu0 0
        %6245 = vmatpush1.bf16.xpose.msra.mxu0 0
        %6246 = vmatprep.subr.bf16.mxu0 %v4517
        %6247 = vmatpush1.bf16.xpose.msra.mxu0 %v4516
        %6248 = vmatprep.subr.bf16.mxu0 %v4261
        %6249 = vmatpush1.bf16.xpose.msra.mxu0 %v4260
        %6250 = vmatprep.subr.bf16.mxu0 0
        %6251 = vmatpush2.bf16.xpose.msra.mxu0 0
        %6252 = vmatprep.subr.bf16.mxu0 0
        %6253 = vmatpush2.bf16.xpose.msra.mxu0 0
        %6254 = vmatprep.subr.bf16.mxu0 0
        %6255 = vmatpush2.bf16.xpose.msra.mxu0 0
        %6256 = vmatprep.subr.bf16.mxu0 0
        %6257 = vmatpush2.bf16.xpose.msra.mxu0 0
        %6258 = vmatprep.subr.bf16.mxu0 0
        %6259 = vmatpush2.bf16.xpose.msra.mxu0 0
        %6260 = vmatprep.subr.bf16.mxu0 0
        %6261 = vmatpush2.bf16.xpose.msra.mxu0 0
        %6262 = vmatprep.subr.bf16.mxu0 0
        %6263 = vmatpush2.bf16.xpose.msra.mxu0 0
        %6264 = vmatprep.subr.bf16.mxu0 0
        %6265 = vmatpush2.bf16.xpose.msra.mxu0 0
        %6266 = vmatprep.mubr.bf16.mxu0 %v1191
        %6267 = vmatmul.mubr.bf16.gmra.mxu0 %v1189
        %v6268 = vpop.f32.mrf.mxu0
        %v6269 = vadd.f32 %v6229, %v6268
        %v6270 = vpop.f32.mrf.mxu0
        %v6271 = vpop.f32.mrf.mxu0
        %v6272 = vpop.f32.mrf.mxu0
        %6273 = vdwg.mxu0
        %6274 = vmatprep.subr.bf16.mxu0 0
        %6275 = vmatpush1.bf16.xpose.msra.mxu0 0
        %6276 = vmatprep.subr.bf16.mxu0 0
        %6277 = vmatpush1.bf16.xpose.msra.mxu0 0
        %6278 = vmatprep.subr.bf16.mxu0 0
        %6279 = vmatpush1.bf16.xpose.msra.mxu0 0
        %6280 = vmatprep.subr.bf16.mxu0 0
        %6281 = vmatpush1.bf16.xpose.msra.mxu0 0
        %6282 = vmatprep.subr.bf16.mxu0 0
        %6283 = vmatpush1.bf16.xpose.msra.mxu0 0
        %6284 = vmatprep.subr.bf16.mxu0 0
        %6285 = vmatpush1.bf16.xpose.msra.mxu0 0
        %6286 = vmatprep.subr.bf16.mxu0 %v4519
        %6287 = vmatpush1.bf16.xpose.msra.mxu0 %v4518
        %6288 = vmatprep.subr.bf16.mxu0 %v4263
        %6289 = vmatpush1.bf16.xpose.msra.mxu0 %v4262
        %6290 = vmatprep.subr.bf16.mxu0 0
        %6291 = vmatpush2.bf16.xpose.msra.mxu0 0
        %6292 = vmatprep.subr.bf16.mxu0 0
        %6293 = vmatpush2.bf16.xpose.msra.mxu0 0
        %6294 = vmatprep.subr.bf16.mxu0 0
        %6295 = vmatpush2.bf16.xpose.msra.mxu0 0
        %6296 = vmatprep.subr.bf16.mxu0 0
        %6297 = vmatpush2.bf16.xpose.msra.mxu0 0
        %6298 = vmatprep.subr.bf16.mxu0 0
        %6299 = vmatpush2.bf16.xpose.msra.mxu0 0
        %6300 = vmatprep.subr.bf16.mxu0 0
        %6301 = vmatpush2.bf16.xpose.msra.mxu0 0
        %6302 = vmatprep.subr.bf16.mxu0 0
        %6303 = vmatpush2.bf16.xpose.msra.mxu0 0
        %6304 = vmatprep.subr.bf16.mxu0 0
        %6305 = vmatpush2.bf16.xpose.msra.mxu0 0
        %6306 = vmatprep.mubr.bf16.mxu0 %v1188
        %6307 = vmatmul.mubr.bf16.gmra.mxu0 %v1174
        %v6308 = vpop.f32.mrf.mxu0
        %v6309 = vadd.f32 %v6269, %v6308
        %v6310 = vpop.f32.mrf.mxu0
        %v6311 = vpop.f32.mrf.mxu0
        %v6312 = vpop.f32.mrf.mxu0
        %6313 = vdwg.mxu0
        %6314 = vmatprep.subr.bf16.mxu0 0
        %6315 = vmatpush1.bf16.xpose.msra.mxu0 0
        %6316 = vmatprep.subr.bf16.mxu0 0
        %6317 = vmatpush1.bf16.xpose.msra.mxu0 0
        %6318 = vmatprep.subr.bf16.mxu0 0
        %6319 = vmatpush1.bf16.xpose.msra.mxu0 0
        %6320 = vmatprep.subr.bf16.mxu0 0
        %6321 = vmatpush1.bf16.xpose.msra.mxu0 0
        %6322 = vmatprep.subr.bf16.mxu0 0
        %6323 = vmatpush1.bf16.xpose.msra.mxu0 0
        %6324 = vmatprep.subr.bf16.mxu0 0
        %6325 = vmatpush1.bf16.xpose.msra.mxu0 0
        %6326 = vmatprep.subr.bf16.mxu0 %v4521
        %6327 = vmatpush1.bf16.xpose.msra.mxu0 %v4520
        %6328 = vmatprep.subr.bf16.mxu0 %v4265
        %6329 = vmatpush1.bf16.xpose.msra.mxu0 %v4264
        %6330 = vmatprep.subr.bf16.mxu0 0
        %6331 = vmatpush2.bf16.xpose.msra.mxu0 0
        %6332 = vmatprep.subr.bf16.mxu0 0
        %6333 = vmatpush2.bf16.xpose.msra.mxu0 0
        %6334 = vmatprep.subr.bf16.mxu0 0
        %6335 = vmatpush2.bf16.xpose.msra.mxu0 0
        %6336 = vmatprep.subr.bf16.mxu0 0
        %6337 = vmatpush2.bf16.xpose.msra.mxu0 0
        %6338 = vmatprep.subr.bf16.mxu0 0
        %6339 = vmatpush2.bf16.xpose.msra.mxu0 0
        %6340 = vmatprep.subr.bf16.mxu0 0
        %6341 = vmatpush2.bf16.xpose.msra.mxu0 0
        %6342 = vmatprep.subr.bf16.mxu0 0
        %6343 = vmatpush2.bf16.xpose.msra.mxu0 0
        %6344 = vmatprep.subr.bf16.mxu0 0
        %6345 = vmatpush2.bf16.xpose.msra.mxu0 0
        %6346 = vmatprep.mubr.bf16.mxu0 %v1192
        %6347 = vmatmul.mubr.bf16.gmra.mxu0 %v1190
        %v6348 = vpop.f32.mrf.mxu0
        %v6349 = vadd.f32 %v6309, %v6348
        %v6350 = vpop.f32.mrf.mxu0
        %v6351 = vpop.f32.mrf.mxu0
        %v6352 = vpop.f32.mrf.mxu0
        %6353 = vdwg.mxu0
        %6354 = vmatprep.subr.bf16.mxu0 0
        %6355 = vmatpush1.bf16.xpose.msra.mxu0 0
        %6356 = vmatprep.subr.bf16.mxu0 0
        %6357 = vmatpush1.bf16.xpose.msra.mxu0 0
        %6358 = vmatprep.subr.bf16.mxu0 0
        %6359 = vmatpush1.bf16.xpose.msra.mxu0 0
        %6360 = vmatprep.subr.bf16.mxu0 0
        %6361 = vmatpush1.bf16.xpose.msra.mxu0 0
        %6362 = vmatprep.subr.bf16.mxu0 0
        %6363 = vmatpush1.bf16.xpose.msra.mxu0 0
        %6364 = vmatprep.subr.bf16.mxu0 0
        %6365 = vmatpush1.bf16.xpose.msra.mxu0 0
        %6366 = vmatprep.subr.bf16.mxu0 %v4523
        %6367 = vmatpush1.bf16.xpose.msra.mxu0 %v4522
        %6368 = vmatprep.subr.bf16.mxu0 %v4267
        %6369 = vmatpush1.bf16.xpose.msra.mxu0 %v4266
        %6370 = vmatprep.subr.bf16.mxu0 0
        %6371 = vmatpush2.bf16.xpose.msra.mxu0 0
        %6372 = vmatprep.subr.bf16.mxu0 0
        %6373 = vmatpush2.bf16.xpose.msra.mxu0 0
        %6374 = vmatprep.subr.bf16.mxu0 0
        %6375 = vmatpush2.bf16.xpose.msra.mxu0 0
        %6376 = vmatprep.subr.bf16.mxu0 0
        %6377 = vmatpush2.bf16.xpose.msra.mxu0 0
        %6378 = vmatprep.subr.bf16.mxu0 0
        %6379 = vmatpush2.bf16.xpose.msra.mxu0 0
        %6380 = vmatprep.subr.bf16.mxu0 0
        %6381 = vmatpush2.bf16.xpose.msra.mxu0 0
        %6382 = vmatprep.subr.bf16.mxu0 0
        %6383 = vmatpush2.bf16.xpose.msra.mxu0 0
        %6384 = vmatprep.subr.bf16.mxu0 0
        %6385 = vmatpush2.bf16.xpose.msra.mxu0 0
        %6386 = vmatprep.mubr.bf16.mxu0 %v1230
        %6387 = vmatmul.mubr.bf16.gmra.mxu0 %v1216
        %v6388 = vpop.f32.mrf.mxu0
        %v6389 = vadd.f32 %v6349, %v6388
        %v6390 = vpop.f32.mrf.mxu0
        %v6391 = vpop.f32.mrf.mxu0
        %v6392 = vpop.f32.mrf.mxu0
        %6393 = vdwg.mxu0
        %6394 = vmatprep.subr.bf16.mxu0 0
        %6395 = vmatpush1.bf16.xpose.msra.mxu0 0
        %6396 = vmatprep.subr.bf16.mxu0 0
        %6397 = vmatpush1.bf16.xpose.msra.mxu0 0
        %6398 = vmatprep.subr.bf16.mxu0 0
        %6399 = vmatpush1.bf16.xpose.msra.mxu0 0
        %6400 = vmatprep.subr.bf16.mxu0 0
        %6401 = vmatpush1.bf16.xpose.msra.mxu0 0
        %6402 = vmatprep.subr.bf16.mxu0 0
        %6403 = vmatpush1.bf16.xpose.msra.mxu0 0
        %6404 = vmatprep.subr.bf16.mxu0 0
        %6405 = vmatpush1.bf16.xpose.msra.mxu0 0
        %6406 = vmatprep.subr.bf16.mxu0 %v4525
        %6407 = vmatpush1.bf16.xpose.msra.mxu0 %v4524
        %6408 = vmatprep.subr.bf16.mxu0 %v4269
        %6409 = vmatpush1.bf16.xpose.msra.mxu0 %v4268
        %6410 = vmatprep.subr.bf16.mxu0 0
        %6411 = vmatpush2.bf16.xpose.msra.mxu0 0
        %6412 = vmatprep.subr.bf16.mxu0 0
        %6413 = vmatpush2.bf16.xpose.msra.mxu0 0
        %6414 = vmatprep.subr.bf16.mxu0 0
        %6415 = vmatpush2.bf16.xpose.msra.mxu0 0
        %6416 = vmatprep.subr.bf16.mxu0 0
        %6417 = vmatpush2.bf16.xpose.msra.mxu0 0
        %6418 = vmatprep.subr.bf16.mxu0 0
        %6419 = vmatpush2.bf16.xpose.msra.mxu0 0
        %6420 = vmatprep.subr.bf16.mxu0 0
        %6421 = vmatpush2.bf16.xpose.msra.mxu0 0
        %6422 = vmatprep.subr.bf16.mxu0 0
        %6423 = vmatpush2.bf16.xpose.msra.mxu0 0
        %6424 = vmatprep.subr.bf16.mxu0 0
        %6425 = vmatpush2.bf16.xpose.msra.mxu0 0
        %6426 = vmatprep.mubr.bf16.mxu0 %v1240
        %6427 = vmatmul.mubr.bf16.gmra.mxu0 %v1238
        %v6428 = vpop.f32.mrf.mxu0
        %v6429 = vadd.f32 %v6389, %v6428
        %v6430 = vpop.f32.mrf.mxu0
        %v6431 = vpop.f32.mrf.mxu0
        %v6432 = vpop.f32.mrf.mxu0
        %6433 = vdwg.mxu0
        %6434 = vmatprep.subr.bf16.mxu0 0
        %6435 = vmatpush1.bf16.xpose.msra.mxu0 0
        %6436 = vmatprep.subr.bf16.mxu0 0
        %6437 = vmatpush1.bf16.xpose.msra.mxu0 0
        %6438 = vmatprep.subr.bf16.mxu0 0
        %6439 = vmatpush1.bf16.xpose.msra.mxu0 0
        %6440 = vmatprep.subr.bf16.mxu0 0
        %6441 = vmatpush1.bf16.xpose.msra.mxu0 0
        %6442 = vmatprep.subr.bf16.mxu0 0
        %6443 = vmatpush1.bf16.xpose.msra.mxu0 0
        %6444 = vmatprep.subr.bf16.mxu0 0
        %6445 = vmatpush1.bf16.xpose.msra.mxu0 0
        %6446 = vmatprep.subr.bf16.mxu0 %v4527
        %6447 = vmatpush1.bf16.xpose.msra.mxu0 %v4526
        %6448 = vmatprep.subr.bf16.mxu0 %v4271
        %6449 = vmatpush1.bf16.xpose.msra.mxu0 %v4270
        %6450 = vmatprep.subr.bf16.mxu0 0
        %6451 = vmatpush2.bf16.xpose.msra.mxu0 0
        %6452 = vmatprep.subr.bf16.mxu0 0
        %6453 = vmatpush2.bf16.xpose.msra.mxu0 0
        %6454 = vmatprep.subr.bf16.mxu0 0
        %6455 = vmatpush2.bf16.xpose.msra.mxu0 0
        %6456 = vmatprep.subr.bf16.mxu0 0
        %6457 = vmatpush2.bf16.xpose.msra.mxu0 0
        %6458 = vmatprep.subr.bf16.mxu0 0
        %6459 = vmatpush2.bf16.xpose.msra.mxu0 0
        %6460 = vmatprep.subr.bf16.mxu0 0
        %6461 = vmatpush2.bf16.xpose.msra.mxu0 0
        %6462 = vmatprep.subr.bf16.mxu0 0
        %6463 = vmatpush2.bf16.xpose.msra.mxu0 0
        %6464 = vmatprep.subr.bf16.mxu0 0
        %6465 = vmatpush2.bf16.xpose.msra.mxu0 0
        %6466 = vmatprep.mubr.bf16.mxu0 %v1237
        %6467 = vmatmul.mubr.bf16.gmra.mxu0 %v1223
        %v6468 = vpop.f32.mrf.mxu0
        %v6469 = vadd.f32 %v6429, %v6468
        %v6470 = vpop.f32.mrf.mxu0
        %v6471 = vpop.f32.mrf.mxu0
        %v6472 = vpop.f32.mrf.mxu0
        %6473 = vdwg.mxu0
        %6474 = vmatprep.subr.bf16.mxu0 0
        %6475 = vmatpush1.bf16.xpose.msra.mxu0 0
        %6476 = vmatprep.subr.bf16.mxu0 0
        %6477 = vmatpush1.bf16.xpose.msra.mxu0 0
        %6478 = vmatprep.subr.bf16.mxu0 0
        %6479 = vmatpush1.bf16.xpose.msra.mxu0 0
        %6480 = vmatprep.subr.bf16.mxu0 0
        %6481 = vmatpush1.bf16.xpose.msra.mxu0 0
        %6482 = vmatprep.subr.bf16.mxu0 0
        %6483 = vmatpush1.bf16.xpose.msra.mxu0 0
        %6484 = vmatprep.subr.bf16.mxu0 0
        %6485 = vmatpush1.bf16.xpose.msra.mxu0 0
        %6486 = vmatprep.subr.bf16.mxu0 %v4529
        %6487 = vmatpush1.bf16.xpose.msra.mxu0 %v4528
        %6488 = vmatprep.subr.bf16.mxu0 %v4273
        %6489 = vmatpush1.bf16.xpose.msra.mxu0 %v4272
        %6490 = vmatprep.subr.bf16.mxu0 0
        %6491 = vmatpush2.bf16.xpose.msra.mxu0 0
        %6492 = vmatprep.subr.bf16.mxu0 0
        %6493 = vmatpush2.bf16.xpose.msra.mxu0 0
        %6494 = vmatprep.subr.bf16.mxu0 0
        %6495 = vmatpush2.bf16.xpose.msra.mxu0 0
        %6496 = vmatprep.subr.bf16.mxu0 0
        %6497 = vmatpush2.bf16.xpose.msra.mxu0 0
        %6498 = vmatprep.subr.bf16.mxu0 0
        %6499 = vmatpush2.bf16.xpose.msra.mxu0 0
        %6500 = vmatprep.subr.bf16.mxu0 0
        %6501 = vmatpush2.bf16.xpose.msra.mxu0 0
        %6502 = vmatprep.subr.bf16.mxu0 0
        %6503 = vmatpush2.bf16.xpose.msra.mxu0 0
        %6504 = vmatprep.subr.bf16.mxu0 0
        %6505 = vmatpush2.bf16.xpose.msra.mxu0 0
        %6506 = vmatprep.mubr.bf16.mxu0 %v1241
        %6507 = vmatmul.mubr.bf16.gmra.mxu0 %v1239
        %v6508 = vpop.f32.mrf.mxu0
        %v6509 = vadd.f32 %v6469, %v6508
        %v6510 = vpop.f32.mrf.mxu0
        %v6511 = vpop.f32.mrf.mxu0
        %v6512 = vpop.f32.mrf.mxu0
        %6513 = vdwg.mxu0
        %6514 = vmatprep.subr.bf16.mxu0 0
        %6515 = vmatpush1.bf16.xpose.msra.mxu0 0
        %6516 = vmatprep.subr.bf16.mxu0 0
        %6517 = vmatpush1.bf16.xpose.msra.mxu0 0
        %6518 = vmatprep.subr.bf16.mxu0 0
        %6519 = vmatpush1.bf16.xpose.msra.mxu0 0
        %6520 = vmatprep.subr.bf16.mxu0 0
        %6521 = vmatpush1.bf16.xpose.msra.mxu0 0
        %6522 = vmatprep.subr.bf16.mxu0 0
        %6523 = vmatpush1.bf16.xpose.msra.mxu0 0
        %6524 = vmatprep.subr.bf16.mxu0 0
        %6525 = vmatpush1.bf16.xpose.msra.mxu0 0
        %6526 = vmatprep.subr.bf16.mxu0 %v4531
        %6527 = vmatpush1.bf16.xpose.msra.mxu0 %v4530
        %6528 = vmatprep.subr.bf16.mxu0 %v4275
        %6529 = vmatpush1.bf16.xpose.msra.mxu0 %v4274
        %6530 = vmatprep.subr.bf16.mxu0 0
        %6531 = vmatpush2.bf16.xpose.msra.mxu0 0
        %6532 = vmatprep.subr.bf16.mxu0 0
        %6533 = vmatpush2.bf16.xpose.msra.mxu0 0
        %6534 = vmatprep.subr.bf16.mxu0 0
        %6535 = vmatpush2.bf16.xpose.msra.mxu0 0
        %6536 = vmatprep.subr.bf16.mxu0 0
        %6537 = vmatpush2.bf16.xpose.msra.mxu0 0
        %6538 = vmatprep.subr.bf16.mxu0 0
        %6539 = vmatpush2.bf16.xpose.msra.mxu0 0
        %6540 = vmatprep.subr.bf16.mxu0 0
        %6541 = vmatpush2.bf16.xpose.msra.mxu0 0
        %6542 = vmatprep.subr.bf16.mxu0 0
        %6543 = vmatpush2.bf16.xpose.msra.mxu0 0
        %6544 = vmatprep.subr.bf16.mxu0 0
        %6545 = vmatpush2.bf16.xpose.msra.mxu0 0
        %6546 = vmatprep.mubr.bf16.mxu0 %v1279
        %6547 = vmatmul.mubr.bf16.gmra.mxu0 %v1265
        %v6548 = vpop.f32.mrf.mxu0
        %v6549 = vadd.f32 %v6509, %v6548
        %v6550 = vpop.f32.mrf.mxu0
        %v6551 = vpop.f32.mrf.mxu0
        %v6552 = vpop.f32.mrf.mxu0
        %6553 = vdwg.mxu0
        %6554 = vmatprep.subr.bf16.mxu0 0
        %6555 = vmatpush1.bf16.xpose.msra.mxu0 0
        %6556 = vmatprep.subr.bf16.mxu0 0
        %6557 = vmatpush1.bf16.xpose.msra.mxu0 0
        %6558 = vmatprep.subr.bf16.mxu0 0
        %6559 = vmatpush1.bf16.xpose.msra.mxu0 0
        %6560 = vmatprep.subr.bf16.mxu0 0
        %6561 = vmatpush1.bf16.xpose.msra.mxu0 0
        %6562 = vmatprep.subr.bf16.mxu0 0
        %6563 = vmatpush1.bf16.xpose.msra.mxu0 0
        %6564 = vmatprep.subr.bf16.mxu0 0
        %6565 = vmatpush1.bf16.xpose.msra.mxu0 0
        %6566 = vmatprep.subr.bf16.mxu0 %v4533
        %6567 = vmatpush1.bf16.xpose.msra.mxu0 %v4532
        %6568 = vmatprep.subr.bf16.mxu0 %v4277
        %6569 = vmatpush1.bf16.xpose.msra.mxu0 %v4276
        %6570 = vmatprep.subr.bf16.mxu0 0
        %6571 = vmatpush2.bf16.xpose.msra.mxu0 0
        %6572 = vmatprep.subr.bf16.mxu0 0
        %6573 = vmatpush2.bf16.xpose.msra.mxu0 0
        %6574 = vmatprep.subr.bf16.mxu0 0
        %6575 = vmatpush2.bf16.xpose.msra.mxu0 0
        %6576 = vmatprep.subr.bf16.mxu0 0
        %6577 = vmatpush2.bf16.xpose.msra.mxu0 0
        %6578 = vmatprep.subr.bf16.mxu0 0
        %6579 = vmatpush2.bf16.xpose.msra.mxu0 0
        %6580 = vmatprep.subr.bf16.mxu0 0
        %6581 = vmatpush2.bf16.xpose.msra.mxu0 0
        %6582 = vmatprep.subr.bf16.mxu0 0
        %6583 = vmatpush2.bf16.xpose.msra.mxu0 0
        %6584 = vmatprep.subr.bf16.mxu0 0
        %6585 = vmatpush2.bf16.xpose.msra.mxu0 0
        %6586 = vmatprep.mubr.bf16.mxu0 %v1289
        %6587 = vmatmul.mubr.bf16.gmra.mxu0 %v1287
        %v6588 = vpop.f32.mrf.mxu0
        %v6589 = vadd.f32 %v6549, %v6588
        %v6590 = vpop.f32.mrf.mxu0
        %v6591 = vpop.f32.mrf.mxu0
        %v6592 = vpop.f32.mrf.mxu0
        %6593 = vdwg.mxu0
        %6594 = vmatprep.subr.bf16.mxu0 0
        %6595 = vmatpush1.bf16.xpose.msra.mxu0 0
        %6596 = vmatprep.subr.bf16.mxu0 0
        %6597 = vmatpush1.bf16.xpose.msra.mxu0 0
        %6598 = vmatprep.subr.bf16.mxu0 0
        %6599 = vmatpush1.bf16.xpose.msra.mxu0 0
        %6600 = vmatprep.subr.bf16.mxu0 0
        %6601 = vmatpush1.bf16.xpose.msra.mxu0 0
        %6602 = vmatprep.subr.bf16.mxu0 0
        %6603 = vmatpush1.bf16.xpose.msra.mxu0 0
        %6604 = vmatprep.subr.bf16.mxu0 0
        %6605 = vmatpush1.bf16.xpose.msra.mxu0 0
        %6606 = vmatprep.subr.bf16.mxu0 %v4535
        %6607 = vmatpush1.bf16.xpose.msra.mxu0 %v4534
        %6608 = vmatprep.subr.bf16.mxu0 %v4279
        %6609 = vmatpush1.bf16.xpose.msra.mxu0 %v4278
        %6610 = vmatprep.subr.bf16.mxu0 0
        %6611 = vmatpush2.bf16.xpose.msra.mxu0 0
        %6612 = vmatprep.subr.bf16.mxu0 0
        %6613 = vmatpush2.bf16.xpose.msra.mxu0 0
        %6614 = vmatprep.subr.bf16.mxu0 0
        %6615 = vmatpush2.bf16.xpose.msra.mxu0 0
        %6616 = vmatprep.subr.bf16.mxu0 0
        %6617 = vmatpush2.bf16.xpose.msra.mxu0 0
        %6618 = vmatprep.subr.bf16.mxu0 0
        %6619 = vmatpush2.bf16.xpose.msra.mxu0 0
        %6620 = vmatprep.subr.bf16.mxu0 0
        %6621 = vmatpush2.bf16.xpose.msra.mxu0 0
        %6622 = vmatprep.subr.bf16.mxu0 0
        %6623 = vmatpush2.bf16.xpose.msra.mxu0 0
        %6624 = vmatprep.subr.bf16.mxu0 0
        %6625 = vmatpush2.bf16.xpose.msra.mxu0 0
        %6626 = vmatprep.mubr.bf16.mxu0 %v1286
        %6627 = vmatmul.mubr.bf16.gmra.mxu0 %v1272
        %v6628 = vpop.f32.mrf.mxu0
        %v6629 = vadd.f32 %v6589, %v6628
        %v6630 = vpop.f32.mrf.mxu0
        %v6631 = vpop.f32.mrf.mxu0
        %v6632 = vpop.f32.mrf.mxu0
        %6633 = vdwg.mxu0
        %6634 = vmatprep.subr.bf16.mxu0 0
        %6635 = vmatpush1.bf16.xpose.msra.mxu0 0
        %6636 = vmatprep.subr.bf16.mxu0 0
        %6637 = vmatpush1.bf16.xpose.msra.mxu0 0
        %6638 = vmatprep.subr.bf16.mxu0 0
        %6639 = vmatpush1.bf16.xpose.msra.mxu0 0
        %6640 = vmatprep.subr.bf16.mxu0 0
        %6641 = vmatpush1.bf16.xpose.msra.mxu0 0
        %6642 = vmatprep.subr.bf16.mxu0 0
        %6643 = vmatpush1.bf16.xpose.msra.mxu0 0
        %6644 = vmatprep.subr.bf16.mxu0 0
        %6645 = vmatpush1.bf16.xpose.msra.mxu0 0
        %6646 = vmatprep.subr.bf16.mxu0 %v4537
        %6647 = vmatpush1.bf16.xpose.msra.mxu0 %v4536
        %6648 = vmatprep.subr.bf16.mxu0 %v4281
        %6649 = vmatpush1.bf16.xpose.msra.mxu0 %v4280
        %6650 = vmatprep.subr.bf16.mxu0 0
        %6651 = vmatpush2.bf16.xpose.msra.mxu0 0
        %6652 = vmatprep.subr.bf16.mxu0 0
        %6653 = vmatpush2.bf16.xpose.msra.mxu0 0
        %6654 = vmatprep.subr.bf16.mxu0 0
        %6655 = vmatpush2.bf16.xpose.msra.mxu0 0
        %6656 = vmatprep.subr.bf16.mxu0 0
        %6657 = vmatpush2.bf16.xpose.msra.mxu0 0
        %6658 = vmatprep.subr.bf16.mxu0 0
        %6659 = vmatpush2.bf16.xpose.msra.mxu0 0
        %6660 = vmatprep.subr.bf16.mxu0 0
        %6661 = vmatpush2.bf16.xpose.msra.mxu0 0
        %6662 = vmatprep.subr.bf16.mxu0 0
        %6663 = vmatpush2.bf16.xpose.msra.mxu0 0
        %6664 = vmatprep.subr.bf16.mxu0 0
        %6665 = vmatpush2.bf16.xpose.msra.mxu0 0
        %6666 = vmatprep.mubr.bf16.mxu0 %v1290
        %6667 = vmatmul.mubr.bf16.gmra.mxu0 %v1288
        %v6668 = vpop.f32.mrf.mxu0
        %v6669 = vadd.f32 %v6629, %v6668
        %v6670 = vpop.f32.mrf.mxu0
        %v6671 = vpop.f32.mrf.mxu0
        %v6672 = vpop.f32.mrf.mxu0
        %6673 = vdwg.mxu0
        %6674 = vmatprep.subr.bf16.mxu0 0
        %6675 = vmatpush1.bf16.xpose.msra.mxu0 0
        %6676 = vmatprep.subr.bf16.mxu0 0
        %6677 = vmatpush1.bf16.xpose.msra.mxu0 0
        %6678 = vmatprep.subr.bf16.mxu0 0
        %6679 = vmatpush1.bf16.xpose.msra.mxu0 0
        %6680 = vmatprep.subr.bf16.mxu0 0
        %6681 = vmatpush1.bf16.xpose.msra.mxu0 0
        %6682 = vmatprep.subr.bf16.mxu0 0
        %6683 = vmatpush1.bf16.xpose.msra.mxu0 0
        %6684 = vmatprep.subr.bf16.mxu0 0
        %6685 = vmatpush1.bf16.xpose.msra.mxu0 0
        %6686 = vmatprep.subr.bf16.mxu0 %v4539
        %6687 = vmatpush1.bf16.xpose.msra.mxu0 %v4538
        %6688 = vmatprep.subr.bf16.mxu0 %v4283
        %6689 = vmatpush1.bf16.xpose.msra.mxu0 %v4282
        %6690 = vmatprep.subr.bf16.mxu0 0
        %6691 = vmatpush2.bf16.xpose.msra.mxu0 0
        %6692 = vmatprep.subr.bf16.mxu0 0
        %6693 = vmatpush2.bf16.xpose.msra.mxu0 0
        %6694 = vmatprep.subr.bf16.mxu0 0
        %6695 = vmatpush2.bf16.xpose.msra.mxu0 0
        %6696 = vmatprep.subr.bf16.mxu0 0
        %6697 = vmatpush2.bf16.xpose.msra.mxu0 0
        %6698 = vmatprep.subr.bf16.mxu0 0
        %6699 = vmatpush2.bf16.xpose.msra.mxu0 0
        %6700 = vmatprep.subr.bf16.mxu0 0
        %6701 = vmatpush2.bf16.xpose.msra.mxu0 0
        %6702 = vmatprep.subr.bf16.mxu0 0
        %6703 = vmatpush2.bf16.xpose.msra.mxu0 0
        %6704 = vmatprep.subr.bf16.mxu0 0
        %6705 = vmatpush2.bf16.xpose.msra.mxu0 0
        %6706 = vmatprep.mubr.bf16.mxu0 %v1328
        %6707 = vmatmul.mubr.bf16.gmra.mxu0 %v1314
        %v6708 = vpop.f32.mrf.mxu0
        %v6709 = vadd.f32 %v6669, %v6708
        %v6710 = vpop.f32.mrf.mxu0
        %v6711 = vpop.f32.mrf.mxu0
        %v6712 = vpop.f32.mrf.mxu0
        %6713 = vdwg.mxu0
        %6714 = vmatprep.subr.bf16.mxu0 0
        %6715 = vmatpush1.bf16.xpose.msra.mxu0 0
        %6716 = vmatprep.subr.bf16.mxu0 0
        %6717 = vmatpush1.bf16.xpose.msra.mxu0 0
        %6718 = vmatprep.subr.bf16.mxu0 0
        %6719 = vmatpush1.bf16.xpose.msra.mxu0 0
        %6720 = vmatprep.subr.bf16.mxu0 0
        %6721 = vmatpush1.bf16.xpose.msra.mxu0 0
        %6722 = vmatprep.subr.bf16.mxu0 0
        %6723 = vmatpush1.bf16.xpose.msra.mxu0 0
        %6724 = vmatprep.subr.bf16.mxu0 0
        %6725 = vmatpush1.bf16.xpose.msra.mxu0 0
        %6726 = vmatprep.subr.bf16.mxu0 %v4541
        %6727 = vmatpush1.bf16.xpose.msra.mxu0 %v4540
        %6728 = vmatprep.subr.bf16.mxu0 %v4285
        %6729 = vmatpush1.bf16.xpose.msra.mxu0 %v4284
        %6730 = vmatprep.subr.bf16.mxu0 0
        %6731 = vmatpush2.bf16.xpose.msra.mxu0 0
        %6732 = vmatprep.subr.bf16.mxu0 0
        %6733 = vmatpush2.bf16.xpose.msra.mxu0 0
        %6734 = vmatprep.subr.bf16.mxu0 0
        %6735 = vmatpush2.bf16.xpose.msra.mxu0 0
        %6736 = vmatprep.subr.bf16.mxu0 0
        %6737 = vmatpush2.bf16.xpose.msra.mxu0 0
        %6738 = vmatprep.subr.bf16.mxu0 0
        %6739 = vmatpush2.bf16.xpose.msra.mxu0 0
        %6740 = vmatprep.subr.bf16.mxu0 0
        %6741 = vmatpush2.bf16.xpose.msra.mxu0 0
        %6742 = vmatprep.subr.bf16.mxu0 0
        %6743 = vmatpush2.bf16.xpose.msra.mxu0 0
        %6744 = vmatprep.subr.bf16.mxu0 0
        %6745 = vmatpush2.bf16.xpose.msra.mxu0 0
        %6746 = vmatprep.mubr.bf16.mxu0 %v1338
        %6747 = vmatmul.mubr.bf16.gmra.mxu0 %v1336
        %v6748 = vpop.f32.mrf.mxu0
        %v6749 = vadd.f32 %v6709, %v6748
        %v6750 = vpop.f32.mrf.mxu0
        %v6751 = vpop.f32.mrf.mxu0
        %v6752 = vpop.f32.mrf.mxu0
        %6753 = vdwg.mxu0
        %6754 = vmatprep.subr.bf16.mxu0 0
        %6755 = vmatpush1.bf16.xpose.msra.mxu0 0
        %6756 = vmatprep.subr.bf16.mxu0 0
        %6757 = vmatpush1.bf16.xpose.msra.mxu0 0
        %6758 = vmatprep.subr.bf16.mxu0 0
        %6759 = vmatpush1.bf16.xpose.msra.mxu0 0
        %6760 = vmatprep.subr.bf16.mxu0 0
        %6761 = vmatpush1.bf16.xpose.msra.mxu0 0
        %6762 = vmatprep.subr.bf16.mxu0 0
        %6763 = vmatpush1.bf16.xpose.msra.mxu0 0
        %6764 = vmatprep.subr.bf16.mxu0 0
        %6765 = vmatpush1.bf16.xpose.msra.mxu0 0
        %6766 = vmatprep.subr.bf16.mxu0 %v4543
        %6767 = vmatpush1.bf16.xpose.msra.mxu0 %v4542
        %6768 = vmatprep.subr.bf16.mxu0 %v4287
        %6769 = vmatpush1.bf16.xpose.msra.mxu0 %v4286
        %6770 = vmatprep.subr.bf16.mxu0 0
        %6771 = vmatpush2.bf16.xpose.msra.mxu0 0
        %6772 = vmatprep.subr.bf16.mxu0 0
        %6773 = vmatpush2.bf16.xpose.msra.mxu0 0
        %6774 = vmatprep.subr.bf16.mxu0 0
        %6775 = vmatpush2.bf16.xpose.msra.mxu0 0
        %6776 = vmatprep.subr.bf16.mxu0 0
        %6777 = vmatpush2.bf16.xpose.msra.mxu0 0
        %6778 = vmatprep.subr.bf16.mxu0 0
        %6779 = vmatpush2.bf16.xpose.msra.mxu0 0
        %6780 = vmatprep.subr.bf16.mxu0 0
        %6781 = vmatpush2.bf16.xpose.msra.mxu0 0
        %6782 = vmatprep.subr.bf16.mxu0 0
        %6783 = vmatpush2.bf16.xpose.msra.mxu0 0
        %6784 = vmatprep.subr.bf16.mxu0 0
        %6785 = vmatpush2.bf16.xpose.msra.mxu0 0
        %6786 = vmatprep.mubr.bf16.mxu0 %v1335
        %6787 = vmatmul.mubr.bf16.gmra.mxu0 %v1321
        %v6788 = vpop.f32.mrf.mxu0
        %v6789 = vadd.f32 %v6749, %v6788
        %v6790 = vpop.f32.mrf.mxu0
        %v6791 = vpop.f32.mrf.mxu0
        %v6792 = vpop.f32.mrf.mxu0
        %6793 = vdwg.mxu0
        %6794 = vmatprep.subr.bf16.mxu0 0
        %6795 = vmatpush1.bf16.xpose.msra.mxu0 0
        %6796 = vmatprep.subr.bf16.mxu0 0
        %6797 = vmatpush1.bf16.xpose.msra.mxu0 0
        %6798 = vmatprep.subr.bf16.mxu0 0
        %6799 = vmatpush1.bf16.xpose.msra.mxu0 0
        %6800 = vmatprep.subr.bf16.mxu0 0
        %6801 = vmatpush1.bf16.xpose.msra.mxu0 0
        %6802 = vmatprep.subr.bf16.mxu0 0
        %6803 = vmatpush1.bf16.xpose.msra.mxu0 0
        %6804 = vmatprep.subr.bf16.mxu0 0
        %6805 = vmatpush1.bf16.xpose.msra.mxu0 0
        %6806 = vmatprep.subr.bf16.mxu0 %v4545
        %6807 = vmatpush1.bf16.xpose.msra.mxu0 %v4544
        %6808 = vmatprep.subr.bf16.mxu0 %v4289
        %6809 = vmatpush1.bf16.xpose.msra.mxu0 %v4288
        %6810 = vmatprep.subr.bf16.mxu0 0
        %6811 = vmatpush2.bf16.xpose.msra.mxu0 0
        %6812 = vmatprep.subr.bf16.mxu0 0
        %6813 = vmatpush2.bf16.xpose.msra.mxu0 0
        %6814 = vmatprep.subr.bf16.mxu0 0
        %6815 = vmatpush2.bf16.xpose.msra.mxu0 0
        %6816 = vmatprep.subr.bf16.mxu0 0
        %6817 = vmatpush2.bf16.xpose.msra.mxu0 0
        %6818 = vmatprep.subr.bf16.mxu0 0
        %6819 = vmatpush2.bf16.xpose.msra.mxu0 0
        %6820 = vmatprep.subr.bf16.mxu0 0
        %6821 = vmatpush2.bf16.xpose.msra.mxu0 0
        %6822 = vmatprep.subr.bf16.mxu0 0
        %6823 = vmatpush2.bf16.xpose.msra.mxu0 0
        %6824 = vmatprep.subr.bf16.mxu0 0
        %6825 = vmatpush2.bf16.xpose.msra.mxu0 0
        %6826 = vmatprep.mubr.bf16.mxu0 %v1339
        %6827 = vmatmul.mubr.bf16.gmra.mxu0 %v1337
        %v6828 = vpop.f32.mrf.mxu0
        %v6829 = vadd.f32 %v6789, %v6828
        %v6830 = vpop.f32.mrf.mxu0
        %v6831 = vpop.f32.mrf.mxu0
        %v6832 = vpop.f32.mrf.mxu0
        %6833 = vdwg.mxu0
        %6834 = vmatprep.subr.bf16.mxu0 0
        %6835 = vmatpush1.bf16.xpose.msra.mxu0 0
        %6836 = vmatprep.subr.bf16.mxu0 0
        %6837 = vmatpush1.bf16.xpose.msra.mxu0 0
        %6838 = vmatprep.subr.bf16.mxu0 0
        %6839 = vmatpush1.bf16.xpose.msra.mxu0 0
        %6840 = vmatprep.subr.bf16.mxu0 0
        %6841 = vmatpush1.bf16.xpose.msra.mxu0 0
        %6842 = vmatprep.subr.bf16.mxu0 0
        %6843 = vmatpush1.bf16.xpose.msra.mxu0 0
        %6844 = vmatprep.subr.bf16.mxu0 0
        %6845 = vmatpush1.bf16.xpose.msra.mxu0 0
        %6846 = vmatprep.subr.bf16.mxu0 %v4547
        %6847 = vmatpush1.bf16.xpose.msra.mxu0 %v4546
        %6848 = vmatprep.subr.bf16.mxu0 %v4291
        %6849 = vmatpush1.bf16.xpose.msra.mxu0 %v4290
        %6850 = vmatprep.subr.bf16.mxu0 0
        %6851 = vmatpush2.bf16.xpose.msra.mxu0 0
        %6852 = vmatprep.subr.bf16.mxu0 0
        %6853 = vmatpush2.bf16.xpose.msra.mxu0 0
        %6854 = vmatprep.subr.bf16.mxu0 0
        %6855 = vmatpush2.bf16.xpose.msra.mxu0 0
        %6856 = vmatprep.subr.bf16.mxu0 0
        %6857 = vmatpush2.bf16.xpose.msra.mxu0 0
        %6858 = vmatprep.subr.bf16.mxu0 0
        %6859 = vmatpush2.bf16.xpose.msra.mxu0 0
        %6860 = vmatprep.subr.bf16.mxu0 0
        %6861 = vmatpush2.bf16.xpose.msra.mxu0 0
        %6862 = vmatprep.subr.bf16.mxu0 0
        %6863 = vmatpush2.bf16.xpose.msra.mxu0 0
        %6864 = vmatprep.subr.bf16.mxu0 0
        %6865 = vmatpush2.bf16.xpose.msra.mxu0 0
        %6866 = vmatprep.mubr.bf16.mxu0 %v1377
        %6867 = vmatmul.mubr.bf16.gmra.mxu0 %v1363
        %v6868 = vpop.f32.mrf.mxu0
        %v6869 = vadd.f32 %v6829, %v6868
        %v6870 = vpop.f32.mrf.mxu0
        %v6871 = vpop.f32.mrf.mxu0
        %v6872 = vpop.f32.mrf.mxu0
        %6873 = vdwg.mxu0
        %6874 = vmatprep.subr.bf16.mxu0 0
        %6875 = vmatpush1.bf16.xpose.msra.mxu0 0
        %6876 = vmatprep.subr.bf16.mxu0 0
        %6877 = vmatpush1.bf16.xpose.msra.mxu0 0
        %6878 = vmatprep.subr.bf16.mxu0 0
        %6879 = vmatpush1.bf16.xpose.msra.mxu0 0
        %6880 = vmatprep.subr.bf16.mxu0 0
        %6881 = vmatpush1.bf16.xpose.msra.mxu0 0
        %6882 = vmatprep.subr.bf16.mxu0 0
        %6883 = vmatpush1.bf16.xpose.msra.mxu0 0
        %6884 = vmatprep.subr.bf16.mxu0 0
        %6885 = vmatpush1.bf16.xpose.msra.mxu0 0
        %6886 = vmatprep.subr.bf16.mxu0 %v4549
        %6887 = vmatpush1.bf16.xpose.msra.mxu0 %v4548
        %6888 = vmatprep.subr.bf16.mxu0 %v4293
        %6889 = vmatpush1.bf16.xpose.msra.mxu0 %v4292
        %6890 = vmatprep.subr.bf16.mxu0 0
        %6891 = vmatpush2.bf16.xpose.msra.mxu0 0
        %6892 = vmatprep.subr.bf16.mxu0 0
        %6893 = vmatpush2.bf16.xpose.msra.mxu0 0
        %6894 = vmatprep.subr.bf16.mxu0 0
        %6895 = vmatpush2.bf16.xpose.msra.mxu0 0
        %6896 = vmatprep.subr.bf16.mxu0 0
        %6897 = vmatpush2.bf16.xpose.msra.mxu0 0
        %6898 = vmatprep.subr.bf16.mxu0 0
        %6899 = vmatpush2.bf16.xpose.msra.mxu0 0
        %6900 = vmatprep.subr.bf16.mxu0 0
        %6901 = vmatpush2.bf16.xpose.msra.mxu0 0
        %6902 = vmatprep.subr.bf16.mxu0 0
        %6903 = vmatpush2.bf16.xpose.msra.mxu0 0
        %6904 = vmatprep.subr.bf16.mxu0 0
        %6905 = vmatpush2.bf16.xpose.msra.mxu0 0
        %6906 = vmatprep.mubr.bf16.mxu0 %v1387
        %6907 = vmatmul.mubr.bf16.gmra.mxu0 %v1385
        %v6908 = vpop.f32.mrf.mxu0
        %v6909 = vadd.f32 %v6869, %v6908
        %v6910 = vpop.f32.mrf.mxu0
        %v6911 = vpop.f32.mrf.mxu0
        %v6912 = vpop.f32.mrf.mxu0
        %6913 = vdwg.mxu0
        %6914 = vmatprep.subr.bf16.mxu0 0
        %6915 = vmatpush1.bf16.xpose.msra.mxu0 0
        %6916 = vmatprep.subr.bf16.mxu0 0
        %6917 = vmatpush1.bf16.xpose.msra.mxu0 0
        %6918 = vmatprep.subr.bf16.mxu0 0
        %6919 = vmatpush1.bf16.xpose.msra.mxu0 0
        %6920 = vmatprep.subr.bf16.mxu0 0
        %6921 = vmatpush1.bf16.xpose.msra.mxu0 0
        %6922 = vmatprep.subr.bf16.mxu0 0
        %6923 = vmatpush1.bf16.xpose.msra.mxu0 0
        %6924 = vmatprep.subr.bf16.mxu0 0
        %6925 = vmatpush1.bf16.xpose.msra.mxu0 0
        %6926 = vmatprep.subr.bf16.mxu0 %v4551
        %6927 = vmatpush1.bf16.xpose.msra.mxu0 %v4550
        %6928 = vmatprep.subr.bf16.mxu0 %v4295
        %6929 = vmatpush1.bf16.xpose.msra.mxu0 %v4294
        %6930 = vmatprep.subr.bf16.mxu0 0
        %6931 = vmatpush2.bf16.xpose.msra.mxu0 0
        %6932 = vmatprep.subr.bf16.mxu0 0
        %6933 = vmatpush2.bf16.xpose.msra.mxu0 0
        %6934 = vmatprep.subr.bf16.mxu0 0
        %6935 = vmatpush2.bf16.xpose.msra.mxu0 0
        %6936 = vmatprep.subr.bf16.mxu0 0
        %6937 = vmatpush2.bf16.xpose.msra.mxu0 0
        %6938 = vmatprep.subr.bf16.mxu0 0
        %6939 = vmatpush2.bf16.xpose.msra.mxu0 0
        %6940 = vmatprep.subr.bf16.mxu0 0
        %6941 = vmatpush2.bf16.xpose.msra.mxu0 0
        %6942 = vmatprep.subr.bf16.mxu0 0
        %6943 = vmatpush2.bf16.xpose.msra.mxu0 0
        %6944 = vmatprep.subr.bf16.mxu0 0
        %6945 = vmatpush2.bf16.xpose.msra.mxu0 0
        %6946 = vmatprep.mubr.bf16.mxu0 %v1384
        %6947 = vmatmul.mubr.bf16.gmra.mxu0 %v1370
        %v6948 = vpop.f32.mrf.mxu0
        %v6949 = vadd.f32 %v6909, %v6948
        %v6950 = vpop.f32.mrf.mxu0
        %v6951 = vpop.f32.mrf.mxu0
        %v6952 = vpop.f32.mrf.mxu0
        %6953 = vdwg.mxu0
        %6954 = vmatprep.subr.bf16.mxu0 0
        %6955 = vmatpush1.bf16.xpose.msra.mxu0 0
        %6956 = vmatprep.subr.bf16.mxu0 0
        %6957 = vmatpush1.bf16.xpose.msra.mxu0 0
        %6958 = vmatprep.subr.bf16.mxu0 0
        %6959 = vmatpush1.bf16.xpose.msra.mxu0 0
        %6960 = vmatprep.subr.bf16.mxu0 0
        %6961 = vmatpush1.bf16.xpose.msra.mxu0 0
        %6962 = vmatprep.subr.bf16.mxu0 0
        %6963 = vmatpush1.bf16.xpose.msra.mxu0 0
        %6964 = vmatprep.subr.bf16.mxu0 0
        %6965 = vmatpush1.bf16.xpose.msra.mxu0 0
        %6966 = vmatprep.subr.bf16.mxu0 %v4553
        %6967 = vmatpush1.bf16.xpose.msra.mxu0 %v4552
        %6968 = vmatprep.subr.bf16.mxu0 %v4297
        %6969 = vmatpush1.bf16.xpose.msra.mxu0 %v4296
        %6970 = vmatprep.subr.bf16.mxu0 0
        %6971 = vmatpush2.bf16.xpose.msra.mxu0 0
        %6972 = vmatprep.subr.bf16.mxu0 0
        %6973 = vmatpush2.bf16.xpose.msra.mxu0 0
        %6974 = vmatprep.subr.bf16.mxu0 0
        %6975 = vmatpush2.bf16.xpose.msra.mxu0 0
        %6976 = vmatprep.subr.bf16.mxu0 0
        %6977 = vmatpush2.bf16.xpose.msra.mxu0 0
        %6978 = vmatprep.subr.bf16.mxu0 0
        %6979 = vmatpush2.bf16.xpose.msra.mxu0 0
        %6980 = vmatprep.subr.bf16.mxu0 0
        %6981 = vmatpush2.bf16.xpose.msra.mxu0 0
        %6982 = vmatprep.subr.bf16.mxu0 0
        %6983 = vmatpush2.bf16.xpose.msra.mxu0 0
        %6984 = vmatprep.subr.bf16.mxu0 0
        %6985 = vmatpush2.bf16.xpose.msra.mxu0 0
        %6986 = vmatprep.mubr.bf16.mxu0 %v1388
        %6987 = vmatmul.mubr.bf16.gmra.mxu0 %v1386
        %v6988 = vpop.f32.mrf.mxu0
        %v6989 = vadd.f32 %v6949, %v6988
        %v6990 = vpop.f32.mrf.mxu0
        %v6991 = vpop.f32.mrf.mxu0
        %v6992 = vpop.f32.mrf.mxu0
        %6993 = vdwg.mxu0
        %6994 = vmatprep.subr.bf16.mxu0 0
        %6995 = vmatpush1.bf16.xpose.msra.mxu0 0
        %6996 = vmatprep.subr.bf16.mxu0 0
        %6997 = vmatpush1.bf16.xpose.msra.mxu0 0
        %6998 = vmatprep.subr.bf16.mxu0 0
        %6999 = vmatpush1.bf16.xpose.msra.mxu0 0
        %7000 = vmatprep.subr.bf16.mxu0 0
        %7001 = vmatpush1.bf16.xpose.msra.mxu0 0
        %7002 = vmatprep.subr.bf16.mxu0 0
        %7003 = vmatpush1.bf16.xpose.msra.mxu0 0
        %7004 = vmatprep.subr.bf16.mxu0 0
        %7005 = vmatpush1.bf16.xpose.msra.mxu0 0
        %7006 = vmatprep.subr.bf16.mxu0 %v4555
        %7007 = vmatpush1.bf16.xpose.msra.mxu0 %v4554
        %7008 = vmatprep.subr.bf16.mxu0 %v4299
        %7009 = vmatpush1.bf16.xpose.msra.mxu0 %v4298
        %7010 = vmatprep.subr.bf16.mxu0 0
        %7011 = vmatpush2.bf16.xpose.msra.mxu0 0
        %7012 = vmatprep.subr.bf16.mxu0 0
        %7013 = vmatpush2.bf16.xpose.msra.mxu0 0
        %7014 = vmatprep.subr.bf16.mxu0 0
        %7015 = vmatpush2.bf16.xpose.msra.mxu0 0
        %7016 = vmatprep.subr.bf16.mxu0 0
        %7017 = vmatpush2.bf16.xpose.msra.mxu0 0
        %7018 = vmatprep.subr.bf16.mxu0 0
        %7019 = vmatpush2.bf16.xpose.msra.mxu0 0
        %7020 = vmatprep.subr.bf16.mxu0 0
        %7021 = vmatpush2.bf16.xpose.msra.mxu0 0
        %7022 = vmatprep.subr.bf16.mxu0 0
        %7023 = vmatpush2.bf16.xpose.msra.mxu0 0
        %7024 = vmatprep.subr.bf16.mxu0 0
        %7025 = vmatpush2.bf16.xpose.msra.mxu0 0
        %7026 = vmatprep.mubr.bf16.mxu0 %v1426
        %7027 = vmatmul.mubr.bf16.gmra.mxu0 %v1412
        %v7028 = vpop.f32.mrf.mxu0
        %v7029 = vadd.f32 %v6989, %v7028
        %v7030 = vpop.f32.mrf.mxu0
        %v7031 = vpop.f32.mrf.mxu0
        %v7032 = vpop.f32.mrf.mxu0
        %7033 = vdwg.mxu0
        %7034 = vmatprep.subr.bf16.mxu0 0
        %7035 = vmatpush1.bf16.xpose.msra.mxu0 0
        %7036 = vmatprep.subr.bf16.mxu0 0
        %7037 = vmatpush1.bf16.xpose.msra.mxu0 0
        %7038 = vmatprep.subr.bf16.mxu0 0
        %7039 = vmatpush1.bf16.xpose.msra.mxu0 0
        %7040 = vmatprep.subr.bf16.mxu0 0
        %7041 = vmatpush1.bf16.xpose.msra.mxu0 0
        %7042 = vmatprep.subr.bf16.mxu0 0
        %7043 = vmatpush1.bf16.xpose.msra.mxu0 0
        %7044 = vmatprep.subr.bf16.mxu0 0
        %7045 = vmatpush1.bf16.xpose.msra.mxu0 0
        %7046 = vmatprep.subr.bf16.mxu0 %v4557
        %7047 = vmatpush1.bf16.xpose.msra.mxu0 %v4556
        %7048 = vmatprep.subr.bf16.mxu0 %v4301
        %7049 = vmatpush1.bf16.xpose.msra.mxu0 %v4300
        %7050 = vmatprep.subr.bf16.mxu0 0
        %7051 = vmatpush2.bf16.xpose.msra.mxu0 0
        %7052 = vmatprep.subr.bf16.mxu0 0
        %7053 = vmatpush2.bf16.xpose.msra.mxu0 0
        %7054 = vmatprep.subr.bf16.mxu0 0
        %7055 = vmatpush2.bf16.xpose.msra.mxu0 0
        %7056 = vmatprep.subr.bf16.mxu0 0
        %7057 = vmatpush2.bf16.xpose.msra.mxu0 0
        %7058 = vmatprep.subr.bf16.mxu0 0
        %7059 = vmatpush2.bf16.xpose.msra.mxu0 0
        %7060 = vmatprep.subr.bf16.mxu0 0
        %7061 = vmatpush2.bf16.xpose.msra.mxu0 0
        %7062 = vmatprep.subr.bf16.mxu0 0
        %7063 = vmatpush2.bf16.xpose.msra.mxu0 0
        %7064 = vmatprep.subr.bf16.mxu0 0
        %7065 = vmatpush2.bf16.xpose.msra.mxu0 0
        %7066 = vmatprep.mubr.bf16.mxu0 %v1436
        %7067 = vmatmul.mubr.bf16.gmra.mxu0 %v1434
        %v7068 = vpop.f32.mrf.mxu0
        %v7069 = vadd.f32 %v7029, %v7068
        %v7070 = vpop.f32.mrf.mxu0
        %v7071 = vpop.f32.mrf.mxu0
        %v7072 = vpop.f32.mrf.mxu0
        %7073 = vdwg.mxu0
        %7074 = vmatprep.subr.bf16.mxu0 0
        %7075 = vmatpush1.bf16.xpose.msra.mxu0 0
        %7076 = vmatprep.subr.bf16.mxu0 0
        %7077 = vmatpush1.bf16.xpose.msra.mxu0 0
        %7078 = vmatprep.subr.bf16.mxu0 0
        %7079 = vmatpush1.bf16.xpose.msra.mxu0 0
        %7080 = vmatprep.subr.bf16.mxu0 0
        %7081 = vmatpush1.bf16.xpose.msra.mxu0 0
        %7082 = vmatprep.subr.bf16.mxu0 0
        %7083 = vmatpush1.bf16.xpose.msra.mxu0 0
        %7084 = vmatprep.subr.bf16.mxu0 0
        %7085 = vmatpush1.bf16.xpose.msra.mxu0 0
        %7086 = vmatprep.subr.bf16.mxu0 %v4559
        %7087 = vmatpush1.bf16.xpose.msra.mxu0 %v4558
        %7088 = vmatprep.subr.bf16.mxu0 %v4303
        %7089 = vmatpush1.bf16.xpose.msra.mxu0 %v4302
        %7090 = vmatprep.subr.bf16.mxu0 0
        %7091 = vmatpush2.bf16.xpose.msra.mxu0 0
        %7092 = vmatprep.subr.bf16.mxu0 0
        %7093 = vmatpush2.bf16.xpose.msra.mxu0 0
        %7094 = vmatprep.subr.bf16.mxu0 0
        %7095 = vmatpush2.bf16.xpose.msra.mxu0 0
        %7096 = vmatprep.subr.bf16.mxu0 0
        %7097 = vmatpush2.bf16.xpose.msra.mxu0 0
        %7098 = vmatprep.subr.bf16.mxu0 0
        %7099 = vmatpush2.bf16.xpose.msra.mxu0 0
        %7100 = vmatprep.subr.bf16.mxu0 0
        %7101 = vmatpush2.bf16.xpose.msra.mxu0 0
        %7102 = vmatprep.subr.bf16.mxu0 0
        %7103 = vmatpush2.bf16.xpose.msra.mxu0 0
        %7104 = vmatprep.subr.bf16.mxu0 0
        %7105 = vmatpush2.bf16.xpose.msra.mxu0 0
        %7106 = vmatprep.mubr.bf16.mxu0 %v1433
        %7107 = vmatmul.mubr.bf16.gmra.mxu0 %v1419
        %v7108 = vpop.f32.mrf.mxu0
        %v7109 = vadd.f32 %v7069, %v7108
        %v7110 = vpop.f32.mrf.mxu0
        %v7111 = vpop.f32.mrf.mxu0
        %v7112 = vpop.f32.mrf.mxu0
        %7113 = vdwg.mxu0
        %7114 = vmatprep.subr.bf16.mxu0 0
        %7115 = vmatpush1.bf16.xpose.msra.mxu0 0
        %7116 = vmatprep.subr.bf16.mxu0 0
        %7117 = vmatpush1.bf16.xpose.msra.mxu0 0
        %7118 = vmatprep.subr.bf16.mxu0 0
        %7119 = vmatpush1.bf16.xpose.msra.mxu0 0
        %7120 = vmatprep.subr.bf16.mxu0 0
        %7121 = vmatpush1.bf16.xpose.msra.mxu0 0
        %7122 = vmatprep.subr.bf16.mxu0 0
        %7123 = vmatpush1.bf16.xpose.msra.mxu0 0
        %7124 = vmatprep.subr.bf16.mxu0 0
        %7125 = vmatpush1.bf16.xpose.msra.mxu0 0
        %7126 = vmatprep.subr.bf16.mxu0 %v4561
        %7127 = vmatpush1.bf16.xpose.msra.mxu0 %v4560
        %7128 = vmatprep.subr.bf16.mxu0 %v4305
        %7129 = vmatpush1.bf16.xpose.msra.mxu0 %v4304
        %7130 = vmatprep.subr.bf16.mxu0 0
        %7131 = vmatpush2.bf16.xpose.msra.mxu0 0
        %7132 = vmatprep.subr.bf16.mxu0 0
        %7133 = vmatpush2.bf16.xpose.msra.mxu0 0
        %7134 = vmatprep.subr.bf16.mxu0 0
        %7135 = vmatpush2.bf16.xpose.msra.mxu0 0
        %7136 = vmatprep.subr.bf16.mxu0 0
        %7137 = vmatpush2.bf16.xpose.msra.mxu0 0
        %7138 = vmatprep.subr.bf16.mxu0 0
        %7139 = vmatpush2.bf16.xpose.msra.mxu0 0
        %7140 = vmatprep.subr.bf16.mxu0 0
        %7141 = vmatpush2.bf16.xpose.msra.mxu0 0
        %7142 = vmatprep.subr.bf16.mxu0 0
        %7143 = vmatpush2.bf16.xpose.msra.mxu0 0
        %7144 = vmatprep.subr.bf16.mxu0 0
        %7145 = vmatpush2.bf16.xpose.msra.mxu0 0
        %7146 = vmatprep.mubr.bf16.mxu0 %v1437
        %7147 = vmatmul.mubr.bf16.gmra.mxu0 %v1435
        %v7148 = vpop.f32.mrf.mxu0
        %v7149 = vadd.f32 %v7109, %v7148
        %v7150 = vpop.f32.mrf.mxu0
        %v7151 = vpop.f32.mrf.mxu0
        %v7152 = vpop.f32.mrf.mxu0
        %7153 = vdwg.mxu0
        %7154 = vmatprep.subr.bf16.mxu0 0
        %7155 = vmatpush1.bf16.xpose.msra.mxu0 0
        %7156 = vmatprep.subr.bf16.mxu0 0
        %7157 = vmatpush1.bf16.xpose.msra.mxu0 0
        %7158 = vmatprep.subr.bf16.mxu0 0
        %7159 = vmatpush1.bf16.xpose.msra.mxu0 0
        %7160 = vmatprep.subr.bf16.mxu0 0
        %7161 = vmatpush1.bf16.xpose.msra.mxu0 0
        %7162 = vmatprep.subr.bf16.mxu0 0
        %7163 = vmatpush1.bf16.xpose.msra.mxu0 0
        %7164 = vmatprep.subr.bf16.mxu0 0
        %7165 = vmatpush1.bf16.xpose.msra.mxu0 0
        %7166 = vmatprep.subr.bf16.mxu0 %v4563
        %7167 = vmatpush1.bf16.xpose.msra.mxu0 %v4562
        %7168 = vmatprep.subr.bf16.mxu0 %v4307
        %7169 = vmatpush1.bf16.xpose.msra.mxu0 %v4306
        %7170 = vmatprep.subr.bf16.mxu0 0
        %7171 = vmatpush2.bf16.xpose.msra.mxu0 0
        %7172 = vmatprep.subr.bf16.mxu0 0
        %7173 = vmatpush2.bf16.xpose.msra.mxu0 0
        %7174 = vmatprep.subr.bf16.mxu0 0
        %7175 = vmatpush2.bf16.xpose.msra.mxu0 0
        %7176 = vmatprep.subr.bf16.mxu0 0
        %7177 = vmatpush2.bf16.xpose.msra.mxu0 0
        %7178 = vmatprep.subr.bf16.mxu0 0
        %7179 = vmatpush2.bf16.xpose.msra.mxu0 0
        %7180 = vmatprep.subr.bf16.mxu0 0
        %7181 = vmatpush2.bf16.xpose.msra.mxu0 0
        %7182 = vmatprep.subr.bf16.mxu0 0
        %7183 = vmatpush2.bf16.xpose.msra.mxu0 0
        %7184 = vmatprep.subr.bf16.mxu0 0
        %7185 = vmatpush2.bf16.xpose.msra.mxu0 0
        %7186 = vmatprep.mubr.bf16.mxu0 %v1475
        %7187 = vmatmul.mubr.bf16.gmra.mxu0 %v1461
        %v7188 = vpop.f32.mrf.mxu0
        %v7189 = vadd.f32 %v7149, %v7188
        %v7190 = vpop.f32.mrf.mxu0
        %v7191 = vpop.f32.mrf.mxu0
        %v7192 = vpop.f32.mrf.mxu0
        %7193 = vdwg.mxu0
        %7194 = vmatprep.subr.bf16.mxu0 0
        %7195 = vmatpush1.bf16.xpose.msra.mxu0 0
        %7196 = vmatprep.subr.bf16.mxu0 0
        %7197 = vmatpush1.bf16.xpose.msra.mxu0 0
        %7198 = vmatprep.subr.bf16.mxu0 0
        %7199 = vmatpush1.bf16.xpose.msra.mxu0 0
        %7200 = vmatprep.subr.bf16.mxu0 0
        %7201 = vmatpush1.bf16.xpose.msra.mxu0 0
        %7202 = vmatprep.subr.bf16.mxu0 0
        %7203 = vmatpush1.bf16.xpose.msra.mxu0 0
        %7204 = vmatprep.subr.bf16.mxu0 0
        %7205 = vmatpush1.bf16.xpose.msra.mxu0 0
        %7206 = vmatprep.subr.bf16.mxu0 %v4565
        %7207 = vmatpush1.bf16.xpose.msra.mxu0 %v4564
        %7208 = vmatprep.subr.bf16.mxu0 %v4309
        %7209 = vmatpush1.bf16.xpose.msra.mxu0 %v4308
        %7210 = vmatprep.subr.bf16.mxu0 0
        %7211 = vmatpush2.bf16.xpose.msra.mxu0 0
        %7212 = vmatprep.subr.bf16.mxu0 0
        %7213 = vmatpush2.bf16.xpose.msra.mxu0 0
        %7214 = vmatprep.subr.bf16.mxu0 0
        %7215 = vmatpush2.bf16.xpose.msra.mxu0 0
        %7216 = vmatprep.subr.bf16.mxu0 0
        %7217 = vmatpush2.bf16.xpose.msra.mxu0 0
        %7218 = vmatprep.subr.bf16.mxu0 0
        %7219 = vmatpush2.bf16.xpose.msra.mxu0 0
        %7220 = vmatprep.subr.bf16.mxu0 0
        %7221 = vmatpush2.bf16.xpose.msra.mxu0 0
        %7222 = vmatprep.subr.bf16.mxu0 0
        %7223 = vmatpush2.bf16.xpose.msra.mxu0 0
        %7224 = vmatprep.subr.bf16.mxu0 0
        %7225 = vmatpush2.bf16.xpose.msra.mxu0 0
        %7226 = vmatprep.mubr.bf16.mxu0 %v1485
        %7227 = vmatmul.mubr.bf16.gmra.mxu0 %v1483
        %v7228 = vpop.f32.mrf.mxu0
        %v7229 = vadd.f32 %v7189, %v7228
        %v7230 = vpop.f32.mrf.mxu0
        %v7231 = vpop.f32.mrf.mxu0
        %v7232 = vpop.f32.mrf.mxu0
        %7233 = vdwg.mxu0
        %7234 = vmatprep.subr.bf16.mxu0 0
        %7235 = vmatpush1.bf16.xpose.msra.mxu0 0
        %7236 = vmatprep.subr.bf16.mxu0 0
        %7237 = vmatpush1.bf16.xpose.msra.mxu0 0
        %7238 = vmatprep.subr.bf16.mxu0 0
        %7239 = vmatpush1.bf16.xpose.msra.mxu0 0
        %7240 = vmatprep.subr.bf16.mxu0 0
        %7241 = vmatpush1.bf16.xpose.msra.mxu0 0
        %7242 = vmatprep.subr.bf16.mxu0 0
        %7243 = vmatpush1.bf16.xpose.msra.mxu0 0
        %7244 = vmatprep.subr.bf16.mxu0 0
        %7245 = vmatpush1.bf16.xpose.msra.mxu0 0
        %7246 = vmatprep.subr.bf16.mxu0 %v4567
        %7247 = vmatpush1.bf16.xpose.msra.mxu0 %v4566
        %7248 = vmatprep.subr.bf16.mxu0 %v4311
        %7249 = vmatpush1.bf16.xpose.msra.mxu0 %v4310
        %7250 = vmatprep.subr.bf16.mxu0 0
        %7251 = vmatpush2.bf16.xpose.msra.mxu0 0
        %7252 = vmatprep.subr.bf16.mxu0 0
        %7253 = vmatpush2.bf16.xpose.msra.mxu0 0
        %7254 = vmatprep.subr.bf16.mxu0 0
        %7255 = vmatpush2.bf16.xpose.msra.mxu0 0
        %7256 = vmatprep.subr.bf16.mxu0 0
        %7257 = vmatpush2.bf16.xpose.msra.mxu0 0
        %7258 = vmatprep.subr.bf16.mxu0 0
        %7259 = vmatpush2.bf16.xpose.msra.mxu0 0
        %7260 = vmatprep.subr.bf16.mxu0 0
        %7261 = vmatpush2.bf16.xpose.msra.mxu0 0
        %7262 = vmatprep.subr.bf16.mxu0 0
        %7263 = vmatpush2.bf16.xpose.msra.mxu0 0
        %7264 = vmatprep.subr.bf16.mxu0 0
        %7265 = vmatpush2.bf16.xpose.msra.mxu0 0
        %7266 = vmatprep.mubr.bf16.mxu0 %v1482
        %7267 = vmatmul.mubr.bf16.gmra.mxu0 %v1468
        %v7268 = vpop.f32.mrf.mxu0
        %v7269 = vadd.f32 %v7229, %v7268
        %v7270 = vpop.f32.mrf.mxu0
        %v7271 = vpop.f32.mrf.mxu0
        %v7272 = vpop.f32.mrf.mxu0
        %7273 = vdwg.mxu0
        %7274 = vmatprep.subr.bf16.mxu0 0
        %7275 = vmatpush1.bf16.xpose.msra.mxu0 0
        %7276 = vmatprep.subr.bf16.mxu0 0
        %7277 = vmatpush1.bf16.xpose.msra.mxu0 0
        %7278 = vmatprep.subr.bf16.mxu0 0
        %7279 = vmatpush1.bf16.xpose.msra.mxu0 0
        %7280 = vmatprep.subr.bf16.mxu0 0
        %7281 = vmatpush1.bf16.xpose.msra.mxu0 0
        %7282 = vmatprep.subr.bf16.mxu0 0
        %7283 = vmatpush1.bf16.xpose.msra.mxu0 0
        %7284 = vmatprep.subr.bf16.mxu0 0
        %7285 = vmatpush1.bf16.xpose.msra.mxu0 0
        %7286 = vmatprep.subr.bf16.mxu0 %v4569
        %7287 = vmatpush1.bf16.xpose.msra.mxu0 %v4568
        %7288 = vmatprep.subr.bf16.mxu0 %v4313
        %7289 = vmatpush1.bf16.xpose.msra.mxu0 %v4312
        %7290 = vmatprep.subr.bf16.mxu0 0
        %7291 = vmatpush2.bf16.xpose.msra.mxu0 0
        %7292 = vmatprep.subr.bf16.mxu0 0
        %7293 = vmatpush2.bf16.xpose.msra.mxu0 0
        %7294 = vmatprep.subr.bf16.mxu0 0
        %7295 = vmatpush2.bf16.xpose.msra.mxu0 0
        %7296 = vmatprep.subr.bf16.mxu0 0
        %7297 = vmatpush2.bf16.xpose.msra.mxu0 0
        %7298 = vmatprep.subr.bf16.mxu0 0
        %7299 = vmatpush2.bf16.xpose.msra.mxu0 0
        %7300 = vmatprep.subr.bf16.mxu0 0
        %7301 = vmatpush2.bf16.xpose.msra.mxu0 0
        %7302 = vmatprep.subr.bf16.mxu0 0
        %7303 = vmatpush2.bf16.xpose.msra.mxu0 0
        %7304 = vmatprep.subr.bf16.mxu0 0
        %7305 = vmatpush2.bf16.xpose.msra.mxu0 0
        %7306 = vmatprep.mubr.bf16.mxu0 %v1486
        %7307 = vmatmul.mubr.bf16.gmra.mxu0 %v1484
        %v7308 = vpop.f32.mrf.mxu0
        %v7309 = vadd.f32 %v7269, %v7308
        %v7310 = vpop.f32.mrf.mxu0
        %v7311 = vpop.f32.mrf.mxu0
        %v7312 = vpop.f32.mrf.mxu0
        %7313 = vdwg.mxu0
        %7314 = vmatprep.subr.bf16.mxu0 0
        %7315 = vmatpush1.bf16.xpose.msra.mxu0 0
        %7316 = vmatprep.subr.bf16.mxu0 0
        %7317 = vmatpush1.bf16.xpose.msra.mxu0 0
        %7318 = vmatprep.subr.bf16.mxu0 0
        %7319 = vmatpush1.bf16.xpose.msra.mxu0 0
        %7320 = vmatprep.subr.bf16.mxu0 0
        %7321 = vmatpush1.bf16.xpose.msra.mxu0 0
        %7322 = vmatprep.subr.bf16.mxu0 0
        %7323 = vmatpush1.bf16.xpose.msra.mxu0 0
        %7324 = vmatprep.subr.bf16.mxu0 0
        %7325 = vmatpush1.bf16.xpose.msra.mxu0 0
        %7326 = vmatprep.subr.bf16.mxu0 %v4571
        %7327 = vmatpush1.bf16.xpose.msra.mxu0 %v4570
        %7328 = vmatprep.subr.bf16.mxu0 %v4315
        %7329 = vmatpush1.bf16.xpose.msra.mxu0 %v4314
        %7330 = vmatprep.subr.bf16.mxu0 0
        %7331 = vmatpush2.bf16.xpose.msra.mxu0 0
        %7332 = vmatprep.subr.bf16.mxu0 0
        %7333 = vmatpush2.bf16.xpose.msra.mxu0 0
        %7334 = vmatprep.subr.bf16.mxu0 0
        %7335 = vmatpush2.bf16.xpose.msra.mxu0 0
        %7336 = vmatprep.subr.bf16.mxu0 0
        %7337 = vmatpush2.bf16.xpose.msra.mxu0 0
        %7338 = vmatprep.subr.bf16.mxu0 0
        %7339 = vmatpush2.bf16.xpose.msra.mxu0 0
        %7340 = vmatprep.subr.bf16.mxu0 0
        %7341 = vmatpush2.bf16.xpose.msra.mxu0 0
        %7342 = vmatprep.subr.bf16.mxu0 0
        %7343 = vmatpush2.bf16.xpose.msra.mxu0 0
        %7344 = vmatprep.subr.bf16.mxu0 0
        %7345 = vmatpush2.bf16.xpose.msra.mxu0 0
        %7346 = vmatprep.mubr.bf16.mxu0 %v1524
        %7347 = vmatmul.mubr.bf16.gmra.mxu0 %v1510
        %v7348 = vpop.f32.mrf.mxu0
        %v7349 = vadd.f32 %v7309, %v7348
        %v7350 = vpop.f32.mrf.mxu0
        %v7351 = vpop.f32.mrf.mxu0
        %v7352 = vpop.f32.mrf.mxu0
        %7353 = vdwg.mxu0
        %7354 = vmatprep.subr.bf16.mxu0 0
        %7355 = vmatpush1.bf16.xpose.msra.mxu0 0
        %7356 = vmatprep.subr.bf16.mxu0 0
        %7357 = vmatpush1.bf16.xpose.msra.mxu0 0
        %7358 = vmatprep.subr.bf16.mxu0 0
        %7359 = vmatpush1.bf16.xpose.msra.mxu0 0
        %7360 = vmatprep.subr.bf16.mxu0 0
        %7361 = vmatpush1.bf16.xpose.msra.mxu0 0
        %7362 = vmatprep.subr.bf16.mxu0 0
        %7363 = vmatpush1.bf16.xpose.msra.mxu0 0
        %7364 = vmatprep.subr.bf16.mxu0 0
        %7365 = vmatpush1.bf16.xpose.msra.mxu0 0
        %7366 = vmatprep.subr.bf16.mxu0 %v4573
        %7367 = vmatpush1.bf16.xpose.msra.mxu0 %v4572
        %7368 = vmatprep.subr.bf16.mxu0 %v4317
        %7369 = vmatpush1.bf16.xpose.msra.mxu0 %v4316
        %7370 = vmatprep.subr.bf16.mxu0 0
        %7371 = vmatpush2.bf16.xpose.msra.mxu0 0
        %7372 = vmatprep.subr.bf16.mxu0 0
        %7373 = vmatpush2.bf16.xpose.msra.mxu0 0
        %7374 = vmatprep.subr.bf16.mxu0 0
        %7375 = vmatpush2.bf16.xpose.msra.mxu0 0
        %7376 = vmatprep.subr.bf16.mxu0 0
        %7377 = vmatpush2.bf16.xpose.msra.mxu0 0
        %7378 = vmatprep.subr.bf16.mxu0 0
        %7379 = vmatpush2.bf16.xpose.msra.mxu0 0
        %7380 = vmatprep.subr.bf16.mxu0 0
        %7381 = vmatpush2.bf16.xpose.msra.mxu0 0
        %7382 = vmatprep.subr.bf16.mxu0 0
        %7383 = vmatpush2.bf16.xpose.msra.mxu0 0
        %7384 = vmatprep.subr.bf16.mxu0 0
        %7385 = vmatpush2.bf16.xpose.msra.mxu0 0
        %7386 = vmatprep.mubr.bf16.mxu0 %v1534
        %7387 = vmatmul.mubr.bf16.gmra.mxu0 %v1532
        %v7388 = vpop.f32.mrf.mxu0
        %v7389 = vadd.f32 %v7349, %v7388
        %v7390 = vpop.f32.mrf.mxu0
        %v7391 = vpop.f32.mrf.mxu0
        %v7392 = vpop.f32.mrf.mxu0
        %7393 = vdwg.mxu0
        %7394 = vmatprep.subr.bf16.mxu0 0
        %7395 = vmatpush1.bf16.xpose.msra.mxu0 0
        %7396 = vmatprep.subr.bf16.mxu0 0
        %7397 = vmatpush1.bf16.xpose.msra.mxu0 0
        %7398 = vmatprep.subr.bf16.mxu0 0
        %7399 = vmatpush1.bf16.xpose.msra.mxu0 0
        %7400 = vmatprep.subr.bf16.mxu0 0
        %7401 = vmatpush1.bf16.xpose.msra.mxu0 0
        %7402 = vmatprep.subr.bf16.mxu0 0
        %7403 = vmatpush1.bf16.xpose.msra.mxu0 0
        %7404 = vmatprep.subr.bf16.mxu0 0
        %7405 = vmatpush1.bf16.xpose.msra.mxu0 0
        %7406 = vmatprep.subr.bf16.mxu0 %v4575
        %7407 = vmatpush1.bf16.xpose.msra.mxu0 %v4574
        %7408 = vmatprep.subr.bf16.mxu0 %v4319
        %7409 = vmatpush1.bf16.xpose.msra.mxu0 %v4318
        %7410 = vmatprep.subr.bf16.mxu0 0
        %7411 = vmatpush2.bf16.xpose.msra.mxu0 0
        %7412 = vmatprep.subr.bf16.mxu0 0
        %7413 = vmatpush2.bf16.xpose.msra.mxu0 0
        %7414 = vmatprep.subr.bf16.mxu0 0
        %7415 = vmatpush2.bf16.xpose.msra.mxu0 0
        %7416 = vmatprep.subr.bf16.mxu0 0
        %7417 = vmatpush2.bf16.xpose.msra.mxu0 0
        %7418 = vmatprep.subr.bf16.mxu0 0
        %7419 = vmatpush2.bf16.xpose.msra.mxu0 0
        %7420 = vmatprep.subr.bf16.mxu0 0
        %7421 = vmatpush2.bf16.xpose.msra.mxu0 0
        %7422 = vmatprep.subr.bf16.mxu0 0
        %7423 = vmatpush2.bf16.xpose.msra.mxu0 0
        %7424 = vmatprep.subr.bf16.mxu0 0
        %7425 = vmatpush2.bf16.xpose.msra.mxu0 0
        %7426 = vmatprep.mubr.bf16.mxu0 %v1531
        %7427 = vmatmul.mubr.bf16.gmra.mxu0 %v1517
        %v7428 = vpop.f32.mrf.mxu0
        %v7429 = vadd.f32 %v7389, %v7428
        %v7430 = vpop.f32.mrf.mxu0
        %v7431 = vpop.f32.mrf.mxu0
        %v7432 = vpop.f32.mrf.mxu0
        %7433 = vdwg.mxu0
        %7434 = vmatprep.subr.bf16.mxu0 0
        %7435 = vmatpush1.bf16.xpose.msra.mxu0 0
        %7436 = vmatprep.subr.bf16.mxu0 0
        %7437 = vmatpush1.bf16.xpose.msra.mxu0 0
        %7438 = vmatprep.subr.bf16.mxu0 0
        %7439 = vmatpush1.bf16.xpose.msra.mxu0 0
        %7440 = vmatprep.subr.bf16.mxu0 0
        %7441 = vmatpush1.bf16.xpose.msra.mxu0 0
        %7442 = vmatprep.subr.bf16.mxu0 0
        %7443 = vmatpush1.bf16.xpose.msra.mxu0 0
        %7444 = vmatprep.subr.bf16.mxu0 0
        %7445 = vmatpush1.bf16.xpose.msra.mxu0 0
        %7446 = vmatprep.subr.bf16.mxu0 %v4577
        %7447 = vmatpush1.bf16.xpose.msra.mxu0 %v4576
        %7448 = vmatprep.subr.bf16.mxu0 %v4321
        %7449 = vmatpush1.bf16.xpose.msra.mxu0 %v4320
        %7450 = vmatprep.subr.bf16.mxu0 0
        %7451 = vmatpush2.bf16.xpose.msra.mxu0 0
        %7452 = vmatprep.subr.bf16.mxu0 0
        %7453 = vmatpush2.bf16.xpose.msra.mxu0 0
        %7454 = vmatprep.subr.bf16.mxu0 0
        %7455 = vmatpush2.bf16.xpose.msra.mxu0 0
        %7456 = vmatprep.subr.bf16.mxu0 0
        %7457 = vmatpush2.bf16.xpose.msra.mxu0 0
        %7458 = vmatprep.subr.bf16.mxu0 0
        %7459 = vmatpush2.bf16.xpose.msra.mxu0 0
        %7460 = vmatprep.subr.bf16.mxu0 0
        %7461 = vmatpush2.bf16.xpose.msra.mxu0 0
        %7462 = vmatprep.subr.bf16.mxu0 0
        %7463 = vmatpush2.bf16.xpose.msra.mxu0 0
        %7464 = vmatprep.subr.bf16.mxu0 0
        %7465 = vmatpush2.bf16.xpose.msra.mxu0 0
        %7466 = vmatprep.mubr.bf16.mxu0 %v1535
        %7467 = vmatmul.mubr.bf16.gmra.mxu0 %v1533
        %v7468 = vpop.f32.mrf.mxu0
        %v7469 = vadd.f32 %v7429, %v7468
        %v7470 = vpop.f32.mrf.mxu0
        %v7471 = vpop.f32.mrf.mxu0
        %v7472 = vpop.f32.mrf.mxu0
        %7473 = vdwg.mxu0
        %7474 = vmatprep.subr.bf16.mxu0 0
        %7475 = vmatpush1.bf16.xpose.msra.mxu0 0
        %7476 = vmatprep.subr.bf16.mxu0 0
        %7477 = vmatpush1.bf16.xpose.msra.mxu0 0
        %7478 = vmatprep.subr.bf16.mxu0 0
        %7479 = vmatpush1.bf16.xpose.msra.mxu0 0
        %7480 = vmatprep.subr.bf16.mxu0 0
        %7481 = vmatpush1.bf16.xpose.msra.mxu0 0
        %7482 = vmatprep.subr.bf16.mxu0 0
        %7483 = vmatpush1.bf16.xpose.msra.mxu0 0
        %7484 = vmatprep.subr.bf16.mxu0 0
        %7485 = vmatpush1.bf16.xpose.msra.mxu0 0
        %7486 = vmatprep.subr.bf16.mxu0 %v4579
        %7487 = vmatpush1.bf16.xpose.msra.mxu0 %v4578
        %7488 = vmatprep.subr.bf16.mxu0 %v4323
        %7489 = vmatpush1.bf16.xpose.msra.mxu0 %v4322
        %7490 = vmatprep.subr.bf16.mxu0 0
        %7491 = vmatpush2.bf16.xpose.msra.mxu0 0
        %7492 = vmatprep.subr.bf16.mxu0 0
        %7493 = vmatpush2.bf16.xpose.msra.mxu0 0
        %7494 = vmatprep.subr.bf16.mxu0 0
        %7495 = vmatpush2.bf16.xpose.msra.mxu0 0
        %7496 = vmatprep.subr.bf16.mxu0 0
        %7497 = vmatpush2.bf16.xpose.msra.mxu0 0
        %7498 = vmatprep.subr.bf16.mxu0 0
        %7499 = vmatpush2.bf16.xpose.msra.mxu0 0
        %7500 = vmatprep.subr.bf16.mxu0 0
        %7501 = vmatpush2.bf16.xpose.msra.mxu0 0
        %7502 = vmatprep.subr.bf16.mxu0 0
        %7503 = vmatpush2.bf16.xpose.msra.mxu0 0
        %7504 = vmatprep.subr.bf16.mxu0 0
        %7505 = vmatpush2.bf16.xpose.msra.mxu0 0
        %7506 = vmatprep.mubr.bf16.mxu0 %v1573
        %7507 = vmatmul.mubr.bf16.gmra.mxu0 %v1559
        %v7508 = vpop.f32.mrf.mxu0
        %v7509 = vadd.f32 %v7469, %v7508
        %v7510 = vpop.f32.mrf.mxu0
        %v7511 = vpop.f32.mrf.mxu0
        %v7512 = vpop.f32.mrf.mxu0
        %7513 = vdwg.mxu0
        %7514 = vmatprep.subr.bf16.mxu0 0
        %7515 = vmatpush1.bf16.xpose.msra.mxu0 0
        %7516 = vmatprep.subr.bf16.mxu0 0
        %7517 = vmatpush1.bf16.xpose.msra.mxu0 0
        %7518 = vmatprep.subr.bf16.mxu0 0
        %7519 = vmatpush1.bf16.xpose.msra.mxu0 0
        %7520 = vmatprep.subr.bf16.mxu0 0
        %7521 = vmatpush1.bf16.xpose.msra.mxu0 0
        %7522 = vmatprep.subr.bf16.mxu0 0
        %7523 = vmatpush1.bf16.xpose.msra.mxu0 0
        %7524 = vmatprep.subr.bf16.mxu0 0
        %7525 = vmatpush1.bf16.xpose.msra.mxu0 0
        %7526 = vmatprep.subr.bf16.mxu0 %v4581
        %7527 = vmatpush1.bf16.xpose.msra.mxu0 %v4580
        %7528 = vmatprep.subr.bf16.mxu0 %v4325
        %7529 = vmatpush1.bf16.xpose.msra.mxu0 %v4324
        %7530 = vmatprep.subr.bf16.mxu0 0
        %7531 = vmatpush2.bf16.xpose.msra.mxu0 0
        %7532 = vmatprep.subr.bf16.mxu0 0
        %7533 = vmatpush2.bf16.xpose.msra.mxu0 0
        %7534 = vmatprep.subr.bf16.mxu0 0
        %7535 = vmatpush2.bf16.xpose.msra.mxu0 0
        %7536 = vmatprep.subr.bf16.mxu0 0
        %7537 = vmatpush2.bf16.xpose.msra.mxu0 0
        %7538 = vmatprep.subr.bf16.mxu0 0
        %7539 = vmatpush2.bf16.xpose.msra.mxu0 0
        %7540 = vmatprep.subr.bf16.mxu0 0
        %7541 = vmatpush2.bf16.xpose.msra.mxu0 0
        %7542 = vmatprep.subr.bf16.mxu0 0
        %7543 = vmatpush2.bf16.xpose.msra.mxu0 0
        %7544 = vmatprep.subr.bf16.mxu0 0
        %7545 = vmatpush2.bf16.xpose.msra.mxu0 0
        %7546 = vmatprep.mubr.bf16.mxu0 %v1583
        %7547 = vmatmul.mubr.bf16.gmra.mxu0 %v1581
        %v7548 = vpop.f32.mrf.mxu0
        %v7549 = vadd.f32 %v7509, %v7548
        %v7550 = vpop.f32.mrf.mxu0
        %v7551 = vpop.f32.mrf.mxu0
        %v7552 = vpop.f32.mrf.mxu0
        %7553 = vdwg.mxu0
        %7554 = vmatprep.subr.bf16.mxu0 0
        %7555 = vmatpush1.bf16.xpose.msra.mxu0 0
        %7556 = vmatprep.subr.bf16.mxu0 0
        %7557 = vmatpush1.bf16.xpose.msra.mxu0 0
        %7558 = vmatprep.subr.bf16.mxu0 0
        %7559 = vmatpush1.bf16.xpose.msra.mxu0 0
        %7560 = vmatprep.subr.bf16.mxu0 0
        %7561 = vmatpush1.bf16.xpose.msra.mxu0 0
        %7562 = vmatprep.subr.bf16.mxu0 0
        %7563 = vmatpush1.bf16.xpose.msra.mxu0 0
        %7564 = vmatprep.subr.bf16.mxu0 0
        %7565 = vmatpush1.bf16.xpose.msra.mxu0 0
        %7566 = vmatprep.subr.bf16.mxu0 %v4583
        %7567 = vmatpush1.bf16.xpose.msra.mxu0 %v4582
        %7568 = vmatprep.subr.bf16.mxu0 %v4327
        %7569 = vmatpush1.bf16.xpose.msra.mxu0 %v4326
        %7570 = vmatprep.subr.bf16.mxu0 0
        %7571 = vmatpush2.bf16.xpose.msra.mxu0 0
        %7572 = vmatprep.subr.bf16.mxu0 0
        %7573 = vmatpush2.bf16.xpose.msra.mxu0 0
        %7574 = vmatprep.subr.bf16.mxu0 0
        %7575 = vmatpush2.bf16.xpose.msra.mxu0 0
        %7576 = vmatprep.subr.bf16.mxu0 0
        %7577 = vmatpush2.bf16.xpose.msra.mxu0 0
        %7578 = vmatprep.subr.bf16.mxu0 0
        %7579 = vmatpush2.bf16.xpose.msra.mxu0 0
        %7580 = vmatprep.subr.bf16.mxu0 0
        %7581 = vmatpush2.bf16.xpose.msra.mxu0 0
        %7582 = vmatprep.subr.bf16.mxu0 0
        %7583 = vmatpush2.bf16.xpose.msra.mxu0 0
        %7584 = vmatprep.subr.bf16.mxu0 0
        %7585 = vmatpush2.bf16.xpose.msra.mxu0 0
        %7586 = vmatprep.mubr.bf16.mxu0 %v1580
        %7587 = vmatmul.mubr.bf16.gmra.mxu0 %v1566
        %v7588 = vpop.f32.mrf.mxu0
        %v7589 = vadd.f32 %v7549, %v7588
        %v7590 = vpop.f32.mrf.mxu0
        %v7591 = vpop.f32.mrf.mxu0
        %v7592 = vpop.f32.mrf.mxu0
        %7593 = vdwg.mxu0
        %7594 = vmatprep.subr.bf16.mxu0 0
        %7595 = vmatpush1.bf16.xpose.msra.mxu0 0
        %7596 = vmatprep.subr.bf16.mxu0 0
        %7597 = vmatpush1.bf16.xpose.msra.mxu0 0
        %7598 = vmatprep.subr.bf16.mxu0 0
        %7599 = vmatpush1.bf16.xpose.msra.mxu0 0
        %7600 = vmatprep.subr.bf16.mxu0 0
        %7601 = vmatpush1.bf16.xpose.msra.mxu0 0
        %7602 = vmatprep.subr.bf16.mxu0 0
        %7603 = vmatpush1.bf16.xpose.msra.mxu0 0
        %7604 = vmatprep.subr.bf16.mxu0 0
        %7605 = vmatpush1.bf16.xpose.msra.mxu0 0
        %7606 = vmatprep.subr.bf16.mxu0 %v4585
        %7607 = vmatpush1.bf16.xpose.msra.mxu0 %v4584
        %7608 = vmatprep.subr.bf16.mxu0 %v4329
        %7609 = vmatpush1.bf16.xpose.msra.mxu0 %v4328
        %7610 = vmatprep.subr.bf16.mxu0 0
        %7611 = vmatpush2.bf16.xpose.msra.mxu0 0
        %7612 = vmatprep.subr.bf16.mxu0 0
        %7613 = vmatpush2.bf16.xpose.msra.mxu0 0
        %7614 = vmatprep.subr.bf16.mxu0 0
        %7615 = vmatpush2.bf16.xpose.msra.mxu0 0
        %7616 = vmatprep.subr.bf16.mxu0 0
        %7617 = vmatpush2.bf16.xpose.msra.mxu0 0
        %7618 = vmatprep.subr.bf16.mxu0 0
        %7619 = vmatpush2.bf16.xpose.msra.mxu0 0
        %7620 = vmatprep.subr.bf16.mxu0 0
        %7621 = vmatpush2.bf16.xpose.msra.mxu0 0
        %7622 = vmatprep.subr.bf16.mxu0 0
        %7623 = vmatpush2.bf16.xpose.msra.mxu0 0
        %7624 = vmatprep.subr.bf16.mxu0 0
        %7625 = vmatpush2.bf16.xpose.msra.mxu0 0
        %7626 = vmatprep.mubr.bf16.mxu0 %v1584
        %7627 = vmatmul.mubr.bf16.gmra.mxu0 %v1582
        %v7628 = vpop.f32.mrf.mxu0
        %v7629 = vadd.f32 %v7589, %v7628
        %v7630 = vpop.f32.mrf.mxu0
        %v7631 = vpop.f32.mrf.mxu0
        %v7632 = vpop.f32.mrf.mxu0
        %7633 = vdwg.mxu0
        %7634 = vmatprep.subr.bf16.mxu0 0
        %7635 = vmatpush1.bf16.xpose.msra.mxu0 0
        %7636 = vmatprep.subr.bf16.mxu0 0
        %7637 = vmatpush1.bf16.xpose.msra.mxu0 0
        %7638 = vmatprep.subr.bf16.mxu0 0
        %7639 = vmatpush1.bf16.xpose.msra.mxu0 0
        %7640 = vmatprep.subr.bf16.mxu0 0
        %7641 = vmatpush1.bf16.xpose.msra.mxu0 0
        %7642 = vmatprep.subr.bf16.mxu0 0
        %7643 = vmatpush1.bf16.xpose.msra.mxu0 0
        %7644 = vmatprep.subr.bf16.mxu0 0
        %7645 = vmatpush1.bf16.xpose.msra.mxu0 0
        %7646 = vmatprep.subr.bf16.mxu0 %v4587
        %7647 = vmatpush1.bf16.xpose.msra.mxu0 %v4586
        %7648 = vmatprep.subr.bf16.mxu0 %v4331
        %7649 = vmatpush1.bf16.xpose.msra.mxu0 %v4330
        %7650 = vmatprep.subr.bf16.mxu0 0
        %7651 = vmatpush2.bf16.xpose.msra.mxu0 0
        %7652 = vmatprep.subr.bf16.mxu0 0
        %7653 = vmatpush2.bf16.xpose.msra.mxu0 0
        %7654 = vmatprep.subr.bf16.mxu0 0
        %7655 = vmatpush2.bf16.xpose.msra.mxu0 0
        %7656 = vmatprep.subr.bf16.mxu0 0
        %7657 = vmatpush2.bf16.xpose.msra.mxu0 0
        %7658 = vmatprep.subr.bf16.mxu0 0
        %7659 = vmatpush2.bf16.xpose.msra.mxu0 0
        %7660 = vmatprep.subr.bf16.mxu0 0
        %7661 = vmatpush2.bf16.xpose.msra.mxu0 0
        %7662 = vmatprep.subr.bf16.mxu0 0
        %7663 = vmatpush2.bf16.xpose.msra.mxu0 0
        %7664 = vmatprep.subr.bf16.mxu0 0
        %7665 = vmatpush2.bf16.xpose.msra.mxu0 0
        %7666 = vmatprep.mubr.bf16.mxu0 %v1622
        %7667 = vmatmul.mubr.bf16.gmra.mxu0 %v1608
        %v7668 = vpop.f32.mrf.mxu0
        %v7669 = vadd.f32 %v7629, %v7668
        %v7670 = vpop.f32.mrf.mxu0
        %v7671 = vpop.f32.mrf.mxu0
        %v7672 = vpop.f32.mrf.mxu0
        %7673 = vdwg.mxu0
        %7674 = vmatprep.subr.bf16.mxu0 0
        %7675 = vmatpush1.bf16.xpose.msra.mxu0 0
        %7676 = vmatprep.subr.bf16.mxu0 0
        %7677 = vmatpush1.bf16.xpose.msra.mxu0 0
        %7678 = vmatprep.subr.bf16.mxu0 0
        %7679 = vmatpush1.bf16.xpose.msra.mxu0 0
        %7680 = vmatprep.subr.bf16.mxu0 0
        %7681 = vmatpush1.bf16.xpose.msra.mxu0 0
        %7682 = vmatprep.subr.bf16.mxu0 0
        %7683 = vmatpush1.bf16.xpose.msra.mxu0 0
        %7684 = vmatprep.subr.bf16.mxu0 0
        %7685 = vmatpush1.bf16.xpose.msra.mxu0 0
        %7686 = vmatprep.subr.bf16.mxu0 %v4589
        %7687 = vmatpush1.bf16.xpose.msra.mxu0 %v4588
        %7688 = vmatprep.subr.bf16.mxu0 %v4333
        %7689 = vmatpush1.bf16.xpose.msra.mxu0 %v4332
        %7690 = vmatprep.subr.bf16.mxu0 0
        %7691 = vmatpush2.bf16.xpose.msra.mxu0 0
        %7692 = vmatprep.subr.bf16.mxu0 0
        %7693 = vmatpush2.bf16.xpose.msra.mxu0 0
        %7694 = vmatprep.subr.bf16.mxu0 0
        %7695 = vmatpush2.bf16.xpose.msra.mxu0 0
        %7696 = vmatprep.subr.bf16.mxu0 0
        %7697 = vmatpush2.bf16.xpose.msra.mxu0 0
        %7698 = vmatprep.subr.bf16.mxu0 0
        %7699 = vmatpush2.bf16.xpose.msra.mxu0 0
        %7700 = vmatprep.subr.bf16.mxu0 0
        %7701 = vmatpush2.bf16.xpose.msra.mxu0 0
        %7702 = vmatprep.subr.bf16.mxu0 0
        %7703 = vmatpush2.bf16.xpose.msra.mxu0 0
        %7704 = vmatprep.subr.bf16.mxu0 0
        %7705 = vmatpush2.bf16.xpose.msra.mxu0 0
        %7706 = vmatprep.mubr.bf16.mxu0 %v1632
        %7707 = vmatmul.mubr.bf16.gmra.mxu0 %v1630
        %v7708 = vpop.f32.mrf.mxu0
        %v7709 = vadd.f32 %v7669, %v7708
        %v7710 = vpop.f32.mrf.mxu0
        %v7711 = vpop.f32.mrf.mxu0
        %v7712 = vpop.f32.mrf.mxu0
        %7713 = vdwg.mxu0
        %7714 = vmatprep.subr.bf16.mxu0 0
        %7715 = vmatpush1.bf16.xpose.msra.mxu0 0
        %7716 = vmatprep.subr.bf16.mxu0 0
        %7717 = vmatpush1.bf16.xpose.msra.mxu0 0
        %7718 = vmatprep.subr.bf16.mxu0 0
        %7719 = vmatpush1.bf16.xpose.msra.mxu0 0
        %7720 = vmatprep.subr.bf16.mxu0 0
        %7721 = vmatpush1.bf16.xpose.msra.mxu0 0
        %7722 = vmatprep.subr.bf16.mxu0 0
        %7723 = vmatpush1.bf16.xpose.msra.mxu0 0
        %7724 = vmatprep.subr.bf16.mxu0 0
        %7725 = vmatpush1.bf16.xpose.msra.mxu0 0
        %7726 = vmatprep.subr.bf16.mxu0 %v4591
        %7727 = vmatpush1.bf16.xpose.msra.mxu0 %v4590
        %7728 = vmatprep.subr.bf16.mxu0 %v4335
        %7729 = vmatpush1.bf16.xpose.msra.mxu0 %v4334
        %7730 = vmatprep.subr.bf16.mxu0 0
        %7731 = vmatpush2.bf16.xpose.msra.mxu0 0
        %7732 = vmatprep.subr.bf16.mxu0 0
        %7733 = vmatpush2.bf16.xpose.msra.mxu0 0
        %7734 = vmatprep.subr.bf16.mxu0 0
        %7735 = vmatpush2.bf16.xpose.msra.mxu0 0
        %7736 = vmatprep.subr.bf16.mxu0 0
        %7737 = vmatpush2.bf16.xpose.msra.mxu0 0
        %7738 = vmatprep.subr.bf16.mxu0 0
        %7739 = vmatpush2.bf16.xpose.msra.mxu0 0
        %7740 = vmatprep.subr.bf16.mxu0 0
        %7741 = vmatpush2.bf16.xpose.msra.mxu0 0
        %7742 = vmatprep.subr.bf16.mxu0 0
        %7743 = vmatpush2.bf16.xpose.msra.mxu0 0
        %7744 = vmatprep.subr.bf16.mxu0 0
        %7745 = vmatpush2.bf16.xpose.msra.mxu0 0
        %7746 = vmatprep.mubr.bf16.mxu0 %v1629
        %7747 = vmatmul.mubr.bf16.gmra.mxu0 %v1615
        %v7748 = vpop.f32.mrf.mxu0
        %v7749 = vadd.f32 %v7709, %v7748
        %v7750 = vpop.f32.mrf.mxu0
        %v7751 = vpop.f32.mrf.mxu0
        %v7752 = vpop.f32.mrf.mxu0
        %7753 = vdwg.mxu0
        %7754 = vmatprep.subr.bf16.mxu0 0
        %7755 = vmatpush1.bf16.xpose.msra.mxu0 0
        %7756 = vmatprep.subr.bf16.mxu0 0
        %7757 = vmatpush1.bf16.xpose.msra.mxu0 0
        %7758 = vmatprep.subr.bf16.mxu0 0
        %7759 = vmatpush1.bf16.xpose.msra.mxu0 0
        %7760 = vmatprep.subr.bf16.mxu0 0
        %7761 = vmatpush1.bf16.xpose.msra.mxu0 0
        %7762 = vmatprep.subr.bf16.mxu0 0
        %7763 = vmatpush1.bf16.xpose.msra.mxu0 0
        %7764 = vmatprep.subr.bf16.mxu0 0
        %7765 = vmatpush1.bf16.xpose.msra.mxu0 0
        %7766 = vmatprep.subr.bf16.mxu0 %v4593
        %7767 = vmatpush1.bf16.xpose.msra.mxu0 %v4592
        %7768 = vmatprep.subr.bf16.mxu0 %v4337
        %7769 = vmatpush1.bf16.xpose.msra.mxu0 %v4336
        %7770 = vmatprep.subr.bf16.mxu0 0
        %7771 = vmatpush2.bf16.xpose.msra.mxu0 0
        %7772 = vmatprep.subr.bf16.mxu0 0
        %7773 = vmatpush2.bf16.xpose.msra.mxu0 0
        %7774 = vmatprep.subr.bf16.mxu0 0
        %7775 = vmatpush2.bf16.xpose.msra.mxu0 0
        %7776 = vmatprep.subr.bf16.mxu0 0
        %7777 = vmatpush2.bf16.xpose.msra.mxu0 0
        %7778 = vmatprep.subr.bf16.mxu0 0
        %7779 = vmatpush2.bf16.xpose.msra.mxu0 0
        %7780 = vmatprep.subr.bf16.mxu0 0
        %7781 = vmatpush2.bf16.xpose.msra.mxu0 0
        %7782 = vmatprep.subr.bf16.mxu0 0
        %7783 = vmatpush2.bf16.xpose.msra.mxu0 0
        %7784 = vmatprep.subr.bf16.mxu0 0
        %7785 = vmatpush2.bf16.xpose.msra.mxu0 0
        %7786 = vmatprep.mubr.bf16.mxu0 %v1633
        %7787 = vmatmul.mubr.bf16.gmra.mxu0 %v1631
        %v7788 = vpop.f32.mrf.mxu0
        %v7789 = vadd.f32 %v7749, %v7788
        %v7790 = vpop.f32.mrf.mxu0
        %v7791 = vpop.f32.mrf.mxu0
        %v7792 = vpop.f32.mrf.mxu0
        %7793 = vdwg.mxu0
        %7794 = vmatprep.subr.bf16.mxu0 0
        %7795 = vmatpush1.bf16.xpose.msra.mxu0 0
        %7796 = vmatprep.subr.bf16.mxu0 0
        %7797 = vmatpush1.bf16.xpose.msra.mxu0 0
        %7798 = vmatprep.subr.bf16.mxu0 0
        %7799 = vmatpush1.bf16.xpose.msra.mxu0 0
        %7800 = vmatprep.subr.bf16.mxu0 0
        %7801 = vmatpush1.bf16.xpose.msra.mxu0 0
        %7802 = vmatprep.subr.bf16.mxu0 0
        %7803 = vmatpush1.bf16.xpose.msra.mxu0 0
        %7804 = vmatprep.subr.bf16.mxu0 0
        %7805 = vmatpush1.bf16.xpose.msra.mxu0 0
        %7806 = vmatprep.subr.bf16.mxu0 %v4595
        %7807 = vmatpush1.bf16.xpose.msra.mxu0 %v4594
        %7808 = vmatprep.subr.bf16.mxu0 %v4339
        %7809 = vmatpush1.bf16.xpose.msra.mxu0 %v4338
        %7810 = vmatprep.subr.bf16.mxu0 0
        %7811 = vmatpush2.bf16.xpose.msra.mxu0 0
        %7812 = vmatprep.subr.bf16.mxu0 0
        %7813 = vmatpush2.bf16.xpose.msra.mxu0 0
        %7814 = vmatprep.subr.bf16.mxu0 0
        %7815 = vmatpush2.bf16.xpose.msra.mxu0 0
        %7816 = vmatprep.subr.bf16.mxu0 0
        %7817 = vmatpush2.bf16.xpose.msra.mxu0 0
        %7818 = vmatprep.subr.bf16.mxu0 0
        %7819 = vmatpush2.bf16.xpose.msra.mxu0 0
        %7820 = vmatprep.subr.bf16.mxu0 0
        %7821 = vmatpush2.bf16.xpose.msra.mxu0 0
        %7822 = vmatprep.subr.bf16.mxu0 0
        %7823 = vmatpush2.bf16.xpose.msra.mxu0 0
        %7824 = vmatprep.subr.bf16.mxu0 0
        %7825 = vmatpush2.bf16.xpose.msra.mxu0 0
        %7826 = vmatprep.mubr.bf16.mxu0 %v1671
        %7827 = vmatmul.mubr.bf16.gmra.mxu0 %v1657
        %v7828 = vpop.f32.mrf.mxu0
        %v7829 = vadd.f32 %v7789, %v7828
        %v7830 = vpop.f32.mrf.mxu0
        %v7831 = vpop.f32.mrf.mxu0
        %v7832 = vpop.f32.mrf.mxu0
        %7833 = vdwg.mxu0
        %7834 = vmatprep.subr.bf16.mxu0 0
        %7835 = vmatpush1.bf16.xpose.msra.mxu0 0
        %7836 = vmatprep.subr.bf16.mxu0 0
        %7837 = vmatpush1.bf16.xpose.msra.mxu0 0
        %7838 = vmatprep.subr.bf16.mxu0 0
        %7839 = vmatpush1.bf16.xpose.msra.mxu0 0
        %7840 = vmatprep.subr.bf16.mxu0 0
        %7841 = vmatpush1.bf16.xpose.msra.mxu0 0
        %7842 = vmatprep.subr.bf16.mxu0 0
        %7843 = vmatpush1.bf16.xpose.msra.mxu0 0
        %7844 = vmatprep.subr.bf16.mxu0 0
        %7845 = vmatpush1.bf16.xpose.msra.mxu0 0
        %7846 = vmatprep.subr.bf16.mxu0 %v4597
        %7847 = vmatpush1.bf16.xpose.msra.mxu0 %v4596
        %7848 = vmatprep.subr.bf16.mxu0 %v4341
        %7849 = vmatpush1.bf16.xpose.msra.mxu0 %v4340
        %7850 = vmatprep.subr.bf16.mxu0 0
        %7851 = vmatpush2.bf16.xpose.msra.mxu0 0
        %7852 = vmatprep.subr.bf16.mxu0 0
        %7853 = vmatpush2.bf16.xpose.msra.mxu0 0
        %7854 = vmatprep.subr.bf16.mxu0 0
        %7855 = vmatpush2.bf16.xpose.msra.mxu0 0
        %7856 = vmatprep.subr.bf16.mxu0 0
        %7857 = vmatpush2.bf16.xpose.msra.mxu0 0
        %7858 = vmatprep.subr.bf16.mxu0 0
        %7859 = vmatpush2.bf16.xpose.msra.mxu0 0
        %7860 = vmatprep.subr.bf16.mxu0 0
        %7861 = vmatpush2.bf16.xpose.msra.mxu0 0
        %7862 = vmatprep.subr.bf16.mxu0 0
        %7863 = vmatpush2.bf16.xpose.msra.mxu0 0
        %7864 = vmatprep.subr.bf16.mxu0 0
        %7865 = vmatpush2.bf16.xpose.msra.mxu0 0
        %7866 = vmatprep.mubr.bf16.mxu0 %v1681
        %7867 = vmatmul.mubr.bf16.gmra.mxu0 %v1679
        %v7868 = vpop.f32.mrf.mxu0
        %v7869 = vadd.f32 %v7829, %v7868
        %v7870 = vpop.f32.mrf.mxu0
        %v7871 = vpop.f32.mrf.mxu0
        %v7872 = vpop.f32.mrf.mxu0
        %7873 = vdwg.mxu0
        %7874 = vmatprep.subr.bf16.mxu0 0
        %7875 = vmatpush1.bf16.xpose.msra.mxu0 0
        %7876 = vmatprep.subr.bf16.mxu0 0
        %7877 = vmatpush1.bf16.xpose.msra.mxu0 0
        %7878 = vmatprep.subr.bf16.mxu0 0
        %7879 = vmatpush1.bf16.xpose.msra.mxu0 0
        %7880 = vmatprep.subr.bf16.mxu0 0
        %7881 = vmatpush1.bf16.xpose.msra.mxu0 0
        %7882 = vmatprep.subr.bf16.mxu0 0
        %7883 = vmatpush1.bf16.xpose.msra.mxu0 0
        %7884 = vmatprep.subr.bf16.mxu0 0
        %7885 = vmatpush1.bf16.xpose.msra.mxu0 0
        %7886 = vmatprep.subr.bf16.mxu0 %v4599
        %7887 = vmatpush1.bf16.xpose.msra.mxu0 %v4598
        %7888 = vmatprep.subr.bf16.mxu0 %v4343
        %7889 = vmatpush1.bf16.xpose.msra.mxu0 %v4342
        %7890 = vmatprep.subr.bf16.mxu0 0
        %7891 = vmatpush2.bf16.xpose.msra.mxu0 0
        %7892 = vmatprep.subr.bf16.mxu0 0
        %7893 = vmatpush2.bf16.xpose.msra.mxu0 0
        %7894 = vmatprep.subr.bf16.mxu0 0
        %7895 = vmatpush2.bf16.xpose.msra.mxu0 0
        %7896 = vmatprep.subr.bf16.mxu0 0
        %7897 = vmatpush2.bf16.xpose.msra.mxu0 0
        %7898 = vmatprep.subr.bf16.mxu0 0
        %7899 = vmatpush2.bf16.xpose.msra.mxu0 0
        %7900 = vmatprep.subr.bf16.mxu0 0
        %7901 = vmatpush2.bf16.xpose.msra.mxu0 0
        %7902 = vmatprep.subr.bf16.mxu0 0
        %7903 = vmatpush2.bf16.xpose.msra.mxu0 0
        %7904 = vmatprep.subr.bf16.mxu0 0
        %7905 = vmatpush2.bf16.xpose.msra.mxu0 0
        %7906 = vmatprep.mubr.bf16.mxu0 %v1678
        %7907 = vmatmul.mubr.bf16.gmra.mxu0 %v1664
        %v7908 = vpop.f32.mrf.mxu0
        %v7909 = vadd.f32 %v7869, %v7908
        %v7910 = vpop.f32.mrf.mxu0
        %v7911 = vpop.f32.mrf.mxu0
        %v7912 = vpop.f32.mrf.mxu0
        %7913 = vdwg.mxu0
        %7914 = vmatprep.subr.bf16.mxu0 0
        %7915 = vmatpush1.bf16.xpose.msra.mxu0 0
        %7916 = vmatprep.subr.bf16.mxu0 0
        %7917 = vmatpush1.bf16.xpose.msra.mxu0 0
        %7918 = vmatprep.subr.bf16.mxu0 0
        %7919 = vmatpush1.bf16.xpose.msra.mxu0 0
        %7920 = vmatprep.subr.bf16.mxu0 0
        %7921 = vmatpush1.bf16.xpose.msra.mxu0 0
        %7922 = vmatprep.subr.bf16.mxu0 0
        %7923 = vmatpush1.bf16.xpose.msra.mxu0 0
        %7924 = vmatprep.subr.bf16.mxu0 0
        %7925 = vmatpush1.bf16.xpose.msra.mxu0 0
        %7926 = vmatprep.subr.bf16.mxu0 %v4601
        %7927 = vmatpush1.bf16.xpose.msra.mxu0 %v4600
        %7928 = vmatprep.subr.bf16.mxu0 %v4345
        %7929 = vmatpush1.bf16.xpose.msra.mxu0 %v4344
        %7930 = vmatprep.subr.bf16.mxu0 0
        %7931 = vmatpush2.bf16.xpose.msra.mxu0 0
        %7932 = vmatprep.subr.bf16.mxu0 0
        %7933 = vmatpush2.bf16.xpose.msra.mxu0 0
        %7934 = vmatprep.subr.bf16.mxu0 0
        %7935 = vmatpush2.bf16.xpose.msra.mxu0 0
        %7936 = vmatprep.subr.bf16.mxu0 0
        %7937 = vmatpush2.bf16.xpose.msra.mxu0 0
        %7938 = vmatprep.subr.bf16.mxu0 0
        %7939 = vmatpush2.bf16.xpose.msra.mxu0 0
        %7940 = vmatprep.subr.bf16.mxu0 0
        %7941 = vmatpush2.bf16.xpose.msra.mxu0 0
        %7942 = vmatprep.subr.bf16.mxu0 0
        %7943 = vmatpush2.bf16.xpose.msra.mxu0 0
        %7944 = vmatprep.subr.bf16.mxu0 0
        %7945 = vmatpush2.bf16.xpose.msra.mxu0 0
        %7946 = vmatprep.mubr.bf16.mxu0 %v1682
        %7947 = vmatmul.mubr.bf16.gmra.mxu0 %v1680
        %v7948 = vpop.f32.mrf.mxu0
        %v7949 = vadd.f32 %v7909, %v7948
        %v7950 = vpop.f32.mrf.mxu0
        %v7951 = vpop.f32.mrf.mxu0
        %v7952 = vpop.f32.mrf.mxu0
        %7953 = vdwg.mxu0
        %7954 = vmatprep.subr.bf16.mxu0 0
        %7955 = vmatpush1.bf16.xpose.msra.mxu0 0
        %7956 = vmatprep.subr.bf16.mxu0 0
        %7957 = vmatpush1.bf16.xpose.msra.mxu0 0
        %7958 = vmatprep.subr.bf16.mxu0 0
        %7959 = vmatpush1.bf16.xpose.msra.mxu0 0
        %7960 = vmatprep.subr.bf16.mxu0 0
        %7961 = vmatpush1.bf16.xpose.msra.mxu0 0
        %7962 = vmatprep.subr.bf16.mxu0 0
        %7963 = vmatpush1.bf16.xpose.msra.mxu0 0
        %7964 = vmatprep.subr.bf16.mxu0 0
        %7965 = vmatpush1.bf16.xpose.msra.mxu0 0
        %7966 = vmatprep.subr.bf16.mxu0 %v4603
        %7967 = vmatpush1.bf16.xpose.msra.mxu0 %v4602
        %7968 = vmatprep.subr.bf16.mxu0 %v4347
        %7969 = vmatpush1.bf16.xpose.msra.mxu0 %v4346
        %7970 = vmatprep.subr.bf16.mxu0 0
        %7971 = vmatpush2.bf16.xpose.msra.mxu0 0
        %7972 = vmatprep.subr.bf16.mxu0 0
        %7973 = vmatpush2.bf16.xpose.msra.mxu0 0
        %7974 = vmatprep.subr.bf16.mxu0 0
        %7975 = vmatpush2.bf16.xpose.msra.mxu0 0
        %7976 = vmatprep.subr.bf16.mxu0 0
        %7977 = vmatpush2.bf16.xpose.msra.mxu0 0
        %7978 = vmatprep.subr.bf16.mxu0 0
        %7979 = vmatpush2.bf16.xpose.msra.mxu0 0
        %7980 = vmatprep.subr.bf16.mxu0 0
        %7981 = vmatpush2.bf16.xpose.msra.mxu0 0
        %7982 = vmatprep.subr.bf16.mxu0 0
        %7983 = vmatpush2.bf16.xpose.msra.mxu0 0
        %7984 = vmatprep.subr.bf16.mxu0 0
        %7985 = vmatpush2.bf16.xpose.msra.mxu0 0
        %7986 = vmatprep.mubr.bf16.mxu0 %v1720
        %7987 = vmatmul.mubr.bf16.gmra.mxu0 %v1706
        %v7988 = vpop.f32.mrf.mxu0
        %v7989 = vadd.f32 %v7949, %v7988
        %v7990 = vpop.f32.mrf.mxu0
        %v7991 = vpop.f32.mrf.mxu0
        %v7992 = vpop.f32.mrf.mxu0
        %7993 = vdwg.mxu0
        %7994 = vmatprep.subr.bf16.mxu0 0
        %7995 = vmatpush1.bf16.xpose.msra.mxu0 0
        %7996 = vmatprep.subr.bf16.mxu0 0
        %7997 = vmatpush1.bf16.xpose.msra.mxu0 0
        %7998 = vmatprep.subr.bf16.mxu0 0
        %7999 = vmatpush1.bf16.xpose.msra.mxu0 0
        %8000 = vmatprep.subr.bf16.mxu0 0
        %8001 = vmatpush1.bf16.xpose.msra.mxu0 0
        %8002 = vmatprep.subr.bf16.mxu0 0
        %8003 = vmatpush1.bf16.xpose.msra.mxu0 0
        %8004 = vmatprep.subr.bf16.mxu0 0
        %8005 = vmatpush1.bf16.xpose.msra.mxu0 0
        %8006 = vmatprep.subr.bf16.mxu0 %v4605
        %8007 = vmatpush1.bf16.xpose.msra.mxu0 %v4604
        %8008 = vmatprep.subr.bf16.mxu0 %v4349
        %8009 = vmatpush1.bf16.xpose.msra.mxu0 %v4348
        %8010 = vmatprep.subr.bf16.mxu0 0
        %8011 = vmatpush2.bf16.xpose.msra.mxu0 0
        %8012 = vmatprep.subr.bf16.mxu0 0
        %8013 = vmatpush2.bf16.xpose.msra.mxu0 0
        %8014 = vmatprep.subr.bf16.mxu0 0
        %8015 = vmatpush2.bf16.xpose.msra.mxu0 0
        %8016 = vmatprep.subr.bf16.mxu0 0
        %8017 = vmatpush2.bf16.xpose.msra.mxu0 0
        %8018 = vmatprep.subr.bf16.mxu0 0
        %8019 = vmatpush2.bf16.xpose.msra.mxu0 0
        %8020 = vmatprep.subr.bf16.mxu0 0
        %8021 = vmatpush2.bf16.xpose.msra.mxu0 0
        %8022 = vmatprep.subr.bf16.mxu0 0
        %8023 = vmatpush2.bf16.xpose.msra.mxu0 0
        %8024 = vmatprep.subr.bf16.mxu0 0
        %8025 = vmatpush2.bf16.xpose.msra.mxu0 0
        %8026 = vmatprep.mubr.bf16.mxu0 %v1730
        %8027 = vmatmul.mubr.bf16.gmra.mxu0 %v1728
        %v8028 = vpop.f32.mrf.mxu0
        %v8029 = vadd.f32 %v7989, %v8028
        %v8030 = vpop.f32.mrf.mxu0
        %v8031 = vpop.f32.mrf.mxu0
        %v8032 = vpop.f32.mrf.mxu0
        %8033 = vdwg.mxu0
        %8034 = vmatprep.subr.bf16.mxu0 0
        %8035 = vmatpush1.bf16.xpose.msra.mxu0 0
        %8036 = vmatprep.subr.bf16.mxu0 0
        %8037 = vmatpush1.bf16.xpose.msra.mxu0 0
        %8038 = vmatprep.subr.bf16.mxu0 0
        %8039 = vmatpush1.bf16.xpose.msra.mxu0 0
        %8040 = vmatprep.subr.bf16.mxu0 0
        %8041 = vmatpush1.bf16.xpose.msra.mxu0 0
        %8042 = vmatprep.subr.bf16.mxu0 0
        %8043 = vmatpush1.bf16.xpose.msra.mxu0 0
        %8044 = vmatprep.subr.bf16.mxu0 0
        %8045 = vmatpush1.bf16.xpose.msra.mxu0 0
        %8046 = vmatprep.subr.bf16.mxu0 %v4607
        %8047 = vmatpush1.bf16.xpose.msra.mxu0 %v4606
        %8048 = vmatprep.subr.bf16.mxu0 %v4351
        %8049 = vmatpush1.bf16.xpose.msra.mxu0 %v4350
        %8050 = vmatprep.subr.bf16.mxu0 0
        %8051 = vmatpush2.bf16.xpose.msra.mxu0 0
        %8052 = vmatprep.subr.bf16.mxu0 0
        %8053 = vmatpush2.bf16.xpose.msra.mxu0 0
        %8054 = vmatprep.subr.bf16.mxu0 0
        %8055 = vmatpush2.bf16.xpose.msra.mxu0 0
        %8056 = vmatprep.subr.bf16.mxu0 0
        %8057 = vmatpush2.bf16.xpose.msra.mxu0 0
        %8058 = vmatprep.subr.bf16.mxu0 0
        %8059 = vmatpush2.bf16.xpose.msra.mxu0 0
        %8060 = vmatprep.subr.bf16.mxu0 0
        %8061 = vmatpush2.bf16.xpose.msra.mxu0 0
        %8062 = vmatprep.subr.bf16.mxu0 0
        %8063 = vmatpush2.bf16.xpose.msra.mxu0 0
        %8064 = vmatprep.subr.bf16.mxu0 0
        %8065 = vmatpush2.bf16.xpose.msra.mxu0 0
        %8066 = vmatprep.mubr.bf16.mxu0 %v1727
        %8067 = vmatmul.mubr.bf16.gmra.mxu0 %v1713
        %v8068 = vpop.f32.mrf.mxu0
        %v8069 = vadd.f32 %v8029, %v8068
        %v8070 = vpop.f32.mrf.mxu0
        %v8071 = vpop.f32.mrf.mxu0
        %v8072 = vpop.f32.mrf.mxu0
        %8073 = vdwg.mxu0
        %8074 = vmatprep.subr.bf16.mxu0 0
        %8075 = vmatpush1.bf16.xpose.msra.mxu0 0
        %8076 = vmatprep.subr.bf16.mxu0 0
        %8077 = vmatpush1.bf16.xpose.msra.mxu0 0
        %8078 = vmatprep.subr.bf16.mxu0 0
        %8079 = vmatpush1.bf16.xpose.msra.mxu0 0
        %8080 = vmatprep.subr.bf16.mxu0 0
        %8081 = vmatpush1.bf16.xpose.msra.mxu0 0
        %8082 = vmatprep.subr.bf16.mxu0 0
        %8083 = vmatpush1.bf16.xpose.msra.mxu0 0
        %8084 = vmatprep.subr.bf16.mxu0 0
        %8085 = vmatpush1.bf16.xpose.msra.mxu0 0
        %8086 = vmatprep.subr.bf16.mxu0 %v4609
        %8087 = vmatpush1.bf16.xpose.msra.mxu0 %v4608
        %8088 = vmatprep.subr.bf16.mxu0 %v4353
        %8089 = vmatpush1.bf16.xpose.msra.mxu0 %v4352
        %8090 = vmatprep.subr.bf16.mxu0 0
        %8091 = vmatpush2.bf16.xpose.msra.mxu0 0
        %8092 = vmatprep.subr.bf16.mxu0 0
        %8093 = vmatpush2.bf16.xpose.msra.mxu0 0
        %8094 = vmatprep.subr.bf16.mxu0 0
        %8095 = vmatpush2.bf16.xpose.msra.mxu0 0
        %8096 = vmatprep.subr.bf16.mxu0 0
        %8097 = vmatpush2.bf16.xpose.msra.mxu0 0
        %8098 = vmatprep.subr.bf16.mxu0 0
        %8099 = vmatpush2.bf16.xpose.msra.mxu0 0
        %8100 = vmatprep.subr.bf16.mxu0 0
        %8101 = vmatpush2.bf16.xpose.msra.mxu0 0
        %8102 = vmatprep.subr.bf16.mxu0 0
        %8103 = vmatpush2.bf16.xpose.msra.mxu0 0
        %8104 = vmatprep.subr.bf16.mxu0 0
        %8105 = vmatpush2.bf16.xpose.msra.mxu0 0
        %8106 = vmatprep.mubr.bf16.mxu0 %v1731
        %8107 = vmatmul.mubr.bf16.gmra.mxu0 %v1729
        %v8108 = vpop.f32.mrf.mxu0
        %v8109 = vadd.f32 %v8069, %v8108
        %v8110 = vpop.f32.mrf.mxu0
        %v8111 = vpop.f32.mrf.mxu0
        %v8112 = vpop.f32.mrf.mxu0
        %8113 = vdwg.mxu0
        %8114 = vmatprep.subr.bf16.mxu0 0
        %8115 = vmatpush1.bf16.xpose.msra.mxu0 0
        %8116 = vmatprep.subr.bf16.mxu0 0
        %8117 = vmatpush1.bf16.xpose.msra.mxu0 0
        %8118 = vmatprep.subr.bf16.mxu0 0
        %8119 = vmatpush1.bf16.xpose.msra.mxu0 0
        %8120 = vmatprep.subr.bf16.mxu0 0
        %8121 = vmatpush1.bf16.xpose.msra.mxu0 0
        %8122 = vmatprep.subr.bf16.mxu0 0
        %8123 = vmatpush1.bf16.xpose.msra.mxu0 0
        %8124 = vmatprep.subr.bf16.mxu0 0
        %8125 = vmatpush1.bf16.xpose.msra.mxu0 0
        %8126 = vmatprep.subr.bf16.mxu0 %v4611
        %8127 = vmatpush1.bf16.xpose.msra.mxu0 %v4610
        %8128 = vmatprep.subr.bf16.mxu0 %v4355
        %8129 = vmatpush1.bf16.xpose.msra.mxu0 %v4354
        %8130 = vmatprep.subr.bf16.mxu0 0
        %8131 = vmatpush2.bf16.xpose.msra.mxu0 0
        %8132 = vmatprep.subr.bf16.mxu0 0
        %8133 = vmatpush2.bf16.xpose.msra.mxu0 0
        %8134 = vmatprep.subr.bf16.mxu0 0
        %8135 = vmatpush2.bf16.xpose.msra.mxu0 0
        %8136 = vmatprep.subr.bf16.mxu0 0
        %8137 = vmatpush2.bf16.xpose.msra.mxu0 0
        %8138 = vmatprep.subr.bf16.mxu0 0
        %8139 = vmatpush2.bf16.xpose.msra.mxu0 0
        %8140 = vmatprep.subr.bf16.mxu0 0
        %8141 = vmatpush2.bf16.xpose.msra.mxu0 0
        %8142 = vmatprep.subr.bf16.mxu0 0
        %8143 = vmatpush2.bf16.xpose.msra.mxu0 0
        %8144 = vmatprep.subr.bf16.mxu0 0
        %8145 = vmatpush2.bf16.xpose.msra.mxu0 0
        %8146 = vmatprep.mubr.bf16.mxu0 %v1769
        %8147 = vmatmul.mubr.bf16.gmra.mxu0 %v1755
        %v8148 = vpop.f32.mrf.mxu0
        %v8149 = vadd.f32 %v8109, %v8148
        %v8150 = vpop.f32.mrf.mxu0
        %v8151 = vpop.f32.mrf.mxu0
        %v8152 = vpop.f32.mrf.mxu0
        %8153 = vdwg.mxu0
        %8154 = vmatprep.subr.bf16.mxu0 0
        %8155 = vmatpush1.bf16.xpose.msra.mxu0 0
        %8156 = vmatprep.subr.bf16.mxu0 0
        %8157 = vmatpush1.bf16.xpose.msra.mxu0 0
        %8158 = vmatprep.subr.bf16.mxu0 0
        %8159 = vmatpush1.bf16.xpose.msra.mxu0 0
        %8160 = vmatprep.subr.bf16.mxu0 0
        %8161 = vmatpush1.bf16.xpose.msra.mxu0 0
        %8162 = vmatprep.subr.bf16.mxu0 0
        %8163 = vmatpush1.bf16.xpose.msra.mxu0 0
        %8164 = vmatprep.subr.bf16.mxu0 0
        %8165 = vmatpush1.bf16.xpose.msra.mxu0 0
        %8166 = vmatprep.subr.bf16.mxu0 %v4613
        %8167 = vmatpush1.bf16.xpose.msra.mxu0 %v4612
        %8168 = vmatprep.subr.bf16.mxu0 %v4357
        %8169 = vmatpush1.bf16.xpose.msra.mxu0 %v4356
        %8170 = vmatprep.subr.bf16.mxu0 0
        %8171 = vmatpush2.bf16.xpose.msra.mxu0 0
        %8172 = vmatprep.subr.bf16.mxu0 0
        %8173 = vmatpush2.bf16.xpose.msra.mxu0 0
        %8174 = vmatprep.subr.bf16.mxu0 0
        %8175 = vmatpush2.bf16.xpose.msra.mxu0 0
        %8176 = vmatprep.subr.bf16.mxu0 0
        %8177 = vmatpush2.bf16.xpose.msra.mxu0 0
        %8178 = vmatprep.subr.bf16.mxu0 0
        %8179 = vmatpush2.bf16.xpose.msra.mxu0 0
        %8180 = vmatprep.subr.bf16.mxu0 0
        %8181 = vmatpush2.bf16.xpose.msra.mxu0 0
        %8182 = vmatprep.subr.bf16.mxu0 0
        %8183 = vmatpush2.bf16.xpose.msra.mxu0 0
        %8184 = vmatprep.subr.bf16.mxu0 0
        %8185 = vmatpush2.bf16.xpose.msra.mxu0 0
        %8186 = vmatprep.mubr.bf16.mxu0 %v1779
        %8187 = vmatmul.mubr.bf16.gmra.mxu0 %v1777
        %v8188 = vpop.f32.mrf.mxu0
        %v8189 = vadd.f32 %v8149, %v8188
        %v8190 = vpop.f32.mrf.mxu0
        %v8191 = vpop.f32.mrf.mxu0
        %v8192 = vpop.f32.mrf.mxu0
        %8193 = vdwg.mxu0
        %8194 = vmatprep.subr.bf16.mxu0 0
        %8195 = vmatpush1.bf16.xpose.msra.mxu0 0
        %8196 = vmatprep.subr.bf16.mxu0 0
        %8197 = vmatpush1.bf16.xpose.msra.mxu0 0
        %8198 = vmatprep.subr.bf16.mxu0 0
        %8199 = vmatpush1.bf16.xpose.msra.mxu0 0
        %8200 = vmatprep.subr.bf16.mxu0 0
        %8201 = vmatpush1.bf16.xpose.msra.mxu0 0
        %8202 = vmatprep.subr.bf16.mxu0 0
        %8203 = vmatpush1.bf16.xpose.msra.mxu0 0
        %8204 = vmatprep.subr.bf16.mxu0 0
        %8205 = vmatpush1.bf16.xpose.msra.mxu0 0
        %8206 = vmatprep.subr.bf16.mxu0 %v4615
        %8207 = vmatpush1.bf16.xpose.msra.mxu0 %v4614
        %8208 = vmatprep.subr.bf16.mxu0 %v4359
        %8209 = vmatpush1.bf16.xpose.msra.mxu0 %v4358
        %8210 = vmatprep.subr.bf16.mxu0 0
        %8211 = vmatpush2.bf16.xpose.msra.mxu0 0
        %8212 = vmatprep.subr.bf16.mxu0 0
        %8213 = vmatpush2.bf16.xpose.msra.mxu0 0
        %8214 = vmatprep.subr.bf16.mxu0 0
        %8215 = vmatpush2.bf16.xpose.msra.mxu0 0
        %8216 = vmatprep.subr.bf16.mxu0 0
        %8217 = vmatpush2.bf16.xpose.msra.mxu0 0
        %8218 = vmatprep.subr.bf16.mxu0 0
        %8219 = vmatpush2.bf16.xpose.msra.mxu0 0
        %8220 = vmatprep.subr.bf16.mxu0 0
        %8221 = vmatpush2.bf16.xpose.msra.mxu0 0
        %8222 = vmatprep.subr.bf16.mxu0 0
        %8223 = vmatpush2.bf16.xpose.msra.mxu0 0
        %8224 = vmatprep.subr.bf16.mxu0 0
        %8225 = vmatpush2.bf16.xpose.msra.mxu0 0
        %8226 = vmatprep.mubr.bf16.mxu0 %v1776
        %8227 = vmatmul.mubr.bf16.gmra.mxu0 %v1762
        %v8228 = vpop.f32.mrf.mxu0
        %v8229 = vadd.f32 %v8189, %v8228
        %v8230 = vpop.f32.mrf.mxu0
        %v8231 = vpop.f32.mrf.mxu0
        %v8232 = vpop.f32.mrf.mxu0
        %8233 = vdwg.mxu0
        %8234 = vmatprep.subr.bf16.mxu0 0
        %8235 = vmatpush1.bf16.xpose.msra.mxu0 0
        %8236 = vmatprep.subr.bf16.mxu0 0
        %8237 = vmatpush1.bf16.xpose.msra.mxu0 0
        %8238 = vmatprep.subr.bf16.mxu0 0
        %8239 = vmatpush1.bf16.xpose.msra.mxu0 0
        %8240 = vmatprep.subr.bf16.mxu0 0
        %8241 = vmatpush1.bf16.xpose.msra.mxu0 0
        %8242 = vmatprep.subr.bf16.mxu0 0
        %8243 = vmatpush1.bf16.xpose.msra.mxu0 0
        %8244 = vmatprep.subr.bf16.mxu0 0
        %8245 = vmatpush1.bf16.xpose.msra.mxu0 0
        %8246 = vmatprep.subr.bf16.mxu0 %v4617
        %8247 = vmatpush1.bf16.xpose.msra.mxu0 %v4616
        %8248 = vmatprep.subr.bf16.mxu0 %v4361
        %8249 = vmatpush1.bf16.xpose.msra.mxu0 %v4360
        %8250 = vmatprep.subr.bf16.mxu0 0
        %8251 = vmatpush2.bf16.xpose.msra.mxu0 0
        %8252 = vmatprep.subr.bf16.mxu0 0
        %8253 = vmatpush2.bf16.xpose.msra.mxu0 0
        %8254 = vmatprep.subr.bf16.mxu0 0
        %8255 = vmatpush2.bf16.xpose.msra.mxu0 0
        %8256 = vmatprep.subr.bf16.mxu0 0
        %8257 = vmatpush2.bf16.xpose.msra.mxu0 0
        %8258 = vmatprep.subr.bf16.mxu0 0
        %8259 = vmatpush2.bf16.xpose.msra.mxu0 0
        %8260 = vmatprep.subr.bf16.mxu0 0
        %8261 = vmatpush2.bf16.xpose.msra.mxu0 0
        %8262 = vmatprep.subr.bf16.mxu0 0
        %8263 = vmatpush2.bf16.xpose.msra.mxu0 0
        %8264 = vmatprep.subr.bf16.mxu0 0
        %8265 = vmatpush2.bf16.xpose.msra.mxu0 0
        %8266 = vmatprep.mubr.bf16.mxu0 %v1780
        %8267 = vmatmul.mubr.bf16.gmra.mxu0 %v1778
        %v8268 = vpop.f32.mrf.mxu0
        %v8269 = vadd.f32 %v8229, %v8268
        %v8270 = vpop.f32.mrf.mxu0
        %v8271 = vpop.f32.mrf.mxu0
        %v8272 = vpop.f32.mrf.mxu0
        %8273 = vdwg.mxu0
        %8274 = vmatprep.subr.bf16.mxu0 0
        %8275 = vmatpush1.bf16.xpose.msra.mxu0 0
        %8276 = vmatprep.subr.bf16.mxu0 0
        %8277 = vmatpush1.bf16.xpose.msra.mxu0 0
        %8278 = vmatprep.subr.bf16.mxu0 0
        %8279 = vmatpush1.bf16.xpose.msra.mxu0 0
        %8280 = vmatprep.subr.bf16.mxu0 0
        %8281 = vmatpush1.bf16.xpose.msra.mxu0 0
        %8282 = vmatprep.subr.bf16.mxu0 0
        %8283 = vmatpush1.bf16.xpose.msra.mxu0 0
        %8284 = vmatprep.subr.bf16.mxu0 0
        %8285 = vmatpush1.bf16.xpose.msra.mxu0 0
        %8286 = vmatprep.subr.bf16.mxu0 %v4619
        %8287 = vmatpush1.bf16.xpose.msra.mxu0 %v4618
        %8288 = vmatprep.subr.bf16.mxu0 %v4363
        %8289 = vmatpush1.bf16.xpose.msra.mxu0 %v4362
        %8290 = vmatprep.subr.bf16.mxu0 0
        %8291 = vmatpush2.bf16.xpose.msra.mxu0 0
        %8292 = vmatprep.subr.bf16.mxu0 0
        %8293 = vmatpush2.bf16.xpose.msra.mxu0 0
        %8294 = vmatprep.subr.bf16.mxu0 0
        %8295 = vmatpush2.bf16.xpose.msra.mxu0 0
        %8296 = vmatprep.subr.bf16.mxu0 0
        %8297 = vmatpush2.bf16.xpose.msra.mxu0 0
        %8298 = vmatprep.subr.bf16.mxu0 0
        %8299 = vmatpush2.bf16.xpose.msra.mxu0 0
        %8300 = vmatprep.subr.bf16.mxu0 0
        %8301 = vmatpush2.bf16.xpose.msra.mxu0 0
        %8302 = vmatprep.subr.bf16.mxu0 0
        %8303 = vmatpush2.bf16.xpose.msra.mxu0 0
        %8304 = vmatprep.subr.bf16.mxu0 0
        %8305 = vmatpush2.bf16.xpose.msra.mxu0 0
        %8306 = vmatprep.mubr.bf16.mxu0 %v1818
        %8307 = vmatmul.mubr.bf16.gmra.mxu0 %v1804
        %v8308 = vpop.f32.mrf.mxu0
        %v8309 = vadd.f32 %v8269, %v8308
        %v8310 = vpop.f32.mrf.mxu0
        %v8311 = vpop.f32.mrf.mxu0
        %v8312 = vpop.f32.mrf.mxu0
        %8313 = vdwg.mxu0
        %8314 = vmatprep.subr.bf16.mxu0 0
        %8315 = vmatpush1.bf16.xpose.msra.mxu0 0
        %8316 = vmatprep.subr.bf16.mxu0 0
        %8317 = vmatpush1.bf16.xpose.msra.mxu0 0
        %8318 = vmatprep.subr.bf16.mxu0 0
        %8319 = vmatpush1.bf16.xpose.msra.mxu0 0
        %8320 = vmatprep.subr.bf16.mxu0 0
        %8321 = vmatpush1.bf16.xpose.msra.mxu0 0
        %8322 = vmatprep.subr.bf16.mxu0 0
        %8323 = vmatpush1.bf16.xpose.msra.mxu0 0
        %8324 = vmatprep.subr.bf16.mxu0 0
        %8325 = vmatpush1.bf16.xpose.msra.mxu0 0
        %8326 = vmatprep.subr.bf16.mxu0 %v4621
        %8327 = vmatpush1.bf16.xpose.msra.mxu0 %v4620
        %8328 = vmatprep.subr.bf16.mxu0 %v4365
        %8329 = vmatpush1.bf16.xpose.msra.mxu0 %v4364
        %8330 = vmatprep.subr.bf16.mxu0 0
        %8331 = vmatpush2.bf16.xpose.msra.mxu0 0
        %8332 = vmatprep.subr.bf16.mxu0 0
        %8333 = vmatpush2.bf16.xpose.msra.mxu0 0
        %8334 = vmatprep.subr.bf16.mxu0 0
        %8335 = vmatpush2.bf16.xpose.msra.mxu0 0
        %8336 = vmatprep.subr.bf16.mxu0 0
        %8337 = vmatpush2.bf16.xpose.msra.mxu0 0
        %8338 = vmatprep.subr.bf16.mxu0 0
        %8339 = vmatpush2.bf16.xpose.msra.mxu0 0
        %8340 = vmatprep.subr.bf16.mxu0 0
        %8341 = vmatpush2.bf16.xpose.msra.mxu0 0
        %8342 = vmatprep.subr.bf16.mxu0 0
        %8343 = vmatpush2.bf16.xpose.msra.mxu0 0
        %8344 = vmatprep.subr.bf16.mxu0 0
        %8345 = vmatpush2.bf16.xpose.msra.mxu0 0
        %8346 = vmatprep.mubr.bf16.mxu0 %v1828
        %8347 = vmatmul.mubr.bf16.gmra.mxu0 %v1826
        %v8348 = vpop.f32.mrf.mxu0
        %v8349 = vadd.f32 %v8309, %v8348
        %v8350 = vpop.f32.mrf.mxu0
        %v8351 = vpop.f32.mrf.mxu0
        %v8352 = vpop.f32.mrf.mxu0
        %8353 = vdwg.mxu0
        %8354 = vmatprep.subr.bf16.mxu0 0
        %8355 = vmatpush1.bf16.xpose.msra.mxu0 0
        %8356 = vmatprep.subr.bf16.mxu0 0
        %8357 = vmatpush1.bf16.xpose.msra.mxu0 0
        %8358 = vmatprep.subr.bf16.mxu0 0
        %8359 = vmatpush1.bf16.xpose.msra.mxu0 0
        %8360 = vmatprep.subr.bf16.mxu0 0
        %8361 = vmatpush1.bf16.xpose.msra.mxu0 0
        %8362 = vmatprep.subr.bf16.mxu0 0
        %8363 = vmatpush1.bf16.xpose.msra.mxu0 0
        %8364 = vmatprep.subr.bf16.mxu0 0
        %8365 = vmatpush1.bf16.xpose.msra.mxu0 0
        %8366 = vmatprep.subr.bf16.mxu0 %v4623
        %8367 = vmatpush1.bf16.xpose.msra.mxu0 %v4622
        %8368 = vmatprep.subr.bf16.mxu0 %v4367
        %8369 = vmatpush1.bf16.xpose.msra.mxu0 %v4366
        %8370 = vmatprep.subr.bf16.mxu0 0
        %8371 = vmatpush2.bf16.xpose.msra.mxu0 0
        %8372 = vmatprep.subr.bf16.mxu0 0
        %8373 = vmatpush2.bf16.xpose.msra.mxu0 0
        %8374 = vmatprep.subr.bf16.mxu0 0
        %8375 = vmatpush2.bf16.xpose.msra.mxu0 0
        %8376 = vmatprep.subr.bf16.mxu0 0
        %8377 = vmatpush2.bf16.xpose.msra.mxu0 0
        %8378 = vmatprep.subr.bf16.mxu0 0
        %8379 = vmatpush2.bf16.xpose.msra.mxu0 0
        %8380 = vmatprep.subr.bf16.mxu0 0
        %8381 = vmatpush2.bf16.xpose.msra.mxu0 0
        %8382 = vmatprep.subr.bf16.mxu0 0
        %8383 = vmatpush2.bf16.xpose.msra.mxu0 0
        %8384 = vmatprep.subr.bf16.mxu0 0
        %8385 = vmatpush2.bf16.xpose.msra.mxu0 0
        %8386 = vmatprep.mubr.bf16.mxu0 %v1825
        %8387 = vmatmul.mubr.bf16.gmra.mxu0 %v1811
        %v8388 = vpop.f32.mrf.mxu0
        %v8389 = vadd.f32 %v8349, %v8388
        %v8390 = vpop.f32.mrf.mxu0
        %v8391 = vpop.f32.mrf.mxu0
        %v8392 = vpop.f32.mrf.mxu0
        %8393 = vdwg.mxu0
        %8394 = vmatprep.subr.bf16.mxu0 0
        %8395 = vmatpush1.bf16.xpose.msra.mxu0 0
        %8396 = vmatprep.subr.bf16.mxu0 0
        %8397 = vmatpush1.bf16.xpose.msra.mxu0 0
        %8398 = vmatprep.subr.bf16.mxu0 0
        %8399 = vmatpush1.bf16.xpose.msra.mxu0 0
        %8400 = vmatprep.subr.bf16.mxu0 0
        %8401 = vmatpush1.bf16.xpose.msra.mxu0 0
        %8402 = vmatprep.subr.bf16.mxu0 0
        %8403 = vmatpush1.bf16.xpose.msra.mxu0 0
        %8404 = vmatprep.subr.bf16.mxu0 0
        %8405 = vmatpush1.bf16.xpose.msra.mxu0 0
        %8406 = vmatprep.subr.bf16.mxu0 %v4625
        %8407 = vmatpush1.bf16.xpose.msra.mxu0 %v4624
        %8408 = vmatprep.subr.bf16.mxu0 %v4369
        %8409 = vmatpush1.bf16.xpose.msra.mxu0 %v4368
        %8410 = vmatprep.subr.bf16.mxu0 0
        %8411 = vmatpush2.bf16.xpose.msra.mxu0 0
        %8412 = vmatprep.subr.bf16.mxu0 0
        %8413 = vmatpush2.bf16.xpose.msra.mxu0 0
        %8414 = vmatprep.subr.bf16.mxu0 0
        %8415 = vmatpush2.bf16.xpose.msra.mxu0 0
        %8416 = vmatprep.subr.bf16.mxu0 0
        %8417 = vmatpush2.bf16.xpose.msra.mxu0 0
        %8418 = vmatprep.subr.bf16.mxu0 0
        %8419 = vmatpush2.bf16.xpose.msra.mxu0 0
        %8420 = vmatprep.subr.bf16.mxu0 0
        %8421 = vmatpush2.bf16.xpose.msra.mxu0 0
        %8422 = vmatprep.subr.bf16.mxu0 0
        %8423 = vmatpush2.bf16.xpose.msra.mxu0 0
        %8424 = vmatprep.subr.bf16.mxu0 0
        %8425 = vmatpush2.bf16.xpose.msra.mxu0 0
        %8426 = vmatprep.mubr.bf16.mxu0 %v1829
        %8427 = vmatmul.mubr.bf16.gmra.mxu0 %v1827
        %v8428 = vpop.f32.mrf.mxu0
        %v8429 = vadd.f32 %v8389, %v8428
        %v8430 = vpop.f32.mrf.mxu0
        %v8431 = vpop.f32.mrf.mxu0
        %v8432 = vpop.f32.mrf.mxu0
        %8433 = vdwg.mxu0
        %8434 = vmatprep.subr.bf16.mxu0 0
        %8435 = vmatpush1.bf16.xpose.msra.mxu0 0
        %8436 = vmatprep.subr.bf16.mxu0 0
        %8437 = vmatpush1.bf16.xpose.msra.mxu0 0
        %8438 = vmatprep.subr.bf16.mxu0 0
        %8439 = vmatpush1.bf16.xpose.msra.mxu0 0
        %8440 = vmatprep.subr.bf16.mxu0 0
        %8441 = vmatpush1.bf16.xpose.msra.mxu0 0
        %8442 = vmatprep.subr.bf16.mxu0 0
        %8443 = vmatpush1.bf16.xpose.msra.mxu0 0
        %8444 = vmatprep.subr.bf16.mxu0 0
        %8445 = vmatpush1.bf16.xpose.msra.mxu0 0
        %8446 = vmatprep.subr.bf16.mxu0 %v4627
        %8447 = vmatpush1.bf16.xpose.msra.mxu0 %v4626
        %8448 = vmatprep.subr.bf16.mxu0 %v4371
        %8449 = vmatpush1.bf16.xpose.msra.mxu0 %v4370
        %8450 = vmatprep.subr.bf16.mxu0 0
        %8451 = vmatpush2.bf16.xpose.msra.mxu0 0
        %8452 = vmatprep.subr.bf16.mxu0 0
        %8453 = vmatpush2.bf16.xpose.msra.mxu0 0
        %8454 = vmatprep.subr.bf16.mxu0 0
        %8455 = vmatpush2.bf16.xpose.msra.mxu0 0
        %8456 = vmatprep.subr.bf16.mxu0 0
        %8457 = vmatpush2.bf16.xpose.msra.mxu0 0
        %8458 = vmatprep.subr.bf16.mxu0 0
        %8459 = vmatpush2.bf16.xpose.msra.mxu0 0
        %8460 = vmatprep.subr.bf16.mxu0 0
        %8461 = vmatpush2.bf16.xpose.msra.mxu0 0
        %8462 = vmatprep.subr.bf16.mxu0 0
        %8463 = vmatpush2.bf16.xpose.msra.mxu0 0
        %8464 = vmatprep.subr.bf16.mxu0 0
        %8465 = vmatpush2.bf16.xpose.msra.mxu0 0
        %8466 = vmatprep.mubr.bf16.mxu0 %v1867
        %8467 = vmatmul.mubr.bf16.gmra.mxu0 %v1853
        %v8468 = vpop.f32.mrf.mxu0
        %v8469 = vadd.f32 %v8429, %v8468
        %v8470 = vpop.f32.mrf.mxu0
        %v8471 = vpop.f32.mrf.mxu0
        %v8472 = vpop.f32.mrf.mxu0
        %8473 = vdwg.mxu0
        %8474 = vmatprep.subr.bf16.mxu0 0
        %8475 = vmatpush1.bf16.xpose.msra.mxu0 0
        %8476 = vmatprep.subr.bf16.mxu0 0
        %8477 = vmatpush1.bf16.xpose.msra.mxu0 0
        %8478 = vmatprep.subr.bf16.mxu0 0
        %8479 = vmatpush1.bf16.xpose.msra.mxu0 0
        %8480 = vmatprep.subr.bf16.mxu0 0
        %8481 = vmatpush1.bf16.xpose.msra.mxu0 0
        %8482 = vmatprep.subr.bf16.mxu0 0
        %8483 = vmatpush1.bf16.xpose.msra.mxu0 0
        %8484 = vmatprep.subr.bf16.mxu0 0
        %8485 = vmatpush1.bf16.xpose.msra.mxu0 0
        %8486 = vmatprep.subr.bf16.mxu0 %v4629
        %8487 = vmatpush1.bf16.xpose.msra.mxu0 %v4628
        %8488 = vmatprep.subr.bf16.mxu0 %v4373
        %8489 = vmatpush1.bf16.xpose.msra.mxu0 %v4372
        %8490 = vmatprep.subr.bf16.mxu0 0
        %8491 = vmatpush2.bf16.xpose.msra.mxu0 0
        %8492 = vmatprep.subr.bf16.mxu0 0
        %8493 = vmatpush2.bf16.xpose.msra.mxu0 0
        %8494 = vmatprep.subr.bf16.mxu0 0
        %8495 = vmatpush2.bf16.xpose.msra.mxu0 0
        %8496 = vmatprep.subr.bf16.mxu0 0
        %8497 = vmatpush2.bf16.xpose.msra.mxu0 0
        %8498 = vmatprep.subr.bf16.mxu0 0
        %8499 = vmatpush2.bf16.xpose.msra.mxu0 0
        %8500 = vmatprep.subr.bf16.mxu0 0
        %8501 = vmatpush2.bf16.xpose.msra.mxu0 0
        %8502 = vmatprep.subr.bf16.mxu0 0
        %8503 = vmatpush2.bf16.xpose.msra.mxu0 0
        %8504 = vmatprep.subr.bf16.mxu0 0
        %8505 = vmatpush2.bf16.xpose.msra.mxu0 0
        %8506 = vmatprep.mubr.bf16.mxu0 %v1877
        %8507 = vmatmul.mubr.bf16.gmra.mxu0 %v1875
        %v8508 = vpop.f32.mrf.mxu0
        %v8509 = vadd.f32 %v8469, %v8508
        %v8510 = vpop.f32.mrf.mxu0
        %v8511 = vpop.f32.mrf.mxu0
        %v8512 = vpop.f32.mrf.mxu0
        %8513 = vdwg.mxu0
        %8514 = vmatprep.subr.bf16.mxu0 0
        %8515 = vmatpush1.bf16.xpose.msra.mxu0 0
        %8516 = vmatprep.subr.bf16.mxu0 0
        %8517 = vmatpush1.bf16.xpose.msra.mxu0 0
        %8518 = vmatprep.subr.bf16.mxu0 0
        %8519 = vmatpush1.bf16.xpose.msra.mxu0 0
        %8520 = vmatprep.subr.bf16.mxu0 0
        %8521 = vmatpush1.bf16.xpose.msra.mxu0 0
        %8522 = vmatprep.subr.bf16.mxu0 0
        %8523 = vmatpush1.bf16.xpose.msra.mxu0 0
        %8524 = vmatprep.subr.bf16.mxu0 0
        %8525 = vmatpush1.bf16.xpose.msra.mxu0 0
        %8526 = vmatprep.subr.bf16.mxu0 %v4631
        %8527 = vmatpush1.bf16.xpose.msra.mxu0 %v4630
        %8528 = vmatprep.subr.bf16.mxu0 %v4375
        %8529 = vmatpush1.bf16.xpose.msra.mxu0 %v4374
        %8530 = vmatprep.subr.bf16.mxu0 0
        %8531 = vmatpush2.bf16.xpose.msra.mxu0 0
        %8532 = vmatprep.subr.bf16.mxu0 0
        %8533 = vmatpush2.bf16.xpose.msra.mxu0 0
        %8534 = vmatprep.subr.bf16.mxu0 0
        %8535 = vmatpush2.bf16.xpose.msra.mxu0 0
        %8536 = vmatprep.subr.bf16.mxu0 0
        %8537 = vmatpush2.bf16.xpose.msra.mxu0 0
        %8538 = vmatprep.subr.bf16.mxu0 0
        %8539 = vmatpush2.bf16.xpose.msra.mxu0 0
        %8540 = vmatprep.subr.bf16.mxu0 0
        %8541 = vmatpush2.bf16.xpose.msra.mxu0 0
        %8542 = vmatprep.subr.bf16.mxu0 0
        %8543 = vmatpush2.bf16.xpose.msra.mxu0 0
        %8544 = vmatprep.subr.bf16.mxu0 0
        %8545 = vmatpush2.bf16.xpose.msra.mxu0 0
        %8546 = vmatprep.mubr.bf16.mxu0 %v1874
        %8547 = vmatmul.mubr.bf16.gmra.mxu0 %v1860
        %v8548 = vpop.f32.mrf.mxu0
        %v8549 = vadd.f32 %v8509, %v8548
        %v8550 = vpop.f32.mrf.mxu0
        %v8551 = vpop.f32.mrf.mxu0
        %v8552 = vpop.f32.mrf.mxu0
        %8553 = vdwg.mxu0
        %8554 = vmatprep.subr.bf16.mxu0 0
        %8555 = vmatpush1.bf16.xpose.msra.mxu0 0
        %8556 = vmatprep.subr.bf16.mxu0 0
        %8557 = vmatpush1.bf16.xpose.msra.mxu0 0
        %8558 = vmatprep.subr.bf16.mxu0 0
        %8559 = vmatpush1.bf16.xpose.msra.mxu0 0
        %8560 = vmatprep.subr.bf16.mxu0 0
        %8561 = vmatpush1.bf16.xpose.msra.mxu0 0
        %8562 = vmatprep.subr.bf16.mxu0 0
        %8563 = vmatpush1.bf16.xpose.msra.mxu0 0
        %8564 = vmatprep.subr.bf16.mxu0 0
        %8565 = vmatpush1.bf16.xpose.msra.mxu0 0
        %8566 = vmatprep.subr.bf16.mxu0 %v4633
        %8567 = vmatpush1.bf16.xpose.msra.mxu0 %v4632
        %8568 = vmatprep.subr.bf16.mxu0 %v4377
        %8569 = vmatpush1.bf16.xpose.msra.mxu0 %v4376
        %8570 = vmatprep.subr.bf16.mxu0 0
        %8571 = vmatpush2.bf16.xpose.msra.mxu0 0
        %8572 = vmatprep.subr.bf16.mxu0 0
        %8573 = vmatpush2.bf16.xpose.msra.mxu0 0
        %8574 = vmatprep.subr.bf16.mxu0 0
        %8575 = vmatpush2.bf16.xpose.msra.mxu0 0
        %8576 = vmatprep.subr.bf16.mxu0 0
        %8577 = vmatpush2.bf16.xpose.msra.mxu0 0
        %8578 = vmatprep.subr.bf16.mxu0 0
        %8579 = vmatpush2.bf16.xpose.msra.mxu0 0
        %8580 = vmatprep.subr.bf16.mxu0 0
        %8581 = vmatpush2.bf16.xpose.msra.mxu0 0
        %8582 = vmatprep.subr.bf16.mxu0 0
        %8583 = vmatpush2.bf16.xpose.msra.mxu0 0
        %8584 = vmatprep.subr.bf16.mxu0 0
        %8585 = vmatpush2.bf16.xpose.msra.mxu0 0
        %8586 = vmatprep.mubr.bf16.mxu0 %v1878
        %8587 = vmatmul.mubr.bf16.gmra.mxu0 %v1876
        %v8588 = vpop.f32.mrf.mxu0
        %v8589 = vadd.f32 %v8549, %v8588
        %v8590 = vpop.f32.mrf.mxu0
        %v8591 = vpop.f32.mrf.mxu0
        %v8592 = vpop.f32.mrf.mxu0
        %8593 = vdwg.mxu0
        %8594 = vmatprep.subr.bf16.mxu0 0
        %8595 = vmatpush1.bf16.xpose.msra.mxu0 0
        %8596 = vmatprep.subr.bf16.mxu0 0
        %8597 = vmatpush1.bf16.xpose.msra.mxu0 0
        %8598 = vmatprep.subr.bf16.mxu0 0
        %8599 = vmatpush1.bf16.xpose.msra.mxu0 0
        %8600 = vmatprep.subr.bf16.mxu0 0
        %8601 = vmatpush1.bf16.xpose.msra.mxu0 0
        %8602 = vmatprep.subr.bf16.mxu0 0
        %8603 = vmatpush1.bf16.xpose.msra.mxu0 0
        %8604 = vmatprep.subr.bf16.mxu0 0
        %8605 = vmatpush1.bf16.xpose.msra.mxu0 0
        %8606 = vmatprep.subr.bf16.mxu0 %v4635
        %8607 = vmatpush1.bf16.xpose.msra.mxu0 %v4634
        %8608 = vmatprep.subr.bf16.mxu0 %v4379
        %8609 = vmatpush1.bf16.xpose.msra.mxu0 %v4378
        %8610 = vmatprep.subr.bf16.mxu0 0
        %8611 = vmatpush2.bf16.xpose.msra.mxu0 0
        %8612 = vmatprep.subr.bf16.mxu0 0
        %8613 = vmatpush2.bf16.xpose.msra.mxu0 0
        %8614 = vmatprep.subr.bf16.mxu0 0
        %8615 = vmatpush2.bf16.xpose.msra.mxu0 0
        %8616 = vmatprep.subr.bf16.mxu0 0
        %8617 = vmatpush2.bf16.xpose.msra.mxu0 0
        %8618 = vmatprep.subr.bf16.mxu0 0
        %8619 = vmatpush2.bf16.xpose.msra.mxu0 0
        %8620 = vmatprep.subr.bf16.mxu0 0
        %8621 = vmatpush2.bf16.xpose.msra.mxu0 0
        %8622 = vmatprep.subr.bf16.mxu0 0
        %8623 = vmatpush2.bf16.xpose.msra.mxu0 0
        %8624 = vmatprep.subr.bf16.mxu0 0
        %8625 = vmatpush2.bf16.xpose.msra.mxu0 0
        %8626 = vmatprep.mubr.bf16.mxu0 %v1916
        %8627 = vmatmul.mubr.bf16.gmra.mxu0 %v1902
        %v8628 = vpop.f32.mrf.mxu0
        %v8629 = vadd.f32 %v8589, %v8628
        %v8630 = vpop.f32.mrf.mxu0
        %v8631 = vpop.f32.mrf.mxu0
        %v8632 = vpop.f32.mrf.mxu0
        %8633 = vdwg.mxu0
        %8634 = vmatprep.subr.bf16.mxu0 0
        %8635 = vmatpush1.bf16.xpose.msra.mxu0 0
        %8636 = vmatprep.subr.bf16.mxu0 0
        %8637 = vmatpush1.bf16.xpose.msra.mxu0 0
        %8638 = vmatprep.subr.bf16.mxu0 0
        %8639 = vmatpush1.bf16.xpose.msra.mxu0 0
        %8640 = vmatprep.subr.bf16.mxu0 0
        %8641 = vmatpush1.bf16.xpose.msra.mxu0 0
        %8642 = vmatprep.subr.bf16.mxu0 0
        %8643 = vmatpush1.bf16.xpose.msra.mxu0 0
        %8644 = vmatprep.subr.bf16.mxu0 0
        %8645 = vmatpush1.bf16.xpose.msra.mxu0 0
        %8646 = vmatprep.subr.bf16.mxu0 %v4637
        %8647 = vmatpush1.bf16.xpose.msra.mxu0 %v4636
        %8648 = vmatprep.subr.bf16.mxu0 %v4381
        %8649 = vmatpush1.bf16.xpose.msra.mxu0 %v4380
        %8650 = vmatprep.subr.bf16.mxu0 0
        %8651 = vmatpush2.bf16.xpose.msra.mxu0 0
        %8652 = vmatprep.subr.bf16.mxu0 0
        %8653 = vmatpush2.bf16.xpose.msra.mxu0 0
        %8654 = vmatprep.subr.bf16.mxu0 0
        %8655 = vmatpush2.bf16.xpose.msra.mxu0 0
        %8656 = vmatprep.subr.bf16.mxu0 0
        %8657 = vmatpush2.bf16.xpose.msra.mxu0 0
        %8658 = vmatprep.subr.bf16.mxu0 0
        %8659 = vmatpush2.bf16.xpose.msra.mxu0 0
        %8660 = vmatprep.subr.bf16.mxu0 0
        %8661 = vmatpush2.bf16.xpose.msra.mxu0 0
        %8662 = vmatprep.subr.bf16.mxu0 0
        %8663 = vmatpush2.bf16.xpose.msra.mxu0 0
        %8664 = vmatprep.subr.bf16.mxu0 0
        %8665 = vmatpush2.bf16.xpose.msra.mxu0 0
        %8666 = vmatprep.mubr.bf16.mxu0 %v1926
        %8667 = vmatmul.mubr.bf16.gmra.mxu0 %v1924
        %v8668 = vpop.f32.mrf.mxu0
        %v8669 = vadd.f32 %v8629, %v8668
        %v8670 = vpop.f32.mrf.mxu0
        %v8671 = vpop.f32.mrf.mxu0
        %v8672 = vpop.f32.mrf.mxu0
        %8673 = vdwg.mxu0
        %8674 = vmatprep.subr.bf16.mxu0 0
        %8675 = vmatpush1.bf16.xpose.msra.mxu0 0
        %8676 = vmatprep.subr.bf16.mxu0 0
        %8677 = vmatpush1.bf16.xpose.msra.mxu0 0
        %8678 = vmatprep.subr.bf16.mxu0 0
        %8679 = vmatpush1.bf16.xpose.msra.mxu0 0
        %8680 = vmatprep.subr.bf16.mxu0 0
        %8681 = vmatpush1.bf16.xpose.msra.mxu0 0
        %8682 = vmatprep.subr.bf16.mxu0 0
        %8683 = vmatpush1.bf16.xpose.msra.mxu0 0
        %8684 = vmatprep.subr.bf16.mxu0 0
        %8685 = vmatpush1.bf16.xpose.msra.mxu0 0
        %8686 = vmatprep.subr.bf16.mxu0 %v4639
        %8687 = vmatpush1.bf16.xpose.msra.mxu0 %v4638
        %8688 = vmatprep.subr.bf16.mxu0 %v4383
        %8689 = vmatpush1.bf16.xpose.msra.mxu0 %v4382
        %8690 = vmatprep.subr.bf16.mxu0 0
        %8691 = vmatpush2.bf16.xpose.msra.mxu0 0
        %8692 = vmatprep.subr.bf16.mxu0 0
        %8693 = vmatpush2.bf16.xpose.msra.mxu0 0
        %8694 = vmatprep.subr.bf16.mxu0 0
        %8695 = vmatpush2.bf16.xpose.msra.mxu0 0
        %8696 = vmatprep.subr.bf16.mxu0 0
        %8697 = vmatpush2.bf16.xpose.msra.mxu0 0
        %8698 = vmatprep.subr.bf16.mxu0 0
        %8699 = vmatpush2.bf16.xpose.msra.mxu0 0
        %8700 = vmatprep.subr.bf16.mxu0 0
        %8701 = vmatpush2.bf16.xpose.msra.mxu0 0
        %8702 = vmatprep.subr.bf16.mxu0 0
        %8703 = vmatpush2.bf16.xpose.msra.mxu0 0
        %8704 = vmatprep.subr.bf16.mxu0 0
        %8705 = vmatpush2.bf16.xpose.msra.mxu0 0
        %8706 = vmatprep.mubr.bf16.mxu0 %v1923
        %8707 = vmatmul.mubr.bf16.gmra.mxu0 %v1909
        %v8708 = vpop.f32.mrf.mxu0
        %v8709 = vadd.f32 %v8669, %v8708
        %v8710 = vpop.f32.mrf.mxu0
        %v8711 = vpop.f32.mrf.mxu0
        %v8712 = vpop.f32.mrf.mxu0
        %8713 = vdwg.mxu0
        %8714 = vmatprep.subr.bf16.mxu0 0
        %8715 = vmatpush1.bf16.xpose.msra.mxu0 0
        %8716 = vmatprep.subr.bf16.mxu0 0
        %8717 = vmatpush1.bf16.xpose.msra.mxu0 0
        %8718 = vmatprep.subr.bf16.mxu0 0
        %8719 = vmatpush1.bf16.xpose.msra.mxu0 0
        %8720 = vmatprep.subr.bf16.mxu0 0
        %8721 = vmatpush1.bf16.xpose.msra.mxu0 0
        %8722 = vmatprep.subr.bf16.mxu0 0
        %8723 = vmatpush1.bf16.xpose.msra.mxu0 0
        %8724 = vmatprep.subr.bf16.mxu0 0
        %8725 = vmatpush1.bf16.xpose.msra.mxu0 0
        %8726 = vmatprep.subr.bf16.mxu0 %v4641
        %8727 = vmatpush1.bf16.xpose.msra.mxu0 %v4640
        %8728 = vmatprep.subr.bf16.mxu0 %v4385
        %8729 = vmatpush1.bf16.xpose.msra.mxu0 %v4384
        %8730 = vmatprep.subr.bf16.mxu0 0
        %8731 = vmatpush2.bf16.xpose.msra.mxu0 0
        %8732 = vmatprep.subr.bf16.mxu0 0
        %8733 = vmatpush2.bf16.xpose.msra.mxu0 0
        %8734 = vmatprep.subr.bf16.mxu0 0
        %8735 = vmatpush2.bf16.xpose.msra.mxu0 0
        %8736 = vmatprep.subr.bf16.mxu0 0
        %8737 = vmatpush2.bf16.xpose.msra.mxu0 0
        %8738 = vmatprep.subr.bf16.mxu0 0
        %8739 = vmatpush2.bf16.xpose.msra.mxu0 0
        %8740 = vmatprep.subr.bf16.mxu0 0
        %8741 = vmatpush2.bf16.xpose.msra.mxu0 0
        %8742 = vmatprep.subr.bf16.mxu0 0
        %8743 = vmatpush2.bf16.xpose.msra.mxu0 0
        %8744 = vmatprep.subr.bf16.mxu0 0
        %8745 = vmatpush2.bf16.xpose.msra.mxu0 0
        %8746 = vmatprep.mubr.bf16.mxu0 %v1927
        %8747 = vmatmul.mubr.bf16.gmra.mxu0 %v1925
        %v8748 = vpop.f32.mrf.mxu0
        %v8749 = vadd.f32 %v8709, %v8748
        %v8750 = vpop.f32.mrf.mxu0
        %v8751 = vpop.f32.mrf.mxu0
        %v8752 = vpop.f32.mrf.mxu0
        %8753 = vdwg.mxu0
        %8754 = vmatprep.subr.bf16.mxu0 0
        %8755 = vmatpush1.bf16.xpose.msra.mxu0 0
        %8756 = vmatprep.subr.bf16.mxu0 0
        %8757 = vmatpush1.bf16.xpose.msra.mxu0 0
        %8758 = vmatprep.subr.bf16.mxu0 0
        %8759 = vmatpush1.bf16.xpose.msra.mxu0 0
        %8760 = vmatprep.subr.bf16.mxu0 0
        %8761 = vmatpush1.bf16.xpose.msra.mxu0 0
        %8762 = vmatprep.subr.bf16.mxu0 0
        %8763 = vmatpush1.bf16.xpose.msra.mxu0 0
        %8764 = vmatprep.subr.bf16.mxu0 0
        %8765 = vmatpush1.bf16.xpose.msra.mxu0 0
        %8766 = vmatprep.subr.bf16.mxu0 %v4643
        %8767 = vmatpush1.bf16.xpose.msra.mxu0 %v4642
        %8768 = vmatprep.subr.bf16.mxu0 %v4387
        %8769 = vmatpush1.bf16.xpose.msra.mxu0 %v4386
        %8770 = vmatprep.subr.bf16.mxu0 0
        %8771 = vmatpush2.bf16.xpose.msra.mxu0 0
        %8772 = vmatprep.subr.bf16.mxu0 0
        %8773 = vmatpush2.bf16.xpose.msra.mxu0 0
        %8774 = vmatprep.subr.bf16.mxu0 0
        %8775 = vmatpush2.bf16.xpose.msra.mxu0 0
        %8776 = vmatprep.subr.bf16.mxu0 0
        %8777 = vmatpush2.bf16.xpose.msra.mxu0 0
        %8778 = vmatprep.subr.bf16.mxu0 0
        %8779 = vmatpush2.bf16.xpose.msra.mxu0 0
        %8780 = vmatprep.subr.bf16.mxu0 0
        %8781 = vmatpush2.bf16.xpose.msra.mxu0 0
        %8782 = vmatprep.subr.bf16.mxu0 0
        %8783 = vmatpush2.bf16.xpose.msra.mxu0 0
        %8784 = vmatprep.subr.bf16.mxu0 0
        %8785 = vmatpush2.bf16.xpose.msra.mxu0 0
        %8786 = vmatprep.mubr.bf16.mxu0 %v1965
        %8787 = vmatmul.mubr.bf16.gmra.mxu0 %v1951
        %v8788 = vpop.f32.mrf.mxu0
        %v8789 = vadd.f32 %v8749, %v8788
        %v8790 = vpop.f32.mrf.mxu0
        %v8791 = vpop.f32.mrf.mxu0
        %v8792 = vpop.f32.mrf.mxu0
        %8793 = vdwg.mxu0
        %8794 = vmatprep.subr.bf16.mxu0 0
        %8795 = vmatpush1.bf16.xpose.msra.mxu0 0
        %8796 = vmatprep.subr.bf16.mxu0 0
        %8797 = vmatpush1.bf16.xpose.msra.mxu0 0
        %8798 = vmatprep.subr.bf16.mxu0 0
        %8799 = vmatpush1.bf16.xpose.msra.mxu0 0
        %8800 = vmatprep.subr.bf16.mxu0 0
        %8801 = vmatpush1.bf16.xpose.msra.mxu0 0
        %8802 = vmatprep.subr.bf16.mxu0 0
        %8803 = vmatpush1.bf16.xpose.msra.mxu0 0
        %8804 = vmatprep.subr.bf16.mxu0 0
        %8805 = vmatpush1.bf16.xpose.msra.mxu0 0
        %8806 = vmatprep.subr.bf16.mxu0 %v4645
        %8807 = vmatpush1.bf16.xpose.msra.mxu0 %v4644
        %8808 = vmatprep.subr.bf16.mxu0 %v4389
        %8809 = vmatpush1.bf16.xpose.msra.mxu0 %v4388
        %8810 = vmatprep.subr.bf16.mxu0 0
        %8811 = vmatpush2.bf16.xpose.msra.mxu0 0
        %8812 = vmatprep.subr.bf16.mxu0 0
        %8813 = vmatpush2.bf16.xpose.msra.mxu0 0
        %8814 = vmatprep.subr.bf16.mxu0 0
        %8815 = vmatpush2.bf16.xpose.msra.mxu0 0
        %8816 = vmatprep.subr.bf16.mxu0 0
        %8817 = vmatpush2.bf16.xpose.msra.mxu0 0
        %8818 = vmatprep.subr.bf16.mxu0 0
        %8819 = vmatpush2.bf16.xpose.msra.mxu0 0
        %8820 = vmatprep.subr.bf16.mxu0 0
        %8821 = vmatpush2.bf16.xpose.msra.mxu0 0
        %8822 = vmatprep.subr.bf16.mxu0 0
        %8823 = vmatpush2.bf16.xpose.msra.mxu0 0
        %8824 = vmatprep.subr.bf16.mxu0 0
        %8825 = vmatpush2.bf16.xpose.msra.mxu0 0
        %8826 = vmatprep.mubr.bf16.mxu0 %v1975
        %8827 = vmatmul.mubr.bf16.gmra.mxu0 %v1973
        %v8828 = vpop.f32.mrf.mxu0
        %v8829 = vadd.f32 %v8789, %v8828
        %v8830 = vpop.f32.mrf.mxu0
        %v8831 = vpop.f32.mrf.mxu0
        %v8832 = vpop.f32.mrf.mxu0
        %8833 = vdwg.mxu0
        %8834 = vmatprep.subr.bf16.mxu0 0
        %8835 = vmatpush1.bf16.xpose.msra.mxu0 0
        %8836 = vmatprep.subr.bf16.mxu0 0
        %8837 = vmatpush1.bf16.xpose.msra.mxu0 0
        %8838 = vmatprep.subr.bf16.mxu0 0
        %8839 = vmatpush1.bf16.xpose.msra.mxu0 0
        %8840 = vmatprep.subr.bf16.mxu0 0
        %8841 = vmatpush1.bf16.xpose.msra.mxu0 0
        %8842 = vmatprep.subr.bf16.mxu0 0
        %8843 = vmatpush1.bf16.xpose.msra.mxu0 0
        %8844 = vmatprep.subr.bf16.mxu0 0
        %8845 = vmatpush1.bf16.xpose.msra.mxu0 0
        %8846 = vmatprep.subr.bf16.mxu0 %v4647
        %8847 = vmatpush1.bf16.xpose.msra.mxu0 %v4646
        %8848 = vmatprep.subr.bf16.mxu0 %v4391
        %8849 = vmatpush1.bf16.xpose.msra.mxu0 %v4390
        %8850 = vmatprep.subr.bf16.mxu0 0
        %8851 = vmatpush2.bf16.xpose.msra.mxu0 0
        %8852 = vmatprep.subr.bf16.mxu0 0
        %8853 = vmatpush2.bf16.xpose.msra.mxu0 0
        %8854 = vmatprep.subr.bf16.mxu0 0
        %8855 = vmatpush2.bf16.xpose.msra.mxu0 0
        %8856 = vmatprep.subr.bf16.mxu0 0
        %8857 = vmatpush2.bf16.xpose.msra.mxu0 0
        %8858 = vmatprep.subr.bf16.mxu0 0
        %8859 = vmatpush2.bf16.xpose.msra.mxu0 0
        %8860 = vmatprep.subr.bf16.mxu0 0
        %8861 = vmatpush2.bf16.xpose.msra.mxu0 0
        %8862 = vmatprep.subr.bf16.mxu0 0
        %8863 = vmatpush2.bf16.xpose.msra.mxu0 0
        %8864 = vmatprep.subr.bf16.mxu0 0
        %8865 = vmatpush2.bf16.xpose.msra.mxu0 0
        %8866 = vmatprep.mubr.bf16.mxu0 %v1972
        %8867 = vmatmul.mubr.bf16.gmra.mxu0 %v1958
        %v8868 = vpop.f32.mrf.mxu0
        %v8869 = vadd.f32 %v8829, %v8868
        %v8870 = vpop.f32.mrf.mxu0
        %v8871 = vpop.f32.mrf.mxu0
        %v8872 = vpop.f32.mrf.mxu0
        %8873 = vdwg.mxu0
        %8874 = vmatprep.subr.bf16.mxu0 0
        %8875 = vmatpush1.bf16.xpose.msra.mxu0 0
        %8876 = vmatprep.subr.bf16.mxu0 0
        %8877 = vmatpush1.bf16.xpose.msra.mxu0 0
        %8878 = vmatprep.subr.bf16.mxu0 0
        %8879 = vmatpush1.bf16.xpose.msra.mxu0 0
        %8880 = vmatprep.subr.bf16.mxu0 0
        %8881 = vmatpush1.bf16.xpose.msra.mxu0 0
        %8882 = vmatprep.subr.bf16.mxu0 0
        %8883 = vmatpush1.bf16.xpose.msra.mxu0 0
        %8884 = vmatprep.subr.bf16.mxu0 0
        %8885 = vmatpush1.bf16.xpose.msra.mxu0 0
        %8886 = vmatprep.subr.bf16.mxu0 %v4649
        %8887 = vmatpush1.bf16.xpose.msra.mxu0 %v4648
        %8888 = vmatprep.subr.bf16.mxu0 %v4393
        %8889 = vmatpush1.bf16.xpose.msra.mxu0 %v4392
        %8890 = vmatprep.subr.bf16.mxu0 0
        %8891 = vmatpush2.bf16.xpose.msra.mxu0 0
        %8892 = vmatprep.subr.bf16.mxu0 0
        %8893 = vmatpush2.bf16.xpose.msra.mxu0 0
        %8894 = vmatprep.subr.bf16.mxu0 0
        %8895 = vmatpush2.bf16.xpose.msra.mxu0 0
        %8896 = vmatprep.subr.bf16.mxu0 0
        %8897 = vmatpush2.bf16.xpose.msra.mxu0 0
        %8898 = vmatprep.subr.bf16.mxu0 0
        %8899 = vmatpush2.bf16.xpose.msra.mxu0 0
        %8900 = vmatprep.subr.bf16.mxu0 0
        %8901 = vmatpush2.bf16.xpose.msra.mxu0 0
        %8902 = vmatprep.subr.bf16.mxu0 0
        %8903 = vmatpush2.bf16.xpose.msra.mxu0 0
        %8904 = vmatprep.subr.bf16.mxu0 0
        %8905 = vmatpush2.bf16.xpose.msra.mxu0 0
        %8906 = vmatprep.mubr.bf16.mxu0 %v1976
        %8907 = vmatmul.mubr.bf16.gmra.mxu0 %v1974
        %v8908 = vpop.f32.mrf.mxu0
        %v8909 = vadd.f32 %v8869, %v8908
        %v8910 = vpop.f32.mrf.mxu0
        %v8911 = vpop.f32.mrf.mxu0
        %v8912 = vpop.f32.mrf.mxu0
        %8913 = vdwg.mxu0
        %8914 = vmatprep.subr.bf16.mxu0 0
        %8915 = vmatpush1.bf16.xpose.msra.mxu0 0
        %8916 = vmatprep.subr.bf16.mxu0 0
        %8917 = vmatpush1.bf16.xpose.msra.mxu0 0
        %8918 = vmatprep.subr.bf16.mxu0 0
        %8919 = vmatpush1.bf16.xpose.msra.mxu0 0
        %8920 = vmatprep.subr.bf16.mxu0 0
        %8921 = vmatpush1.bf16.xpose.msra.mxu0 0
        %8922 = vmatprep.subr.bf16.mxu0 0
        %8923 = vmatpush1.bf16.xpose.msra.mxu0 0
        %8924 = vmatprep.subr.bf16.mxu0 0
        %8925 = vmatpush1.bf16.xpose.msra.mxu0 0
        %8926 = vmatprep.subr.bf16.mxu0 %v4651
        %8927 = vmatpush1.bf16.xpose.msra.mxu0 %v4650
        %8928 = vmatprep.subr.bf16.mxu0 %v4395
        %8929 = vmatpush1.bf16.xpose.msra.mxu0 %v4394
        %8930 = vmatprep.subr.bf16.mxu0 0
        %8931 = vmatpush2.bf16.xpose.msra.mxu0 0
        %8932 = vmatprep.subr.bf16.mxu0 0
        %8933 = vmatpush2.bf16.xpose.msra.mxu0 0
        %8934 = vmatprep.subr.bf16.mxu0 0
        %8935 = vmatpush2.bf16.xpose.msra.mxu0 0
        %8936 = vmatprep.subr.bf16.mxu0 0
        %8937 = vmatpush2.bf16.xpose.msra.mxu0 0
        %8938 = vmatprep.subr.bf16.mxu0 0
        %8939 = vmatpush2.bf16.xpose.msra.mxu0 0
        %8940 = vmatprep.subr.bf16.mxu0 0
        %8941 = vmatpush2.bf16.xpose.msra.mxu0 0
        %8942 = vmatprep.subr.bf16.mxu0 0
        %8943 = vmatpush2.bf16.xpose.msra.mxu0 0
        %8944 = vmatprep.subr.bf16.mxu0 0
        %8945 = vmatpush2.bf16.xpose.msra.mxu0 0
        %8946 = vmatprep.mubr.bf16.mxu0 %v2014
        %8947 = vmatmul.mubr.bf16.gmra.mxu0 %v2000
        %v8948 = vpop.f32.mrf.mxu0
        %v8949 = vadd.f32 %v8909, %v8948
        %v8950 = vpop.f32.mrf.mxu0
        %v8951 = vpop.f32.mrf.mxu0
        %v8952 = vpop.f32.mrf.mxu0
        %8953 = vdwg.mxu0
        %8954 = vmatprep.subr.bf16.mxu0 0
        %8955 = vmatpush1.bf16.xpose.msra.mxu0 0
        %8956 = vmatprep.subr.bf16.mxu0 0
        %8957 = vmatpush1.bf16.xpose.msra.mxu0 0
        %8958 = vmatprep.subr.bf16.mxu0 0
        %8959 = vmatpush1.bf16.xpose.msra.mxu0 0
        %8960 = vmatprep.subr.bf16.mxu0 0
        %8961 = vmatpush1.bf16.xpose.msra.mxu0 0
        %8962 = vmatprep.subr.bf16.mxu0 0
        %8963 = vmatpush1.bf16.xpose.msra.mxu0 0
        %8964 = vmatprep.subr.bf16.mxu0 0
        %8965 = vmatpush1.bf16.xpose.msra.mxu0 0
        %8966 = vmatprep.subr.bf16.mxu0 %v4653
        %8967 = vmatpush1.bf16.xpose.msra.mxu0 %v4652
        %8968 = vmatprep.subr.bf16.mxu0 %v4397
        %8969 = vmatpush1.bf16.xpose.msra.mxu0 %v4396
        %8970 = vmatprep.subr.bf16.mxu0 0
        %8971 = vmatpush2.bf16.xpose.msra.mxu0 0
        %8972 = vmatprep.subr.bf16.mxu0 0
        %8973 = vmatpush2.bf16.xpose.msra.mxu0 0
        %8974 = vmatprep.subr.bf16.mxu0 0
        %8975 = vmatpush2.bf16.xpose.msra.mxu0 0
        %8976 = vmatprep.subr.bf16.mxu0 0
        %8977 = vmatpush2.bf16.xpose.msra.mxu0 0
        %8978 = vmatprep.subr.bf16.mxu0 0
        %8979 = vmatpush2.bf16.xpose.msra.mxu0 0
        %8980 = vmatprep.subr.bf16.mxu0 0
        %8981 = vmatpush2.bf16.xpose.msra.mxu0 0
        %8982 = vmatprep.subr.bf16.mxu0 0
        %8983 = vmatpush2.bf16.xpose.msra.mxu0 0
        %8984 = vmatprep.subr.bf16.mxu0 0
        %8985 = vmatpush2.bf16.xpose.msra.mxu0 0
        %8986 = vmatprep.mubr.bf16.mxu0 %v2024
        %8987 = vmatmul.mubr.bf16.gmra.mxu0 %v2022
        %v8988 = vpop.f32.mrf.mxu0
        %v8989 = vadd.f32 %v8949, %v8988
        %v8990 = vpop.f32.mrf.mxu0
        %v8991 = vpop.f32.mrf.mxu0
        %v8992 = vpop.f32.mrf.mxu0
        %8993 = vdwg.mxu0
        %8994 = vmatprep.subr.bf16.mxu0 0
        %8995 = vmatpush1.bf16.xpose.msra.mxu0 0
        %8996 = vmatprep.subr.bf16.mxu0 0
        %8997 = vmatpush1.bf16.xpose.msra.mxu0 0
        %8998 = vmatprep.subr.bf16.mxu0 0
        %8999 = vmatpush1.bf16.xpose.msra.mxu0 0
        %9000 = vmatprep.subr.bf16.mxu0 0
        %9001 = vmatpush1.bf16.xpose.msra.mxu0 0
        %9002 = vmatprep.subr.bf16.mxu0 0
        %9003 = vmatpush1.bf16.xpose.msra.mxu0 0
        %9004 = vmatprep.subr.bf16.mxu0 0
        %9005 = vmatpush1.bf16.xpose.msra.mxu0 0
        %9006 = vmatprep.subr.bf16.mxu0 %v4655
        %9007 = vmatpush1.bf16.xpose.msra.mxu0 %v4654
        %9008 = vmatprep.subr.bf16.mxu0 %v4399
        %9009 = vmatpush1.bf16.xpose.msra.mxu0 %v4398
        %9010 = vmatprep.subr.bf16.mxu0 0
        %9011 = vmatpush2.bf16.xpose.msra.mxu0 0
        %9012 = vmatprep.subr.bf16.mxu0 0
        %9013 = vmatpush2.bf16.xpose.msra.mxu0 0
        %9014 = vmatprep.subr.bf16.mxu0 0
        %9015 = vmatpush2.bf16.xpose.msra.mxu0 0
        %9016 = vmatprep.subr.bf16.mxu0 0
        %9017 = vmatpush2.bf16.xpose.msra.mxu0 0
        %9018 = vmatprep.subr.bf16.mxu0 0
        %9019 = vmatpush2.bf16.xpose.msra.mxu0 0
        %9020 = vmatprep.subr.bf16.mxu0 0
        %9021 = vmatpush2.bf16.xpose.msra.mxu0 0
        %9022 = vmatprep.subr.bf16.mxu0 0
        %9023 = vmatpush2.bf16.xpose.msra.mxu0 0
        %9024 = vmatprep.subr.bf16.mxu0 0
        %9025 = vmatpush2.bf16.xpose.msra.mxu0 0
        %9026 = vmatprep.mubr.bf16.mxu0 %v2021
        %9027 = vmatmul.mubr.bf16.gmra.mxu0 %v2007
        %v9028 = vpop.f32.mrf.mxu0
        %v9029 = vadd.f32 %v8989, %v9028
        %v9030 = vpop.f32.mrf.mxu0
        %v9031 = vpop.f32.mrf.mxu0
        %v9032 = vpop.f32.mrf.mxu0
        %9033 = vdwg.mxu0
        %9034 = vmatprep.subr.bf16.mxu0 0
        %9035 = vmatpush1.bf16.xpose.msra.mxu0 0
        %9036 = vmatprep.subr.bf16.mxu0 0
        %9037 = vmatpush1.bf16.xpose.msra.mxu0 0
        %9038 = vmatprep.subr.bf16.mxu0 0
        %9039 = vmatpush1.bf16.xpose.msra.mxu0 0
        %9040 = vmatprep.subr.bf16.mxu0 0
        %9041 = vmatpush1.bf16.xpose.msra.mxu0 0
        %9042 = vmatprep.subr.bf16.mxu0 0
        %9043 = vmatpush1.bf16.xpose.msra.mxu0 0
        %9044 = vmatprep.subr.bf16.mxu0 0
        %9045 = vmatpush1.bf16.xpose.msra.mxu0 0
        %9046 = vmatprep.subr.bf16.mxu0 %v4657
        %9047 = vmatpush1.bf16.xpose.msra.mxu0 %v4656
        %9048 = vmatprep.subr.bf16.mxu0 %v4401
        %9049 = vmatpush1.bf16.xpose.msra.mxu0 %v4400
        %9050 = vmatprep.subr.bf16.mxu0 0
        %9051 = vmatpush2.bf16.xpose.msra.mxu0 0
        %9052 = vmatprep.subr.bf16.mxu0 0
        %9053 = vmatpush2.bf16.xpose.msra.mxu0 0
        %9054 = vmatprep.subr.bf16.mxu0 0
        %9055 = vmatpush2.bf16.xpose.msra.mxu0 0
        %9056 = vmatprep.subr.bf16.mxu0 0
        %9057 = vmatpush2.bf16.xpose.msra.mxu0 0
        %9058 = vmatprep.subr.bf16.mxu0 0
        %9059 = vmatpush2.bf16.xpose.msra.mxu0 0
        %9060 = vmatprep.subr.bf16.mxu0 0
        %9061 = vmatpush2.bf16.xpose.msra.mxu0 0
        %9062 = vmatprep.subr.bf16.mxu0 0
        %9063 = vmatpush2.bf16.xpose.msra.mxu0 0
        %9064 = vmatprep.subr.bf16.mxu0 0
        %9065 = vmatpush2.bf16.xpose.msra.mxu0 0
        %9066 = vmatprep.mubr.bf16.mxu0 %v2025
        %9067 = vmatmul.mubr.bf16.gmra.mxu0 %v2023
        %v9068 = vpop.f32.mrf.mxu0
        %v9069 = vadd.f32 %v9029, %v9068
        %v9070 = vpop.f32.mrf.mxu0
        %v9071 = vpop.f32.mrf.mxu0
        %v9072 = vpop.f32.mrf.mxu0
        %9073 = vdwg.mxu0
        %9074 = vmatprep.subr.bf16.mxu0 0
        %9075 = vmatpush1.bf16.xpose.msra.mxu0 0
        %9076 = vmatprep.subr.bf16.mxu0 0
        %9077 = vmatpush1.bf16.xpose.msra.mxu0 0
        %9078 = vmatprep.subr.bf16.mxu0 0
        %9079 = vmatpush1.bf16.xpose.msra.mxu0 0
        %9080 = vmatprep.subr.bf16.mxu0 0
        %9081 = vmatpush1.bf16.xpose.msra.mxu0 0
        %9082 = vmatprep.subr.bf16.mxu0 0
        %9083 = vmatpush1.bf16.xpose.msra.mxu0 0
        %9084 = vmatprep.subr.bf16.mxu0 0
        %9085 = vmatpush1.bf16.xpose.msra.mxu0 0
        %9086 = vmatprep.subr.bf16.mxu0 %v4659
        %9087 = vmatpush1.bf16.xpose.msra.mxu0 %v4658
        %9088 = vmatprep.subr.bf16.mxu0 %v4403
        %9089 = vmatpush1.bf16.xpose.msra.mxu0 %v4402
        %9090 = vmatprep.subr.bf16.mxu0 0
        %9091 = vmatpush2.bf16.xpose.msra.mxu0 0
        %9092 = vmatprep.subr.bf16.mxu0 0
        %9093 = vmatpush2.bf16.xpose.msra.mxu0 0
        %9094 = vmatprep.subr.bf16.mxu0 0
        %9095 = vmatpush2.bf16.xpose.msra.mxu0 0
        %9096 = vmatprep.subr.bf16.mxu0 0
        %9097 = vmatpush2.bf16.xpose.msra.mxu0 0
        %9098 = vmatprep.subr.bf16.mxu0 0
        %9099 = vmatpush2.bf16.xpose.msra.mxu0 0
        %9100 = vmatprep.subr.bf16.mxu0 0
        %9101 = vmatpush2.bf16.xpose.msra.mxu0 0
        %9102 = vmatprep.subr.bf16.mxu0 0
        %9103 = vmatpush2.bf16.xpose.msra.mxu0 0
        %9104 = vmatprep.subr.bf16.mxu0 0
        %9105 = vmatpush2.bf16.xpose.msra.mxu0 0
        %9106 = vmatprep.mubr.bf16.mxu0 %v2063
        %9107 = vmatmul.mubr.bf16.gmra.mxu0 %v2049
        %v9108 = vpop.f32.mrf.mxu0
        %v9109 = vadd.f32 %v9069, %v9108
        %v9110 = vpop.f32.mrf.mxu0
        %v9111 = vpop.f32.mrf.mxu0
        %v9112 = vpop.f32.mrf.mxu0
        %9113 = vdwg.mxu0
        %9114 = vmatprep.subr.bf16.mxu0 0
        %9115 = vmatpush1.bf16.xpose.msra.mxu0 0
        %9116 = vmatprep.subr.bf16.mxu0 0
        %9117 = vmatpush1.bf16.xpose.msra.mxu0 0
        %9118 = vmatprep.subr.bf16.mxu0 0
        %9119 = vmatpush1.bf16.xpose.msra.mxu0 0
        %9120 = vmatprep.subr.bf16.mxu0 0
        %9121 = vmatpush1.bf16.xpose.msra.mxu0 0
        %9122 = vmatprep.subr.bf16.mxu0 0
        %9123 = vmatpush1.bf16.xpose.msra.mxu0 0
        %9124 = vmatprep.subr.bf16.mxu0 0
        %9125 = vmatpush1.bf16.xpose.msra.mxu0 0
        %9126 = vmatprep.subr.bf16.mxu0 %v4661
        %9127 = vmatpush1.bf16.xpose.msra.mxu0 %v4660
        %9128 = vmatprep.subr.bf16.mxu0 %v4405
        %9129 = vmatpush1.bf16.xpose.msra.mxu0 %v4404
        %9130 = vmatprep.subr.bf16.mxu0 0
        %9131 = vmatpush2.bf16.xpose.msra.mxu0 0
        %9132 = vmatprep.subr.bf16.mxu0 0
        %9133 = vmatpush2.bf16.xpose.msra.mxu0 0
        %9134 = vmatprep.subr.bf16.mxu0 0
        %9135 = vmatpush2.bf16.xpose.msra.mxu0 0
        %9136 = vmatprep.subr.bf16.mxu0 0
        %9137 = vmatpush2.bf16.xpose.msra.mxu0 0
        %9138 = vmatprep.subr.bf16.mxu0 0
        %9139 = vmatpush2.bf16.xpose.msra.mxu0 0
        %9140 = vmatprep.subr.bf16.mxu0 0
        %9141 = vmatpush2.bf16.xpose.msra.mxu0 0
        %9142 = vmatprep.subr.bf16.mxu0 0
        %9143 = vmatpush2.bf16.xpose.msra.mxu0 0
        %9144 = vmatprep.subr.bf16.mxu0 0
        %9145 = vmatpush2.bf16.xpose.msra.mxu0 0
        %9146 = vmatprep.mubr.bf16.mxu0 %v2073
        %9147 = vmatmul.mubr.bf16.gmra.mxu0 %v2071
        %v9148 = vpop.f32.mrf.mxu0
        %v9149 = vadd.f32 %v9109, %v9148
        %v9150 = vpop.f32.mrf.mxu0
        %v9151 = vpop.f32.mrf.mxu0
        %v9152 = vpop.f32.mrf.mxu0
        %9153 = vdwg.mxu0
        %9154 = vmatprep.subr.bf16.mxu0 0
        %9155 = vmatpush1.bf16.xpose.msra.mxu0 0
        %9156 = vmatprep.subr.bf16.mxu0 0
        %9157 = vmatpush1.bf16.xpose.msra.mxu0 0
        %9158 = vmatprep.subr.bf16.mxu0 0
        %9159 = vmatpush1.bf16.xpose.msra.mxu0 0
        %9160 = vmatprep.subr.bf16.mxu0 0
        %9161 = vmatpush1.bf16.xpose.msra.mxu0 0
        %9162 = vmatprep.subr.bf16.mxu0 0
        %9163 = vmatpush1.bf16.xpose.msra.mxu0 0
        %9164 = vmatprep.subr.bf16.mxu0 0
        %9165 = vmatpush1.bf16.xpose.msra.mxu0 0
        %9166 = vmatprep.subr.bf16.mxu0 %v4663
        %9167 = vmatpush1.bf16.xpose.msra.mxu0 %v4662
        %9168 = vmatprep.subr.bf16.mxu0 %v4407
        %9169 = vmatpush1.bf16.xpose.msra.mxu0 %v4406
        %9170 = vmatprep.subr.bf16.mxu0 0
        %9171 = vmatpush2.bf16.xpose.msra.mxu0 0
        %9172 = vmatprep.subr.bf16.mxu0 0
        %9173 = vmatpush2.bf16.xpose.msra.mxu0 0
        %9174 = vmatprep.subr.bf16.mxu0 0
        %9175 = vmatpush2.bf16.xpose.msra.mxu0 0
        %9176 = vmatprep.subr.bf16.mxu0 0
        %9177 = vmatpush2.bf16.xpose.msra.mxu0 0
        %9178 = vmatprep.subr.bf16.mxu0 0
        %9179 = vmatpush2.bf16.xpose.msra.mxu0 0
        %9180 = vmatprep.subr.bf16.mxu0 0
        %9181 = vmatpush2.bf16.xpose.msra.mxu0 0
        %9182 = vmatprep.subr.bf16.mxu0 0
        %9183 = vmatpush2.bf16.xpose.msra.mxu0 0
        %9184 = vmatprep.subr.bf16.mxu0 0
        %9185 = vmatpush2.bf16.xpose.msra.mxu0 0
        %9186 = vmatprep.mubr.bf16.mxu0 %v2070
        %9187 = vmatmul.mubr.bf16.gmra.mxu0 %v2056
        %v9188 = vpop.f32.mrf.mxu0
        %v9189 = vadd.f32 %v9149, %v9188
        %v9190 = vpop.f32.mrf.mxu0
        %v9191 = vpop.f32.mrf.mxu0
        %v9192 = vpop.f32.mrf.mxu0
        %9193 = vdwg.mxu0
        %9194 = vmatprep.subr.bf16.mxu0 0
        %9195 = vmatpush1.bf16.xpose.msra.mxu0 0
        %9196 = vmatprep.subr.bf16.mxu0 0
        %9197 = vmatpush1.bf16.xpose.msra.mxu0 0
        %9198 = vmatprep.subr.bf16.mxu0 0
        %9199 = vmatpush1.bf16.xpose.msra.mxu0 0
        %9200 = vmatprep.subr.bf16.mxu0 0
        %9201 = vmatpush1.bf16.xpose.msra.mxu0 0
        %9202 = vmatprep.subr.bf16.mxu0 0
        %9203 = vmatpush1.bf16.xpose.msra.mxu0 0
        %9204 = vmatprep.subr.bf16.mxu0 0
        %9205 = vmatpush1.bf16.xpose.msra.mxu0 0
        %9206 = vmatprep.subr.bf16.mxu0 %v4665
        %9207 = vmatpush1.bf16.xpose.msra.mxu0 %v4664
        %9208 = vmatprep.subr.bf16.mxu0 %v4409
        %9209 = vmatpush1.bf16.xpose.msra.mxu0 %v4408
        %9210 = vmatprep.subr.bf16.mxu0 0
        %9211 = vmatpush2.bf16.xpose.msra.mxu0 0
        %9212 = vmatprep.subr.bf16.mxu0 0
        %9213 = vmatpush2.bf16.xpose.msra.mxu0 0
        %9214 = vmatprep.subr.bf16.mxu0 0
        %9215 = vmatpush2.bf16.xpose.msra.mxu0 0
        %9216 = vmatprep.subr.bf16.mxu0 0
        %9217 = vmatpush2.bf16.xpose.msra.mxu0 0
        %9218 = vmatprep.subr.bf16.mxu0 0
        %9219 = vmatpush2.bf16.xpose.msra.mxu0 0
        %9220 = vmatprep.subr.bf16.mxu0 0
        %9221 = vmatpush2.bf16.xpose.msra.mxu0 0
        %9222 = vmatprep.subr.bf16.mxu0 0
        %9223 = vmatpush2.bf16.xpose.msra.mxu0 0
        %9224 = vmatprep.subr.bf16.mxu0 0
        %9225 = vmatpush2.bf16.xpose.msra.mxu0 0
        %9226 = vmatprep.mubr.bf16.mxu0 %v2074
        %9227 = vmatmul.mubr.bf16.gmra.mxu0 %v2072
        %v9228 = vpop.f32.mrf.mxu0
        %v9229 = vadd.f32 %v9189, %v9228
        %v9230 = vpop.f32.mrf.mxu0
        %v9231 = vpop.f32.mrf.mxu0
        %v9232 = vpop.f32.mrf.mxu0
        %9233 = vdwg.mxu0
        %9234 = vmatprep.subr.bf16.mxu0 0
        %9235 = vmatpush1.bf16.xpose.msra.mxu0 0
        %9236 = vmatprep.subr.bf16.mxu0 0
        %9237 = vmatpush1.bf16.xpose.msra.mxu0 0
        %9238 = vmatprep.subr.bf16.mxu0 0
        %9239 = vmatpush1.bf16.xpose.msra.mxu0 0
        %9240 = vmatprep.subr.bf16.mxu0 0
        %9241 = vmatpush1.bf16.xpose.msra.mxu0 0
        %9242 = vmatprep.subr.bf16.mxu0 0
        %9243 = vmatpush1.bf16.xpose.msra.mxu0 0
        %9244 = vmatprep.subr.bf16.mxu0 0
        %9245 = vmatpush1.bf16.xpose.msra.mxu0 0
        %9246 = vmatprep.subr.bf16.mxu0 %v4667
        %9247 = vmatpush1.bf16.xpose.msra.mxu0 %v4666
        %9248 = vmatprep.subr.bf16.mxu0 %v4411
        %9249 = vmatpush1.bf16.xpose.msra.mxu0 %v4410
        %9250 = vmatprep.subr.bf16.mxu0 0
        %9251 = vmatpush2.bf16.xpose.msra.mxu0 0
        %9252 = vmatprep.subr.bf16.mxu0 0
        %9253 = vmatpush2.bf16.xpose.msra.mxu0 0
        %9254 = vmatprep.subr.bf16.mxu0 0
        %9255 = vmatpush2.bf16.xpose.msra.mxu0 0
        %9256 = vmatprep.subr.bf16.mxu0 0
        %9257 = vmatpush2.bf16.xpose.msra.mxu0 0
        %9258 = vmatprep.subr.bf16.mxu0 0
        %9259 = vmatpush2.bf16.xpose.msra.mxu0 0
        %9260 = vmatprep.subr.bf16.mxu0 0
        %9261 = vmatpush2.bf16.xpose.msra.mxu0 0
        %9262 = vmatprep.subr.bf16.mxu0 0
        %9263 = vmatpush2.bf16.xpose.msra.mxu0 0
        %9264 = vmatprep.subr.bf16.mxu0 0
        %9265 = vmatpush2.bf16.xpose.msra.mxu0 0
        %9266 = vmatprep.mubr.bf16.mxu0 %v2112
        %9267 = vmatmul.mubr.bf16.gmra.mxu0 %v2098
        %v9268 = vpop.f32.mrf.mxu0
        %v9269 = vadd.f32 %v9229, %v9268
        %v9270 = vpop.f32.mrf.mxu0
        %v9271 = vpop.f32.mrf.mxu0
        %v9272 = vpop.f32.mrf.mxu0
        %9273 = vdwg.mxu0
        %9274 = vmatprep.subr.bf16.mxu0 0
        %9275 = vmatpush1.bf16.xpose.msra.mxu0 0
        %9276 = vmatprep.subr.bf16.mxu0 0
        %9277 = vmatpush1.bf16.xpose.msra.mxu0 0
        %9278 = vmatprep.subr.bf16.mxu0 0
        %9279 = vmatpush1.bf16.xpose.msra.mxu0 0
        %9280 = vmatprep.subr.bf16.mxu0 0
        %9281 = vmatpush1.bf16.xpose.msra.mxu0 0
        %9282 = vmatprep.subr.bf16.mxu0 0
        %9283 = vmatpush1.bf16.xpose.msra.mxu0 0
        %9284 = vmatprep.subr.bf16.mxu0 0
        %9285 = vmatpush1.bf16.xpose.msra.mxu0 0
        %9286 = vmatprep.subr.bf16.mxu0 %v4669
        %9287 = vmatpush1.bf16.xpose.msra.mxu0 %v4668
        %9288 = vmatprep.subr.bf16.mxu0 %v4413
        %9289 = vmatpush1.bf16.xpose.msra.mxu0 %v4412
        %9290 = vmatprep.subr.bf16.mxu0 0
        %9291 = vmatpush2.bf16.xpose.msra.mxu0 0
        %9292 = vmatprep.subr.bf16.mxu0 0
        %9293 = vmatpush2.bf16.xpose.msra.mxu0 0
        %9294 = vmatprep.subr.bf16.mxu0 0
        %9295 = vmatpush2.bf16.xpose.msra.mxu0 0
        %9296 = vmatprep.subr.bf16.mxu0 0
        %9297 = vmatpush2.bf16.xpose.msra.mxu0 0
        %9298 = vmatprep.subr.bf16.mxu0 0
        %9299 = vmatpush2.bf16.xpose.msra.mxu0 0
        %9300 = vmatprep.subr.bf16.mxu0 0
        %9301 = vmatpush2.bf16.xpose.msra.mxu0 0
        %9302 = vmatprep.subr.bf16.mxu0 0
        %9303 = vmatpush2.bf16.xpose.msra.mxu0 0
        %9304 = vmatprep.subr.bf16.mxu0 0
        %9305 = vmatpush2.bf16.xpose.msra.mxu0 0
        %9306 = vmatprep.mubr.bf16.mxu0 %v2122
        %9307 = vmatmul.mubr.bf16.gmra.mxu0 %v2120
        %v9308 = vpop.f32.mrf.mxu0
        %v9309 = vadd.f32 %v9269, %v9308
        %v9310 = vpop.f32.mrf.mxu0
        %v9311 = vpop.f32.mrf.mxu0
        %v9312 = vpop.f32.mrf.mxu0
        %9313 = vdwg.mxu0
        %9314 = vmatprep.subr.bf16.mxu0 0
        %9315 = vmatpush1.bf16.xpose.msra.mxu0 0
        %9316 = vmatprep.subr.bf16.mxu0 0
        %9317 = vmatpush1.bf16.xpose.msra.mxu0 0
        %9318 = vmatprep.subr.bf16.mxu0 0
        %9319 = vmatpush1.bf16.xpose.msra.mxu0 0
        %9320 = vmatprep.subr.bf16.mxu0 0
        %9321 = vmatpush1.bf16.xpose.msra.mxu0 0
        %9322 = vmatprep.subr.bf16.mxu0 0
        %9323 = vmatpush1.bf16.xpose.msra.mxu0 0
        %9324 = vmatprep.subr.bf16.mxu0 0
        %9325 = vmatpush1.bf16.xpose.msra.mxu0 0
        %9326 = vmatprep.subr.bf16.mxu0 %v4671
        %9327 = vmatpush1.bf16.xpose.msra.mxu0 %v4670
        %9328 = vmatprep.subr.bf16.mxu0 %v4415
        %9329 = vmatpush1.bf16.xpose.msra.mxu0 %v4414
        %9330 = vmatprep.subr.bf16.mxu0 0
        %9331 = vmatpush2.bf16.xpose.msra.mxu0 0
        %9332 = vmatprep.subr.bf16.mxu0 0
        %9333 = vmatpush2.bf16.xpose.msra.mxu0 0
        %9334 = vmatprep.subr.bf16.mxu0 0
        %9335 = vmatpush2.bf16.xpose.msra.mxu0 0
        %9336 = vmatprep.subr.bf16.mxu0 0
        %9337 = vmatpush2.bf16.xpose.msra.mxu0 0
        %9338 = vmatprep.subr.bf16.mxu0 0
        %9339 = vmatpush2.bf16.xpose.msra.mxu0 0
        %9340 = vmatprep.subr.bf16.mxu0 0
        %9341 = vmatpush2.bf16.xpose.msra.mxu0 0
        %9342 = vmatprep.subr.bf16.mxu0 0
        %9343 = vmatpush2.bf16.xpose.msra.mxu0 0
        %9344 = vmatprep.subr.bf16.mxu0 0
        %9345 = vmatpush2.bf16.xpose.msra.mxu0 0
        %9346 = vmatprep.mubr.bf16.mxu0 %v2119
        %9347 = vmatmul.mubr.bf16.gmra.mxu0 %v2105
        %v9348 = vpop.f32.mrf.mxu0
        %v9349 = vadd.f32 %v9309, %v9348
        %v9350 = vpop.f32.mrf.mxu0
        %v9351 = vpop.f32.mrf.mxu0
        %v9352 = vpop.f32.mrf.mxu0
        %9353 = vdwg.mxu0
        %9354 = vmatprep.subr.bf16.mxu0 0
        %9355 = vmatpush1.bf16.xpose.msra.mxu0 0
        %9356 = vmatprep.subr.bf16.mxu0 0
        %9357 = vmatpush1.bf16.xpose.msra.mxu0 0
        %9358 = vmatprep.subr.bf16.mxu0 0
        %9359 = vmatpush1.bf16.xpose.msra.mxu0 0
        %9360 = vmatprep.subr.bf16.mxu0 0
        %9361 = vmatpush1.bf16.xpose.msra.mxu0 0
        %9362 = vmatprep.subr.bf16.mxu0 0
        %9363 = vmatpush1.bf16.xpose.msra.mxu0 0
        %9364 = vmatprep.subr.bf16.mxu0 0
        %9365 = vmatpush1.bf16.xpose.msra.mxu0 0
        %9366 = vmatprep.subr.bf16.mxu0 %v4673
        %9367 = vmatpush1.bf16.xpose.msra.mxu0 %v4672
        %9368 = vmatprep.subr.bf16.mxu0 %v4417
        %9369 = vmatpush1.bf16.xpose.msra.mxu0 %v4416
        %9370 = vmatprep.subr.bf16.mxu0 0
        %9371 = vmatpush2.bf16.xpose.msra.mxu0 0
        %9372 = vmatprep.subr.bf16.mxu0 0
        %9373 = vmatpush2.bf16.xpose.msra.mxu0 0
        %9374 = vmatprep.subr.bf16.mxu0 0
        %9375 = vmatpush2.bf16.xpose.msra.mxu0 0
        %9376 = vmatprep.subr.bf16.mxu0 0
        %9377 = vmatpush2.bf16.xpose.msra.mxu0 0
        %9378 = vmatprep.subr.bf16.mxu0 0
        %9379 = vmatpush2.bf16.xpose.msra.mxu0 0
        %9380 = vmatprep.subr.bf16.mxu0 0
        %9381 = vmatpush2.bf16.xpose.msra.mxu0 0
        %9382 = vmatprep.subr.bf16.mxu0 0
        %9383 = vmatpush2.bf16.xpose.msra.mxu0 0
        %9384 = vmatprep.subr.bf16.mxu0 0
        %9385 = vmatpush2.bf16.xpose.msra.mxu0 0
        %9386 = vmatprep.mubr.bf16.mxu0 %v2123
        %9387 = vmatmul.mubr.bf16.gmra.mxu0 %v2121
        %v9388 = vpop.f32.mrf.mxu0
        %v9389 = vadd.f32 %v9349, %v9388
        %v9390 = vpop.f32.mrf.mxu0
        %v9391 = vpop.f32.mrf.mxu0
        %v9392 = vpop.f32.mrf.mxu0
        %9393 = vdwg.mxu0
        %9394 = vmatprep.subr.bf16.mxu0 0
        %9395 = vmatpush1.bf16.xpose.msra.mxu0 0
        %9396 = vmatprep.subr.bf16.mxu0 0
        %9397 = vmatpush1.bf16.xpose.msra.mxu0 0
        %9398 = vmatprep.subr.bf16.mxu0 0
        %9399 = vmatpush1.bf16.xpose.msra.mxu0 0
        %9400 = vmatprep.subr.bf16.mxu0 0
        %9401 = vmatpush1.bf16.xpose.msra.mxu0 0
        %9402 = vmatprep.subr.bf16.mxu0 0
        %9403 = vmatpush1.bf16.xpose.msra.mxu0 0
        %9404 = vmatprep.subr.bf16.mxu0 0
        %9405 = vmatpush1.bf16.xpose.msra.mxu0 0
        %9406 = vmatprep.subr.bf16.mxu0 %v4675
        %9407 = vmatpush1.bf16.xpose.msra.mxu0 %v4674
        %9408 = vmatprep.subr.bf16.mxu0 %v4419
        %9409 = vmatpush1.bf16.xpose.msra.mxu0 %v4418
        %9410 = vmatprep.subr.bf16.mxu0 0
        %9411 = vmatpush2.bf16.xpose.msra.mxu0 0
        %9412 = vmatprep.subr.bf16.mxu0 0
        %9413 = vmatpush2.bf16.xpose.msra.mxu0 0
        %9414 = vmatprep.subr.bf16.mxu0 0
        %9415 = vmatpush2.bf16.xpose.msra.mxu0 0
        %9416 = vmatprep.subr.bf16.mxu0 0
        %9417 = vmatpush2.bf16.xpose.msra.mxu0 0
        %9418 = vmatprep.subr.bf16.mxu0 0
        %9419 = vmatpush2.bf16.xpose.msra.mxu0 0
        %9420 = vmatprep.subr.bf16.mxu0 0
        %9421 = vmatpush2.bf16.xpose.msra.mxu0 0
        %9422 = vmatprep.subr.bf16.mxu0 0
        %9423 = vmatpush2.bf16.xpose.msra.mxu0 0
        %9424 = vmatprep.subr.bf16.mxu0 0
        %9425 = vmatpush2.bf16.xpose.msra.mxu0 0
        %9426 = vmatprep.mubr.bf16.mxu0 %v2161
        %9427 = vmatmul.mubr.bf16.gmra.mxu0 %v2147
        %v9428 = vpop.f32.mrf.mxu0
        %v9429 = vadd.f32 %v9389, %v9428
        %v9430 = vpop.f32.mrf.mxu0
        %v9431 = vpop.f32.mrf.mxu0
        %v9432 = vpop.f32.mrf.mxu0
        %9433 = vdwg.mxu0
        %9434 = vmatprep.subr.bf16.mxu0 0
        %9435 = vmatpush1.bf16.xpose.msra.mxu0 0
        %9436 = vmatprep.subr.bf16.mxu0 0
        %9437 = vmatpush1.bf16.xpose.msra.mxu0 0
        %9438 = vmatprep.subr.bf16.mxu0 0
        %9439 = vmatpush1.bf16.xpose.msra.mxu0 0
        %9440 = vmatprep.subr.bf16.mxu0 0
        %9441 = vmatpush1.bf16.xpose.msra.mxu0 0
        %9442 = vmatprep.subr.bf16.mxu0 0
        %9443 = vmatpush1.bf16.xpose.msra.mxu0 0
        %9444 = vmatprep.subr.bf16.mxu0 0
        %9445 = vmatpush1.bf16.xpose.msra.mxu0 0
        %9446 = vmatprep.subr.bf16.mxu0 %v4677
        %9447 = vmatpush1.bf16.xpose.msra.mxu0 %v4676
        %9448 = vmatprep.subr.bf16.mxu0 %v4421
        %9449 = vmatpush1.bf16.xpose.msra.mxu0 %v4420
        %9450 = vmatprep.subr.bf16.mxu0 0
        %9451 = vmatpush2.bf16.xpose.msra.mxu0 0
        %9452 = vmatprep.subr.bf16.mxu0 0
        %9453 = vmatpush2.bf16.xpose.msra.mxu0 0
        %9454 = vmatprep.subr.bf16.mxu0 0
        %9455 = vmatpush2.bf16.xpose.msra.mxu0 0
        %9456 = vmatprep.subr.bf16.mxu0 0
        %9457 = vmatpush2.bf16.xpose.msra.mxu0 0
        %9458 = vmatprep.subr.bf16.mxu0 0
        %9459 = vmatpush2.bf16.xpose.msra.mxu0 0
        %9460 = vmatprep.subr.bf16.mxu0 0
        %9461 = vmatpush2.bf16.xpose.msra.mxu0 0
        %9462 = vmatprep.subr.bf16.mxu0 0
        %9463 = vmatpush2.bf16.xpose.msra.mxu0 0
        %9464 = vmatprep.subr.bf16.mxu0 0
        %9465 = vmatpush2.bf16.xpose.msra.mxu0 0
        %9466 = vmatprep.mubr.bf16.mxu0 %v2171
        %9467 = vmatmul.mubr.bf16.gmra.mxu0 %v2169
        %v9468 = vpop.f32.mrf.mxu0
        %v9469 = vadd.f32 %v9429, %v9468
        %v9470 = vpop.f32.mrf.mxu0
        %v9471 = vpop.f32.mrf.mxu0
        %v9472 = vpop.f32.mrf.mxu0
        %9473 = vdwg.mxu0
        %9474 = vmatprep.subr.bf16.mxu0 0
        %9475 = vmatpush1.bf16.xpose.msra.mxu0 0
        %9476 = vmatprep.subr.bf16.mxu0 0
        %9477 = vmatpush1.bf16.xpose.msra.mxu0 0
        %9478 = vmatprep.subr.bf16.mxu0 0
        %9479 = vmatpush1.bf16.xpose.msra.mxu0 0
        %9480 = vmatprep.subr.bf16.mxu0 0
        %9481 = vmatpush1.bf16.xpose.msra.mxu0 0
        %9482 = vmatprep.subr.bf16.mxu0 0
        %9483 = vmatpush1.bf16.xpose.msra.mxu0 0
        %9484 = vmatprep.subr.bf16.mxu0 0
        %9485 = vmatpush1.bf16.xpose.msra.mxu0 0
        %9486 = vmatprep.subr.bf16.mxu0 %v4679
        %9487 = vmatpush1.bf16.xpose.msra.mxu0 %v4678
        %9488 = vmatprep.subr.bf16.mxu0 %v4423
        %9489 = vmatpush1.bf16.xpose.msra.mxu0 %v4422
        %9490 = vmatprep.subr.bf16.mxu0 0
        %9491 = vmatpush2.bf16.xpose.msra.mxu0 0
        %9492 = vmatprep.subr.bf16.mxu0 0
        %9493 = vmatpush2.bf16.xpose.msra.mxu0 0
        %9494 = vmatprep.subr.bf16.mxu0 0
        %9495 = vmatpush2.bf16.xpose.msra.mxu0 0
        %9496 = vmatprep.subr.bf16.mxu0 0
        %9497 = vmatpush2.bf16.xpose.msra.mxu0 0
        %9498 = vmatprep.subr.bf16.mxu0 0
        %9499 = vmatpush2.bf16.xpose.msra.mxu0 0
        %9500 = vmatprep.subr.bf16.mxu0 0
        %9501 = vmatpush2.bf16.xpose.msra.mxu0 0
        %9502 = vmatprep.subr.bf16.mxu0 0
        %9503 = vmatpush2.bf16.xpose.msra.mxu0 0
        %9504 = vmatprep.subr.bf16.mxu0 0
        %9505 = vmatpush2.bf16.xpose.msra.mxu0 0
        %9506 = vmatprep.mubr.bf16.mxu0 %v2168
        %9507 = vmatmul.mubr.bf16.gmra.mxu0 %v2154
        %v9508 = vpop.f32.mrf.mxu0
        %v9509 = vadd.f32 %v9469, %v9508
        %v9510 = vpop.f32.mrf.mxu0
        %v9511 = vpop.f32.mrf.mxu0
        %v9512 = vpop.f32.mrf.mxu0
        %9513 = vdwg.mxu0
        %9514 = vmatprep.subr.bf16.mxu0 0
        %9515 = vmatpush1.bf16.xpose.msra.mxu0 0
        %9516 = vmatprep.subr.bf16.mxu0 0
        %9517 = vmatpush1.bf16.xpose.msra.mxu0 0
        %9518 = vmatprep.subr.bf16.mxu0 0
        %9519 = vmatpush1.bf16.xpose.msra.mxu0 0
        %9520 = vmatprep.subr.bf16.mxu0 0
        %9521 = vmatpush1.bf16.xpose.msra.mxu0 0
        %9522 = vmatprep.subr.bf16.mxu0 0
        %9523 = vmatpush1.bf16.xpose.msra.mxu0 0
        %9524 = vmatprep.subr.bf16.mxu0 0
        %9525 = vmatpush1.bf16.xpose.msra.mxu0 0
        %9526 = vmatprep.subr.bf16.mxu0 %v4681
        %9527 = vmatpush1.bf16.xpose.msra.mxu0 %v4680
        %9528 = vmatprep.subr.bf16.mxu0 %v4425
        %9529 = vmatpush1.bf16.xpose.msra.mxu0 %v4424
        %9530 = vmatprep.subr.bf16.mxu0 0
        %9531 = vmatpush2.bf16.xpose.msra.mxu0 0
        %9532 = vmatprep.subr.bf16.mxu0 0
        %9533 = vmatpush2.bf16.xpose.msra.mxu0 0
        %9534 = vmatprep.subr.bf16.mxu0 0
        %9535 = vmatpush2.bf16.xpose.msra.mxu0 0
        %9536 = vmatprep.subr.bf16.mxu0 0
        %9537 = vmatpush2.bf16.xpose.msra.mxu0 0
        %9538 = vmatprep.subr.bf16.mxu0 0
        %9539 = vmatpush2.bf16.xpose.msra.mxu0 0
        %9540 = vmatprep.subr.bf16.mxu0 0
        %9541 = vmatpush2.bf16.xpose.msra.mxu0 0
        %9542 = vmatprep.subr.bf16.mxu0 0
        %9543 = vmatpush2.bf16.xpose.msra.mxu0 0
        %9544 = vmatprep.subr.bf16.mxu0 0
        %9545 = vmatpush2.bf16.xpose.msra.mxu0 0
        %9546 = vmatprep.mubr.bf16.mxu0 %v2172
        %9547 = vmatmul.mubr.bf16.gmra.mxu0 %v2170
        %v9548 = vpop.f32.mrf.mxu0
        %v9549 = vadd.f32 %v9509, %v9548
        %v9550 = vpop.f32.mrf.mxu0
        %v9551 = vpop.f32.mrf.mxu0
        %v9552 = vpop.f32.mrf.mxu0
        %9553 = vdwg.mxu0
        %9554 = vmatprep.subr.bf16.mxu0 0
        %9555 = vmatpush1.bf16.xpose.msra.mxu0 0
        %9556 = vmatprep.subr.bf16.mxu0 0
        %9557 = vmatpush1.bf16.xpose.msra.mxu0 0
        %9558 = vmatprep.subr.bf16.mxu0 0
        %9559 = vmatpush1.bf16.xpose.msra.mxu0 0
        %9560 = vmatprep.subr.bf16.mxu0 0
        %9561 = vmatpush1.bf16.xpose.msra.mxu0 0
        %9562 = vmatprep.subr.bf16.mxu0 0
        %9563 = vmatpush1.bf16.xpose.msra.mxu0 0
        %9564 = vmatprep.subr.bf16.mxu0 0
        %9565 = vmatpush1.bf16.xpose.msra.mxu0 0
        %9566 = vmatprep.subr.bf16.mxu0 %v4683
        %9567 = vmatpush1.bf16.xpose.msra.mxu0 %v4682
        %9568 = vmatprep.subr.bf16.mxu0 %v4427
        %9569 = vmatpush1.bf16.xpose.msra.mxu0 %v4426
        %9570 = vmatprep.subr.bf16.mxu0 0
        %9571 = vmatpush2.bf16.xpose.msra.mxu0 0
        %9572 = vmatprep.subr.bf16.mxu0 0
        %9573 = vmatpush2.bf16.xpose.msra.mxu0 0
        %9574 = vmatprep.subr.bf16.mxu0 0
        %9575 = vmatpush2.bf16.xpose.msra.mxu0 0
        %9576 = vmatprep.subr.bf16.mxu0 0
        %9577 = vmatpush2.bf16.xpose.msra.mxu0 0
        %9578 = vmatprep.subr.bf16.mxu0 0
        %9579 = vmatpush2.bf16.xpose.msra.mxu0 0
        %9580 = vmatprep.subr.bf16.mxu0 0
        %9581 = vmatpush2.bf16.xpose.msra.mxu0 0
        %9582 = vmatprep.subr.bf16.mxu0 0
        %9583 = vmatpush2.bf16.xpose.msra.mxu0 0
        %9584 = vmatprep.subr.bf16.mxu0 0
        %9585 = vmatpush2.bf16.xpose.msra.mxu0 0
        %9586 = vmatprep.mubr.bf16.mxu0 %v2210
        %9587 = vmatmul.mubr.bf16.gmra.mxu0 %v2196
        %v9588 = vpop.f32.mrf.mxu0
        %v9589 = vadd.f32 %v9549, %v9588
        %v9590 = vpop.f32.mrf.mxu0
        %v9591 = vpop.f32.mrf.mxu0
        %v9592 = vpop.f32.mrf.mxu0
        %9593 = vdwg.mxu0
        %9594 = vmatprep.subr.bf16.mxu0 0
        %9595 = vmatpush1.bf16.xpose.msra.mxu0 0
        %9596 = vmatprep.subr.bf16.mxu0 0
        %9597 = vmatpush1.bf16.xpose.msra.mxu0 0
        %9598 = vmatprep.subr.bf16.mxu0 0
        %9599 = vmatpush1.bf16.xpose.msra.mxu0 0
        %9600 = vmatprep.subr.bf16.mxu0 0
        %9601 = vmatpush1.bf16.xpose.msra.mxu0 0
        %9602 = vmatprep.subr.bf16.mxu0 0
        %9603 = vmatpush1.bf16.xpose.msra.mxu0 0
        %9604 = vmatprep.subr.bf16.mxu0 0
        %9605 = vmatpush1.bf16.xpose.msra.mxu0 0
        %9606 = vmatprep.subr.bf16.mxu0 %v4685
        %9607 = vmatpush1.bf16.xpose.msra.mxu0 %v4684
        %9608 = vmatprep.subr.bf16.mxu0 %v4429
        %9609 = vmatpush1.bf16.xpose.msra.mxu0 %v4428
        %9610 = vmatprep.subr.bf16.mxu0 0
        %9611 = vmatpush2.bf16.xpose.msra.mxu0 0
        %9612 = vmatprep.subr.bf16.mxu0 0
        %9613 = vmatpush2.bf16.xpose.msra.mxu0 0
        %9614 = vmatprep.subr.bf16.mxu0 0
        %9615 = vmatpush2.bf16.xpose.msra.mxu0 0
        %9616 = vmatprep.subr.bf16.mxu0 0
        %9617 = vmatpush2.bf16.xpose.msra.mxu0 0
        %9618 = vmatprep.subr.bf16.mxu0 0
        %9619 = vmatpush2.bf16.xpose.msra.mxu0 0
        %9620 = vmatprep.subr.bf16.mxu0 0
        %9621 = vmatpush2.bf16.xpose.msra.mxu0 0
        %9622 = vmatprep.subr.bf16.mxu0 0
        %9623 = vmatpush2.bf16.xpose.msra.mxu0 0
        %9624 = vmatprep.subr.bf16.mxu0 0
        %9625 = vmatpush2.bf16.xpose.msra.mxu0 0
        %9626 = vmatprep.mubr.bf16.mxu0 %v2220
        %9627 = vmatmul.mubr.bf16.gmra.mxu0 %v2218
        %v9628 = vpop.f32.mrf.mxu0
        %v9629 = vadd.f32 %v9589, %v9628
        %v9630 = vpop.f32.mrf.mxu0
        %v9631 = vpop.f32.mrf.mxu0
        %v9632 = vpop.f32.mrf.mxu0
        %9633 = vdwg.mxu0
        %9634 = vmatprep.subr.bf16.mxu0 0
        %9635 = vmatpush1.bf16.xpose.msra.mxu0 0
        %9636 = vmatprep.subr.bf16.mxu0 0
        %9637 = vmatpush1.bf16.xpose.msra.mxu0 0
        %9638 = vmatprep.subr.bf16.mxu0 0
        %9639 = vmatpush1.bf16.xpose.msra.mxu0 0
        %9640 = vmatprep.subr.bf16.mxu0 0
        %9641 = vmatpush1.bf16.xpose.msra.mxu0 0
        %9642 = vmatprep.subr.bf16.mxu0 0
        %9643 = vmatpush1.bf16.xpose.msra.mxu0 0
        %9644 = vmatprep.subr.bf16.mxu0 0
        %9645 = vmatpush1.bf16.xpose.msra.mxu0 0
        %9646 = vmatprep.subr.bf16.mxu0 %v4687
        %9647 = vmatpush1.bf16.xpose.msra.mxu0 %v4686
        %9648 = vmatprep.subr.bf16.mxu0 %v4431
        %9649 = vmatpush1.bf16.xpose.msra.mxu0 %v4430
        %9650 = vmatprep.subr.bf16.mxu0 0
        %9651 = vmatpush2.bf16.xpose.msra.mxu0 0
        %9652 = vmatprep.subr.bf16.mxu0 0
        %9653 = vmatpush2.bf16.xpose.msra.mxu0 0
        %9654 = vmatprep.subr.bf16.mxu0 0
        %9655 = vmatpush2.bf16.xpose.msra.mxu0 0
        %9656 = vmatprep.subr.bf16.mxu0 0
        %9657 = vmatpush2.bf16.xpose.msra.mxu0 0
        %9658 = vmatprep.subr.bf16.mxu0 0
        %9659 = vmatpush2.bf16.xpose.msra.mxu0 0
        %9660 = vmatprep.subr.bf16.mxu0 0
        %9661 = vmatpush2.bf16.xpose.msra.mxu0 0
        %9662 = vmatprep.subr.bf16.mxu0 0
        %9663 = vmatpush2.bf16.xpose.msra.mxu0 0
        %9664 = vmatprep.subr.bf16.mxu0 0
        %9665 = vmatpush2.bf16.xpose.msra.mxu0 0
        %9666 = vmatprep.mubr.bf16.mxu0 %v2217
        %9667 = vmatmul.mubr.bf16.gmra.mxu0 %v2203
        %v9668 = vpop.f32.mrf.mxu0
        %v9669 = vadd.f32 %v9629, %v9668
        %v9670 = vpop.f32.mrf.mxu0
        %v9671 = vpop.f32.mrf.mxu0
        %v9672 = vpop.f32.mrf.mxu0
        %9673 = vdwg.mxu0
        %9674 = vmatprep.subr.bf16.mxu0 0
        %9675 = vmatpush1.bf16.xpose.msra.mxu0 0
        %9676 = vmatprep.subr.bf16.mxu0 0
        %9677 = vmatpush1.bf16.xpose.msra.mxu0 0
        %9678 = vmatprep.subr.bf16.mxu0 0
        %9679 = vmatpush1.bf16.xpose.msra.mxu0 0
        %9680 = vmatprep.subr.bf16.mxu0 0
        %9681 = vmatpush1.bf16.xpose.msra.mxu0 0
        %9682 = vmatprep.subr.bf16.mxu0 0
        %9683 = vmatpush1.bf16.xpose.msra.mxu0 0
        %9684 = vmatprep.subr.bf16.mxu0 0
        %9685 = vmatpush1.bf16.xpose.msra.mxu0 0
        %9686 = vmatprep.subr.bf16.mxu0 %v4689
        %9687 = vmatpush1.bf16.xpose.msra.mxu0 %v4688
        %9688 = vmatprep.subr.bf16.mxu0 %v4433
        %9689 = vmatpush1.bf16.xpose.msra.mxu0 %v4432
        %9690 = vmatprep.subr.bf16.mxu0 0
        %9691 = vmatpush2.bf16.xpose.msra.mxu0 0
        %9692 = vmatprep.subr.bf16.mxu0 0
        %9693 = vmatpush2.bf16.xpose.msra.mxu0 0
        %9694 = vmatprep.subr.bf16.mxu0 0
        %9695 = vmatpush2.bf16.xpose.msra.mxu0 0
        %9696 = vmatprep.subr.bf16.mxu0 0
        %9697 = vmatpush2.bf16.xpose.msra.mxu0 0
        %9698 = vmatprep.subr.bf16.mxu0 0
        %9699 = vmatpush2.bf16.xpose.msra.mxu0 0
        %9700 = vmatprep.subr.bf16.mxu0 0
        %9701 = vmatpush2.bf16.xpose.msra.mxu0 0
        %9702 = vmatprep.subr.bf16.mxu0 0
        %9703 = vmatpush2.bf16.xpose.msra.mxu0 0
        %9704 = vmatprep.subr.bf16.mxu0 0
        %9705 = vmatpush2.bf16.xpose.msra.mxu0 0
        %9706 = vmatprep.mubr.bf16.mxu0 %v2221
        %9707 = vmatmul.mubr.bf16.gmra.mxu0 %v2219
        %v9708 = vpop.f32.mrf.mxu0
        %v9709 = vadd.f32 %v9669, %v9708
        %v9710 = vpop.f32.mrf.mxu0
        %v9711 = vpop.f32.mrf.mxu0
        %v9712 = vpop.f32.mrf.mxu0
        %9713 = vdwg.mxu0
        %9714 = vmatprep.subr.bf16.mxu0 0
        %9715 = vmatpush1.bf16.xpose.msra.mxu0 0
        %9716 = vmatprep.subr.bf16.mxu0 0
        %9717 = vmatpush1.bf16.xpose.msra.mxu0 0
        %9718 = vmatprep.subr.bf16.mxu0 0
        %9719 = vmatpush1.bf16.xpose.msra.mxu0 0
        %9720 = vmatprep.subr.bf16.mxu0 0
        %9721 = vmatpush1.bf16.xpose.msra.mxu0 0
        %9722 = vmatprep.subr.bf16.mxu0 0
        %9723 = vmatpush1.bf16.xpose.msra.mxu0 0
        %9724 = vmatprep.subr.bf16.mxu0 0
        %9725 = vmatpush1.bf16.xpose.msra.mxu0 0
        %9726 = vmatprep.subr.bf16.mxu0 %v4691
        %9727 = vmatpush1.bf16.xpose.msra.mxu0 %v4690
        %9728 = vmatprep.subr.bf16.mxu0 %v4435
        %9729 = vmatpush1.bf16.xpose.msra.mxu0 %v4434
        %9730 = vmatprep.subr.bf16.mxu0 0
        %9731 = vmatpush2.bf16.xpose.msra.mxu0 0
        %9732 = vmatprep.subr.bf16.mxu0 0
        %9733 = vmatpush2.bf16.xpose.msra.mxu0 0
        %9734 = vmatprep.subr.bf16.mxu0 0
        %9735 = vmatpush2.bf16.xpose.msra.mxu0 0
        %9736 = vmatprep.subr.bf16.mxu0 0
        %9737 = vmatpush2.bf16.xpose.msra.mxu0 0
        %9738 = vmatprep.subr.bf16.mxu0 0
        %9739 = vmatpush2.bf16.xpose.msra.mxu0 0
        %9740 = vmatprep.subr.bf16.mxu0 0
        %9741 = vmatpush2.bf16.xpose.msra.mxu0 0
        %9742 = vmatprep.subr.bf16.mxu0 0
        %9743 = vmatpush2.bf16.xpose.msra.mxu0 0
        %9744 = vmatprep.subr.bf16.mxu0 0
        %9745 = vmatpush2.bf16.xpose.msra.mxu0 0
        %9746 = vmatprep.mubr.bf16.mxu0 %v2259
        %9747 = vmatmul.mubr.bf16.gmra.mxu0 %v2245
        %v9748 = vpop.f32.mrf.mxu0
        %v9749 = vadd.f32 %v9709, %v9748
        %v9750 = vpop.f32.mrf.mxu0
        %v9751 = vpop.f32.mrf.mxu0
        %v9752 = vpop.f32.mrf.mxu0
        %9753 = vdwg.mxu0
        %9754 = vmatprep.subr.bf16.mxu0 0
        %9755 = vmatpush1.bf16.xpose.msra.mxu0 0
        %9756 = vmatprep.subr.bf16.mxu0 0
        %9757 = vmatpush1.bf16.xpose.msra.mxu0 0
        %9758 = vmatprep.subr.bf16.mxu0 0
        %9759 = vmatpush1.bf16.xpose.msra.mxu0 0
        %9760 = vmatprep.subr.bf16.mxu0 0
        %9761 = vmatpush1.bf16.xpose.msra.mxu0 0
        %9762 = vmatprep.subr.bf16.mxu0 0
        %9763 = vmatpush1.bf16.xpose.msra.mxu0 0
        %9764 = vmatprep.subr.bf16.mxu0 0
        %9765 = vmatpush1.bf16.xpose.msra.mxu0 0
        %9766 = vmatprep.subr.bf16.mxu0 %v4693
        %9767 = vmatpush1.bf16.xpose.msra.mxu0 %v4692
        %9768 = vmatprep.subr.bf16.mxu0 %v4437
        %9769 = vmatpush1.bf16.xpose.msra.mxu0 %v4436
        %9770 = vmatprep.subr.bf16.mxu0 0
        %9771 = vmatpush2.bf16.xpose.msra.mxu0 0
        %9772 = vmatprep.subr.bf16.mxu0 0
        %9773 = vmatpush2.bf16.xpose.msra.mxu0 0
        %9774 = vmatprep.subr.bf16.mxu0 0
        %9775 = vmatpush2.bf16.xpose.msra.mxu0 0
        %9776 = vmatprep.subr.bf16.mxu0 0
        %9777 = vmatpush2.bf16.xpose.msra.mxu0 0
        %9778 = vmatprep.subr.bf16.mxu0 0
        %9779 = vmatpush2.bf16.xpose.msra.mxu0 0
        %9780 = vmatprep.subr.bf16.mxu0 0
        %9781 = vmatpush2.bf16.xpose.msra.mxu0 0
        %9782 = vmatprep.subr.bf16.mxu0 0
        %9783 = vmatpush2.bf16.xpose.msra.mxu0 0
        %9784 = vmatprep.subr.bf16.mxu0 0
        %9785 = vmatpush2.bf16.xpose.msra.mxu0 0
        %9786 = vmatprep.mubr.bf16.mxu0 %v2269
        %9787 = vmatmul.mubr.bf16.gmra.mxu0 %v2267
        %v9788 = vpop.f32.mrf.mxu0
        %v9789 = vadd.f32 %v9749, %v9788
        %v9790 = vpop.f32.mrf.mxu0
        %v9791 = vpop.f32.mrf.mxu0
        %v9792 = vpop.f32.mrf.mxu0
        %9793 = vdwg.mxu0
        %9794 = vmatprep.subr.bf16.mxu0 0
        %9795 = vmatpush1.bf16.xpose.msra.mxu0 0
        %9796 = vmatprep.subr.bf16.mxu0 0
        %9797 = vmatpush1.bf16.xpose.msra.mxu0 0
        %9798 = vmatprep.subr.bf16.mxu0 0
        %9799 = vmatpush1.bf16.xpose.msra.mxu0 0
        %9800 = vmatprep.subr.bf16.mxu0 0
        %9801 = vmatpush1.bf16.xpose.msra.mxu0 0
        %9802 = vmatprep.subr.bf16.mxu0 0
        %9803 = vmatpush1.bf16.xpose.msra.mxu0 0
        %9804 = vmatprep.subr.bf16.mxu0 0
        %9805 = vmatpush1.bf16.xpose.msra.mxu0 0
        %9806 = vmatprep.subr.bf16.mxu0 %v4695
        %9807 = vmatpush1.bf16.xpose.msra.mxu0 %v4694
        %9808 = vmatprep.subr.bf16.mxu0 %v4439
        %9809 = vmatpush1.bf16.xpose.msra.mxu0 %v4438
        %9810 = vmatprep.subr.bf16.mxu0 0
        %9811 = vmatpush2.bf16.xpose.msra.mxu0 0
        %9812 = vmatprep.subr.bf16.mxu0 0
        %9813 = vmatpush2.bf16.xpose.msra.mxu0 0
        %9814 = vmatprep.subr.bf16.mxu0 0
        %9815 = vmatpush2.bf16.xpose.msra.mxu0 0
        %9816 = vmatprep.subr.bf16.mxu0 0
        %9817 = vmatpush2.bf16.xpose.msra.mxu0 0
        %9818 = vmatprep.subr.bf16.mxu0 0
        %9819 = vmatpush2.bf16.xpose.msra.mxu0 0
        %9820 = vmatprep.subr.bf16.mxu0 0
        %9821 = vmatpush2.bf16.xpose.msra.mxu0 0
        %9822 = vmatprep.subr.bf16.mxu0 0
        %9823 = vmatpush2.bf16.xpose.msra.mxu0 0
        %9824 = vmatprep.subr.bf16.mxu0 0
        %9825 = vmatpush2.bf16.xpose.msra.mxu0 0
        %9826 = vmatprep.mubr.bf16.mxu0 %v2266
        %9827 = vmatmul.mubr.bf16.gmra.mxu0 %v2252
        %v9828 = vpop.f32.mrf.mxu0
        %v9829 = vadd.f32 %v9789, %v9828
        %v9830 = vpop.f32.mrf.mxu0
        %v9831 = vpop.f32.mrf.mxu0
        %v9832 = vpop.f32.mrf.mxu0
        %9833 = vdwg.mxu0
        %9834 = vmatprep.subr.bf16.mxu0 0
        %9835 = vmatpush1.bf16.xpose.msra.mxu0 0
        %9836 = vmatprep.subr.bf16.mxu0 0
        %9837 = vmatpush1.bf16.xpose.msra.mxu0 0
        %9838 = vmatprep.subr.bf16.mxu0 0
        %9839 = vmatpush1.bf16.xpose.msra.mxu0 0
        %9840 = vmatprep.subr.bf16.mxu0 0
        %9841 = vmatpush1.bf16.xpose.msra.mxu0 0
        %9842 = vmatprep.subr.bf16.mxu0 0
        %9843 = vmatpush1.bf16.xpose.msra.mxu0 0
        %9844 = vmatprep.subr.bf16.mxu0 0
        %9845 = vmatpush1.bf16.xpose.msra.mxu0 0
        %9846 = vmatprep.subr.bf16.mxu0 %v4697
        %9847 = vmatpush1.bf16.xpose.msra.mxu0 %v4696
        %9848 = vmatprep.subr.bf16.mxu0 %v4441
        %9849 = vmatpush1.bf16.xpose.msra.mxu0 %v4440
        %9850 = vmatprep.subr.bf16.mxu0 0
        %9851 = vmatpush2.bf16.xpose.msra.mxu0 0
        %9852 = vmatprep.subr.bf16.mxu0 0
        %9853 = vmatpush2.bf16.xpose.msra.mxu0 0
        %9854 = vmatprep.subr.bf16.mxu0 0
        %9855 = vmatpush2.bf16.xpose.msra.mxu0 0
        %9856 = vmatprep.subr.bf16.mxu0 0
        %9857 = vmatpush2.bf16.xpose.msra.mxu0 0
        %9858 = vmatprep.subr.bf16.mxu0 0
        %9859 = vmatpush2.bf16.xpose.msra.mxu0 0
        %9860 = vmatprep.subr.bf16.mxu0 0
        %9861 = vmatpush2.bf16.xpose.msra.mxu0 0
        %9862 = vmatprep.subr.bf16.mxu0 0
        %9863 = vmatpush2.bf16.xpose.msra.mxu0 0
        %9864 = vmatprep.subr.bf16.mxu0 0
        %9865 = vmatpush2.bf16.xpose.msra.mxu0 0
        %9866 = vmatprep.mubr.bf16.mxu0 %v2270
        %9867 = vmatmul.mubr.bf16.gmra.mxu0 %v2268
        %v9868 = vpop.f32.mrf.mxu0
        %v9869 = vadd.f32 %v9829, %v9868
        %v9870 = vpop.f32.mrf.mxu0
        %v9871 = vpop.f32.mrf.mxu0
        %v9872 = vpop.f32.mrf.mxu0
        %9873 = vdwg.mxu0
        %9874 = vmatprep.subr.bf16.mxu0 0
        %9875 = vmatpush1.bf16.xpose.msra.mxu0 0
        %9876 = vmatprep.subr.bf16.mxu0 0
        %9877 = vmatpush1.bf16.xpose.msra.mxu0 0
        %9878 = vmatprep.subr.bf16.mxu0 0
        %9879 = vmatpush1.bf16.xpose.msra.mxu0 0
        %9880 = vmatprep.subr.bf16.mxu0 0
        %9881 = vmatpush1.bf16.xpose.msra.mxu0 0
        %9882 = vmatprep.subr.bf16.mxu0 0
        %9883 = vmatpush1.bf16.xpose.msra.mxu0 0
        %9884 = vmatprep.subr.bf16.mxu0 0
        %9885 = vmatpush1.bf16.xpose.msra.mxu0 0
        %9886 = vmatprep.subr.bf16.mxu0 %v4699
        %9887 = vmatpush1.bf16.xpose.msra.mxu0 %v4698
        %9888 = vmatprep.subr.bf16.mxu0 %v4443
        %9889 = vmatpush1.bf16.xpose.msra.mxu0 %v4442
        %9890 = vmatprep.subr.bf16.mxu0 0
        %9891 = vmatpush2.bf16.xpose.msra.mxu0 0
        %9892 = vmatprep.subr.bf16.mxu0 0
        %9893 = vmatpush2.bf16.xpose.msra.mxu0 0
        %9894 = vmatprep.subr.bf16.mxu0 0
        %9895 = vmatpush2.bf16.xpose.msra.mxu0 0
        %9896 = vmatprep.subr.bf16.mxu0 0
        %9897 = vmatpush2.bf16.xpose.msra.mxu0 0
        %9898 = vmatprep.subr.bf16.mxu0 0
        %9899 = vmatpush2.bf16.xpose.msra.mxu0 0
        %9900 = vmatprep.subr.bf16.mxu0 0
        %9901 = vmatpush2.bf16.xpose.msra.mxu0 0
        %9902 = vmatprep.subr.bf16.mxu0 0
        %9903 = vmatpush2.bf16.xpose.msra.mxu0 0
        %9904 = vmatprep.subr.bf16.mxu0 0
        %9905 = vmatpush2.bf16.xpose.msra.mxu0 0
        %9906 = vmatprep.mubr.bf16.mxu0 %v2308
        %9907 = vmatmul.mubr.bf16.gmra.mxu0 %v2294
        %v9908 = vpop.f32.mrf.mxu0
        %v9909 = vadd.f32 %v9869, %v9908
        %v9910 = vpop.f32.mrf.mxu0
        %v9911 = vpop.f32.mrf.mxu0
        %v9912 = vpop.f32.mrf.mxu0
        %9913 = vdwg.mxu0
        %9914 = vmatprep.subr.bf16.mxu0 0
        %9915 = vmatpush1.bf16.xpose.msra.mxu0 0
        %9916 = vmatprep.subr.bf16.mxu0 0
        %9917 = vmatpush1.bf16.xpose.msra.mxu0 0
        %9918 = vmatprep.subr.bf16.mxu0 0
        %9919 = vmatpush1.bf16.xpose.msra.mxu0 0
        %9920 = vmatprep.subr.bf16.mxu0 0
        %9921 = vmatpush1.bf16.xpose.msra.mxu0 0
        %9922 = vmatprep.subr.bf16.mxu0 0
        %9923 = vmatpush1.bf16.xpose.msra.mxu0 0
        %9924 = vmatprep.subr.bf16.mxu0 0
        %9925 = vmatpush1.bf16.xpose.msra.mxu0 0
        %9926 = vmatprep.subr.bf16.mxu0 %v4701
        %9927 = vmatpush1.bf16.xpose.msra.mxu0 %v4700
        %9928 = vmatprep.subr.bf16.mxu0 %v4445
        %9929 = vmatpush1.bf16.xpose.msra.mxu0 %v4444
        %9930 = vmatprep.subr.bf16.mxu0 0
        %9931 = vmatpush2.bf16.xpose.msra.mxu0 0
        %9932 = vmatprep.subr.bf16.mxu0 0
        %9933 = vmatpush2.bf16.xpose.msra.mxu0 0
        %9934 = vmatprep.subr.bf16.mxu0 0
        %9935 = vmatpush2.bf16.xpose.msra.mxu0 0
        %9936 = vmatprep.subr.bf16.mxu0 0
        %9937 = vmatpush2.bf16.xpose.msra.mxu0 0
        %9938 = vmatprep.subr.bf16.mxu0 0
        %9939 = vmatpush2.bf16.xpose.msra.mxu0 0
        %9940 = vmatprep.subr.bf16.mxu0 0
        %9941 = vmatpush2.bf16.xpose.msra.mxu0 0
        %9942 = vmatprep.subr.bf16.mxu0 0
        %9943 = vmatpush2.bf16.xpose.msra.mxu0 0
        %9944 = vmatprep.subr.bf16.mxu0 0
        %9945 = vmatpush2.bf16.xpose.msra.mxu0 0
        %9946 = vmatprep.mubr.bf16.mxu0 %v2318
        %9947 = vmatmul.mubr.bf16.gmra.mxu0 %v2316
        %v9948 = vpop.f32.mrf.mxu0
        %v9949 = vadd.f32 %v9909, %v9948
        %v9950 = vpop.f32.mrf.mxu0
        %v9951 = vpop.f32.mrf.mxu0
        %v9952 = vpop.f32.mrf.mxu0
        %9953 = vdwg.mxu0
        %9954 = vmatprep.subr.bf16.mxu0 0
        %9955 = vmatpush1.bf16.xpose.msra.mxu0 0
        %9956 = vmatprep.subr.bf16.mxu0 0
        %9957 = vmatpush1.bf16.xpose.msra.mxu0 0
        %9958 = vmatprep.subr.bf16.mxu0 0
        %9959 = vmatpush1.bf16.xpose.msra.mxu0 0
        %9960 = vmatprep.subr.bf16.mxu0 0
        %9961 = vmatpush1.bf16.xpose.msra.mxu0 0
        %9962 = vmatprep.subr.bf16.mxu0 0
        %9963 = vmatpush1.bf16.xpose.msra.mxu0 0
        %9964 = vmatprep.subr.bf16.mxu0 0
        %9965 = vmatpush1.bf16.xpose.msra.mxu0 0
        %9966 = vmatprep.subr.bf16.mxu0 %v4703
        %9967 = vmatpush1.bf16.xpose.msra.mxu0 %v4702
        %9968 = vmatprep.subr.bf16.mxu0 %v4447
        %9969 = vmatpush1.bf16.xpose.msra.mxu0 %v4446
        %9970 = vmatprep.subr.bf16.mxu0 0
        %9971 = vmatpush2.bf16.xpose.msra.mxu0 0
        %9972 = vmatprep.subr.bf16.mxu0 0
        %9973 = vmatpush2.bf16.xpose.msra.mxu0 0
        %9974 = vmatprep.subr.bf16.mxu0 0
        %9975 = vmatpush2.bf16.xpose.msra.mxu0 0
        %9976 = vmatprep.subr.bf16.mxu0 0
        %9977 = vmatpush2.bf16.xpose.msra.mxu0 0
        %9978 = vmatprep.subr.bf16.mxu0 0
        %9979 = vmatpush2.bf16.xpose.msra.mxu0 0
        %9980 = vmatprep.subr.bf16.mxu0 0
        %9981 = vmatpush2.bf16.xpose.msra.mxu0 0
        %9982 = vmatprep.subr.bf16.mxu0 0
        %9983 = vmatpush2.bf16.xpose.msra.mxu0 0
        %9984 = vmatprep.subr.bf16.mxu0 0
        %9985 = vmatpush2.bf16.xpose.msra.mxu0 0
        %9986 = vmatprep.mubr.bf16.mxu0 %v2315
        %9987 = vmatmul.mubr.bf16.gmra.mxu0 %v2301
        %v9988 = vpop.f32.mrf.mxu0
        %v9989 = vadd.f32 %v9949, %v9988
        %v9990 = vpop.f32.mrf.mxu0
        %v9991 = vpop.f32.mrf.mxu0
        %v9992 = vpop.f32.mrf.mxu0
        %9993 = vdwg.mxu0
        %9994 = vmatprep.subr.bf16.mxu0 0
        %9995 = vmatpush1.bf16.xpose.msra.mxu0 0
        %9996 = vmatprep.subr.bf16.mxu0 0
        %9997 = vmatpush1.bf16.xpose.msra.mxu0 0
        %9998 = vmatprep.subr.bf16.mxu0 0
        %9999 = vmatpush1.bf16.xpose.msra.mxu0 0
        %10000 = vmatprep.subr.bf16.mxu0 0
        %10001 = vmatpush1.bf16.xpose.msra.mxu0 0
        %10002 = vmatprep.subr.bf16.mxu0 0
        %10003 = vmatpush1.bf16.xpose.msra.mxu0 0
        %10004 = vmatprep.subr.bf16.mxu0 0
        %10005 = vmatpush1.bf16.xpose.msra.mxu0 0
        %10006 = vmatprep.subr.bf16.mxu0 %v4705
        %10007 = vmatpush1.bf16.xpose.msra.mxu0 %v4704
        %10008 = vmatprep.subr.bf16.mxu0 %v4449
        %10009 = vmatpush1.bf16.xpose.msra.mxu0 %v4448
        %10010 = vmatprep.subr.bf16.mxu0 0
        %10011 = vmatpush2.bf16.xpose.msra.mxu0 0
        %10012 = vmatprep.subr.bf16.mxu0 0
        %10013 = vmatpush2.bf16.xpose.msra.mxu0 0
        %10014 = vmatprep.subr.bf16.mxu0 0
        %10015 = vmatpush2.bf16.xpose.msra.mxu0 0
        %10016 = vmatprep.subr.bf16.mxu0 0
        %10017 = vmatpush2.bf16.xpose.msra.mxu0 0
        %10018 = vmatprep.subr.bf16.mxu0 0
        %10019 = vmatpush2.bf16.xpose.msra.mxu0 0
        %10020 = vmatprep.subr.bf16.mxu0 0
        %10021 = vmatpush2.bf16.xpose.msra.mxu0 0
        %10022 = vmatprep.subr.bf16.mxu0 0
        %10023 = vmatpush2.bf16.xpose.msra.mxu0 0
        %10024 = vmatprep.subr.bf16.mxu0 0
        %10025 = vmatpush2.bf16.xpose.msra.mxu0 0
        %10026 = vmatprep.mubr.bf16.mxu0 %v2319
        %10027 = vmatmul.mubr.bf16.gmra.mxu0 %v2317
        %v10028 = vpop.f32.mrf.mxu0
        %v10029 = vadd.f32 %v9989, %v10028
        %v10030 = vpop.f32.mrf.mxu0
        %v10031 = vpop.f32.mrf.mxu0
        %v10032 = vpop.f32.mrf.mxu0
        %10033 = vdwg.mxu0
        %10034 = vmatprep.subr.bf16.mxu0 0
        %10035 = vmatpush1.bf16.xpose.msra.mxu0 0
        %10036 = vmatprep.subr.bf16.mxu0 0
        %10037 = vmatpush1.bf16.xpose.msra.mxu0 0
        %10038 = vmatprep.subr.bf16.mxu0 0
        %10039 = vmatpush1.bf16.xpose.msra.mxu0 0
        %10040 = vmatprep.subr.bf16.mxu0 0
        %10041 = vmatpush1.bf16.xpose.msra.mxu0 0
        %10042 = vmatprep.subr.bf16.mxu0 0
        %10043 = vmatpush1.bf16.xpose.msra.mxu0 0
        %10044 = vmatprep.subr.bf16.mxu0 0
        %10045 = vmatpush1.bf16.xpose.msra.mxu0 0
        %10046 = vmatprep.subr.bf16.mxu0 %v4707
        %10047 = vmatpush1.bf16.xpose.msra.mxu0 %v4706
        %10048 = vmatprep.subr.bf16.mxu0 %v4451
        %10049 = vmatpush1.bf16.xpose.msra.mxu0 %v4450
        %10050 = vmatprep.subr.bf16.mxu0 0
        %10051 = vmatpush2.bf16.xpose.msra.mxu0 0
        %10052 = vmatprep.subr.bf16.mxu0 0
        %10053 = vmatpush2.bf16.xpose.msra.mxu0 0
        %10054 = vmatprep.subr.bf16.mxu0 0
        %10055 = vmatpush2.bf16.xpose.msra.mxu0 0
        %10056 = vmatprep.subr.bf16.mxu0 0
        %10057 = vmatpush2.bf16.xpose.msra.mxu0 0
        %10058 = vmatprep.subr.bf16.mxu0 0
        %10059 = vmatpush2.bf16.xpose.msra.mxu0 0
        %10060 = vmatprep.subr.bf16.mxu0 0
        %10061 = vmatpush2.bf16.xpose.msra.mxu0 0
        %10062 = vmatprep.subr.bf16.mxu0 0
        %10063 = vmatpush2.bf16.xpose.msra.mxu0 0
        %10064 = vmatprep.subr.bf16.mxu0 0
        %10065 = vmatpush2.bf16.xpose.msra.mxu0 0
        %10066 = vmatprep.mubr.bf16.mxu0 %v2357
        %10067 = vmatmul.mubr.bf16.gmra.mxu0 %v2343
        %v10068 = vpop.f32.mrf.mxu0
        %v10069 = vadd.f32 %v10029, %v10068
        %v10070 = vpop.f32.mrf.mxu0
        %v10071 = vpop.f32.mrf.mxu0
        %v10072 = vpop.f32.mrf.mxu0
        %10073 = vdwg.mxu0
        %10074 = vmatprep.subr.bf16.mxu0 0
        %10075 = vmatpush1.bf16.xpose.msra.mxu0 0
        %10076 = vmatprep.subr.bf16.mxu0 0
        %10077 = vmatpush1.bf16.xpose.msra.mxu0 0
        %10078 = vmatprep.subr.bf16.mxu0 0
        %10079 = vmatpush1.bf16.xpose.msra.mxu0 0
        %10080 = vmatprep.subr.bf16.mxu0 0
        %10081 = vmatpush1.bf16.xpose.msra.mxu0 0
        %10082 = vmatprep.subr.bf16.mxu0 0
        %10083 = vmatpush1.bf16.xpose.msra.mxu0 0
        %10084 = vmatprep.subr.bf16.mxu0 0
        %10085 = vmatpush1.bf16.xpose.msra.mxu0 0
        %10086 = vmatprep.subr.bf16.mxu0 %v4709
        %10087 = vmatpush1.bf16.xpose.msra.mxu0 %v4708
        %10088 = vmatprep.subr.bf16.mxu0 %v4453
        %10089 = vmatpush1.bf16.xpose.msra.mxu0 %v4452
        %10090 = vmatprep.subr.bf16.mxu0 0
        %10091 = vmatpush2.bf16.xpose.msra.mxu0 0
        %10092 = vmatprep.subr.bf16.mxu0 0
        %10093 = vmatpush2.bf16.xpose.msra.mxu0 0
        %10094 = vmatprep.subr.bf16.mxu0 0
        %10095 = vmatpush2.bf16.xpose.msra.mxu0 0
        %10096 = vmatprep.subr.bf16.mxu0 0
        %10097 = vmatpush2.bf16.xpose.msra.mxu0 0
        %10098 = vmatprep.subr.bf16.mxu0 0
        %10099 = vmatpush2.bf16.xpose.msra.mxu0 0
        %10100 = vmatprep.subr.bf16.mxu0 0
        %10101 = vmatpush2.bf16.xpose.msra.mxu0 0
        %10102 = vmatprep.subr.bf16.mxu0 0
        %10103 = vmatpush2.bf16.xpose.msra.mxu0 0
        %10104 = vmatprep.subr.bf16.mxu0 0
        %10105 = vmatpush2.bf16.xpose.msra.mxu0 0
        %10106 = vmatprep.mubr.bf16.mxu0 %v2367
        %10107 = vmatmul.mubr.bf16.gmra.mxu0 %v2365
        %v10108 = vpop.f32.mrf.mxu0
        %v10109 = vadd.f32 %v10069, %v10108
        %v10110 = vpop.f32.mrf.mxu0
        %v10111 = vpop.f32.mrf.mxu0
        %v10112 = vpop.f32.mrf.mxu0
        %10113 = vdwg.mxu0
        %10114 = vmatprep.subr.bf16.mxu0 0
        %10115 = vmatpush1.bf16.xpose.msra.mxu0 0
        %10116 = vmatprep.subr.bf16.mxu0 0
        %10117 = vmatpush1.bf16.xpose.msra.mxu0 0
        %10118 = vmatprep.subr.bf16.mxu0 0
        %10119 = vmatpush1.bf16.xpose.msra.mxu0 0
        %10120 = vmatprep.subr.bf16.mxu0 0
        %10121 = vmatpush1.bf16.xpose.msra.mxu0 0
        %10122 = vmatprep.subr.bf16.mxu0 0
        %10123 = vmatpush1.bf16.xpose.msra.mxu0 0
        %10124 = vmatprep.subr.bf16.mxu0 0
        %10125 = vmatpush1.bf16.xpose.msra.mxu0 0
        %10126 = vmatprep.subr.bf16.mxu0 %v4711
        %10127 = vmatpush1.bf16.xpose.msra.mxu0 %v4710
        %10128 = vmatprep.subr.bf16.mxu0 %v4455
        %10129 = vmatpush1.bf16.xpose.msra.mxu0 %v4454
        %10130 = vmatprep.subr.bf16.mxu0 0
        %10131 = vmatpush2.bf16.xpose.msra.mxu0 0
        %10132 = vmatprep.subr.bf16.mxu0 0
        %10133 = vmatpush2.bf16.xpose.msra.mxu0 0
        %10134 = vmatprep.subr.bf16.mxu0 0
        %10135 = vmatpush2.bf16.xpose.msra.mxu0 0
        %10136 = vmatprep.subr.bf16.mxu0 0
        %10137 = vmatpush2.bf16.xpose.msra.mxu0 0
        %10138 = vmatprep.subr.bf16.mxu0 0
        %10139 = vmatpush2.bf16.xpose.msra.mxu0 0
        %10140 = vmatprep.subr.bf16.mxu0 0
        %10141 = vmatpush2.bf16.xpose.msra.mxu0 0
        %10142 = vmatprep.subr.bf16.mxu0 0
        %10143 = vmatpush2.bf16.xpose.msra.mxu0 0
        %10144 = vmatprep.subr.bf16.mxu0 0
        %10145 = vmatpush2.bf16.xpose.msra.mxu0 0
        %10146 = vmatprep.mubr.bf16.mxu0 %v2364
        %10147 = vmatmul.mubr.bf16.gmra.mxu0 %v2350
        %v10148 = vpop.f32.mrf.mxu0
        %v10149 = vadd.f32 %v10109, %v10148
        %v10150 = vpop.f32.mrf.mxu0
        %v10151 = vpop.f32.mrf.mxu0
        %v10152 = vpop.f32.mrf.mxu0
        %10153 = vdwg.mxu0
        %10154 = vmatprep.subr.bf16.mxu0 0
        %10155 = vmatpush1.bf16.xpose.msra.mxu0 0
        %10156 = vmatprep.subr.bf16.mxu0 0
        %10157 = vmatpush1.bf16.xpose.msra.mxu0 0
        %10158 = vmatprep.subr.bf16.mxu0 0
        %10159 = vmatpush1.bf16.xpose.msra.mxu0 0
        %10160 = vmatprep.subr.bf16.mxu0 0
        %10161 = vmatpush1.bf16.xpose.msra.mxu0 0
        %10162 = vmatprep.subr.bf16.mxu0 0
        %10163 = vmatpush1.bf16.xpose.msra.mxu0 0
        %10164 = vmatprep.subr.bf16.mxu0 0
        %10165 = vmatpush1.bf16.xpose.msra.mxu0 0
        %10166 = vmatprep.subr.bf16.mxu0 %v4713
        %10167 = vmatpush1.bf16.xpose.msra.mxu0 %v4712
        %10168 = vmatprep.subr.bf16.mxu0 %v4457
        %10169 = vmatpush1.bf16.xpose.msra.mxu0 %v4456
        %10170 = vmatprep.subr.bf16.mxu0 0
        %10171 = vmatpush2.bf16.xpose.msra.mxu0 0
        %10172 = vmatprep.subr.bf16.mxu0 0
        %10173 = vmatpush2.bf16.xpose.msra.mxu0 0
        %10174 = vmatprep.subr.bf16.mxu0 0
        %10175 = vmatpush2.bf16.xpose.msra.mxu0 0
        %10176 = vmatprep.subr.bf16.mxu0 0
        %10177 = vmatpush2.bf16.xpose.msra.mxu0 0
        %10178 = vmatprep.subr.bf16.mxu0 0
        %10179 = vmatpush2.bf16.xpose.msra.mxu0 0
        %10180 = vmatprep.subr.bf16.mxu0 0
        %10181 = vmatpush2.bf16.xpose.msra.mxu0 0
        %10182 = vmatprep.subr.bf16.mxu0 0
        %10183 = vmatpush2.bf16.xpose.msra.mxu0 0
        %10184 = vmatprep.subr.bf16.mxu0 0
        %10185 = vmatpush2.bf16.xpose.msra.mxu0 0
        %10186 = vmatprep.mubr.bf16.mxu0 %v2368
        %10187 = vmatmul.mubr.bf16.gmra.mxu0 %v2366
        %v10188 = vpop.f32.mrf.mxu0
        %v10189 = vadd.f32 %v10149, %v10188
        %v10190 = vpop.f32.mrf.mxu0
        %v10191 = vpop.f32.mrf.mxu0
        %v10192 = vpop.f32.mrf.mxu0
        %10193 = vdwg.mxu0
        %10194 = vmatprep.subr.bf16.mxu0 0
        %10195 = vmatpush1.bf16.xpose.msra.mxu0 0
        %10196 = vmatprep.subr.bf16.mxu0 0
        %10197 = vmatpush1.bf16.xpose.msra.mxu0 0
        %10198 = vmatprep.subr.bf16.mxu0 0
        %10199 = vmatpush1.bf16.xpose.msra.mxu0 0
        %10200 = vmatprep.subr.bf16.mxu0 0
        %10201 = vmatpush1.bf16.xpose.msra.mxu0 0
        %10202 = vmatprep.subr.bf16.mxu0 0
        %10203 = vmatpush1.bf16.xpose.msra.mxu0 0
        %10204 = vmatprep.subr.bf16.mxu0 0
        %10205 = vmatpush1.bf16.xpose.msra.mxu0 0
        %10206 = vmatprep.subr.bf16.mxu0 %v4715
        %10207 = vmatpush1.bf16.xpose.msra.mxu0 %v4714
        %10208 = vmatprep.subr.bf16.mxu0 %v4459
        %10209 = vmatpush1.bf16.xpose.msra.mxu0 %v4458
        %10210 = vmatprep.subr.bf16.mxu0 0
        %10211 = vmatpush2.bf16.xpose.msra.mxu0 0
        %10212 = vmatprep.subr.bf16.mxu0 0
        %10213 = vmatpush2.bf16.xpose.msra.mxu0 0
        %10214 = vmatprep.subr.bf16.mxu0 0
        %10215 = vmatpush2.bf16.xpose.msra.mxu0 0
        %10216 = vmatprep.subr.bf16.mxu0 0
        %10217 = vmatpush2.bf16.xpose.msra.mxu0 0
        %10218 = vmatprep.subr.bf16.mxu0 0
        %10219 = vmatpush2.bf16.xpose.msra.mxu0 0
        %10220 = vmatprep.subr.bf16.mxu0 0
        %10221 = vmatpush2.bf16.xpose.msra.mxu0 0
        %10222 = vmatprep.subr.bf16.mxu0 0
        %10223 = vmatpush2.bf16.xpose.msra.mxu0 0
        %10224 = vmatprep.subr.bf16.mxu0 0
        %10225 = vmatpush2.bf16.xpose.msra.mxu0 0
        %10226 = vmatprep.mubr.bf16.mxu0 %v2406
        %10227 = vmatmul.mubr.bf16.gmra.mxu0 %v2392
        %v10228 = vpop.f32.mrf.mxu0
        %v10229 = vadd.f32 %v10189, %v10228
        %v10230 = vpop.f32.mrf.mxu0
        %v10231 = vpop.f32.mrf.mxu0
        %v10232 = vpop.f32.mrf.mxu0
        %10233 = vdwg.mxu0
        %10234 = vmatprep.subr.bf16.mxu0 0
        %10235 = vmatpush1.bf16.xpose.msra.mxu0 0
        %10236 = vmatprep.subr.bf16.mxu0 0
        %10237 = vmatpush1.bf16.xpose.msra.mxu0 0
        %10238 = vmatprep.subr.bf16.mxu0 0
        %10239 = vmatpush1.bf16.xpose.msra.mxu0 0
        %10240 = vmatprep.subr.bf16.mxu0 0
        %10241 = vmatpush1.bf16.xpose.msra.mxu0 0
        %10242 = vmatprep.subr.bf16.mxu0 0
        %10243 = vmatpush1.bf16.xpose.msra.mxu0 0
        %10244 = vmatprep.subr.bf16.mxu0 0
        %10245 = vmatpush1.bf16.xpose.msra.mxu0 0
        %10246 = vmatprep.subr.bf16.mxu0 %v4717
        %10247 = vmatpush1.bf16.xpose.msra.mxu0 %v4716
        %10248 = vmatprep.subr.bf16.mxu0 %v4461
        %10249 = vmatpush1.bf16.xpose.msra.mxu0 %v4460
        %10250 = vmatprep.subr.bf16.mxu0 0
        %10251 = vmatpush2.bf16.xpose.msra.mxu0 0
        %10252 = vmatprep.subr.bf16.mxu0 0
        %10253 = vmatpush2.bf16.xpose.msra.mxu0 0
        %10254 = vmatprep.subr.bf16.mxu0 0
        %10255 = vmatpush2.bf16.xpose.msra.mxu0 0
        %10256 = vmatprep.subr.bf16.mxu0 0
        %10257 = vmatpush2.bf16.xpose.msra.mxu0 0
        %10258 = vmatprep.subr.bf16.mxu0 0
        %10259 = vmatpush2.bf16.xpose.msra.mxu0 0
        %10260 = vmatprep.subr.bf16.mxu0 0
        %10261 = vmatpush2.bf16.xpose.msra.mxu0 0
        %10262 = vmatprep.subr.bf16.mxu0 0
        %10263 = vmatpush2.bf16.xpose.msra.mxu0 0
        %10264 = vmatprep.subr.bf16.mxu0 0
        %10265 = vmatpush2.bf16.xpose.msra.mxu0 0
        %10266 = vmatprep.mubr.bf16.mxu0 %v2416
        %10267 = vmatmul.mubr.bf16.gmra.mxu0 %v2414
        %v10268 = vpop.f32.mrf.mxu0
        %v10269 = vadd.f32 %v10229, %v10268
        %v10270 = vpop.f32.mrf.mxu0
        %v10271 = vpop.f32.mrf.mxu0
        %v10272 = vpop.f32.mrf.mxu0
        %10273 = vdwg.mxu0
        %10274 = vmatprep.subr.bf16.mxu0 0
        %10275 = vmatpush1.bf16.xpose.msra.mxu0 0
        %10276 = vmatprep.subr.bf16.mxu0 0
        %10277 = vmatpush1.bf16.xpose.msra.mxu0 0
        %10278 = vmatprep.subr.bf16.mxu0 0
        %10279 = vmatpush1.bf16.xpose.msra.mxu0 0
        %10280 = vmatprep.subr.bf16.mxu0 0
        %10281 = vmatpush1.bf16.xpose.msra.mxu0 0
        %10282 = vmatprep.subr.bf16.mxu0 0
        %10283 = vmatpush1.bf16.xpose.msra.mxu0 0
        %10284 = vmatprep.subr.bf16.mxu0 0
        %10285 = vmatpush1.bf16.xpose.msra.mxu0 0
        %10286 = vmatprep.subr.bf16.mxu0 %v4719
        %10287 = vmatpush1.bf16.xpose.msra.mxu0 %v4718
        %10288 = vmatprep.subr.bf16.mxu0 %v4463
        %10289 = vmatpush1.bf16.xpose.msra.mxu0 %v4462
        %10290 = vmatprep.subr.bf16.mxu0 0
        %10291 = vmatpush2.bf16.xpose.msra.mxu0 0
        %10292 = vmatprep.subr.bf16.mxu0 0
        %10293 = vmatpush2.bf16.xpose.msra.mxu0 0
        %10294 = vmatprep.subr.bf16.mxu0 0
        %10295 = vmatpush2.bf16.xpose.msra.mxu0 0
        %10296 = vmatprep.subr.bf16.mxu0 0
        %10297 = vmatpush2.bf16.xpose.msra.mxu0 0
        %10298 = vmatprep.subr.bf16.mxu0 0
        %10299 = vmatpush2.bf16.xpose.msra.mxu0 0
        %10300 = vmatprep.subr.bf16.mxu0 0
        %10301 = vmatpush2.bf16.xpose.msra.mxu0 0
        %10302 = vmatprep.subr.bf16.mxu0 0
        %10303 = vmatpush2.bf16.xpose.msra.mxu0 0
        %10304 = vmatprep.subr.bf16.mxu0 0
        %10305 = vmatpush2.bf16.xpose.msra.mxu0 0
        %10306 = vmatprep.mubr.bf16.mxu0 %v2413
        %10307 = vmatmul.mubr.bf16.gmra.mxu0 %v2399
        %v10308 = vpop.f32.mrf.mxu0
        %v10309 = vadd.f32 %v10269, %v10308
        %v10310 = vpop.f32.mrf.mxu0
        %v10311 = vpop.f32.mrf.mxu0
        %v10312 = vpop.f32.mrf.mxu0
        %10313 = vdwg.mxu0
        %10314 = vmatprep.subr.bf16.mxu0 0
        %10315 = vmatpush1.bf16.xpose.msra.mxu0 0
        %10316 = vmatprep.subr.bf16.mxu0 0
        %10317 = vmatpush1.bf16.xpose.msra.mxu0 0
        %10318 = vmatprep.subr.bf16.mxu0 0
        %10319 = vmatpush1.bf16.xpose.msra.mxu0 0
        %10320 = vmatprep.subr.bf16.mxu0 0
        %10321 = vmatpush1.bf16.xpose.msra.mxu0 0
        %10322 = vmatprep.subr.bf16.mxu0 0
        %10323 = vmatpush1.bf16.xpose.msra.mxu0 0
        %10324 = vmatprep.subr.bf16.mxu0 0
        %10325 = vmatpush1.bf16.xpose.msra.mxu0 0
        %10326 = vmatprep.subr.bf16.mxu0 %v4721
        %10327 = vmatpush1.bf16.xpose.msra.mxu0 %v4720
        %10328 = vmatprep.subr.bf16.mxu0 %v4465
        %10329 = vmatpush1.bf16.xpose.msra.mxu0 %v4464
        %10330 = vmatprep.subr.bf16.mxu0 0
        %10331 = vmatpush2.bf16.xpose.msra.mxu0 0
        %10332 = vmatprep.subr.bf16.mxu0 0
        %10333 = vmatpush2.bf16.xpose.msra.mxu0 0
        %10334 = vmatprep.subr.bf16.mxu0 0
        %10335 = vmatpush2.bf16.xpose.msra.mxu0 0
        %10336 = vmatprep.subr.bf16.mxu0 0
        %10337 = vmatpush2.bf16.xpose.msra.mxu0 0
        %10338 = vmatprep.subr.bf16.mxu0 0
        %10339 = vmatpush2.bf16.xpose.msra.mxu0 0
        %10340 = vmatprep.subr.bf16.mxu0 0
        %10341 = vmatpush2.bf16.xpose.msra.mxu0 0
        %10342 = vmatprep.subr.bf16.mxu0 0
        %10343 = vmatpush2.bf16.xpose.msra.mxu0 0
        %10344 = vmatprep.subr.bf16.mxu0 0
        %10345 = vmatpush2.bf16.xpose.msra.mxu0 0
        %10346 = vmatprep.mubr.bf16.mxu0 %v2417
        %10347 = vmatmul.mubr.bf16.gmra.mxu0 %v2415
        %v10348 = vpop.f32.mrf.mxu0
        %v10349 = vadd.f32 %v10309, %v10348
        %v10350 = vpop.f32.mrf.mxu0
        %v10351 = vpop.f32.mrf.mxu0
        %v10352 = vpop.f32.mrf.mxu0
        %10353 = vdwg.mxu0
        %v10354 = vadd.f32 %v273, %v10349
        %vm10355 = vcmask 254976
        %10356 = vst.msk [vmem:[#allocation2] sm:$0x3] %vm10355, %v10354
        %s10357 = sld [smem:[#allocation7 + %s265]]
        %p10358 = scmp.eq.s32.totalorder %s10357, 1
        // Predicated region
        $region41: #{tpu_custom_call.1} parent=27 // pred_check
          %p10359 = pneg %p10358
        $region42: #{tpu_custom_call.1} parent=27 // pred_check_branch
          %10361 = sbr.rel (%p10359) target = $region44
        $region43: #{tpu_custom_call.1} parent=27 // pred_region
          %v10362 = vld [vmem:[#allocation2] sm:$0x3]
          %10363 = vst.msk [vmem:[%s251] sm:$0x3] %vm10355, %v10362
        $region44: #{tpu_custom_call.1} parent=27 // pred_fallthru
          _
        %s10364 = sand.u32 %s128, 1
        %s10365 = scalar_lea.sflag [#allocation10], %s10364
        %s10366 = sand.u32 %s128, 1
        %s10367 = smul.addr %s10366, 2
        %s10368 = scalar_lea.vmem [#allocation13], %s10367
        // Predicated region
        $region45: #{tpu_custom_call.1} parent=27 // pred_check
          %p10369 = pneg %p138
        $region46: #{tpu_custom_call.1} parent=27 // pred_check_branch
          %10371 = sbr.rel (%p10369) target = $region48
        $region47: #{tpu_custom_call.1} parent=27 // pred_region
          %s10372 = smul.u32 %s40, 3
          %s10373 = sadd.s32 %s10372, %s41
          %s10374 = sld [smem:[#allocation5 + %s10373]]
          %s10376 = ssub.s32 32, 32
          %10377 = vsyncadd %s10365, %s10376
          %s10378 = smul.addr %s40, 5
          %s10379 = sadd.s32 %s10374, %s10378
          %s10380 = smul.addr %s10379, 32
          %s10381 = scalar_lea.hbm %s6, %s10380
          %s10383 = sshll.u32 %s10368, 4
          %s10384 = int_to_ptr.vmem [resolvable:$true] %s10383
          %10386 = dma.vmem_to_hbm [thread:$0]  %s10384, 32, %s10381, %s10365
        $region48: #{tpu_custom_call.1} parent=27 // pred_fallthru
          _
      $region28: #{tpu_custom_call.1} parent=5 // pred_fallthru
        _
      %p10387 = scmp.le.s32.totalorder 2, %s31
      // Predicated region
      $region49: #{tpu_custom_call.1} parent=5 // pred_check
        %p10388 = pneg %p10387
      $region50: #{tpu_custom_call.1} parent=5 // pred_check_branch
        %10390 = sbr.rel (%p10388) target = $region52
      $region51: #{tpu_custom_call.1} parent=5 // pred_region
        %s10391 = ssub.s32 %s31, 2
        // Predicated region
        $region53: #{tpu_custom_call.1} parent=51 // pred_check
          %p10392 = pneg %p144
        $region54: #{tpu_custom_call.1} parent=51 // pred_check_branch
          %10394 = sbr.rel (%p10392) target = $region56
        $region55: #{tpu_custom_call.1} parent=51 // pred_region
          %s10395 = sand.u32 %s129, 1
          %s10396 = scalar_lea.sflag [#allocation10], %s10395
          %s10397 = sand.u32 %s129, 1
          %s10398 = smul.addr %s10397, 2
          %s10399 = scalar_lea.vmem [#allocation13], %s10398
          %10400 = dma.done %s10396, 32
        $region56: #{tpu_custom_call.1} parent=51 // pred_fallthru
          _
      $region52: #{tpu_custom_call.1} parent=5 // pred_fallthru
        _
    $region6: #{tpu_custom_call.1} parent=1 // loop_footer
      %s35 = sadd.s32 1, %s31
    $region7: #{tpu_custom_call.1} parent=1 // loop_footer_branch
      %30 = sbr.rel target = $region3
    $region8: #{tpu_custom_call.1} parent=1 // loop_exit
      _
    %10401 = vsyncpa [#allocation9], 1
    %s10402 = scalar_lea.sflag [#allocation9], 1
    %10403 = vsyncpa %s10402, 1
    %10404 = vsyncpa [#allocation12], 1
    %s10405 = scalar_lea.sflag [#allocation12], 1
    %10406 = vsyncpa %s10405, 1
    %10407 = vsyncpa [#allocation10], 1
    %s10408 = scalar_lea.sflag [#allocation10], 1
    %10409 = vsyncpa %s10408, 1

</llo_original>
